<compile_context>
chip_gen: v7x
topology: tpu7x:2x2x1
jax: 0.10.0
libtpu: 0.0.40
codegen_flags: <defaults>
</compile_context>

<pallas_src>
import functools

import jax
import jax.numpy as jnp
from jax import lax
from jax.experimental import pallas as pl
from jax.experimental.pallas import tpu as pltpu

EPS = 1e-5


def _se_conv_bn_kernel(g_ref, x_ref, w_ref, gamma_ref, beta_ref, o_ref):
    """Grid = (C_out blocks,).  Full C_in reduction in a single step.

    g_ref:     (C_in, 1)       SE gate logits (f32)
    x_ref:     (C_in, S)       features (f32)
    w_ref:     (tc_out, C_in)  conv weight slice (bf16 params)
    gamma_ref: (tc_out, 1)     BN scale
    beta_ref:  (tc_out, 1)     BN shift
    o_ref:     (tc_out, S)     f32 output block
    """
    # SE gate + elementwise multiply (VPU/EUP); feed the MXU in the weight dtype
    # (bf16) with f32 accumulation.
    gate = jax.nn.sigmoid(g_ref[...].astype(jnp.float32))            # (C_in, 1)
    xg = (gate * x_ref[...].astype(jnp.float32)).astype(w_ref.dtype)  # (C_in, S)

    # 1x1 conv == matmul on the MXU.
    y = jnp.dot(w_ref[...], xg, preferred_element_type=jnp.float32)   # (tc_out, S)

    # BatchNorm2d in training mode: biased batch statistics over S, computed
    # independently per output-channel row (so the C_out split is exact).
    mean = jnp.mean(y, axis=-1, keepdims=True)
    var = jnp.mean((y - mean) ** 2, axis=-1, keepdims=True)
    inv = lax.rsqrt(var + EPS)
    gamma = gamma_ref[...].astype(jnp.float32)
    beta = beta_ref[...].astype(jnp.float32)
    o_ref[...] = (y - mean) * inv * gamma + beta
    # TODO(synk): PyTorch BatchNorm2d (training) also updates running_mean /
    # running_var; only the normalized forward output is produced here.


def _multi_tensorcore_chip() -> bool:
    """True only for chips with >1 TensorCore per Pallas device (v7x)."""
    try:
        kind = jax.devices()[0].device_kind.lower()
    except Exception:  # pragma: no cover - defensive, default to no split
        return False
    return ("v7" in kind) or ("7x" in kind)


@functools.partial(jax.jit, static_argnames=("tc_out",))
def se_conv_bn(x_gate, x, w, gamma, beta, *, tc_out=None):
    """x_gate: (1, C_in, 1, 1), x: (1, C_in, H, W), w: (C_out, C_in) [bf16 params
    preferred], gamma/beta: (C_out,). Returns (1, C_out, H, W) float32."""
    n, c_in, h, wdim = x.shape
    assert n == 1, "kernel layout assumes batch == 1 (as in the source module)"
    c_out = w.shape[0]
    s = n * h * wdim

    # C_out split only where a second TensorCore exists (v7x); on single-TC
    # v5e/v6e the split would just add a grid step + a second gate recompute.
    if tc_out is None:
        if _multi_tensorcore_chip() and c_out % 2 == 0 and (c_out // 2) % 8 == 0:
            tc_out = c_out // 2
        else:
            tc_out = c_out
    assert c_out % tc_out == 0 and tc_out % 8 == 0

    # Pure metadata reshapes (contiguous views) — no wrapper-side compute passes.
    g2 = x_gate.reshape(c_in, 1)
    x2 = x.reshape(c_in, s)
    gamma2 = gamma.reshape(c_out, 1)
    beta2 = beta.reshape(c_out, 1)

    grid = (c_out // tc_out,)

    # TODO(synk): on v7x, verify "parallel" actually shards this axis across the
    # two TensorCores; if not, switch to pltpu.CORE_PARALLEL / an explicit core_map.
    out2 = pl.pallas_call(
        _se_conv_bn_kernel,
        out_shape=jax.ShapeDtypeStruct((c_out, s), jnp.float32),
        grid=grid,
        in_specs=[
            pl.BlockSpec((c_in, 1), lambda j: (0, 0)),       # gate logits
            pl.BlockSpec((c_in, s), lambda j: (0, 0)),       # features
            pl.BlockSpec((tc_out, c_in), lambda j: (j, 0)),  # conv weight (bf16)
            pl.BlockSpec((tc_out, 1), lambda j: (j, 0)),     # gamma
            pl.BlockSpec((tc_out, 1), lambda j: (j, 0)),     # beta
        ],
        out_specs=pl.BlockSpec((tc_out, s), lambda j: (j, 0)),
        compiler_params=pltpu.CompilerParams(
            dimension_semantics=("parallel",),
        ),
    )(g2, x2, w, gamma2, beta2)

    return out2.reshape(1, c_out, h, wdim)


def _reference(x_gate, x, w, gamma, beta, *, act_dtype=jnp.float32):
    """Pure-JAX reference. `w` may already be bf16-quantized; `act_dtype`
    optionally quantizes the gated activations to mimic the kernel's MXU feed."""
    xg = jax.nn.sigmoid(x_gate) * x                                   # (1,C_in,H,W)
    xg = xg.astype(act_dtype).astype(jnp.float32)
    w32 = w.astype(jnp.float32)
    y = jnp.einsum("nchw,oc->nohw", xg, w32, precision=jax.lax.Precision.HIGHEST)
    mean = jnp.mean(y, axis=(0, 2, 3), keepdims=True)
    var = jnp.mean((y - mean) ** 2, axis=(0, 2, 3), keepdims=True)
    yhat = (y - mean) * lax.rsqrt(var + EPS)
    return yhat * gamma[None, :, None, None] + beta[None, :, None, None]


if __name__ == "__main__":
    # Shapes fixed by the module: N=1, C_in=2688, C_out=448, H=W=7.
    N, C_IN, C_OUT, H, W = 1, 2688, 448, 7, 7

    key = jax.random.PRNGKey(0)
    k1, k2, k3, k4, k5 = jax.random.split(key, 5)

    x485 = jax.random.normal(k1, (N, C_IN, H, W), dtype=jnp.float32)   # features
    x489 = jax.random.normal(k2, (N, C_IN, 1, 1), dtype=jnp.float32)   # SE logits

    fan_in = C_IN
    bound = 1.0 / (fan_in ** 0.5)
    w_conv = jax.random.uniform(k3, (C_OUT, C_IN), jnp.float32, -bound, bound)
    gamma = jax.random.uniform(k4, (C_OUT,), jnp.float32, 0.5, 1.5)
    beta = 0.1 * jax.random.normal(k5, (C_OUT,), dtype=jnp.float32)

    # Conv weight stored once in bf16 (param storage / init time), so the
    # per-call hot path never pays an f32->bf16 convert over the 2.4 MB weight.
    w_bf16 = jax.device_put(w_conv.astype(jnp.bfloat16))

    out = se_conv_bn(x489, x485, w_bf16, gamma, beta)
    out = jax.block_until_ready(out)
    assert out.shape == (N, C_OUT, H, W)

    # (a) Matched-precision reference: same bf16 weight + bf16 gated activations,
    #     f32 accumulation — validates the kernel structure / fused BN tightly.
    ref_matched = _reference(x489, x485, w_bf16, gamma, beta, act_dtype=jnp.bfloat16)
    err_m = jnp.max(jnp.abs(out - ref_matched))
    assert jnp.allclose(out, ref_matched, rtol=5e-3, atol=5e-3), (
        f"matched-precision max abs err {err_m}"
    )

    # (b) Exact f32 module semantics: the bf16 weight/activation feed is a
    #     deliberate precision downgrade (~1e-2 max abs post-BN); tolerance set
    #     accordingly.
    ref_exact = _reference(x489, x485, w_conv, gamma, beta)
    err_e = jnp.max(jnp.abs(out - ref_exact))
    assert jnp.allclose(out, ref_exact, rtol=5e-2, atol=5e-2), (
        f"f32-reference max abs err {err_e}"
    )

    print("KERNEL_OK")
</pallas_src>

<mosaic_0001>
module attributes {stable_mosaic.version = 11 : i64} {
  func.func @_se_conv_bn_kernel(%arg0: i32, %arg1: memref<2688x1xf32, #tpu.memory_space<vmem>>, %arg2: memref<2688x49xf32, #tpu.memory_space<vmem>>, %arg3: memref<448x2688xbf16, #tpu.memory_space<vmem>>, %arg4: memref<448x1xf32, #tpu.memory_space<vmem>>, %arg5: memref<448x1xf32, #tpu.memory_space<vmem>>, %arg6: memref<448x49xf32, #tpu.memory_space<vmem>>) attributes {dimension_semantics = [#tpu.dimension_semantics<parallel>], iteration_bounds = array<i64: 1>, scalar_prefetch = 0 : i64, scratch_operands = 0 : i64, tpu.core_type = #tpu.core_type<tc>, window_params = [{pipeline_mode = #tpu.pipeline_mode<synchronous>, transform_indices = @transform_0, window_bounds = array<i64: 2688, 1>}, {pipeline_mode = #tpu.pipeline_mode<synchronous>, transform_indices = @transform_1, window_bounds = array<i64: 2688, 49>}, {transform_indices = @transform_2, window_bounds = array<i64: 448, 2688>}, {transform_indices = @transform_3, window_bounds = array<i64: 448, 1>}, {transform_indices = @transform_4, window_bounds = array<i64: 448, 1>}, {transform_indices = @transform_5, window_bounds = array<i64: 448, 49>}]} {
    %c0 = arith.constant 0 : index
    %c0_0 = arith.constant 0 : index
    %0 = vector.load %arg1[%c0, %c0_0] : memref<2688x1xf32, #tpu.memory_space<vmem>>, vector<2688x1xf32>
    %1 = arith.negf %0 : vector<2688x1xf32>
    %2 = math.exp %1 : vector<2688x1xf32>
    %cst = arith.constant 1.000000e+00 : f32
    %3 = vector.broadcast %cst : f32 to vector<2688x1xf32>
    %4 = arith.addf %3, %2 : vector<2688x1xf32>
    %5 = arith.divf %3, %4 : vector<2688x1xf32>
    %c0_1 = arith.constant 0 : index
    %c0_2 = arith.constant 0 : index
    %6 = vector.load %arg2[%c0_1, %c0_2] : memref<2688x49xf32, #tpu.memory_space<vmem>>, vector<2688x49xf32>
    %7 = vector.broadcast %5 : vector<2688x1xf32> to vector<2688x49xf32>
    %8 = arith.mulf %7, %6 : vector<2688x49xf32>
    %9 = arith.truncf %8 : vector<2688x49xf32> to vector<2688x49xbf16>
    %c0_3 = arith.constant 0 : index
    %c0_4 = arith.constant 0 : index
    %10 = vector.load %arg3[%c0_3, %c0_4] : memref<448x2688xbf16, #tpu.memory_space<vmem>>, vector<448x2688xbf16>
    %cst_5 = arith.constant dense<0.000000e+00> : vector<448x49xf32>
    %11 = tpu.matmul %10, %9, %cst_5 {dimension_numbers = #tpu.dot_dimension_numbers<[1], [0], [0], [1], [0, 0, 1, 1], [], []>} : vector<448x2688xbf16>, vector<2688x49xbf16>, vector<448x49xf32> -> vector<448x49xf32>
    %cst_6 = arith.constant dense<0.000000e+00> : vector<448xf32>
    %12 = vector.multi_reduction <add>, %11, %cst_6 [1] : vector<448x49xf32> to vector<448xf32>
    %13 = vector.shape_cast %12 : vector<448xf32> to vector<448x1xf32>
    %cst_7 = arith.constant 4.900000e+01 : f32
    %14 = vector.broadcast %cst_7 : f32 to vector<448x1xf32>
    %15 = arith.divf %13, %14 : vector<448x1xf32>
    %16 = vector.broadcast %15 : vector<448x1xf32> to vector<448x49xf32>
    %17 = arith.subf %11, %16 : vector<448x49xf32>
    %18 = arith.mulf %17, %17 : vector<448x49xf32>
    %cst_8 = arith.constant dense<0.000000e+00> : vector<448xf32>
    %19 = vector.multi_reduction <add>, %18, %cst_8 [1] : vector<448x49xf32> to vector<448xf32>
    %20 = vector.shape_cast %19 : vector<448xf32> to vector<448x1xf32>
    %cst_9 = arith.constant 4.900000e+01 : f32
    %21 = vector.broadcast %cst_9 : f32 to vector<448x1xf32>
    %22 = arith.divf %20, %21 : vector<448x1xf32>
    %cst_10 = arith.constant 9.99999974E-6 : f32
    %23 = vector.broadcast %cst_10 : f32 to vector<448x1xf32>
    %24 = arith.addf %22, %23 : vector<448x1xf32>
    %25 = math.rsqrt %24 : vector<448x1xf32>
    %c0_11 = arith.constant 0 : index
    %c0_12 = arith.constant 0 : index
    %26 = vector.load %arg4[%c0_11, %c0_12] : memref<448x1xf32, #tpu.memory_space<vmem>>, vector<448x1xf32>
    %c0_13 = arith.constant 0 : index
    %c0_14 = arith.constant 0 : index
    %27 = vector.load %arg5[%c0_13, %c0_14] : memref<448x1xf32, #tpu.memory_space<vmem>>, vector<448x1xf32>
    %28 = vector.broadcast %15 : vector<448x1xf32> to vector<448x49xf32>
    %29 = arith.subf %11, %28 : vector<448x49xf32>
    %30 = vector.broadcast %25 : vector<448x1xf32> to vector<448x49xf32>
    %31 = arith.mulf %29, %30 : vector<448x49xf32>
    %32 = vector.broadcast %26 : vector<448x1xf32> to vector<448x49xf32>
    %33 = arith.mulf %31, %32 : vector<448x49xf32>
    %34 = vector.broadcast %27 : vector<448x1xf32> to vector<448x49xf32>
    %35 = arith.addf %33, %34 : vector<448x49xf32>
    %c0_15 = arith.constant 0 : index
    %c0_16 = arith.constant 0 : index
    %36 = vector.load %arg6[%c0_15, %c0_16] : memref<448x49xf32, #tpu.memory_space<vmem>>, vector<448x49xf32>
    tpu.vector_store %arg6[%c0_15, %c0_16], %35 {strides = array<i32>} : memref<448x49xf32, #tpu.memory_space<vmem>>, vector<448x49xf32>,
    return
  }
  func.func @transform_0(%arg0: i32) -> (i32, i32) {
    %c0_i32 = arith.constant 0 : i32
    %c0_i32_0 = arith.constant 0 : i32
    %c0_i32_1 = arith.constant 0 : i32
    return %c0_i32, %c0_i32_0 : i32, i32
  }
  func.func @transform_1(%arg0: i32) -> (i32, i32) {
    %c0_i32 = arith.constant 0 : i32
    %c0_i32_0 = arith.constant 0 : i32
    %c0_i32_1 = arith.constant 0 : i32
    return %c0_i32, %c0_i32_0 : i32, i32
  }
  func.func @transform_2(%arg0: i32) -> (i32, i32) {
    %c0_i32 = arith.constant 0 : i32
    %c0_i32_0 = arith.constant 0 : i32
    return %arg0, %c0_i32 : i32, i32
  }
  func.func @transform_3(%arg0: i32) -> (i32, i32) {
    %c0_i32 = arith.constant 0 : i32
    %c0_i32_0 = arith.constant 0 : i32
    return %arg0, %c0_i32 : i32, i32
  }
  func.func @transform_4(%arg0: i32) -> (i32, i32) {
    %c0_i32 = arith.constant 0 : i32
    %c0_i32_0 = arith.constant 0 : i32
    return %arg0, %c0_i32 : i32, i32
  }
  func.func @transform_5(%arg0: i32) -> (i32, i32) {
    %c0_i32 = arith.constant 0 : i32
    %c0_i32_0 = arith.constant 0 : i32
    return %arg0, %c0_i32 : i32, i32
  }
}

</mosaic_0001>

<llo_original>
// kernel: se_conv_bn.1
$region0: #{se_conv_bn.1}
  #allocation0 [shape = 'u32[]', space=smem, size = 0x4, offset = 0x4, fixed_abs, tag = 'smem constant byte address 0x4 - core index']
  #allocation1 [shape = 'u32[144,128]{1,0:T(1,128)}', space=vmem, size = 0x12000, scoped, tag = 'internal scratch']
  %s0 = inlined_call_operand.vmem [shape: f32[2688,1], index: 0, kind: input, shape index: {}]
  %s1 = inlined_call_operand.vmem [shape: f32[2688,49], index: 1, kind: input, shape index: {}]
  %s2 = inlined_call_operand.vmem [shape: bf16[448,2688], index: 2, kind: input, shape index: {}]
  %s3 = inlined_call_operand.vmem [shape: f32[448,1], index: 3, kind: input, shape index: {}]
  %s4 = inlined_call_operand.vmem [shape: f32[448,1], index: 4, kind: input, shape index: {}]
  %s5 = inlined_call_operand.vmem [shape: f32[448,49], index: 5, kind: output, shape index: {}]
  %s6 = sld [smem:[#allocation0]]
  $region30: #{se_conv_bn.1} parent=0
    _
  %s8 = ssub.s32 1, %s6
  %s9 = scalar_select 0, %s8, %s6
  // Predicated region
  $region2: #{se_conv_bn.1} parent=0 // pred_check
    _
  $region3: #{se_conv_bn.1} parent=0 // pred_check_branch
    %11 = sbr.rel (0) target = $region5
  $region4: #{se_conv_bn.1} parent=0 // pred_region
    _
  $region5: #{se_conv_bn.1} parent=0 // pred_fallthru
    _
  // Predicated region
  $region6: #{se_conv_bn.1} parent=0 // pred_check
    _
  $region7: #{se_conv_bn.1} parent=0 // pred_check_branch
    %13 = sbr.rel (0) target = $region9
  $region8: #{se_conv_bn.1} parent=0 // pred_region
    _
  $region9: #{se_conv_bn.1} parent=0 // pred_fallthru
    _
  // Predicated region
  $region10: #{se_conv_bn.1} parent=0 // pred_check
    _
  $region11: #{se_conv_bn.1} parent=0 // pred_check_branch
    %15 = sbr.rel (0) target = $region13
  $region12: #{se_conv_bn.1} parent=0 // pred_region
    _
  $region13: #{se_conv_bn.1} parent=0 // pred_fallthru
    _
  // Predicated region
  $region14: #{se_conv_bn.1} parent=0 // pred_check
    _
  $region15: #{se_conv_bn.1} parent=0 // pred_check_branch
    %17 = sbr.rel (0) target = $region17
  $region16: #{se_conv_bn.1} parent=0 // pred_region
    _
  $region17: #{se_conv_bn.1} parent=0 // pred_fallthru
    _
  // Predicated region
  $region18: #{se_conv_bn.1} parent=0 // pred_check
    _
  $region19: #{se_conv_bn.1} parent=0 // pred_check_branch
    %19 = sbr.rel (0) target = $region21
  $region20: #{se_conv_bn.1} parent=0 // pred_region
    _
  $region21: #{se_conv_bn.1} parent=0 // pred_fallthru
    _
  %v21 = vld [vmem:[%s0] sm:$0xff]
  %v22 = vld [vmem:[%s0 + $0x8] sm:$0xff]
  %v23 = vld [vmem:[%s0 + $0x10] sm:$0xff]
  %v24 = vld [vmem:[%s0 + $0x18] sm:$0xff]
  %v25 = vld [vmem:[%s0 + $0x20] sm:$0xff]
  %v26 = vld [vmem:[%s0 + $0x28] sm:$0xff]
  %v27 = vld [vmem:[%s0 + $0x30] sm:$0xff]
  %v28 = vld [vmem:[%s0 + $0x38] sm:$0xff]
  %v29 = vld [vmem:[%s0 + $0x40] sm:$0xff]
  %v30 = vld [vmem:[%s0 + $0x48] sm:$0xff]
  %v31 = vld [vmem:[%s0 + $0x50] sm:$0xff]
  %v32 = vld [vmem:[%s0 + $0x58] sm:$0xff]
  %v33 = vld [vmem:[%s0 + $0x60] sm:$0xff]
  %v34 = vld [vmem:[%s0 + $0x68] sm:$0xff]
  %v35 = vld [vmem:[%s0 + $0x70] sm:$0xff]
  %v36 = vld [vmem:[%s0 + $0x78] sm:$0xff]
  %v37 = vld [vmem:[%s0 + $0x80] sm:$0xff]
  %v38 = vld [vmem:[%s0 + $0x88] sm:$0xff]
  %v39 = vld [vmem:[%s0 + $0x90] sm:$0xff]
  %v40 = vld [vmem:[%s0 + $0x98] sm:$0xff]
  %v41 = vld [vmem:[%s0 + $0xa0] sm:$0xff]
  %v42 = vld [vmem:[%s0 + $0xa8] sm:$0xff]
  %v43 = vld [vmem:[%s0 + $0xb0] sm:$0xff]
  %v44 = vld [vmem:[%s0 + $0xb8] sm:$0xff]
  %v45 = vld [vmem:[%s0 + $0xc0] sm:$0xff]
  %v46 = vld [vmem:[%s0 + $0xc8] sm:$0xff]
  %v47 = vld [vmem:[%s0 + $0xd0] sm:$0xff]
  %v48 = vld [vmem:[%s0 + $0xd8] sm:$0xff]
  %v49 = vld [vmem:[%s0 + $0xe0] sm:$0xff]
  %v50 = vld [vmem:[%s0 + $0xe8] sm:$0xff]
  %v51 = vld [vmem:[%s0 + $0xf0] sm:$0xff]
  %v52 = vld [vmem:[%s0 + $0xf8] sm:$0xff]
  %v53 = vld [vmem:[%s0 + $0x100] sm:$0xff]
  %v54 = vld [vmem:[%s0 + $0x108] sm:$0xff]
  %v55 = vld [vmem:[%s0 + $0x110] sm:$0xff]
  %v56 = vld [vmem:[%s0 + $0x118] sm:$0xff]
  %v57 = vld [vmem:[%s0 + $0x120] sm:$0xff]
  %v58 = vld [vmem:[%s0 + $0x128] sm:$0xff]
  %v59 = vld [vmem:[%s0 + $0x130] sm:$0xff]
  %v60 = vld [vmem:[%s0 + $0x138] sm:$0xff]
  %v61 = vld [vmem:[%s0 + $0x140] sm:$0xff]
  %v62 = vld [vmem:[%s0 + $0x148] sm:$0xff]
  %v63 = vld [vmem:[%s0 + $0x150] sm:$0xff]
  %v64 = vld [vmem:[%s0 + $0x158] sm:$0xff]
  %v65 = vld [vmem:[%s0 + $0x160] sm:$0xff]
  %v66 = vld [vmem:[%s0 + $0x168] sm:$0xff]
  %v67 = vld [vmem:[%s0 + $0x170] sm:$0xff]
  %v68 = vld [vmem:[%s0 + $0x178] sm:$0xff]
  %v69 = vld [vmem:[%s0 + $0x180] sm:$0xff]
  %v70 = vld [vmem:[%s0 + $0x188] sm:$0xff]
  %v71 = vld [vmem:[%s0 + $0x190] sm:$0xff]
  %v72 = vld [vmem:[%s0 + $0x198] sm:$0xff]
  %v73 = vld [vmem:[%s0 + $0x1a0] sm:$0xff]
  %v74 = vld [vmem:[%s0 + $0x1a8] sm:$0xff]
  %v75 = vld [vmem:[%s0 + $0x1b0] sm:$0xff]
  %v76 = vld [vmem:[%s0 + $0x1b8] sm:$0xff]
  %v77 = vld [vmem:[%s0 + $0x1c0] sm:$0xff]
  %v78 = vld [vmem:[%s0 + $0x1c8] sm:$0xff]
  %v79 = vld [vmem:[%s0 + $0x1d0] sm:$0xff]
  %v80 = vld [vmem:[%s0 + $0x1d8] sm:$0xff]
  %v81 = vld [vmem:[%s0 + $0x1e0] sm:$0xff]
  %v82 = vld [vmem:[%s0 + $0x1e8] sm:$0xff]
  %v83 = vld [vmem:[%s0 + $0x1f0] sm:$0xff]
  %v84 = vld [vmem:[%s0 + $0x1f8] sm:$0xff]
  %v85 = vld [vmem:[%s0 + $0x200] sm:$0xff]
  %v86 = vld [vmem:[%s0 + $0x208] sm:$0xff]
  %v87 = vld [vmem:[%s0 + $0x210] sm:$0xff]
  %v88 = vld [vmem:[%s0 + $0x218] sm:$0xff]
  %v89 = vld [vmem:[%s0 + $0x220] sm:$0xff]
  %v90 = vld [vmem:[%s0 + $0x228] sm:$0xff]
  %v91 = vld [vmem:[%s0 + $0x230] sm:$0xff]
  %v92 = vld [vmem:[%s0 + $0x238] sm:$0xff]
  %v93 = vld [vmem:[%s0 + $0x240] sm:$0xff]
  %v94 = vld [vmem:[%s0 + $0x248] sm:$0xff]
  %v95 = vld [vmem:[%s0 + $0x250] sm:$0xff]
  %v96 = vld [vmem:[%s0 + $0x258] sm:$0xff]
  %v97 = vld [vmem:[%s0 + $0x260] sm:$0xff]
  %v98 = vld [vmem:[%s0 + $0x268] sm:$0xff]
  %v99 = vld [vmem:[%s0 + $0x270] sm:$0xff]
  %v100 = vld [vmem:[%s0 + $0x278] sm:$0xff]
  %v101 = vld [vmem:[%s0 + $0x280] sm:$0xff]
  %v102 = vld [vmem:[%s0 + $0x288] sm:$0xff]
  %v103 = vld [vmem:[%s0 + $0x290] sm:$0xff]
  %v104 = vld [vmem:[%s0 + $0x298] sm:$0xff]
  %v105 = vld [vmem:[%s0 + $0x2a0] sm:$0xff]
  %v106 = vld [vmem:[%s0 + $0x2a8] sm:$0xff]
  %v107 = vld [vmem:[%s0 + $0x2b0] sm:$0xff]
  %v108 = vld [vmem:[%s0 + $0x2b8] sm:$0xff]
  %v109 = vld [vmem:[%s0 + $0x2c0] sm:$0xff]
  %v110 = vld [vmem:[%s0 + $0x2c8] sm:$0xff]
  %v111 = vld [vmem:[%s0 + $0x2d0] sm:$0xff]
  %v112 = vld [vmem:[%s0 + $0x2d8] sm:$0xff]
  %v113 = vld [vmem:[%s0 + $0x2e0] sm:$0xff]
  %v114 = vld [vmem:[%s0 + $0x2e8] sm:$0xff]
  %v115 = vld [vmem:[%s0 + $0x2f0] sm:$0xff]
  %v116 = vld [vmem:[%s0 + $0x2f8] sm:$0xff]
  %v117 = vld [vmem:[%s0 + $0x300] sm:$0xff]
  %v118 = vld [vmem:[%s0 + $0x308] sm:$0xff]
  %v119 = vld [vmem:[%s0 + $0x310] sm:$0xff]
  %v120 = vld [vmem:[%s0 + $0x318] sm:$0xff]
  %v121 = vld [vmem:[%s0 + $0x320] sm:$0xff]
  %v122 = vld [vmem:[%s0 + $0x328] sm:$0xff]
  %v123 = vld [vmem:[%s0 + $0x330] sm:$0xff]
  %v124 = vld [vmem:[%s0 + $0x338] sm:$0xff]
  %v125 = vld [vmem:[%s0 + $0x340] sm:$0xff]
  %v126 = vld [vmem:[%s0 + $0x348] sm:$0xff]
  %v127 = vld [vmem:[%s0 + $0x350] sm:$0xff]
  %v128 = vld [vmem:[%s0 + $0x358] sm:$0xff]
  %v129 = vld [vmem:[%s0 + $0x360] sm:$0xff]
  %v130 = vld [vmem:[%s0 + $0x368] sm:$0xff]
  %v131 = vld [vmem:[%s0 + $0x370] sm:$0xff]
  %v132 = vld [vmem:[%s0 + $0x378] sm:$0xff]
  %v133 = vld [vmem:[%s0 + $0x380] sm:$0xff]
  %v134 = vld [vmem:[%s0 + $0x388] sm:$0xff]
  %v135 = vld [vmem:[%s0 + $0x390] sm:$0xff]
  %v136 = vld [vmem:[%s0 + $0x398] sm:$0xff]
  %v137 = vld [vmem:[%s0 + $0x3a0] sm:$0xff]
  %v138 = vld [vmem:[%s0 + $0x3a8] sm:$0xff]
  %v139 = vld [vmem:[%s0 + $0x3b0] sm:$0xff]
  %v140 = vld [vmem:[%s0 + $0x3b8] sm:$0xff]
  %v141 = vld [vmem:[%s0 + $0x3c0] sm:$0xff]
  %v142 = vld [vmem:[%s0 + $0x3c8] sm:$0xff]
  %v143 = vld [vmem:[%s0 + $0x3d0] sm:$0xff]
  %v144 = vld [vmem:[%s0 + $0x3d8] sm:$0xff]
  %v145 = vld [vmem:[%s0 + $0x3e0] sm:$0xff]
  %v146 = vld [vmem:[%s0 + $0x3e8] sm:$0xff]
  %v147 = vld [vmem:[%s0 + $0x3f0] sm:$0xff]
  %v148 = vld [vmem:[%s0 + $0x3f8] sm:$0xff]
  %v149 = vld [vmem:[%s0 + $0x400] sm:$0xff]
  %v150 = vld [vmem:[%s0 + $0x408] sm:$0xff]
  %v151 = vld [vmem:[%s0 + $0x410] sm:$0xff]
  %v152 = vld [vmem:[%s0 + $0x418] sm:$0xff]
  %v153 = vld [vmem:[%s0 + $0x420] sm:$0xff]
  %v154 = vld [vmem:[%s0 + $0x428] sm:$0xff]
  %v155 = vld [vmem:[%s0 + $0x430] sm:$0xff]
  %v156 = vld [vmem:[%s0 + $0x438] sm:$0xff]
  %v157 = vld [vmem:[%s0 + $0x440] sm:$0xff]
  %v158 = vld [vmem:[%s0 + $0x448] sm:$0xff]
  %v159 = vld [vmem:[%s0 + $0x450] sm:$0xff]
  %v160 = vld [vmem:[%s0 + $0x458] sm:$0xff]
  %v161 = vld [vmem:[%s0 + $0x460] sm:$0xff]
  %v162 = vld [vmem:[%s0 + $0x468] sm:$0xff]
  %v163 = vld [vmem:[%s0 + $0x470] sm:$0xff]
  %v164 = vld [vmem:[%s0 + $0x478] sm:$0xff]
  %v165 = vld [vmem:[%s0 + $0x480] sm:$0xff]
  %v166 = vld [vmem:[%s0 + $0x488] sm:$0xff]
  %v167 = vld [vmem:[%s0 + $0x490] sm:$0xff]
  %v168 = vld [vmem:[%s0 + $0x498] sm:$0xff]
  %v169 = vld [vmem:[%s0 + $0x4a0] sm:$0xff]
  %v170 = vld [vmem:[%s0 + $0x4a8] sm:$0xff]
  %v171 = vld [vmem:[%s0 + $0x4b0] sm:$0xff]
  %v172 = vld [vmem:[%s0 + $0x4b8] sm:$0xff]
  %v173 = vld [vmem:[%s0 + $0x4c0] sm:$0xff]
  %v174 = vld [vmem:[%s0 + $0x4c8] sm:$0xff]
  %v175 = vld [vmem:[%s0 + $0x4d0] sm:$0xff]
  %v176 = vld [vmem:[%s0 + $0x4d8] sm:$0xff]
  %v177 = vld [vmem:[%s0 + $0x4e0] sm:$0xff]
  %v178 = vld [vmem:[%s0 + $0x4e8] sm:$0xff]
  %v179 = vld [vmem:[%s0 + $0x4f0] sm:$0xff]
  %v180 = vld [vmem:[%s0 + $0x4f8] sm:$0xff]
  %v181 = vld [vmem:[%s0 + $0x500] sm:$0xff]
  %v182 = vld [vmem:[%s0 + $0x508] sm:$0xff]
  %v183 = vld [vmem:[%s0 + $0x510] sm:$0xff]
  %v184 = vld [vmem:[%s0 + $0x518] sm:$0xff]
  %v185 = vld [vmem:[%s0 + $0x520] sm:$0xff]
  %v186 = vld [vmem:[%s0 + $0x528] sm:$0xff]
  %v187 = vld [vmem:[%s0 + $0x530] sm:$0xff]
  %v188 = vld [vmem:[%s0 + $0x538] sm:$0xff]
  %v189 = vld [vmem:[%s0 + $0x540] sm:$0xff]
  %v190 = vld [vmem:[%s0 + $0x548] sm:$0xff]
  %v191 = vld [vmem:[%s0 + $0x550] sm:$0xff]
  %v192 = vld [vmem:[%s0 + $0x558] sm:$0xff]
  %v193 = vld [vmem:[%s0 + $0x560] sm:$0xff]
  %v194 = vld [vmem:[%s0 + $0x568] sm:$0xff]
  %v195 = vld [vmem:[%s0 + $0x570] sm:$0xff]
  %v196 = vld [vmem:[%s0 + $0x578] sm:$0xff]
  %v197 = vld [vmem:[%s0 + $0x580] sm:$0xff]
  %v198 = vld [vmem:[%s0 + $0x588] sm:$0xff]
  %v199 = vld [vmem:[%s0 + $0x590] sm:$0xff]
  %v200 = vld [vmem:[%s0 + $0x598] sm:$0xff]
  %v201 = vld [vmem:[%s0 + $0x5a0] sm:$0xff]
  %v202 = vld [vmem:[%s0 + $0x5a8] sm:$0xff]
  %v203 = vld [vmem:[%s0 + $0x5b0] sm:$0xff]
  %v204 = vld [vmem:[%s0 + $0x5b8] sm:$0xff]
  %v205 = vld [vmem:[%s0 + $0x5c0] sm:$0xff]
  %v206 = vld [vmem:[%s0 + $0x5c8] sm:$0xff]
  %v207 = vld [vmem:[%s0 + $0x5d0] sm:$0xff]
  %v208 = vld [vmem:[%s0 + $0x5d8] sm:$0xff]
  %v209 = vld [vmem:[%s0 + $0x5e0] sm:$0xff]
  %v210 = vld [vmem:[%s0 + $0x5e8] sm:$0xff]
  %v211 = vld [vmem:[%s0 + $0x5f0] sm:$0xff]
  %v212 = vld [vmem:[%s0 + $0x5f8] sm:$0xff]
  %v213 = vld [vmem:[%s0 + $0x600] sm:$0xff]
  %v214 = vld [vmem:[%s0 + $0x608] sm:$0xff]
  %v215 = vld [vmem:[%s0 + $0x610] sm:$0xff]
  %v216 = vld [vmem:[%s0 + $0x618] sm:$0xff]
  %v217 = vld [vmem:[%s0 + $0x620] sm:$0xff]
  %v218 = vld [vmem:[%s0 + $0x628] sm:$0xff]
  %v219 = vld [vmem:[%s0 + $0x630] sm:$0xff]
  %v220 = vld [vmem:[%s0 + $0x638] sm:$0xff]
  %v221 = vld [vmem:[%s0 + $0x640] sm:$0xff]
  %v222 = vld [vmem:[%s0 + $0x648] sm:$0xff]
  %v223 = vld [vmem:[%s0 + $0x650] sm:$0xff]
  %v224 = vld [vmem:[%s0 + $0x658] sm:$0xff]
  %v225 = vld [vmem:[%s0 + $0x660] sm:$0xff]
  %v226 = vld [vmem:[%s0 + $0x668] sm:$0xff]
  %v227 = vld [vmem:[%s0 + $0x670] sm:$0xff]
  %v228 = vld [vmem:[%s0 + $0x678] sm:$0xff]
  %v229 = vld [vmem:[%s0 + $0x680] sm:$0xff]
  %v230 = vld [vmem:[%s0 + $0x688] sm:$0xff]
  %v231 = vld [vmem:[%s0 + $0x690] sm:$0xff]
  %v232 = vld [vmem:[%s0 + $0x698] sm:$0xff]
  %v233 = vld [vmem:[%s0 + $0x6a0] sm:$0xff]
  %v234 = vld [vmem:[%s0 + $0x6a8] sm:$0xff]
  %v235 = vld [vmem:[%s0 + $0x6b0] sm:$0xff]
  %v236 = vld [vmem:[%s0 + $0x6b8] sm:$0xff]
  %v237 = vld [vmem:[%s0 + $0x6c0] sm:$0xff]
  %v238 = vld [vmem:[%s0 + $0x6c8] sm:$0xff]
  %v239 = vld [vmem:[%s0 + $0x6d0] sm:$0xff]
  %v240 = vld [vmem:[%s0 + $0x6d8] sm:$0xff]
  %v241 = vld [vmem:[%s0 + $0x6e0] sm:$0xff]
  %v242 = vld [vmem:[%s0 + $0x6e8] sm:$0xff]
  %v243 = vld [vmem:[%s0 + $0x6f0] sm:$0xff]
  %v244 = vld [vmem:[%s0 + $0x6f8] sm:$0xff]
  %v245 = vld [vmem:[%s0 + $0x700] sm:$0xff]
  %v246 = vld [vmem:[%s0 + $0x708] sm:$0xff]
  %v247 = vld [vmem:[%s0 + $0x710] sm:$0xff]
  %v248 = vld [vmem:[%s0 + $0x718] sm:$0xff]
  %v249 = vld [vmem:[%s0 + $0x720] sm:$0xff]
  %v250 = vld [vmem:[%s0 + $0x728] sm:$0xff]
  %v251 = vld [vmem:[%s0 + $0x730] sm:$0xff]
  %v252 = vld [vmem:[%s0 + $0x738] sm:$0xff]
  %v253 = vld [vmem:[%s0 + $0x740] sm:$0xff]
  %v254 = vld [vmem:[%s0 + $0x748] sm:$0xff]
  %v255 = vld [vmem:[%s0 + $0x750] sm:$0xff]
  %v256 = vld [vmem:[%s0 + $0x758] sm:$0xff]
  %v257 = vld [vmem:[%s0 + $0x760] sm:$0xff]
  %v258 = vld [vmem:[%s0 + $0x768] sm:$0xff]
  %v259 = vld [vmem:[%s0 + $0x770] sm:$0xff]
  %v260 = vld [vmem:[%s0 + $0x778] sm:$0xff]
  %v261 = vld [vmem:[%s0 + $0x780] sm:$0xff]
  %v262 = vld [vmem:[%s0 + $0x788] sm:$0xff]
  %v263 = vld [vmem:[%s0 + $0x790] sm:$0xff]
  %v264 = vld [vmem:[%s0 + $0x798] sm:$0xff]
  %v265 = vld [vmem:[%s0 + $0x7a0] sm:$0xff]
  %v266 = vld [vmem:[%s0 + $0x7a8] sm:$0xff]
  %v267 = vld [vmem:[%s0 + $0x7b0] sm:$0xff]
  %v268 = vld [vmem:[%s0 + $0x7b8] sm:$0xff]
  %v269 = vld [vmem:[%s0 + $0x7c0] sm:$0xff]
  %v270 = vld [vmem:[%s0 + $0x7c8] sm:$0xff]
  %v271 = vld [vmem:[%s0 + $0x7d0] sm:$0xff]
  %v272 = vld [vmem:[%s0 + $0x7d8] sm:$0xff]
  %v273 = vld [vmem:[%s0 + $0x7e0] sm:$0xff]
  %v274 = vld [vmem:[%s0 + $0x7e8] sm:$0xff]
  %v275 = vld [vmem:[%s0 + $0x7f0] sm:$0xff]
  %v276 = vld [vmem:[%s0 + $0x7f8] sm:$0xff]
  %v277 = vld [vmem:[%s0 + $0x800] sm:$0xff]
  %v278 = vld [vmem:[%s0 + $0x808] sm:$0xff]
  %v279 = vld [vmem:[%s0 + $0x810] sm:$0xff]
  %v280 = vld [vmem:[%s0 + $0x818] sm:$0xff]
  %v281 = vld [vmem:[%s0 + $0x820] sm:$0xff]
  %v282 = vld [vmem:[%s0 + $0x828] sm:$0xff]
  %v283 = vld [vmem:[%s0 + $0x830] sm:$0xff]
  %v284 = vld [vmem:[%s0 + $0x838] sm:$0xff]
  %v285 = vld [vmem:[%s0 + $0x840] sm:$0xff]
  %v286 = vld [vmem:[%s0 + $0x848] sm:$0xff]
  %v287 = vld [vmem:[%s0 + $0x850] sm:$0xff]
  %v288 = vld [vmem:[%s0 + $0x858] sm:$0xff]
  %v289 = vld [vmem:[%s0 + $0x860] sm:$0xff]
  %v290 = vld [vmem:[%s0 + $0x868] sm:$0xff]
  %v291 = vld [vmem:[%s0 + $0x870] sm:$0xff]
  %v292 = vld [vmem:[%s0 + $0x878] sm:$0xff]
  %v293 = vld [vmem:[%s0 + $0x880] sm:$0xff]
  %v294 = vld [vmem:[%s0 + $0x888] sm:$0xff]
  %v295 = vld [vmem:[%s0 + $0x890] sm:$0xff]
  %v296 = vld [vmem:[%s0 + $0x898] sm:$0xff]
  %v297 = vld [vmem:[%s0 + $0x8a0] sm:$0xff]
  %v298 = vld [vmem:[%s0 + $0x8a8] sm:$0xff]
  %v299 = vld [vmem:[%s0 + $0x8b0] sm:$0xff]
  %v300 = vld [vmem:[%s0 + $0x8b8] sm:$0xff]
  %v301 = vld [vmem:[%s0 + $0x8c0] sm:$0xff]
  %v302 = vld [vmem:[%s0 + $0x8c8] sm:$0xff]
  %v303 = vld [vmem:[%s0 + $0x8d0] sm:$0xff]
  %v304 = vld [vmem:[%s0 + $0x8d8] sm:$0xff]
  %v305 = vld [vmem:[%s0 + $0x8e0] sm:$0xff]
  %v306 = vld [vmem:[%s0 + $0x8e8] sm:$0xff]
  %v307 = vld [vmem:[%s0 + $0x8f0] sm:$0xff]
  %v308 = vld [vmem:[%s0 + $0x8f8] sm:$0xff]
  %v309 = vld [vmem:[%s0 + $0x900] sm:$0xff]
  %v310 = vld [vmem:[%s0 + $0x908] sm:$0xff]
  %v311 = vld [vmem:[%s0 + $0x910] sm:$0xff]
  %v312 = vld [vmem:[%s0 + $0x918] sm:$0xff]
  %v313 = vld [vmem:[%s0 + $0x920] sm:$0xff]
  %v314 = vld [vmem:[%s0 + $0x928] sm:$0xff]
  %v315 = vld [vmem:[%s0 + $0x930] sm:$0xff]
  %v316 = vld [vmem:[%s0 + $0x938] sm:$0xff]
  %v317 = vld [vmem:[%s0 + $0x940] sm:$0xff]
  %v318 = vld [vmem:[%s0 + $0x948] sm:$0xff]
  %v319 = vld [vmem:[%s0 + $0x950] sm:$0xff]
  %v320 = vld [vmem:[%s0 + $0x958] sm:$0xff]
  %v321 = vld [vmem:[%s0 + $0x960] sm:$0xff]
  %v322 = vld [vmem:[%s0 + $0x968] sm:$0xff]
  %v323 = vld [vmem:[%s0 + $0x970] sm:$0xff]
  %v324 = vld [vmem:[%s0 + $0x978] sm:$0xff]
  %v325 = vld [vmem:[%s0 + $0x980] sm:$0xff]
  %v326 = vld [vmem:[%s0 + $0x988] sm:$0xff]
  %v327 = vld [vmem:[%s0 + $0x990] sm:$0xff]
  %v328 = vld [vmem:[%s0 + $0x998] sm:$0xff]
  %v329 = vld [vmem:[%s0 + $0x9a0] sm:$0xff]
  %v330 = vld [vmem:[%s0 + $0x9a8] sm:$0xff]
  %v331 = vld [vmem:[%s0 + $0x9b0] sm:$0xff]
  %v332 = vld [vmem:[%s0 + $0x9b8] sm:$0xff]
  %v333 = vld [vmem:[%s0 + $0x9c0] sm:$0xff]
  %v334 = vld [vmem:[%s0 + $0x9c8] sm:$0xff]
  %v335 = vld [vmem:[%s0 + $0x9d0] sm:$0xff]
  %v336 = vld [vmem:[%s0 + $0x9d8] sm:$0xff]
  %v337 = vld [vmem:[%s0 + $0x9e0] sm:$0xff]
  %v338 = vld [vmem:[%s0 + $0x9e8] sm:$0xff]
  %v339 = vld [vmem:[%s0 + $0x9f0] sm:$0xff]
  %v340 = vld [vmem:[%s0 + $0x9f8] sm:$0xff]
  %v341 = vld [vmem:[%s0 + $0xa00] sm:$0xff]
  %v342 = vld [vmem:[%s0 + $0xa08] sm:$0xff]
  %v343 = vld [vmem:[%s0 + $0xa10] sm:$0xff]
  %v344 = vld [vmem:[%s0 + $0xa18] sm:$0xff]
  %v345 = vld [vmem:[%s0 + $0xa20] sm:$0xff]
  %v346 = vld [vmem:[%s0 + $0xa28] sm:$0xff]
  %v347 = vld [vmem:[%s0 + $0xa30] sm:$0xff]
  %v348 = vld [vmem:[%s0 + $0xa38] sm:$0xff]
  %v349 = vld [vmem:[%s0 + $0xa40] sm:$0xff]
  %v350 = vld [vmem:[%s0 + $0xa48] sm:$0xff]
  %v351 = vld [vmem:[%s0 + $0xa50] sm:$0xff]
  %v352 = vld [vmem:[%s0 + $0xa58] sm:$0xff]
  %v353 = vld [vmem:[%s0 + $0xa60] sm:$0xff]
  %v354 = vld [vmem:[%s0 + $0xa68] sm:$0xff]
  %v355 = vld [vmem:[%s0 + $0xa70] sm:$0xff]
  %v356 = vld [vmem:[%s0 + $0xa78] sm:$0xff]
  %v357 = vxor.u32 %v21, 2147483648
  %v358 = vxor.u32 %v22, 2147483648
  %v359 = vxor.u32 %v23, 2147483648
  %v360 = vxor.u32 %v24, 2147483648
  %v361 = vxor.u32 %v25, 2147483648
  %v362 = vxor.u32 %v26, 2147483648
  %v363 = vxor.u32 %v27, 2147483648
  %v364 = vxor.u32 %v28, 2147483648
  %v365 = vxor.u32 %v29, 2147483648
  %v366 = vxor.u32 %v30, 2147483648
  %v367 = vxor.u32 %v31, 2147483648
  %v368 = vxor.u32 %v32, 2147483648
  %v369 = vxor.u32 %v33, 2147483648
  %v370 = vxor.u32 %v34, 2147483648
  %v371 = vxor.u32 %v35, 2147483648
  %v372 = vxor.u32 %v36, 2147483648
  %v373 = vxor.u32 %v37, 2147483648
  %v374 = vxor.u32 %v38, 2147483648
  %v375 = vxor.u32 %v39, 2147483648
  %v376 = vxor.u32 %v40, 2147483648
  %v377 = vxor.u32 %v41, 2147483648
  %v378 = vxor.u32 %v42, 2147483648
  %v379 = vxor.u32 %v43, 2147483648
  %v380 = vxor.u32 %v44, 2147483648
  %v381 = vxor.u32 %v45, 2147483648
  %v382 = vxor.u32 %v46, 2147483648
  %v383 = vxor.u32 %v47, 2147483648
  %v384 = vxor.u32 %v48, 2147483648
  %v385 = vxor.u32 %v49, 2147483648
  %v386 = vxor.u32 %v50, 2147483648
  %v387 = vxor.u32 %v51, 2147483648
  %v388 = vxor.u32 %v52, 2147483648
  %v389 = vxor.u32 %v53, 2147483648
  %v390 = vxor.u32 %v54, 2147483648
  %v391 = vxor.u32 %v55, 2147483648
  %v392 = vxor.u32 %v56, 2147483648
  %v393 = vxor.u32 %v57, 2147483648
  %v394 = vxor.u32 %v58, 2147483648
  %v395 = vxor.u32 %v59, 2147483648
  %v396 = vxor.u32 %v60, 2147483648
  %v397 = vxor.u32 %v61, 2147483648
  %v398 = vxor.u32 %v62, 2147483648
  %v399 = vxor.u32 %v63, 2147483648
  %v400 = vxor.u32 %v64, 2147483648
  %v401 = vxor.u32 %v65, 2147483648
  %v402 = vxor.u32 %v66, 2147483648
  %v403 = vxor.u32 %v67, 2147483648
  %v404 = vxor.u32 %v68, 2147483648
  %v405 = vxor.u32 %v69, 2147483648
  %v406 = vxor.u32 %v70, 2147483648
  %v407 = vxor.u32 %v71, 2147483648
  %v408 = vxor.u32 %v72, 2147483648
  %v409 = vxor.u32 %v73, 2147483648
  %v410 = vxor.u32 %v74, 2147483648
  %v411 = vxor.u32 %v75, 2147483648
  %v412 = vxor.u32 %v76, 2147483648
  %v413 = vxor.u32 %v77, 2147483648
  %v414 = vxor.u32 %v78, 2147483648
  %v415 = vxor.u32 %v79, 2147483648
  %v416 = vxor.u32 %v80, 2147483648
  %v417 = vxor.u32 %v81, 2147483648
  %v418 = vxor.u32 %v82, 2147483648
  %v419 = vxor.u32 %v83, 2147483648
  %v420 = vxor.u32 %v84, 2147483648
  %v421 = vxor.u32 %v85, 2147483648
  %v422 = vxor.u32 %v86, 2147483648
  %v423 = vxor.u32 %v87, 2147483648
  %v424 = vxor.u32 %v88, 2147483648
  %v425 = vxor.u32 %v89, 2147483648
  %v426 = vxor.u32 %v90, 2147483648
  %v427 = vxor.u32 %v91, 2147483648
  %v428 = vxor.u32 %v92, 2147483648
  %v429 = vxor.u32 %v93, 2147483648
  %v430 = vxor.u32 %v94, 2147483648
  %v431 = vxor.u32 %v95, 2147483648
  %v432 = vxor.u32 %v96, 2147483648
  %v433 = vxor.u32 %v97, 2147483648
  %v434 = vxor.u32 %v98, 2147483648
  %v435 = vxor.u32 %v99, 2147483648
  %v436 = vxor.u32 %v100, 2147483648
  %v437 = vxor.u32 %v101, 2147483648
  %v438 = vxor.u32 %v102, 2147483648
  %v439 = vxor.u32 %v103, 2147483648
  %v440 = vxor.u32 %v104, 2147483648
  %v441 = vxor.u32 %v105, 2147483648
  %v442 = vxor.u32 %v106, 2147483648
  %v443 = vxor.u32 %v107, 2147483648
  %v444 = vxor.u32 %v108, 2147483648
  %v445 = vxor.u32 %v109, 2147483648
  %v446 = vxor.u32 %v110, 2147483648
  %v447 = vxor.u32 %v111, 2147483648
  %v448 = vxor.u32 %v112, 2147483648
  %v449 = vxor.u32 %v113, 2147483648
  %v450 = vxor.u32 %v114, 2147483648
  %v451 = vxor.u32 %v115, 2147483648
  %v452 = vxor.u32 %v116, 2147483648
  %v453 = vxor.u32 %v117, 2147483648
  %v454 = vxor.u32 %v118, 2147483648
  %v455 = vxor.u32 %v119, 2147483648
  %v456 = vxor.u32 %v120, 2147483648
  %v457 = vxor.u32 %v121, 2147483648
  %v458 = vxor.u32 %v122, 2147483648
  %v459 = vxor.u32 %v123, 2147483648
  %v460 = vxor.u32 %v124, 2147483648
  %v461 = vxor.u32 %v125, 2147483648
  %v462 = vxor.u32 %v126, 2147483648
  %v463 = vxor.u32 %v127, 2147483648
  %v464 = vxor.u32 %v128, 2147483648
  %v465 = vxor.u32 %v129, 2147483648
  %v466 = vxor.u32 %v130, 2147483648
  %v467 = vxor.u32 %v131, 2147483648
  %v468 = vxor.u32 %v132, 2147483648
  %v469 = vxor.u32 %v133, 2147483648
  %v470 = vxor.u32 %v134, 2147483648
  %v471 = vxor.u32 %v135, 2147483648
  %v472 = vxor.u32 %v136, 2147483648
  %v473 = vxor.u32 %v137, 2147483648
  %v474 = vxor.u32 %v138, 2147483648
  %v475 = vxor.u32 %v139, 2147483648
  %v476 = vxor.u32 %v140, 2147483648
  %v477 = vxor.u32 %v141, 2147483648
  %v478 = vxor.u32 %v142, 2147483648
  %v479 = vxor.u32 %v143, 2147483648
  %v480 = vxor.u32 %v144, 2147483648
  %v481 = vxor.u32 %v145, 2147483648
  %v482 = vxor.u32 %v146, 2147483648
  %v483 = vxor.u32 %v147, 2147483648
  %v484 = vxor.u32 %v148, 2147483648
  %v485 = vxor.u32 %v149, 2147483648
  %v486 = vxor.u32 %v150, 2147483648
  %v487 = vxor.u32 %v151, 2147483648
  %v488 = vxor.u32 %v152, 2147483648
  %v489 = vxor.u32 %v153, 2147483648
  %v490 = vxor.u32 %v154, 2147483648
  %v491 = vxor.u32 %v155, 2147483648
  %v492 = vxor.u32 %v156, 2147483648
  %v493 = vxor.u32 %v157, 2147483648
  %v494 = vxor.u32 %v158, 2147483648
  %v495 = vxor.u32 %v159, 2147483648
  %v496 = vxor.u32 %v160, 2147483648
  %v497 = vxor.u32 %v161, 2147483648
  %v498 = vxor.u32 %v162, 2147483648
  %v499 = vxor.u32 %v163, 2147483648
  %v500 = vxor.u32 %v164, 2147483648
  %v501 = vxor.u32 %v165, 2147483648
  %v502 = vxor.u32 %v166, 2147483648
  %v503 = vxor.u32 %v167, 2147483648
  %v504 = vxor.u32 %v168, 2147483648
  %v505 = vxor.u32 %v169, 2147483648
  %v506 = vxor.u32 %v170, 2147483648
  %v507 = vxor.u32 %v171, 2147483648
  %v508 = vxor.u32 %v172, 2147483648
  %v509 = vxor.u32 %v173, 2147483648
  %v510 = vxor.u32 %v174, 2147483648
  %v511 = vxor.u32 %v175, 2147483648
  %v512 = vxor.u32 %v176, 2147483648
  %v513 = vxor.u32 %v177, 2147483648
  %v514 = vxor.u32 %v178, 2147483648
  %v515 = vxor.u32 %v179, 2147483648
  %v516 = vxor.u32 %v180, 2147483648
  %v517 = vxor.u32 %v181, 2147483648
  %v518 = vxor.u32 %v182, 2147483648
  %v519 = vxor.u32 %v183, 2147483648
  %v520 = vxor.u32 %v184, 2147483648
  %v521 = vxor.u32 %v185, 2147483648
  %v522 = vxor.u32 %v186, 2147483648
  %v523 = vxor.u32 %v187, 2147483648
  %v524 = vxor.u32 %v188, 2147483648
  %v525 = vxor.u32 %v189, 2147483648
  %v526 = vxor.u32 %v190, 2147483648
  %v527 = vxor.u32 %v191, 2147483648
  %v528 = vxor.u32 %v192, 2147483648
  %v529 = vxor.u32 %v193, 2147483648
  %v530 = vxor.u32 %v194, 2147483648
  %v531 = vxor.u32 %v195, 2147483648
  %v532 = vxor.u32 %v196, 2147483648
  %v533 = vxor.u32 %v197, 2147483648
  %v534 = vxor.u32 %v198, 2147483648
  %v535 = vxor.u32 %v199, 2147483648
  %v536 = vxor.u32 %v200, 2147483648
  %v537 = vxor.u32 %v201, 2147483648
  %v538 = vxor.u32 %v202, 2147483648
  %v539 = vxor.u32 %v203, 2147483648
  %v540 = vxor.u32 %v204, 2147483648
  %v541 = vxor.u32 %v205, 2147483648
  %v542 = vxor.u32 %v206, 2147483648
  %v543 = vxor.u32 %v207, 2147483648
  %v544 = vxor.u32 %v208, 2147483648
  %v545 = vxor.u32 %v209, 2147483648
  %v546 = vxor.u32 %v210, 2147483648
  %v547 = vxor.u32 %v211, 2147483648
  %v548 = vxor.u32 %v212, 2147483648
  %v549 = vxor.u32 %v213, 2147483648
  %v550 = vxor.u32 %v214, 2147483648
  %v551 = vxor.u32 %v215, 2147483648
  %v552 = vxor.u32 %v216, 2147483648
  %v553 = vxor.u32 %v217, 2147483648
  %v554 = vxor.u32 %v218, 2147483648
  %v555 = vxor.u32 %v219, 2147483648
  %v556 = vxor.u32 %v220, 2147483648
  %v557 = vxor.u32 %v221, 2147483648
  %v558 = vxor.u32 %v222, 2147483648
  %v559 = vxor.u32 %v223, 2147483648
  %v560 = vxor.u32 %v224, 2147483648
  %v561 = vxor.u32 %v225, 2147483648
  %v562 = vxor.u32 %v226, 2147483648
  %v563 = vxor.u32 %v227, 2147483648
  %v564 = vxor.u32 %v228, 2147483648
  %v565 = vxor.u32 %v229, 2147483648
  %v566 = vxor.u32 %v230, 2147483648
  %v567 = vxor.u32 %v231, 2147483648
  %v568 = vxor.u32 %v232, 2147483648
  %v569 = vxor.u32 %v233, 2147483648
  %v570 = vxor.u32 %v234, 2147483648
  %v571 = vxor.u32 %v235, 2147483648
  %v572 = vxor.u32 %v236, 2147483648
  %v573 = vxor.u32 %v237, 2147483648
  %v574 = vxor.u32 %v238, 2147483648
  %v575 = vxor.u32 %v239, 2147483648
  %v576 = vxor.u32 %v240, 2147483648
  %v577 = vxor.u32 %v241, 2147483648
  %v578 = vxor.u32 %v242, 2147483648
  %v579 = vxor.u32 %v243, 2147483648
  %v580 = vxor.u32 %v244, 2147483648
  %v581 = vxor.u32 %v245, 2147483648
  %v582 = vxor.u32 %v246, 2147483648
  %v583 = vxor.u32 %v247, 2147483648
  %v584 = vxor.u32 %v248, 2147483648
  %v585 = vxor.u32 %v249, 2147483648
  %v586 = vxor.u32 %v250, 2147483648
  %v587 = vxor.u32 %v251, 2147483648
  %v588 = vxor.u32 %v252, 2147483648
  %v589 = vxor.u32 %v253, 2147483648
  %v590 = vxor.u32 %v254, 2147483648
  %v591 = vxor.u32 %v255, 2147483648
  %v592 = vxor.u32 %v256, 2147483648
  %v593 = vxor.u32 %v257, 2147483648
  %v594 = vxor.u32 %v258, 2147483648
  %v595 = vxor.u32 %v259, 2147483648
  %v596 = vxor.u32 %v260, 2147483648
  %v597 = vxor.u32 %v261, 2147483648
  %v598 = vxor.u32 %v262, 2147483648
  %v599 = vxor.u32 %v263, 2147483648
  %v600 = vxor.u32 %v264, 2147483648
  %v601 = vxor.u32 %v265, 2147483648
  %v602 = vxor.u32 %v266, 2147483648
  %v603 = vxor.u32 %v267, 2147483648
  %v604 = vxor.u32 %v268, 2147483648
  %v605 = vxor.u32 %v269, 2147483648
  %v606 = vxor.u32 %v270, 2147483648
  %v607 = vxor.u32 %v271, 2147483648
  %v608 = vxor.u32 %v272, 2147483648
  %v609 = vxor.u32 %v273, 2147483648
  %v610 = vxor.u32 %v274, 2147483648
  %v611 = vxor.u32 %v275, 2147483648
  %v612 = vxor.u32 %v276, 2147483648
  %v613 = vxor.u32 %v277, 2147483648
  %v614 = vxor.u32 %v278, 2147483648
  %v615 = vxor.u32 %v279, 2147483648
  %v616 = vxor.u32 %v280, 2147483648
  %v617 = vxor.u32 %v281, 2147483648
  %v618 = vxor.u32 %v282, 2147483648
  %v619 = vxor.u32 %v283, 2147483648
  %v620 = vxor.u32 %v284, 2147483648
  %v621 = vxor.u32 %v285, 2147483648
  %v622 = vxor.u32 %v286, 2147483648
  %v623 = vxor.u32 %v287, 2147483648
  %v624 = vxor.u32 %v288, 2147483648
  %v625 = vxor.u32 %v289, 2147483648
  %v626 = vxor.u32 %v290, 2147483648
  %v627 = vxor.u32 %v291, 2147483648
  %v628 = vxor.u32 %v292, 2147483648
  %v629 = vxor.u32 %v293, 2147483648
  %v630 = vxor.u32 %v294, 2147483648
  %v631 = vxor.u32 %v295, 2147483648
  %v632 = vxor.u32 %v296, 2147483648
  %v633 = vxor.u32 %v297, 2147483648
  %v634 = vxor.u32 %v298, 2147483648
  %v635 = vxor.u32 %v299, 2147483648
  %v636 = vxor.u32 %v300, 2147483648
  %v637 = vxor.u32 %v301, 2147483648
  %v638 = vxor.u32 %v302, 2147483648
  %v639 = vxor.u32 %v303, 2147483648
  %v640 = vxor.u32 %v304, 2147483648
  %v641 = vxor.u32 %v305, 2147483648
  %v642 = vxor.u32 %v306, 2147483648
  %v643 = vxor.u32 %v307, 2147483648
  %v644 = vxor.u32 %v308, 2147483648
  %v645 = vxor.u32 %v309, 2147483648
  %v646 = vxor.u32 %v310, 2147483648
  %v647 = vxor.u32 %v311, 2147483648
  %v648 = vxor.u32 %v312, 2147483648
  %v649 = vxor.u32 %v313, 2147483648
  %v650 = vxor.u32 %v314, 2147483648
  %v651 = vxor.u32 %v315, 2147483648
  %v652 = vxor.u32 %v316, 2147483648
  %v653 = vxor.u32 %v317, 2147483648
  %v654 = vxor.u32 %v318, 2147483648
  %v655 = vxor.u32 %v319, 2147483648
  %v656 = vxor.u32 %v320, 2147483648
  %v657 = vxor.u32 %v321, 2147483648
  %v658 = vxor.u32 %v322, 2147483648
  %v659 = vxor.u32 %v323, 2147483648
  %v660 = vxor.u32 %v324, 2147483648
  %v661 = vxor.u32 %v325, 2147483648
  %v662 = vxor.u32 %v326, 2147483648
  %v663 = vxor.u32 %v327, 2147483648
  %v664 = vxor.u32 %v328, 2147483648
  %v665 = vxor.u32 %v329, 2147483648
  %v666 = vxor.u32 %v330, 2147483648
  %v667 = vxor.u32 %v331, 2147483648
  %v668 = vxor.u32 %v332, 2147483648
  %v669 = vxor.u32 %v333, 2147483648
  %v670 = vxor.u32 %v334, 2147483648
  %v671 = vxor.u32 %v335, 2147483648
  %v672 = vxor.u32 %v336, 2147483648
  %v673 = vxor.u32 %v337, 2147483648
  %v674 = vxor.u32 %v338, 2147483648
  %v675 = vxor.u32 %v339, 2147483648
  %v676 = vxor.u32 %v340, 2147483648
  %v677 = vxor.u32 %v341, 2147483648
  %v678 = vxor.u32 %v342, 2147483648
  %v679 = vxor.u32 %v343, 2147483648
  %v680 = vxor.u32 %v344, 2147483648
  %v681 = vxor.u32 %v345, 2147483648
  %v682 = vxor.u32 %v346, 2147483648
  %v683 = vxor.u32 %v347, 2147483648
  %v684 = vxor.u32 %v348, 2147483648
  %v685 = vxor.u32 %v349, 2147483648
  %v686 = vxor.u32 %v350, 2147483648
  %v687 = vxor.u32 %v351, 2147483648
  %v688 = vxor.u32 %v352, 2147483648
  %v689 = vxor.u32 %v353, 2147483648
  %v690 = vxor.u32 %v354, 2147483648
  %v691 = vxor.u32 %v355, 2147483648
  %v692 = vxor.u32 %v356, 2147483648
  %v693 = vmul.f32 %v357, 1.442695
  %v694 = vpow.pop %v693
  %v695 = vmul.f32 %v358, 1.442695
  %v696 = vpow.pop %v695
  %v697 = vmul.f32 %v359, 1.442695
  %v698 = vpow.pop %v697
  %v699 = vmul.f32 %v360, 1.442695
  %v700 = vpow.pop %v699
  %v701 = vmul.f32 %v361, 1.442695
  %v702 = vpow.pop %v701
  %v703 = vmul.f32 %v362, 1.442695
  %v704 = vpow.pop %v703
  %v705 = vmul.f32 %v363, 1.442695
  %v706 = vpow.pop %v705
  %v707 = vmul.f32 %v364, 1.442695
  %v708 = vpow.pop %v707
  %v709 = vmul.f32 %v365, 1.442695
  %v710 = vpow.pop %v709
  %v711 = vmul.f32 %v366, 1.442695
  %v712 = vpow.pop %v711
  %v713 = vmul.f32 %v367, 1.442695
  %v714 = vpow.pop %v713
  %v715 = vmul.f32 %v368, 1.442695
  %v716 = vpow.pop %v715
  %v717 = vmul.f32 %v369, 1.442695
  %v718 = vpow.pop %v717
  %v719 = vmul.f32 %v370, 1.442695
  %v720 = vpow.pop %v719
  %v721 = vmul.f32 %v371, 1.442695
  %v722 = vpow.pop %v721
  %v723 = vmul.f32 %v372, 1.442695
  %v724 = vpow.pop %v723
  %v725 = vmul.f32 %v373, 1.442695
  %v726 = vpow.pop %v725
  %v727 = vmul.f32 %v374, 1.442695
  %v728 = vpow.pop %v727
  %v729 = vmul.f32 %v375, 1.442695
  %v730 = vpow.pop %v729
  %v731 = vmul.f32 %v376, 1.442695
  %v732 = vpow.pop %v731
  %v733 = vmul.f32 %v377, 1.442695
  %v734 = vpow.pop %v733
  %v735 = vmul.f32 %v378, 1.442695
  %v736 = vpow.pop %v735
  %v737 = vmul.f32 %v379, 1.442695
  %v738 = vpow.pop %v737
  %v739 = vmul.f32 %v380, 1.442695
  %v740 = vpow.pop %v739
  %v741 = vmul.f32 %v381, 1.442695
  %v742 = vpow.pop %v741
  %v743 = vmul.f32 %v382, 1.442695
  %v744 = vpow.pop %v743
  %v745 = vmul.f32 %v383, 1.442695
  %v746 = vpow.pop %v745
  %v747 = vmul.f32 %v384, 1.442695
  %v748 = vpow.pop %v747
  %v749 = vmul.f32 %v385, 1.442695
  %v750 = vpow.pop %v749
  %v751 = vmul.f32 %v386, 1.442695
  %v752 = vpow.pop %v751
  %v753 = vmul.f32 %v387, 1.442695
  %v754 = vpow.pop %v753
  %v755 = vmul.f32 %v388, 1.442695
  %v756 = vpow.pop %v755
  %v757 = vmul.f32 %v389, 1.442695
  %v758 = vpow.pop %v757
  %v759 = vmul.f32 %v390, 1.442695
  %v760 = vpow.pop %v759
  %v761 = vmul.f32 %v391, 1.442695
  %v762 = vpow.pop %v761
  %v763 = vmul.f32 %v392, 1.442695
  %v764 = vpow.pop %v763
  %v765 = vmul.f32 %v393, 1.442695
  %v766 = vpow.pop %v765
  %v767 = vmul.f32 %v394, 1.442695
  %v768 = vpow.pop %v767
  %v769 = vmul.f32 %v395, 1.442695
  %v770 = vpow.pop %v769
  %v771 = vmul.f32 %v396, 1.442695
  %v772 = vpow.pop %v771
  %v773 = vmul.f32 %v397, 1.442695
  %v774 = vpow.pop %v773
  %v775 = vmul.f32 %v398, 1.442695
  %v776 = vpow.pop %v775
  %v777 = vmul.f32 %v399, 1.442695
  %v778 = vpow.pop %v777
  %v779 = vmul.f32 %v400, 1.442695
  %v780 = vpow.pop %v779
  %v781 = vmul.f32 %v401, 1.442695
  %v782 = vpow.pop %v781
  %v783 = vmul.f32 %v402, 1.442695
  %v784 = vpow.pop %v783
  %v785 = vmul.f32 %v403, 1.442695
  %v786 = vpow.pop %v785
  %v787 = vmul.f32 %v404, 1.442695
  %v788 = vpow.pop %v787
  %v789 = vmul.f32 %v405, 1.442695
  %v790 = vpow.pop %v789
  %v791 = vmul.f32 %v406, 1.442695
  %v792 = vpow.pop %v791
  %v793 = vmul.f32 %v407, 1.442695
  %v794 = vpow.pop %v793
  %v795 = vmul.f32 %v408, 1.442695
  %v796 = vpow.pop %v795
  %v797 = vmul.f32 %v409, 1.442695
  %v798 = vpow.pop %v797
  %v799 = vmul.f32 %v410, 1.442695
  %v800 = vpow.pop %v799
  %v801 = vmul.f32 %v411, 1.442695
  %v802 = vpow.pop %v801
  %v803 = vmul.f32 %v412, 1.442695
  %v804 = vpow.pop %v803
  %v805 = vmul.f32 %v413, 1.442695
  %v806 = vpow.pop %v805
  %v807 = vmul.f32 %v414, 1.442695
  %v808 = vpow.pop %v807
  %v809 = vmul.f32 %v415, 1.442695
  %v810 = vpow.pop %v809
  %v811 = vmul.f32 %v416, 1.442695
  %v812 = vpow.pop %v811
  %v813 = vmul.f32 %v417, 1.442695
  %v814 = vpow.pop %v813
  %v815 = vmul.f32 %v418, 1.442695
  %v816 = vpow.pop %v815
  %v817 = vmul.f32 %v419, 1.442695
  %v818 = vpow.pop %v817
  %v819 = vmul.f32 %v420, 1.442695
  %v820 = vpow.pop %v819
  %v821 = vmul.f32 %v421, 1.442695
  %v822 = vpow.pop %v821
  %v823 = vmul.f32 %v422, 1.442695
  %v824 = vpow.pop %v823
  %v825 = vmul.f32 %v423, 1.442695
  %v826 = vpow.pop %v825
  %v827 = vmul.f32 %v424, 1.442695
  %v828 = vpow.pop %v827
  %v829 = vmul.f32 %v425, 1.442695
  %v830 = vpow.pop %v829
  %v831 = vmul.f32 %v426, 1.442695
  %v832 = vpow.pop %v831
  %v833 = vmul.f32 %v427, 1.442695
  %v834 = vpow.pop %v833
  %v835 = vmul.f32 %v428, 1.442695
  %v836 = vpow.pop %v835
  %v837 = vmul.f32 %v429, 1.442695
  %v838 = vpow.pop %v837
  %v839 = vmul.f32 %v430, 1.442695
  %v840 = vpow.pop %v839
  %v841 = vmul.f32 %v431, 1.442695
  %v842 = vpow.pop %v841
  %v843 = vmul.f32 %v432, 1.442695
  %v844 = vpow.pop %v843
  %v845 = vmul.f32 %v433, 1.442695
  %v846 = vpow.pop %v845
  %v847 = vmul.f32 %v434, 1.442695
  %v848 = vpow.pop %v847
  %v849 = vmul.f32 %v435, 1.442695
  %v850 = vpow.pop %v849
  %v851 = vmul.f32 %v436, 1.442695
  %v852 = vpow.pop %v851
  %v853 = vmul.f32 %v437, 1.442695
  %v854 = vpow.pop %v853
  %v855 = vmul.f32 %v438, 1.442695
  %v856 = vpow.pop %v855
  %v857 = vmul.f32 %v439, 1.442695
  %v858 = vpow.pop %v857
  %v859 = vmul.f32 %v440, 1.442695
  %v860 = vpow.pop %v859
  %v861 = vmul.f32 %v441, 1.442695
  %v862 = vpow.pop %v861
  %v863 = vmul.f32 %v442, 1.442695
  %v864 = vpow.pop %v863
  %v865 = vmul.f32 %v443, 1.442695
  %v866 = vpow.pop %v865
  %v867 = vmul.f32 %v444, 1.442695
  %v868 = vpow.pop %v867
  %v869 = vmul.f32 %v445, 1.442695
  %v870 = vpow.pop %v869
  %v871 = vmul.f32 %v446, 1.442695
  %v872 = vpow.pop %v871
  %v873 = vmul.f32 %v447, 1.442695
  %v874 = vpow.pop %v873
  %v875 = vmul.f32 %v448, 1.442695
  %v876 = vpow.pop %v875
  %v877 = vmul.f32 %v449, 1.442695
  %v878 = vpow.pop %v877
  %v879 = vmul.f32 %v450, 1.442695
  %v880 = vpow.pop %v879
  %v881 = vmul.f32 %v451, 1.442695
  %v882 = vpow.pop %v881
  %v883 = vmul.f32 %v452, 1.442695
  %v884 = vpow.pop %v883
  %v885 = vmul.f32 %v453, 1.442695
  %v886 = vpow.pop %v885
  %v887 = vmul.f32 %v454, 1.442695
  %v888 = vpow.pop %v887
  %v889 = vmul.f32 %v455, 1.442695
  %v890 = vpow.pop %v889
  %v891 = vmul.f32 %v456, 1.442695
  %v892 = vpow.pop %v891
  %v893 = vmul.f32 %v457, 1.442695
  %v894 = vpow.pop %v893
  %v895 = vmul.f32 %v458, 1.442695
  %v896 = vpow.pop %v895
  %v897 = vmul.f32 %v459, 1.442695
  %v898 = vpow.pop %v897
  %v899 = vmul.f32 %v460, 1.442695
  %v900 = vpow.pop %v899
  %v901 = vmul.f32 %v461, 1.442695
  %v902 = vpow.pop %v901
  %v903 = vmul.f32 %v462, 1.442695
  %v904 = vpow.pop %v903
  %v905 = vmul.f32 %v463, 1.442695
  %v906 = vpow.pop %v905
  %v907 = vmul.f32 %v464, 1.442695
  %v908 = vpow.pop %v907
  %v909 = vmul.f32 %v465, 1.442695
  %v910 = vpow.pop %v909
  %v911 = vmul.f32 %v466, 1.442695
  %v912 = vpow.pop %v911
  %v913 = vmul.f32 %v467, 1.442695
  %v914 = vpow.pop %v913
  %v915 = vmul.f32 %v468, 1.442695
  %v916 = vpow.pop %v915
  %v917 = vmul.f32 %v469, 1.442695
  %v918 = vpow.pop %v917
  %v919 = vmul.f32 %v470, 1.442695
  %v920 = vpow.pop %v919
  %v921 = vmul.f32 %v471, 1.442695
  %v922 = vpow.pop %v921
  %v923 = vmul.f32 %v472, 1.442695
  %v924 = vpow.pop %v923
  %v925 = vmul.f32 %v473, 1.442695
  %v926 = vpow.pop %v925
  %v927 = vmul.f32 %v474, 1.442695
  %v928 = vpow.pop %v927
  %v929 = vmul.f32 %v475, 1.442695
  %v930 = vpow.pop %v929
  %v931 = vmul.f32 %v476, 1.442695
  %v932 = vpow.pop %v931
  %v933 = vmul.f32 %v477, 1.442695
  %v934 = vpow.pop %v933
  %v935 = vmul.f32 %v478, 1.442695
  %v936 = vpow.pop %v935
  %v937 = vmul.f32 %v479, 1.442695
  %v938 = vpow.pop %v937
  %v939 = vmul.f32 %v480, 1.442695
  %v940 = vpow.pop %v939
  %v941 = vmul.f32 %v481, 1.442695
  %v942 = vpow.pop %v941
  %v943 = vmul.f32 %v482, 1.442695
  %v944 = vpow.pop %v943
  %v945 = vmul.f32 %v483, 1.442695
  %v946 = vpow.pop %v945
  %v947 = vmul.f32 %v484, 1.442695
  %v948 = vpow.pop %v947
  %v949 = vmul.f32 %v485, 1.442695
  %v950 = vpow.pop %v949
  %v951 = vmul.f32 %v486, 1.442695
  %v952 = vpow.pop %v951
  %v953 = vmul.f32 %v487, 1.442695
  %v954 = vpow.pop %v953
  %v955 = vmul.f32 %v488, 1.442695
  %v956 = vpow.pop %v955
  %v957 = vmul.f32 %v489, 1.442695
  %v958 = vpow.pop %v957
  %v959 = vmul.f32 %v490, 1.442695
  %v960 = vpow.pop %v959
  %v961 = vmul.f32 %v491, 1.442695
  %v962 = vpow.pop %v961
  %v963 = vmul.f32 %v492, 1.442695
  %v964 = vpow.pop %v963
  %v965 = vmul.f32 %v493, 1.442695
  %v966 = vpow.pop %v965
  %v967 = vmul.f32 %v494, 1.442695
  %v968 = vpow.pop %v967
  %v969 = vmul.f32 %v495, 1.442695
  %v970 = vpow.pop %v969
  %v971 = vmul.f32 %v496, 1.442695
  %v972 = vpow.pop %v971
  %v973 = vmul.f32 %v497, 1.442695
  %v974 = vpow.pop %v973
  %v975 = vmul.f32 %v498, 1.442695
  %v976 = vpow.pop %v975
  %v977 = vmul.f32 %v499, 1.442695
  %v978 = vpow.pop %v977
  %v979 = vmul.f32 %v500, 1.442695
  %v980 = vpow.pop %v979
  %v981 = vmul.f32 %v501, 1.442695
  %v982 = vpow.pop %v981
  %v983 = vmul.f32 %v502, 1.442695
  %v984 = vpow.pop %v983
  %v985 = vmul.f32 %v503, 1.442695
  %v986 = vpow.pop %v985
  %v987 = vmul.f32 %v504, 1.442695
  %v988 = vpow.pop %v987
  %v989 = vmul.f32 %v505, 1.442695
  %v990 = vpow.pop %v989
  %v991 = vmul.f32 %v506, 1.442695
  %v992 = vpow.pop %v991
  %v993 = vmul.f32 %v507, 1.442695
  %v994 = vpow.pop %v993
  %v995 = vmul.f32 %v508, 1.442695
  %v996 = vpow.pop %v995
  %v997 = vmul.f32 %v509, 1.442695
  %v998 = vpow.pop %v997
  %v999 = vmul.f32 %v510, 1.442695
  %v1000 = vpow.pop %v999
  %v1001 = vmul.f32 %v511, 1.442695
  %v1002 = vpow.pop %v1001
  %v1003 = vmul.f32 %v512, 1.442695
  %v1004 = vpow.pop %v1003
  %v1005 = vmul.f32 %v513, 1.442695
  %v1006 = vpow.pop %v1005
  %v1007 = vmul.f32 %v514, 1.442695
  %v1008 = vpow.pop %v1007
  %v1009 = vmul.f32 %v515, 1.442695
  %v1010 = vpow.pop %v1009
  %v1011 = vmul.f32 %v516, 1.442695
  %v1012 = vpow.pop %v1011
  %v1013 = vmul.f32 %v517, 1.442695
  %v1014 = vpow.pop %v1013
  %v1015 = vmul.f32 %v518, 1.442695
  %v1016 = vpow.pop %v1015
  %v1017 = vmul.f32 %v519, 1.442695
  %v1018 = vpow.pop %v1017
  %v1019 = vmul.f32 %v520, 1.442695
  %v1020 = vpow.pop %v1019
  %v1021 = vmul.f32 %v521, 1.442695
  %v1022 = vpow.pop %v1021
  %v1023 = vmul.f32 %v522, 1.442695
  %v1024 = vpow.pop %v1023
  %v1025 = vmul.f32 %v523, 1.442695
  %v1026 = vpow.pop %v1025
  %v1027 = vmul.f32 %v524, 1.442695
  %v1028 = vpow.pop %v1027
  %v1029 = vmul.f32 %v525, 1.442695
  %v1030 = vpow.pop %v1029
  %v1031 = vmul.f32 %v526, 1.442695
  %v1032 = vpow.pop %v1031
  %v1033 = vmul.f32 %v527, 1.442695
  %v1034 = vpow.pop %v1033
  %v1035 = vmul.f32 %v528, 1.442695
  %v1036 = vpow.pop %v1035
  %v1037 = vmul.f32 %v529, 1.442695
  %v1038 = vpow.pop %v1037
  %v1039 = vmul.f32 %v530, 1.442695
  %v1040 = vpow.pop %v1039
  %v1041 = vmul.f32 %v531, 1.442695
  %v1042 = vpow.pop %v1041
  %v1043 = vmul.f32 %v532, 1.442695
  %v1044 = vpow.pop %v1043
  %v1045 = vmul.f32 %v533, 1.442695
  %v1046 = vpow.pop %v1045
  %v1047 = vmul.f32 %v534, 1.442695
  %v1048 = vpow.pop %v1047
  %v1049 = vmul.f32 %v535, 1.442695
  %v1050 = vpow.pop %v1049
  %v1051 = vmul.f32 %v536, 1.442695
  %v1052 = vpow.pop %v1051
  %v1053 = vmul.f32 %v537, 1.442695
  %v1054 = vpow.pop %v1053
  %v1055 = vmul.f32 %v538, 1.442695
  %v1056 = vpow.pop %v1055
  %v1057 = vmul.f32 %v539, 1.442695
  %v1058 = vpow.pop %v1057
  %v1059 = vmul.f32 %v540, 1.442695
  %v1060 = vpow.pop %v1059
  %v1061 = vmul.f32 %v541, 1.442695
  %v1062 = vpow.pop %v1061
  %v1063 = vmul.f32 %v542, 1.442695
  %v1064 = vpow.pop %v1063
  %v1065 = vmul.f32 %v543, 1.442695
  %v1066 = vpow.pop %v1065
  %v1067 = vmul.f32 %v544, 1.442695
  %v1068 = vpow.pop %v1067
  %v1069 = vmul.f32 %v545, 1.442695
  %v1070 = vpow.pop %v1069
  %v1071 = vmul.f32 %v546, 1.442695
  %v1072 = vpow.pop %v1071
  %v1073 = vmul.f32 %v547, 1.442695
  %v1074 = vpow.pop %v1073
  %v1075 = vmul.f32 %v548, 1.442695
  %v1076 = vpow.pop %v1075
  %v1077 = vmul.f32 %v549, 1.442695
  %v1078 = vpow.pop %v1077
  %v1079 = vmul.f32 %v550, 1.442695
  %v1080 = vpow.pop %v1079
  %v1081 = vmul.f32 %v551, 1.442695
  %v1082 = vpow.pop %v1081
  %v1083 = vmul.f32 %v552, 1.442695
  %v1084 = vpow.pop %v1083
  %v1085 = vmul.f32 %v553, 1.442695
  %v1086 = vpow.pop %v1085
  %v1087 = vmul.f32 %v554, 1.442695
  %v1088 = vpow.pop %v1087
  %v1089 = vmul.f32 %v555, 1.442695
  %v1090 = vpow.pop %v1089
  %v1091 = vmul.f32 %v556, 1.442695
  %v1092 = vpow.pop %v1091
  %v1093 = vmul.f32 %v557, 1.442695
  %v1094 = vpow.pop %v1093
  %v1095 = vmul.f32 %v558, 1.442695
  %v1096 = vpow.pop %v1095
  %v1097 = vmul.f32 %v559, 1.442695
  %v1098 = vpow.pop %v1097
  %v1099 = vmul.f32 %v560, 1.442695
  %v1100 = vpow.pop %v1099
  %v1101 = vmul.f32 %v561, 1.442695
  %v1102 = vpow.pop %v1101
  %v1103 = vmul.f32 %v562, 1.442695
  %v1104 = vpow.pop %v1103
  %v1105 = vmul.f32 %v563, 1.442695
  %v1106 = vpow.pop %v1105
  %v1107 = vmul.f32 %v564, 1.442695
  %v1108 = vpow.pop %v1107
  %v1109 = vmul.f32 %v565, 1.442695
  %v1110 = vpow.pop %v1109
  %v1111 = vmul.f32 %v566, 1.442695
  %v1112 = vpow.pop %v1111
  %v1113 = vmul.f32 %v567, 1.442695
  %v1114 = vpow.pop %v1113
  %v1115 = vmul.f32 %v568, 1.442695
  %v1116 = vpow.pop %v1115
  %v1117 = vmul.f32 %v569, 1.442695
  %v1118 = vpow.pop %v1117
  %v1119 = vmul.f32 %v570, 1.442695
  %v1120 = vpow.pop %v1119
  %v1121 = vmul.f32 %v571, 1.442695
  %v1122 = vpow.pop %v1121
  %v1123 = vmul.f32 %v572, 1.442695
  %v1124 = vpow.pop %v1123
  %v1125 = vmul.f32 %v573, 1.442695
  %v1126 = vpow.pop %v1125
  %v1127 = vmul.f32 %v574, 1.442695
  %v1128 = vpow.pop %v1127
  %v1129 = vmul.f32 %v575, 1.442695
  %v1130 = vpow.pop %v1129
  %v1131 = vmul.f32 %v576, 1.442695
  %v1132 = vpow.pop %v1131
  %v1133 = vmul.f32 %v577, 1.442695
  %v1134 = vpow.pop %v1133
  %v1135 = vmul.f32 %v578, 1.442695
  %v1136 = vpow.pop %v1135
  %v1137 = vmul.f32 %v579, 1.442695
  %v1138 = vpow.pop %v1137
  %v1139 = vmul.f32 %v580, 1.442695
  %v1140 = vpow.pop %v1139
  %v1141 = vmul.f32 %v581, 1.442695
  %v1142 = vpow.pop %v1141
  %v1143 = vmul.f32 %v582, 1.442695
  %v1144 = vpow.pop %v1143
  %v1145 = vmul.f32 %v583, 1.442695
  %v1146 = vpow.pop %v1145
  %v1147 = vmul.f32 %v584, 1.442695
  %v1148 = vpow.pop %v1147
  %v1149 = vmul.f32 %v585, 1.442695
  %v1150 = vpow.pop %v1149
  %v1151 = vmul.f32 %v586, 1.442695
  %v1152 = vpow.pop %v1151
  %v1153 = vmul.f32 %v587, 1.442695
  %v1154 = vpow.pop %v1153
  %v1155 = vmul.f32 %v588, 1.442695
  %v1156 = vpow.pop %v1155
  %v1157 = vmul.f32 %v589, 1.442695
  %v1158 = vpow.pop %v1157
  %v1159 = vmul.f32 %v590, 1.442695
  %v1160 = vpow.pop %v1159
  %v1161 = vmul.f32 %v591, 1.442695
  %v1162 = vpow.pop %v1161
  %v1163 = vmul.f32 %v592, 1.442695
  %v1164 = vpow.pop %v1163
  %v1165 = vmul.f32 %v593, 1.442695
  %v1166 = vpow.pop %v1165
  %v1167 = vmul.f32 %v594, 1.442695
  %v1168 = vpow.pop %v1167
  %v1169 = vmul.f32 %v595, 1.442695
  %v1170 = vpow.pop %v1169
  %v1171 = vmul.f32 %v596, 1.442695
  %v1172 = vpow.pop %v1171
  %v1173 = vmul.f32 %v597, 1.442695
  %v1174 = vpow.pop %v1173
  %v1175 = vmul.f32 %v598, 1.442695
  %v1176 = vpow.pop %v1175
  %v1177 = vmul.f32 %v599, 1.442695
  %v1178 = vpow.pop %v1177
  %v1179 = vmul.f32 %v600, 1.442695
  %v1180 = vpow.pop %v1179
  %v1181 = vmul.f32 %v601, 1.442695
  %v1182 = vpow.pop %v1181
  %v1183 = vmul.f32 %v602, 1.442695
  %v1184 = vpow.pop %v1183
  %v1185 = vmul.f32 %v603, 1.442695
  %v1186 = vpow.pop %v1185
  %v1187 = vmul.f32 %v604, 1.442695
  %v1188 = vpow.pop %v1187
  %v1189 = vmul.f32 %v605, 1.442695
  %v1190 = vpow.pop %v1189
  %v1191 = vmul.f32 %v606, 1.442695
  %v1192 = vpow.pop %v1191
  %v1193 = vmul.f32 %v607, 1.442695
  %v1194 = vpow.pop %v1193
  %v1195 = vmul.f32 %v608, 1.442695
  %v1196 = vpow.pop %v1195
  %v1197 = vmul.f32 %v609, 1.442695
  %v1198 = vpow.pop %v1197
  %v1199 = vmul.f32 %v610, 1.442695
  %v1200 = vpow.pop %v1199
  %v1201 = vmul.f32 %v611, 1.442695
  %v1202 = vpow.pop %v1201
  %v1203 = vmul.f32 %v612, 1.442695
  %v1204 = vpow.pop %v1203
  %v1205 = vmul.f32 %v613, 1.442695
  %v1206 = vpow.pop %v1205
  %v1207 = vmul.f32 %v614, 1.442695
  %v1208 = vpow.pop %v1207
  %v1209 = vmul.f32 %v615, 1.442695
  %v1210 = vpow.pop %v1209
  %v1211 = vmul.f32 %v616, 1.442695
  %v1212 = vpow.pop %v1211
  %v1213 = vmul.f32 %v617, 1.442695
  %v1214 = vpow.pop %v1213
  %v1215 = vmul.f32 %v618, 1.442695
  %v1216 = vpow.pop %v1215
  %v1217 = vmul.f32 %v619, 1.442695
  %v1218 = vpow.pop %v1217
  %v1219 = vmul.f32 %v620, 1.442695
  %v1220 = vpow.pop %v1219
  %v1221 = vmul.f32 %v621, 1.442695
  %v1222 = vpow.pop %v1221
  %v1223 = vmul.f32 %v622, 1.442695
  %v1224 = vpow.pop %v1223
  %v1225 = vmul.f32 %v623, 1.442695
  %v1226 = vpow.pop %v1225
  %v1227 = vmul.f32 %v624, 1.442695
  %v1228 = vpow.pop %v1227
  %v1229 = vmul.f32 %v625, 1.442695
  %v1230 = vpow.pop %v1229
  %v1231 = vmul.f32 %v626, 1.442695
  %v1232 = vpow.pop %v1231
  %v1233 = vmul.f32 %v627, 1.442695
  %v1234 = vpow.pop %v1233
  %v1235 = vmul.f32 %v628, 1.442695
  %v1236 = vpow.pop %v1235
  %v1237 = vmul.f32 %v629, 1.442695
  %v1238 = vpow.pop %v1237
  %v1239 = vmul.f32 %v630, 1.442695
  %v1240 = vpow.pop %v1239
  %v1241 = vmul.f32 %v631, 1.442695
  %v1242 = vpow.pop %v1241
  %v1243 = vmul.f32 %v632, 1.442695
  %v1244 = vpow.pop %v1243
  %v1245 = vmul.f32 %v633, 1.442695
  %v1246 = vpow.pop %v1245
  %v1247 = vmul.f32 %v634, 1.442695
  %v1248 = vpow.pop %v1247
  %v1249 = vmul.f32 %v635, 1.442695
  %v1250 = vpow.pop %v1249
  %v1251 = vmul.f32 %v636, 1.442695
  %v1252 = vpow.pop %v1251
  %v1253 = vmul.f32 %v637, 1.442695
  %v1254 = vpow.pop %v1253
  %v1255 = vmul.f32 %v638, 1.442695
  %v1256 = vpow.pop %v1255
  %v1257 = vmul.f32 %v639, 1.442695
  %v1258 = vpow.pop %v1257
  %v1259 = vmul.f32 %v640, 1.442695
  %v1260 = vpow.pop %v1259
  %v1261 = vmul.f32 %v641, 1.442695
  %v1262 = vpow.pop %v1261
  %v1263 = vmul.f32 %v642, 1.442695
  %v1264 = vpow.pop %v1263
  %v1265 = vmul.f32 %v643, 1.442695
  %v1266 = vpow.pop %v1265
  %v1267 = vmul.f32 %v644, 1.442695
  %v1268 = vpow.pop %v1267
  %v1269 = vmul.f32 %v645, 1.442695
  %v1270 = vpow.pop %v1269
  %v1271 = vmul.f32 %v646, 1.442695
  %v1272 = vpow.pop %v1271
  %v1273 = vmul.f32 %v647, 1.442695
  %v1274 = vpow.pop %v1273
  %v1275 = vmul.f32 %v648, 1.442695
  %v1276 = vpow.pop %v1275
  %v1277 = vmul.f32 %v649, 1.442695
  %v1278 = vpow.pop %v1277
  %v1279 = vmul.f32 %v650, 1.442695
  %v1280 = vpow.pop %v1279
  %v1281 = vmul.f32 %v651, 1.442695
  %v1282 = vpow.pop %v1281
  %v1283 = vmul.f32 %v652, 1.442695
  %v1284 = vpow.pop %v1283
  %v1285 = vmul.f32 %v653, 1.442695
  %v1286 = vpow.pop %v1285
  %v1287 = vmul.f32 %v654, 1.442695
  %v1288 = vpow.pop %v1287
  %v1289 = vmul.f32 %v655, 1.442695
  %v1290 = vpow.pop %v1289
  %v1291 = vmul.f32 %v656, 1.442695
  %v1292 = vpow.pop %v1291
  %v1293 = vmul.f32 %v657, 1.442695
  %v1294 = vpow.pop %v1293
  %v1295 = vmul.f32 %v658, 1.442695
  %v1296 = vpow.pop %v1295
  %v1297 = vmul.f32 %v659, 1.442695
  %v1298 = vpow.pop %v1297
  %v1299 = vmul.f32 %v660, 1.442695
  %v1300 = vpow.pop %v1299
  %v1301 = vmul.f32 %v661, 1.442695
  %v1302 = vpow.pop %v1301
  %v1303 = vmul.f32 %v662, 1.442695
  %v1304 = vpow.pop %v1303
  %v1305 = vmul.f32 %v663, 1.442695
  %v1306 = vpow.pop %v1305
  %v1307 = vmul.f32 %v664, 1.442695
  %v1308 = vpow.pop %v1307
  %v1309 = vmul.f32 %v665, 1.442695
  %v1310 = vpow.pop %v1309
  %v1311 = vmul.f32 %v666, 1.442695
  %v1312 = vpow.pop %v1311
  %v1313 = vmul.f32 %v667, 1.442695
  %v1314 = vpow.pop %v1313
  %v1315 = vmul.f32 %v668, 1.442695
  %v1316 = vpow.pop %v1315
  %v1317 = vmul.f32 %v669, 1.442695
  %v1318 = vpow.pop %v1317
  %v1319 = vmul.f32 %v670, 1.442695
  %v1320 = vpow.pop %v1319
  %v1321 = vmul.f32 %v671, 1.442695
  %v1322 = vpow.pop %v1321
  %v1323 = vmul.f32 %v672, 1.442695
  %v1324 = vpow.pop %v1323
  %v1325 = vmul.f32 %v673, 1.442695
  %v1326 = vpow.pop %v1325
  %v1327 = vmul.f32 %v674, 1.442695
  %v1328 = vpow.pop %v1327
  %v1329 = vmul.f32 %v675, 1.442695
  %v1330 = vpow.pop %v1329
  %v1331 = vmul.f32 %v676, 1.442695
  %v1332 = vpow.pop %v1331
  %v1333 = vmul.f32 %v677, 1.442695
  %v1334 = vpow.pop %v1333
  %v1335 = vmul.f32 %v678, 1.442695
  %v1336 = vpow.pop %v1335
  %v1337 = vmul.f32 %v679, 1.442695
  %v1338 = vpow.pop %v1337
  %v1339 = vmul.f32 %v680, 1.442695
  %v1340 = vpow.pop %v1339
  %v1341 = vmul.f32 %v681, 1.442695
  %v1342 = vpow.pop %v1341
  %v1343 = vmul.f32 %v682, 1.442695
  %v1344 = vpow.pop %v1343
  %v1345 = vmul.f32 %v683, 1.442695
  %v1346 = vpow.pop %v1345
  %v1347 = vmul.f32 %v684, 1.442695
  %v1348 = vpow.pop %v1347
  %v1349 = vmul.f32 %v685, 1.442695
  %v1350 = vpow.pop %v1349
  %v1351 = vmul.f32 %v686, 1.442695
  %v1352 = vpow.pop %v1351
  %v1353 = vmul.f32 %v687, 1.442695
  %v1354 = vpow.pop %v1353
  %v1355 = vmul.f32 %v688, 1.442695
  %v1356 = vpow.pop %v1355
  %v1357 = vmul.f32 %v689, 1.442695
  %v1358 = vpow.pop %v1357
  %v1359 = vmul.f32 %v690, 1.442695
  %v1360 = vpow.pop %v1359
  %v1361 = vmul.f32 %v691, 1.442695
  %v1362 = vpow.pop %v1361
  %v1363 = vmul.f32 %v692, 1.442695
  %v1364 = vpow.pop %v1363
  %v1365 = vadd.f32 %v694, 1.0
  %v1366 = vadd.f32 %v696, 1.0
  %v1367 = vadd.f32 %v698, 1.0
  %v1368 = vadd.f32 %v700, 1.0
  %v1369 = vadd.f32 %v702, 1.0
  %v1370 = vadd.f32 %v704, 1.0
  %v1371 = vadd.f32 %v706, 1.0
  %v1372 = vadd.f32 %v708, 1.0
  %v1373 = vadd.f32 %v710, 1.0
  %v1374 = vadd.f32 %v712, 1.0
  %v1375 = vadd.f32 %v714, 1.0
  %v1376 = vadd.f32 %v716, 1.0
  %v1377 = vadd.f32 %v718, 1.0
  %v1378 = vadd.f32 %v720, 1.0
  %v1379 = vadd.f32 %v722, 1.0
  %v1380 = vadd.f32 %v724, 1.0
  %v1381 = vadd.f32 %v726, 1.0
  %v1382 = vadd.f32 %v728, 1.0
  %v1383 = vadd.f32 %v730, 1.0
  %v1384 = vadd.f32 %v732, 1.0
  %v1385 = vadd.f32 %v734, 1.0
  %v1386 = vadd.f32 %v736, 1.0
  %v1387 = vadd.f32 %v738, 1.0
  %v1388 = vadd.f32 %v740, 1.0
  %v1389 = vadd.f32 %v742, 1.0
  %v1390 = vadd.f32 %v744, 1.0
  %v1391 = vadd.f32 %v746, 1.0
  %v1392 = vadd.f32 %v748, 1.0
  %v1393 = vadd.f32 %v750, 1.0
  %v1394 = vadd.f32 %v752, 1.0
  %v1395 = vadd.f32 %v754, 1.0
  %v1396 = vadd.f32 %v756, 1.0
  %v1397 = vadd.f32 %v758, 1.0
  %v1398 = vadd.f32 %v760, 1.0
  %v1399 = vadd.f32 %v762, 1.0
  %v1400 = vadd.f32 %v764, 1.0
  %v1401 = vadd.f32 %v766, 1.0
  %v1402 = vadd.f32 %v768, 1.0
  %v1403 = vadd.f32 %v770, 1.0
  %v1404 = vadd.f32 %v772, 1.0
  %v1405 = vadd.f32 %v774, 1.0
  %v1406 = vadd.f32 %v776, 1.0
  %v1407 = vadd.f32 %v778, 1.0
  %v1408 = vadd.f32 %v780, 1.0
  %v1409 = vadd.f32 %v782, 1.0
  %v1410 = vadd.f32 %v784, 1.0
  %v1411 = vadd.f32 %v786, 1.0
  %v1412 = vadd.f32 %v788, 1.0
  %v1413 = vadd.f32 %v790, 1.0
  %v1414 = vadd.f32 %v792, 1.0
  %v1415 = vadd.f32 %v794, 1.0
  %v1416 = vadd.f32 %v796, 1.0
  %v1417 = vadd.f32 %v798, 1.0
  %v1418 = vadd.f32 %v800, 1.0
  %v1419 = vadd.f32 %v802, 1.0
  %v1420 = vadd.f32 %v804, 1.0
  %v1421 = vadd.f32 %v806, 1.0
  %v1422 = vadd.f32 %v808, 1.0
  %v1423 = vadd.f32 %v810, 1.0
  %v1424 = vadd.f32 %v812, 1.0
  %v1425 = vadd.f32 %v814, 1.0
  %v1426 = vadd.f32 %v816, 1.0
  %v1427 = vadd.f32 %v818, 1.0
  %v1428 = vadd.f32 %v820, 1.0
  %v1429 = vadd.f32 %v822, 1.0
  %v1430 = vadd.f32 %v824, 1.0
  %v1431 = vadd.f32 %v826, 1.0
  %v1432 = vadd.f32 %v828, 1.0
  %v1433 = vadd.f32 %v830, 1.0
  %v1434 = vadd.f32 %v832, 1.0
  %v1435 = vadd.f32 %v834, 1.0
  %v1436 = vadd.f32 %v836, 1.0
  %v1437 = vadd.f32 %v838, 1.0
  %v1438 = vadd.f32 %v840, 1.0
  %v1439 = vadd.f32 %v842, 1.0
  %v1440 = vadd.f32 %v844, 1.0
  %v1441 = vadd.f32 %v846, 1.0
  %v1442 = vadd.f32 %v848, 1.0
  %v1443 = vadd.f32 %v850, 1.0
  %v1444 = vadd.f32 %v852, 1.0
  %v1445 = vadd.f32 %v854, 1.0
  %v1446 = vadd.f32 %v856, 1.0
  %v1447 = vadd.f32 %v858, 1.0
  %v1448 = vadd.f32 %v860, 1.0
  %v1449 = vadd.f32 %v862, 1.0
  %v1450 = vadd.f32 %v864, 1.0
  %v1451 = vadd.f32 %v866, 1.0
  %v1452 = vadd.f32 %v868, 1.0
  %v1453 = vadd.f32 %v870, 1.0
  %v1454 = vadd.f32 %v872, 1.0
  %v1455 = vadd.f32 %v874, 1.0
  %v1456 = vadd.f32 %v876, 1.0
  %v1457 = vadd.f32 %v878, 1.0
  %v1458 = vadd.f32 %v880, 1.0
  %v1459 = vadd.f32 %v882, 1.0
  %v1460 = vadd.f32 %v884, 1.0
  %v1461 = vadd.f32 %v886, 1.0
  %v1462 = vadd.f32 %v888, 1.0
  %v1463 = vadd.f32 %v890, 1.0
  %v1464 = vadd.f32 %v892, 1.0
  %v1465 = vadd.f32 %v894, 1.0
  %v1466 = vadd.f32 %v896, 1.0
  %v1467 = vadd.f32 %v898, 1.0
  %v1468 = vadd.f32 %v900, 1.0
  %v1469 = vadd.f32 %v902, 1.0
  %v1470 = vadd.f32 %v904, 1.0
  %v1471 = vadd.f32 %v906, 1.0
  %v1472 = vadd.f32 %v908, 1.0
  %v1473 = vadd.f32 %v910, 1.0
  %v1474 = vadd.f32 %v912, 1.0
  %v1475 = vadd.f32 %v914, 1.0
  %v1476 = vadd.f32 %v916, 1.0
  %v1477 = vadd.f32 %v918, 1.0
  %v1478 = vadd.f32 %v920, 1.0
  %v1479 = vadd.f32 %v922, 1.0
  %v1480 = vadd.f32 %v924, 1.0
  %v1481 = vadd.f32 %v926, 1.0
  %v1482 = vadd.f32 %v928, 1.0
  %v1483 = vadd.f32 %v930, 1.0
  %v1484 = vadd.f32 %v932, 1.0
  %v1485 = vadd.f32 %v934, 1.0
  %v1486 = vadd.f32 %v936, 1.0
  %v1487 = vadd.f32 %v938, 1.0
  %v1488 = vadd.f32 %v940, 1.0
  %v1489 = vadd.f32 %v942, 1.0
  %v1490 = vadd.f32 %v944, 1.0
  %v1491 = vadd.f32 %v946, 1.0
  %v1492 = vadd.f32 %v948, 1.0
  %v1493 = vadd.f32 %v950, 1.0
  %v1494 = vadd.f32 %v952, 1.0
  %v1495 = vadd.f32 %v954, 1.0
  %v1496 = vadd.f32 %v956, 1.0
  %v1497 = vadd.f32 %v958, 1.0
  %v1498 = vadd.f32 %v960, 1.0
  %v1499 = vadd.f32 %v962, 1.0
  %v1500 = vadd.f32 %v964, 1.0
  %v1501 = vadd.f32 %v966, 1.0
  %v1502 = vadd.f32 %v968, 1.0
  %v1503 = vadd.f32 %v970, 1.0
  %v1504 = vadd.f32 %v972, 1.0
  %v1505 = vadd.f32 %v974, 1.0
  %v1506 = vadd.f32 %v976, 1.0
  %v1507 = vadd.f32 %v978, 1.0
  %v1508 = vadd.f32 %v980, 1.0
  %v1509 = vadd.f32 %v982, 1.0
  %v1510 = vadd.f32 %v984, 1.0
  %v1511 = vadd.f32 %v986, 1.0
  %v1512 = vadd.f32 %v988, 1.0
  %v1513 = vadd.f32 %v990, 1.0
  %v1514 = vadd.f32 %v992, 1.0
  %v1515 = vadd.f32 %v994, 1.0
  %v1516 = vadd.f32 %v996, 1.0
  %v1517 = vadd.f32 %v998, 1.0
  %v1518 = vadd.f32 %v1000, 1.0
  %v1519 = vadd.f32 %v1002, 1.0
  %v1520 = vadd.f32 %v1004, 1.0
  %v1521 = vadd.f32 %v1006, 1.0
  %v1522 = vadd.f32 %v1008, 1.0
  %v1523 = vadd.f32 %v1010, 1.0
  %v1524 = vadd.f32 %v1012, 1.0
  %v1525 = vadd.f32 %v1014, 1.0
  %v1526 = vadd.f32 %v1016, 1.0
  %v1527 = vadd.f32 %v1018, 1.0
  %v1528 = vadd.f32 %v1020, 1.0
  %v1529 = vadd.f32 %v1022, 1.0
  %v1530 = vadd.f32 %v1024, 1.0
  %v1531 = vadd.f32 %v1026, 1.0
  %v1532 = vadd.f32 %v1028, 1.0
  %v1533 = vadd.f32 %v1030, 1.0
  %v1534 = vadd.f32 %v1032, 1.0
  %v1535 = vadd.f32 %v1034, 1.0
  %v1536 = vadd.f32 %v1036, 1.0
  %v1537 = vadd.f32 %v1038, 1.0
  %v1538 = vadd.f32 %v1040, 1.0
  %v1539 = vadd.f32 %v1042, 1.0
  %v1540 = vadd.f32 %v1044, 1.0
  %v1541 = vadd.f32 %v1046, 1.0
  %v1542 = vadd.f32 %v1048, 1.0
  %v1543 = vadd.f32 %v1050, 1.0
  %v1544 = vadd.f32 %v1052, 1.0
  %v1545 = vadd.f32 %v1054, 1.0
  %v1546 = vadd.f32 %v1056, 1.0
  %v1547 = vadd.f32 %v1058, 1.0
  %v1548 = vadd.f32 %v1060, 1.0
  %v1549 = vadd.f32 %v1062, 1.0
  %v1550 = vadd.f32 %v1064, 1.0
  %v1551 = vadd.f32 %v1066, 1.0
  %v1552 = vadd.f32 %v1068, 1.0
  %v1553 = vadd.f32 %v1070, 1.0
  %v1554 = vadd.f32 %v1072, 1.0
  %v1555 = vadd.f32 %v1074, 1.0
  %v1556 = vadd.f32 %v1076, 1.0
  %v1557 = vadd.f32 %v1078, 1.0
  %v1558 = vadd.f32 %v1080, 1.0
  %v1559 = vadd.f32 %v1082, 1.0
  %v1560 = vadd.f32 %v1084, 1.0
  %v1561 = vadd.f32 %v1086, 1.0
  %v1562 = vadd.f32 %v1088, 1.0
  %v1563 = vadd.f32 %v1090, 1.0
  %v1564 = vadd.f32 %v1092, 1.0
  %v1565 = vadd.f32 %v1094, 1.0
  %v1566 = vadd.f32 %v1096, 1.0
  %v1567 = vadd.f32 %v1098, 1.0
  %v1568 = vadd.f32 %v1100, 1.0
  %v1569 = vadd.f32 %v1102, 1.0
  %v1570 = vadd.f32 %v1104, 1.0
  %v1571 = vadd.f32 %v1106, 1.0
  %v1572 = vadd.f32 %v1108, 1.0
  %v1573 = vadd.f32 %v1110, 1.0
  %v1574 = vadd.f32 %v1112, 1.0
  %v1575 = vadd.f32 %v1114, 1.0
  %v1576 = vadd.f32 %v1116, 1.0
  %v1577 = vadd.f32 %v1118, 1.0
  %v1578 = vadd.f32 %v1120, 1.0
  %v1579 = vadd.f32 %v1122, 1.0
  %v1580 = vadd.f32 %v1124, 1.0
  %v1581 = vadd.f32 %v1126, 1.0
  %v1582 = vadd.f32 %v1128, 1.0
  %v1583 = vadd.f32 %v1130, 1.0
  %v1584 = vadd.f32 %v1132, 1.0
  %v1585 = vadd.f32 %v1134, 1.0
  %v1586 = vadd.f32 %v1136, 1.0
  %v1587 = vadd.f32 %v1138, 1.0
  %v1588 = vadd.f32 %v1140, 1.0
  %v1589 = vadd.f32 %v1142, 1.0
  %v1590 = vadd.f32 %v1144, 1.0
  %v1591 = vadd.f32 %v1146, 1.0
  %v1592 = vadd.f32 %v1148, 1.0
  %v1593 = vadd.f32 %v1150, 1.0
  %v1594 = vadd.f32 %v1152, 1.0
  %v1595 = vadd.f32 %v1154, 1.0
  %v1596 = vadd.f32 %v1156, 1.0
  %v1597 = vadd.f32 %v1158, 1.0
  %v1598 = vadd.f32 %v1160, 1.0
  %v1599 = vadd.f32 %v1162, 1.0
  %v1600 = vadd.f32 %v1164, 1.0
  %v1601 = vadd.f32 %v1166, 1.0
  %v1602 = vadd.f32 %v1168, 1.0
  %v1603 = vadd.f32 %v1170, 1.0
  %v1604 = vadd.f32 %v1172, 1.0
  %v1605 = vadd.f32 %v1174, 1.0
  %v1606 = vadd.f32 %v1176, 1.0
  %v1607 = vadd.f32 %v1178, 1.0
  %v1608 = vadd.f32 %v1180, 1.0
  %v1609 = vadd.f32 %v1182, 1.0
  %v1610 = vadd.f32 %v1184, 1.0
  %v1611 = vadd.f32 %v1186, 1.0
  %v1612 = vadd.f32 %v1188, 1.0
  %v1613 = vadd.f32 %v1190, 1.0
  %v1614 = vadd.f32 %v1192, 1.0
  %v1615 = vadd.f32 %v1194, 1.0
  %v1616 = vadd.f32 %v1196, 1.0
  %v1617 = vadd.f32 %v1198, 1.0
  %v1618 = vadd.f32 %v1200, 1.0
  %v1619 = vadd.f32 %v1202, 1.0
  %v1620 = vadd.f32 %v1204, 1.0
  %v1621 = vadd.f32 %v1206, 1.0
  %v1622 = vadd.f32 %v1208, 1.0
  %v1623 = vadd.f32 %v1210, 1.0
  %v1624 = vadd.f32 %v1212, 1.0
  %v1625 = vadd.f32 %v1214, 1.0
  %v1626 = vadd.f32 %v1216, 1.0
  %v1627 = vadd.f32 %v1218, 1.0
  %v1628 = vadd.f32 %v1220, 1.0
  %v1629 = vadd.f32 %v1222, 1.0
  %v1630 = vadd.f32 %v1224, 1.0
  %v1631 = vadd.f32 %v1226, 1.0
  %v1632 = vadd.f32 %v1228, 1.0
  %v1633 = vadd.f32 %v1230, 1.0
  %v1634 = vadd.f32 %v1232, 1.0
  %v1635 = vadd.f32 %v1234, 1.0
  %v1636 = vadd.f32 %v1236, 1.0
  %v1637 = vadd.f32 %v1238, 1.0
  %v1638 = vadd.f32 %v1240, 1.0
  %v1639 = vadd.f32 %v1242, 1.0
  %v1640 = vadd.f32 %v1244, 1.0
  %v1641 = vadd.f32 %v1246, 1.0
  %v1642 = vadd.f32 %v1248, 1.0
  %v1643 = vadd.f32 %v1250, 1.0
  %v1644 = vadd.f32 %v1252, 1.0
  %v1645 = vadd.f32 %v1254, 1.0
  %v1646 = vadd.f32 %v1256, 1.0
  %v1647 = vadd.f32 %v1258, 1.0
  %v1648 = vadd.f32 %v1260, 1.0
  %v1649 = vadd.f32 %v1262, 1.0
  %v1650 = vadd.f32 %v1264, 1.0
  %v1651 = vadd.f32 %v1266, 1.0
  %v1652 = vadd.f32 %v1268, 1.0
  %v1653 = vadd.f32 %v1270, 1.0
  %v1654 = vadd.f32 %v1272, 1.0
  %v1655 = vadd.f32 %v1274, 1.0
  %v1656 = vadd.f32 %v1276, 1.0
  %v1657 = vadd.f32 %v1278, 1.0
  %v1658 = vadd.f32 %v1280, 1.0
  %v1659 = vadd.f32 %v1282, 1.0
  %v1660 = vadd.f32 %v1284, 1.0
  %v1661 = vadd.f32 %v1286, 1.0
  %v1662 = vadd.f32 %v1288, 1.0
  %v1663 = vadd.f32 %v1290, 1.0
  %v1664 = vadd.f32 %v1292, 1.0
  %v1665 = vadd.f32 %v1294, 1.0
  %v1666 = vadd.f32 %v1296, 1.0
  %v1667 = vadd.f32 %v1298, 1.0
  %v1668 = vadd.f32 %v1300, 1.0
  %v1669 = vadd.f32 %v1302, 1.0
  %v1670 = vadd.f32 %v1304, 1.0
  %v1671 = vadd.f32 %v1306, 1.0
  %v1672 = vadd.f32 %v1308, 1.0
  %v1673 = vadd.f32 %v1310, 1.0
  %v1674 = vadd.f32 %v1312, 1.0
  %v1675 = vadd.f32 %v1314, 1.0
  %v1676 = vadd.f32 %v1316, 1.0
  %v1677 = vadd.f32 %v1318, 1.0
  %v1678 = vadd.f32 %v1320, 1.0
  %v1679 = vadd.f32 %v1322, 1.0
  %v1680 = vadd.f32 %v1324, 1.0
  %v1681 = vadd.f32 %v1326, 1.0
  %v1682 = vadd.f32 %v1328, 1.0
  %v1683 = vadd.f32 %v1330, 1.0
  %v1684 = vadd.f32 %v1332, 1.0
  %v1685 = vadd.f32 %v1334, 1.0
  %v1686 = vadd.f32 %v1336, 1.0
  %v1687 = vadd.f32 %v1338, 1.0
  %v1688 = vadd.f32 %v1340, 1.0
  %v1689 = vadd.f32 %v1342, 1.0
  %v1690 = vadd.f32 %v1344, 1.0
  %v1691 = vadd.f32 %v1346, 1.0
  %v1692 = vadd.f32 %v1348, 1.0
  %v1693 = vadd.f32 %v1350, 1.0
  %v1694 = vadd.f32 %v1352, 1.0
  %v1695 = vadd.f32 %v1354, 1.0
  %v1696 = vadd.f32 %v1356, 1.0
  %v1697 = vadd.f32 %v1358, 1.0
  %v1698 = vadd.f32 %v1360, 1.0
  %v1699 = vadd.f32 %v1362, 1.0
  %v1700 = vadd.f32 %v1364, 1.0
  %v1701 = vrcp.pop %v1365
  %v1702 = vmul.f32 1.0, %v1701
  %v1703 = vrcp.pop %v1366
  %v1704 = vmul.f32 1.0, %v1703
  %v1705 = vrcp.pop %v1367
  %v1706 = vmul.f32 1.0, %v1705
  %v1707 = vrcp.pop %v1368
  %v1708 = vmul.f32 1.0, %v1707
  %v1709 = vrcp.pop %v1369
  %v1710 = vmul.f32 1.0, %v1709
  %v1711 = vrcp.pop %v1370
  %v1712 = vmul.f32 1.0, %v1711
  %v1713 = vrcp.pop %v1371
  %v1714 = vmul.f32 1.0, %v1713
  %v1715 = vrcp.pop %v1372
  %v1716 = vmul.f32 1.0, %v1715
  %v1717 = vrcp.pop %v1373
  %v1718 = vmul.f32 1.0, %v1717
  %v1719 = vrcp.pop %v1374
  %v1720 = vmul.f32 1.0, %v1719
  %v1721 = vrcp.pop %v1375
  %v1722 = vmul.f32 1.0, %v1721
  %v1723 = vrcp.pop %v1376
  %v1724 = vmul.f32 1.0, %v1723
  %v1725 = vrcp.pop %v1377
  %v1726 = vmul.f32 1.0, %v1725
  %v1727 = vrcp.pop %v1378
  %v1728 = vmul.f32 1.0, %v1727
  %v1729 = vrcp.pop %v1379
  %v1730 = vmul.f32 1.0, %v1729
  %v1731 = vrcp.pop %v1380
  %v1732 = vmul.f32 1.0, %v1731
  %v1733 = vrcp.pop %v1381
  %v1734 = vmul.f32 1.0, %v1733
  %v1735 = vrcp.pop %v1382
  %v1736 = vmul.f32 1.0, %v1735
  %v1737 = vrcp.pop %v1383
  %v1738 = vmul.f32 1.0, %v1737
  %v1739 = vrcp.pop %v1384
  %v1740 = vmul.f32 1.0, %v1739
  %v1741 = vrcp.pop %v1385
  %v1742 = vmul.f32 1.0, %v1741
  %v1743 = vrcp.pop %v1386
  %v1744 = vmul.f32 1.0, %v1743
  %v1745 = vrcp.pop %v1387
  %v1746 = vmul.f32 1.0, %v1745
  %v1747 = vrcp.pop %v1388
  %v1748 = vmul.f32 1.0, %v1747
  %v1749 = vrcp.pop %v1389
  %v1750 = vmul.f32 1.0, %v1749
  %v1751 = vrcp.pop %v1390
  %v1752 = vmul.f32 1.0, %v1751
  %v1753 = vrcp.pop %v1391
  %v1754 = vmul.f32 1.0, %v1753
  %v1755 = vrcp.pop %v1392
  %v1756 = vmul.f32 1.0, %v1755
  %v1757 = vrcp.pop %v1393
  %v1758 = vmul.f32 1.0, %v1757
  %v1759 = vrcp.pop %v1394
  %v1760 = vmul.f32 1.0, %v1759
  %v1761 = vrcp.pop %v1395
  %v1762 = vmul.f32 1.0, %v1761
  %v1763 = vrcp.pop %v1396
  %v1764 = vmul.f32 1.0, %v1763
  %v1765 = vrcp.pop %v1397
  %v1766 = vmul.f32 1.0, %v1765
  %v1767 = vrcp.pop %v1398
  %v1768 = vmul.f32 1.0, %v1767
  %v1769 = vrcp.pop %v1399
  %v1770 = vmul.f32 1.0, %v1769
  %v1771 = vrcp.pop %v1400
  %v1772 = vmul.f32 1.0, %v1771
  %v1773 = vrcp.pop %v1401
  %v1774 = vmul.f32 1.0, %v1773
  %v1775 = vrcp.pop %v1402
  %v1776 = vmul.f32 1.0, %v1775
  %v1777 = vrcp.pop %v1403
  %v1778 = vmul.f32 1.0, %v1777
  %v1779 = vrcp.pop %v1404
  %v1780 = vmul.f32 1.0, %v1779
  %v1781 = vrcp.pop %v1405
  %v1782 = vmul.f32 1.0, %v1781
  %v1783 = vrcp.pop %v1406
  %v1784 = vmul.f32 1.0, %v1783
  %v1785 = vrcp.pop %v1407
  %v1786 = vmul.f32 1.0, %v1785
  %v1787 = vrcp.pop %v1408
  %v1788 = vmul.f32 1.0, %v1787
  %v1789 = vrcp.pop %v1409
  %v1790 = vmul.f32 1.0, %v1789
  %v1791 = vrcp.pop %v1410
  %v1792 = vmul.f32 1.0, %v1791
  %v1793 = vrcp.pop %v1411
  %v1794 = vmul.f32 1.0, %v1793
  %v1795 = vrcp.pop %v1412
  %v1796 = vmul.f32 1.0, %v1795
  %v1797 = vrcp.pop %v1413
  %v1798 = vmul.f32 1.0, %v1797
  %v1799 = vrcp.pop %v1414
  %v1800 = vmul.f32 1.0, %v1799
  %v1801 = vrcp.pop %v1415
  %v1802 = vmul.f32 1.0, %v1801
  %v1803 = vrcp.pop %v1416
  %v1804 = vmul.f32 1.0, %v1803
  %v1805 = vrcp.pop %v1417
  %v1806 = vmul.f32 1.0, %v1805
  %v1807 = vrcp.pop %v1418
  %v1808 = vmul.f32 1.0, %v1807
  %v1809 = vrcp.pop %v1419
  %v1810 = vmul.f32 1.0, %v1809
  %v1811 = vrcp.pop %v1420
  %v1812 = vmul.f32 1.0, %v1811
  %v1813 = vrcp.pop %v1421
  %v1814 = vmul.f32 1.0, %v1813
  %v1815 = vrcp.pop %v1422
  %v1816 = vmul.f32 1.0, %v1815
  %v1817 = vrcp.pop %v1423
  %v1818 = vmul.f32 1.0, %v1817
  %v1819 = vrcp.pop %v1424
  %v1820 = vmul.f32 1.0, %v1819
  %v1821 = vrcp.pop %v1425
  %v1822 = vmul.f32 1.0, %v1821
  %v1823 = vrcp.pop %v1426
  %v1824 = vmul.f32 1.0, %v1823
  %v1825 = vrcp.pop %v1427
  %v1826 = vmul.f32 1.0, %v1825
  %v1827 = vrcp.pop %v1428
  %v1828 = vmul.f32 1.0, %v1827
  %v1829 = vrcp.pop %v1429
  %v1830 = vmul.f32 1.0, %v1829
  %v1831 = vrcp.pop %v1430
  %v1832 = vmul.f32 1.0, %v1831
  %v1833 = vrcp.pop %v1431
  %v1834 = vmul.f32 1.0, %v1833
  %v1835 = vrcp.pop %v1432
  %v1836 = vmul.f32 1.0, %v1835
  %v1837 = vrcp.pop %v1433
  %v1838 = vmul.f32 1.0, %v1837
  %v1839 = vrcp.pop %v1434
  %v1840 = vmul.f32 1.0, %v1839
  %v1841 = vrcp.pop %v1435
  %v1842 = vmul.f32 1.0, %v1841
  %v1843 = vrcp.pop %v1436
  %v1844 = vmul.f32 1.0, %v1843
  %v1845 = vrcp.pop %v1437
  %v1846 = vmul.f32 1.0, %v1845
  %v1847 = vrcp.pop %v1438
  %v1848 = vmul.f32 1.0, %v1847
  %v1849 = vrcp.pop %v1439
  %v1850 = vmul.f32 1.0, %v1849
  %v1851 = vrcp.pop %v1440
  %v1852 = vmul.f32 1.0, %v1851
  %v1853 = vrcp.pop %v1441
  %v1854 = vmul.f32 1.0, %v1853
  %v1855 = vrcp.pop %v1442
  %v1856 = vmul.f32 1.0, %v1855
  %v1857 = vrcp.pop %v1443
  %v1858 = vmul.f32 1.0, %v1857
  %v1859 = vrcp.pop %v1444
  %v1860 = vmul.f32 1.0, %v1859
  %v1861 = vrcp.pop %v1445
  %v1862 = vmul.f32 1.0, %v1861
  %v1863 = vrcp.pop %v1446
  %v1864 = vmul.f32 1.0, %v1863
  %v1865 = vrcp.pop %v1447
  %v1866 = vmul.f32 1.0, %v1865
  %v1867 = vrcp.pop %v1448
  %v1868 = vmul.f32 1.0, %v1867
  %v1869 = vrcp.pop %v1449
  %v1870 = vmul.f32 1.0, %v1869
  %v1871 = vrcp.pop %v1450
  %v1872 = vmul.f32 1.0, %v1871
  %v1873 = vrcp.pop %v1451
  %v1874 = vmul.f32 1.0, %v1873
  %v1875 = vrcp.pop %v1452
  %v1876 = vmul.f32 1.0, %v1875
  %v1877 = vrcp.pop %v1453
  %v1878 = vmul.f32 1.0, %v1877
  %v1879 = vrcp.pop %v1454
  %v1880 = vmul.f32 1.0, %v1879
  %v1881 = vrcp.pop %v1455
  %v1882 = vmul.f32 1.0, %v1881
  %v1883 = vrcp.pop %v1456
  %v1884 = vmul.f32 1.0, %v1883
  %v1885 = vrcp.pop %v1457
  %v1886 = vmul.f32 1.0, %v1885
  %v1887 = vrcp.pop %v1458
  %v1888 = vmul.f32 1.0, %v1887
  %v1889 = vrcp.pop %v1459
  %v1890 = vmul.f32 1.0, %v1889
  %v1891 = vrcp.pop %v1460
  %v1892 = vmul.f32 1.0, %v1891
  %v1893 = vrcp.pop %v1461
  %v1894 = vmul.f32 1.0, %v1893
  %v1895 = vrcp.pop %v1462
  %v1896 = vmul.f32 1.0, %v1895
  %v1897 = vrcp.pop %v1463
  %v1898 = vmul.f32 1.0, %v1897
  %v1899 = vrcp.pop %v1464
  %v1900 = vmul.f32 1.0, %v1899
  %v1901 = vrcp.pop %v1465
  %v1902 = vmul.f32 1.0, %v1901
  %v1903 = vrcp.pop %v1466
  %v1904 = vmul.f32 1.0, %v1903
  %v1905 = vrcp.pop %v1467
  %v1906 = vmul.f32 1.0, %v1905
  %v1907 = vrcp.pop %v1468
  %v1908 = vmul.f32 1.0, %v1907
  %v1909 = vrcp.pop %v1469
  %v1910 = vmul.f32 1.0, %v1909
  %v1911 = vrcp.pop %v1470
  %v1912 = vmul.f32 1.0, %v1911
  %v1913 = vrcp.pop %v1471
  %v1914 = vmul.f32 1.0, %v1913
  %v1915 = vrcp.pop %v1472
  %v1916 = vmul.f32 1.0, %v1915
  %v1917 = vrcp.pop %v1473
  %v1918 = vmul.f32 1.0, %v1917
  %v1919 = vrcp.pop %v1474
  %v1920 = vmul.f32 1.0, %v1919
  %v1921 = vrcp.pop %v1475
  %v1922 = vmul.f32 1.0, %v1921
  %v1923 = vrcp.pop %v1476
  %v1924 = vmul.f32 1.0, %v1923
  %v1925 = vrcp.pop %v1477
  %v1926 = vmul.f32 1.0, %v1925
  %v1927 = vrcp.pop %v1478
  %v1928 = vmul.f32 1.0, %v1927
  %v1929 = vrcp.pop %v1479
  %v1930 = vmul.f32 1.0, %v1929
  %v1931 = vrcp.pop %v1480
  %v1932 = vmul.f32 1.0, %v1931
  %v1933 = vrcp.pop %v1481
  %v1934 = vmul.f32 1.0, %v1933
  %v1935 = vrcp.pop %v1482
  %v1936 = vmul.f32 1.0, %v1935
  %v1937 = vrcp.pop %v1483
  %v1938 = vmul.f32 1.0, %v1937
  %v1939 = vrcp.pop %v1484
  %v1940 = vmul.f32 1.0, %v1939
  %v1941 = vrcp.pop %v1485
  %v1942 = vmul.f32 1.0, %v1941
  %v1943 = vrcp.pop %v1486
  %v1944 = vmul.f32 1.0, %v1943
  %v1945 = vrcp.pop %v1487
  %v1946 = vmul.f32 1.0, %v1945
  %v1947 = vrcp.pop %v1488
  %v1948 = vmul.f32 1.0, %v1947
  %v1949 = vrcp.pop %v1489
  %v1950 = vmul.f32 1.0, %v1949
  %v1951 = vrcp.pop %v1490
  %v1952 = vmul.f32 1.0, %v1951
  %v1953 = vrcp.pop %v1491
  %v1954 = vmul.f32 1.0, %v1953
  %v1955 = vrcp.pop %v1492
  %v1956 = vmul.f32 1.0, %v1955
  %v1957 = vrcp.pop %v1493
  %v1958 = vmul.f32 1.0, %v1957
  %v1959 = vrcp.pop %v1494
  %v1960 = vmul.f32 1.0, %v1959
  %v1961 = vrcp.pop %v1495
  %v1962 = vmul.f32 1.0, %v1961
  %v1963 = vrcp.pop %v1496
  %v1964 = vmul.f32 1.0, %v1963
  %v1965 = vrcp.pop %v1497
  %v1966 = vmul.f32 1.0, %v1965
  %v1967 = vrcp.pop %v1498
  %v1968 = vmul.f32 1.0, %v1967
  %v1969 = vrcp.pop %v1499
  %v1970 = vmul.f32 1.0, %v1969
  %v1971 = vrcp.pop %v1500
  %v1972 = vmul.f32 1.0, %v1971
  %v1973 = vrcp.pop %v1501
  %v1974 = vmul.f32 1.0, %v1973
  %v1975 = vrcp.pop %v1502
  %v1976 = vmul.f32 1.0, %v1975
  %v1977 = vrcp.pop %v1503
  %v1978 = vmul.f32 1.0, %v1977
  %v1979 = vrcp.pop %v1504
  %v1980 = vmul.f32 1.0, %v1979
  %v1981 = vrcp.pop %v1505
  %v1982 = vmul.f32 1.0, %v1981
  %v1983 = vrcp.pop %v1506
  %v1984 = vmul.f32 1.0, %v1983
  %v1985 = vrcp.pop %v1507
  %v1986 = vmul.f32 1.0, %v1985
  %v1987 = vrcp.pop %v1508
  %v1988 = vmul.f32 1.0, %v1987
  %v1989 = vrcp.pop %v1509
  %v1990 = vmul.f32 1.0, %v1989
  %v1991 = vrcp.pop %v1510
  %v1992 = vmul.f32 1.0, %v1991
  %v1993 = vrcp.pop %v1511
  %v1994 = vmul.f32 1.0, %v1993
  %v1995 = vrcp.pop %v1512
  %v1996 = vmul.f32 1.0, %v1995
  %v1997 = vrcp.pop %v1513
  %v1998 = vmul.f32 1.0, %v1997
  %v1999 = vrcp.pop %v1514
  %v2000 = vmul.f32 1.0, %v1999
  %v2001 = vrcp.pop %v1515
  %v2002 = vmul.f32 1.0, %v2001
  %v2003 = vrcp.pop %v1516
  %v2004 = vmul.f32 1.0, %v2003
  %v2005 = vrcp.pop %v1517
  %v2006 = vmul.f32 1.0, %v2005
  %v2007 = vrcp.pop %v1518
  %v2008 = vmul.f32 1.0, %v2007
  %v2009 = vrcp.pop %v1519
  %v2010 = vmul.f32 1.0, %v2009
  %v2011 = vrcp.pop %v1520
  %v2012 = vmul.f32 1.0, %v2011
  %v2013 = vrcp.pop %v1521
  %v2014 = vmul.f32 1.0, %v2013
  %v2015 = vrcp.pop %v1522
  %v2016 = vmul.f32 1.0, %v2015
  %v2017 = vrcp.pop %v1523
  %v2018 = vmul.f32 1.0, %v2017
  %v2019 = vrcp.pop %v1524
  %v2020 = vmul.f32 1.0, %v2019
  %v2021 = vrcp.pop %v1525
  %v2022 = vmul.f32 1.0, %v2021
  %v2023 = vrcp.pop %v1526
  %v2024 = vmul.f32 1.0, %v2023
  %v2025 = vrcp.pop %v1527
  %v2026 = vmul.f32 1.0, %v2025
  %v2027 = vrcp.pop %v1528
  %v2028 = vmul.f32 1.0, %v2027
  %v2029 = vrcp.pop %v1529
  %v2030 = vmul.f32 1.0, %v2029
  %v2031 = vrcp.pop %v1530
  %v2032 = vmul.f32 1.0, %v2031
  %v2033 = vrcp.pop %v1531
  %v2034 = vmul.f32 1.0, %v2033
  %v2035 = vrcp.pop %v1532
  %v2036 = vmul.f32 1.0, %v2035
  %v2037 = vrcp.pop %v1533
  %v2038 = vmul.f32 1.0, %v2037
  %v2039 = vrcp.pop %v1534
  %v2040 = vmul.f32 1.0, %v2039
  %v2041 = vrcp.pop %v1535
  %v2042 = vmul.f32 1.0, %v2041
  %v2043 = vrcp.pop %v1536
  %v2044 = vmul.f32 1.0, %v2043
  %v2045 = vrcp.pop %v1537
  %v2046 = vmul.f32 1.0, %v2045
  %v2047 = vrcp.pop %v1538
  %v2048 = vmul.f32 1.0, %v2047
  %v2049 = vrcp.pop %v1539
  %v2050 = vmul.f32 1.0, %v2049
  %v2051 = vrcp.pop %v1540
  %v2052 = vmul.f32 1.0, %v2051
  %v2053 = vrcp.pop %v1541
  %v2054 = vmul.f32 1.0, %v2053
  %v2055 = vrcp.pop %v1542
  %v2056 = vmul.f32 1.0, %v2055
  %v2057 = vrcp.pop %v1543
  %v2058 = vmul.f32 1.0, %v2057
  %v2059 = vrcp.pop %v1544
  %v2060 = vmul.f32 1.0, %v2059
  %v2061 = vrcp.pop %v1545
  %v2062 = vmul.f32 1.0, %v2061
  %v2063 = vrcp.pop %v1546
  %v2064 = vmul.f32 1.0, %v2063
  %v2065 = vrcp.pop %v1547
  %v2066 = vmul.f32 1.0, %v2065
  %v2067 = vrcp.pop %v1548
  %v2068 = vmul.f32 1.0, %v2067
  %v2069 = vrcp.pop %v1549
  %v2070 = vmul.f32 1.0, %v2069
  %v2071 = vrcp.pop %v1550
  %v2072 = vmul.f32 1.0, %v2071
  %v2073 = vrcp.pop %v1551
  %v2074 = vmul.f32 1.0, %v2073
  %v2075 = vrcp.pop %v1552
  %v2076 = vmul.f32 1.0, %v2075
  %v2077 = vrcp.pop %v1553
  %v2078 = vmul.f32 1.0, %v2077
  %v2079 = vrcp.pop %v1554
  %v2080 = vmul.f32 1.0, %v2079
  %v2081 = vrcp.pop %v1555
  %v2082 = vmul.f32 1.0, %v2081
  %v2083 = vrcp.pop %v1556
  %v2084 = vmul.f32 1.0, %v2083
  %v2085 = vrcp.pop %v1557
  %v2086 = vmul.f32 1.0, %v2085
  %v2087 = vrcp.pop %v1558
  %v2088 = vmul.f32 1.0, %v2087
  %v2089 = vrcp.pop %v1559
  %v2090 = vmul.f32 1.0, %v2089
  %v2091 = vrcp.pop %v1560
  %v2092 = vmul.f32 1.0, %v2091
  %v2093 = vrcp.pop %v1561
  %v2094 = vmul.f32 1.0, %v2093
  %v2095 = vrcp.pop %v1562
  %v2096 = vmul.f32 1.0, %v2095
  %v2097 = vrcp.pop %v1563
  %v2098 = vmul.f32 1.0, %v2097
  %v2099 = vrcp.pop %v1564
  %v2100 = vmul.f32 1.0, %v2099
  %v2101 = vrcp.pop %v1565
  %v2102 = vmul.f32 1.0, %v2101
  %v2103 = vrcp.pop %v1566
  %v2104 = vmul.f32 1.0, %v2103
  %v2105 = vrcp.pop %v1567
  %v2106 = vmul.f32 1.0, %v2105
  %v2107 = vrcp.pop %v1568
  %v2108 = vmul.f32 1.0, %v2107
  %v2109 = vrcp.pop %v1569
  %v2110 = vmul.f32 1.0, %v2109
  %v2111 = vrcp.pop %v1570
  %v2112 = vmul.f32 1.0, %v2111
  %v2113 = vrcp.pop %v1571
  %v2114 = vmul.f32 1.0, %v2113
  %v2115 = vrcp.pop %v1572
  %v2116 = vmul.f32 1.0, %v2115
  %v2117 = vrcp.pop %v1573
  %v2118 = vmul.f32 1.0, %v2117
  %v2119 = vrcp.pop %v1574
  %v2120 = vmul.f32 1.0, %v2119
  %v2121 = vrcp.pop %v1575
  %v2122 = vmul.f32 1.0, %v2121
  %v2123 = vrcp.pop %v1576
  %v2124 = vmul.f32 1.0, %v2123
  %v2125 = vrcp.pop %v1577
  %v2126 = vmul.f32 1.0, %v2125
  %v2127 = vrcp.pop %v1578
  %v2128 = vmul.f32 1.0, %v2127
  %v2129 = vrcp.pop %v1579
  %v2130 = vmul.f32 1.0, %v2129
  %v2131 = vrcp.pop %v1580
  %v2132 = vmul.f32 1.0, %v2131
  %v2133 = vrcp.pop %v1581
  %v2134 = vmul.f32 1.0, %v2133
  %v2135 = vrcp.pop %v1582
  %v2136 = vmul.f32 1.0, %v2135
  %v2137 = vrcp.pop %v1583
  %v2138 = vmul.f32 1.0, %v2137
  %v2139 = vrcp.pop %v1584
  %v2140 = vmul.f32 1.0, %v2139
  %v2141 = vrcp.pop %v1585
  %v2142 = vmul.f32 1.0, %v2141
  %v2143 = vrcp.pop %v1586
  %v2144 = vmul.f32 1.0, %v2143
  %v2145 = vrcp.pop %v1587
  %v2146 = vmul.f32 1.0, %v2145
  %v2147 = vrcp.pop %v1588
  %v2148 = vmul.f32 1.0, %v2147
  %v2149 = vrcp.pop %v1589
  %v2150 = vmul.f32 1.0, %v2149
  %v2151 = vrcp.pop %v1590
  %v2152 = vmul.f32 1.0, %v2151
  %v2153 = vrcp.pop %v1591
  %v2154 = vmul.f32 1.0, %v2153
  %v2155 = vrcp.pop %v1592
  %v2156 = vmul.f32 1.0, %v2155
  %v2157 = vrcp.pop %v1593
  %v2158 = vmul.f32 1.0, %v2157
  %v2159 = vrcp.pop %v1594
  %v2160 = vmul.f32 1.0, %v2159
  %v2161 = vrcp.pop %v1595
  %v2162 = vmul.f32 1.0, %v2161
  %v2163 = vrcp.pop %v1596
  %v2164 = vmul.f32 1.0, %v2163
  %v2165 = vrcp.pop %v1597
  %v2166 = vmul.f32 1.0, %v2165
  %v2167 = vrcp.pop %v1598
  %v2168 = vmul.f32 1.0, %v2167
  %v2169 = vrcp.pop %v1599
  %v2170 = vmul.f32 1.0, %v2169
  %v2171 = vrcp.pop %v1600
  %v2172 = vmul.f32 1.0, %v2171
  %v2173 = vrcp.pop %v1601
  %v2174 = vmul.f32 1.0, %v2173
  %v2175 = vrcp.pop %v1602
  %v2176 = vmul.f32 1.0, %v2175
  %v2177 = vrcp.pop %v1603
  %v2178 = vmul.f32 1.0, %v2177
  %v2179 = vrcp.pop %v1604
  %v2180 = vmul.f32 1.0, %v2179
  %v2181 = vrcp.pop %v1605
  %v2182 = vmul.f32 1.0, %v2181
  %v2183 = vrcp.pop %v1606
  %v2184 = vmul.f32 1.0, %v2183
  %v2185 = vrcp.pop %v1607
  %v2186 = vmul.f32 1.0, %v2185
  %v2187 = vrcp.pop %v1608
  %v2188 = vmul.f32 1.0, %v2187
  %v2189 = vrcp.pop %v1609
  %v2190 = vmul.f32 1.0, %v2189
  %v2191 = vrcp.pop %v1610
  %v2192 = vmul.f32 1.0, %v2191
  %v2193 = vrcp.pop %v1611
  %v2194 = vmul.f32 1.0, %v2193
  %v2195 = vrcp.pop %v1612
  %v2196 = vmul.f32 1.0, %v2195
  %v2197 = vrcp.pop %v1613
  %v2198 = vmul.f32 1.0, %v2197
  %v2199 = vrcp.pop %v1614
  %v2200 = vmul.f32 1.0, %v2199
  %v2201 = vrcp.pop %v1615
  %v2202 = vmul.f32 1.0, %v2201
  %v2203 = vrcp.pop %v1616
  %v2204 = vmul.f32 1.0, %v2203
  %v2205 = vrcp.pop %v1617
  %v2206 = vmul.f32 1.0, %v2205
  %v2207 = vrcp.pop %v1618
  %v2208 = vmul.f32 1.0, %v2207
  %v2209 = vrcp.pop %v1619
  %v2210 = vmul.f32 1.0, %v2209
  %v2211 = vrcp.pop %v1620
  %v2212 = vmul.f32 1.0, %v2211
  %v2213 = vrcp.pop %v1621
  %v2214 = vmul.f32 1.0, %v2213
  %v2215 = vrcp.pop %v1622
  %v2216 = vmul.f32 1.0, %v2215
  %v2217 = vrcp.pop %v1623
  %v2218 = vmul.f32 1.0, %v2217
  %v2219 = vrcp.pop %v1624
  %v2220 = vmul.f32 1.0, %v2219
  %v2221 = vrcp.pop %v1625
  %v2222 = vmul.f32 1.0, %v2221
  %v2223 = vrcp.pop %v1626
  %v2224 = vmul.f32 1.0, %v2223
  %v2225 = vrcp.pop %v1627
  %v2226 = vmul.f32 1.0, %v2225
  %v2227 = vrcp.pop %v1628
  %v2228 = vmul.f32 1.0, %v2227
  %v2229 = vrcp.pop %v1629
  %v2230 = vmul.f32 1.0, %v2229
  %v2231 = vrcp.pop %v1630
  %v2232 = vmul.f32 1.0, %v2231
  %v2233 = vrcp.pop %v1631
  %v2234 = vmul.f32 1.0, %v2233
  %v2235 = vrcp.pop %v1632
  %v2236 = vmul.f32 1.0, %v2235
  %v2237 = vrcp.pop %v1633
  %v2238 = vmul.f32 1.0, %v2237
  %v2239 = vrcp.pop %v1634
  %v2240 = vmul.f32 1.0, %v2239
  %v2241 = vrcp.pop %v1635
  %v2242 = vmul.f32 1.0, %v2241
  %v2243 = vrcp.pop %v1636
  %v2244 = vmul.f32 1.0, %v2243
  %v2245 = vrcp.pop %v1637
  %v2246 = vmul.f32 1.0, %v2245
  %v2247 = vrcp.pop %v1638
  %v2248 = vmul.f32 1.0, %v2247
  %v2249 = vrcp.pop %v1639
  %v2250 = vmul.f32 1.0, %v2249
  %v2251 = vrcp.pop %v1640
  %v2252 = vmul.f32 1.0, %v2251
  %v2253 = vrcp.pop %v1641
  %v2254 = vmul.f32 1.0, %v2253
  %v2255 = vrcp.pop %v1642
  %v2256 = vmul.f32 1.0, %v2255
  %v2257 = vrcp.pop %v1643
  %v2258 = vmul.f32 1.0, %v2257
  %v2259 = vrcp.pop %v1644
  %v2260 = vmul.f32 1.0, %v2259
  %v2261 = vrcp.pop %v1645
  %v2262 = vmul.f32 1.0, %v2261
  %v2263 = vrcp.pop %v1646
  %v2264 = vmul.f32 1.0, %v2263
  %v2265 = vrcp.pop %v1647
  %v2266 = vmul.f32 1.0, %v2265
  %v2267 = vrcp.pop %v1648
  %v2268 = vmul.f32 1.0, %v2267
  %v2269 = vrcp.pop %v1649
  %v2270 = vmul.f32 1.0, %v2269
  %v2271 = vrcp.pop %v1650
  %v2272 = vmul.f32 1.0, %v2271
  %v2273 = vrcp.pop %v1651
  %v2274 = vmul.f32 1.0, %v2273
  %v2275 = vrcp.pop %v1652
  %v2276 = vmul.f32 1.0, %v2275
  %v2277 = vrcp.pop %v1653
  %v2278 = vmul.f32 1.0, %v2277
  %v2279 = vrcp.pop %v1654
  %v2280 = vmul.f32 1.0, %v2279
  %v2281 = vrcp.pop %v1655
  %v2282 = vmul.f32 1.0, %v2281
  %v2283 = vrcp.pop %v1656
  %v2284 = vmul.f32 1.0, %v2283
  %v2285 = vrcp.pop %v1657
  %v2286 = vmul.f32 1.0, %v2285
  %v2287 = vrcp.pop %v1658
  %v2288 = vmul.f32 1.0, %v2287
  %v2289 = vrcp.pop %v1659
  %v2290 = vmul.f32 1.0, %v2289
  %v2291 = vrcp.pop %v1660
  %v2292 = vmul.f32 1.0, %v2291
  %v2293 = vrcp.pop %v1661
  %v2294 = vmul.f32 1.0, %v2293
  %v2295 = vrcp.pop %v1662
  %v2296 = vmul.f32 1.0, %v2295
  %v2297 = vrcp.pop %v1663
  %v2298 = vmul.f32 1.0, %v2297
  %v2299 = vrcp.pop %v1664
  %v2300 = vmul.f32 1.0, %v2299
  %v2301 = vrcp.pop %v1665
  %v2302 = vmul.f32 1.0, %v2301
  %v2303 = vrcp.pop %v1666
  %v2304 = vmul.f32 1.0, %v2303
  %v2305 = vrcp.pop %v1667
  %v2306 = vmul.f32 1.0, %v2305
  %v2307 = vrcp.pop %v1668
  %v2308 = vmul.f32 1.0, %v2307
  %v2309 = vrcp.pop %v1669
  %v2310 = vmul.f32 1.0, %v2309
  %v2311 = vrcp.pop %v1670
  %v2312 = vmul.f32 1.0, %v2311
  %v2313 = vrcp.pop %v1671
  %v2314 = vmul.f32 1.0, %v2313
  %v2315 = vrcp.pop %v1672
  %v2316 = vmul.f32 1.0, %v2315
  %v2317 = vrcp.pop %v1673
  %v2318 = vmul.f32 1.0, %v2317
  %v2319 = vrcp.pop %v1674
  %v2320 = vmul.f32 1.0, %v2319
  %v2321 = vrcp.pop %v1675
  %v2322 = vmul.f32 1.0, %v2321
  %v2323 = vrcp.pop %v1676
  %v2324 = vmul.f32 1.0, %v2323
  %v2325 = vrcp.pop %v1677
  %v2326 = vmul.f32 1.0, %v2325
  %v2327 = vrcp.pop %v1678
  %v2328 = vmul.f32 1.0, %v2327
  %v2329 = vrcp.pop %v1679
  %v2330 = vmul.f32 1.0, %v2329
  %v2331 = vrcp.pop %v1680
  %v2332 = vmul.f32 1.0, %v2331
  %v2333 = vrcp.pop %v1681
  %v2334 = vmul.f32 1.0, %v2333
  %v2335 = vrcp.pop %v1682
  %v2336 = vmul.f32 1.0, %v2335
  %v2337 = vrcp.pop %v1683
  %v2338 = vmul.f32 1.0, %v2337
  %v2339 = vrcp.pop %v1684
  %v2340 = vmul.f32 1.0, %v2339
  %v2341 = vrcp.pop %v1685
  %v2342 = vmul.f32 1.0, %v2341
  %v2343 = vrcp.pop %v1686
  %v2344 = vmul.f32 1.0, %v2343
  %v2345 = vrcp.pop %v1687
  %v2346 = vmul.f32 1.0, %v2345
  %v2347 = vrcp.pop %v1688
  %v2348 = vmul.f32 1.0, %v2347
  %v2349 = vrcp.pop %v1689
  %v2350 = vmul.f32 1.0, %v2349
  %v2351 = vrcp.pop %v1690
  %v2352 = vmul.f32 1.0, %v2351
  %v2353 = vrcp.pop %v1691
  %v2354 = vmul.f32 1.0, %v2353
  %v2355 = vrcp.pop %v1692
  %v2356 = vmul.f32 1.0, %v2355
  %v2357 = vrcp.pop %v1693
  %v2358 = vmul.f32 1.0, %v2357
  %v2359 = vrcp.pop %v1694
  %v2360 = vmul.f32 1.0, %v2359
  %v2361 = vrcp.pop %v1695
  %v2362 = vmul.f32 1.0, %v2361
  %v2363 = vrcp.pop %v1696
  %v2364 = vmul.f32 1.0, %v2363
  %v2365 = vrcp.pop %v1697
  %v2366 = vmul.f32 1.0, %v2365
  %v2367 = vrcp.pop %v1698
  %v2368 = vmul.f32 1.0, %v2367
  %v2369 = vrcp.pop %v1699
  %v2370 = vmul.f32 1.0, %v2369
  %v2371 = vrcp.pop %v1700
  %v2372 = vmul.f32 1.0, %v2371
  %v2373 = vld [vmem:[%s1] sm:$0xff]
  %v2374 = vld [vmem:[%s1 + $0x8] sm:$0xff]
  %v2375 = vld [vmem:[%s1 + $0x10] sm:$0xff]
  %v2376 = vld [vmem:[%s1 + $0x18] sm:$0xff]
  %v2377 = vld [vmem:[%s1 + $0x20] sm:$0xff]
  %v2378 = vld [vmem:[%s1 + $0x28] sm:$0xff]
  %v2379 = vld [vmem:[%s1 + $0x30] sm:$0xff]
  %v2380 = vld [vmem:[%s1 + $0x38] sm:$0xff]
  %v2381 = vld [vmem:[%s1 + $0x40] sm:$0xff]
  %v2382 = vld [vmem:[%s1 + $0x48] sm:$0xff]
  %v2383 = vld [vmem:[%s1 + $0x50] sm:$0xff]
  %v2384 = vld [vmem:[%s1 + $0x58] sm:$0xff]
  %v2385 = vld [vmem:[%s1 + $0x60] sm:$0xff]
  %v2386 = vld [vmem:[%s1 + $0x68] sm:$0xff]
  %v2387 = vld [vmem:[%s1 + $0x70] sm:$0xff]
  %v2388 = vld [vmem:[%s1 + $0x78] sm:$0xff]
  %v2389 = vld [vmem:[%s1 + $0x80] sm:$0xff]
  %v2390 = vld [vmem:[%s1 + $0x88] sm:$0xff]
  %v2391 = vld [vmem:[%s1 + $0x90] sm:$0xff]
  %v2392 = vld [vmem:[%s1 + $0x98] sm:$0xff]
  %v2393 = vld [vmem:[%s1 + $0xa0] sm:$0xff]
  %v2394 = vld [vmem:[%s1 + $0xa8] sm:$0xff]
  %v2395 = vld [vmem:[%s1 + $0xb0] sm:$0xff]
  %v2396 = vld [vmem:[%s1 + $0xb8] sm:$0xff]
  %v2397 = vld [vmem:[%s1 + $0xc0] sm:$0xff]
  %v2398 = vld [vmem:[%s1 + $0xc8] sm:$0xff]
  %v2399 = vld [vmem:[%s1 + $0xd0] sm:$0xff]
  %v2400 = vld [vmem:[%s1 + $0xd8] sm:$0xff]
  %v2401 = vld [vmem:[%s1 + $0xe0] sm:$0xff]
  %v2402 = vld [vmem:[%s1 + $0xe8] sm:$0xff]
  %v2403 = vld [vmem:[%s1 + $0xf0] sm:$0xff]
  %v2404 = vld [vmem:[%s1 + $0xf8] sm:$0xff]
  %v2405 = vld [vmem:[%s1 + $0x100] sm:$0xff]
  %v2406 = vld [vmem:[%s1 + $0x108] sm:$0xff]
  %v2407 = vld [vmem:[%s1 + $0x110] sm:$0xff]
  %v2408 = vld [vmem:[%s1 + $0x118] sm:$0xff]
  %v2409 = vld [vmem:[%s1 + $0x120] sm:$0xff]
  %v2410 = vld [vmem:[%s1 + $0x128] sm:$0xff]
  %v2411 = vld [vmem:[%s1 + $0x130] sm:$0xff]
  %v2412 = vld [vmem:[%s1 + $0x138] sm:$0xff]
  %v2413 = vld [vmem:[%s1 + $0x140] sm:$0xff]
  %v2414 = vld [vmem:[%s1 + $0x148] sm:$0xff]
  %v2415 = vld [vmem:[%s1 + $0x150] sm:$0xff]
  %v2416 = vld [vmem:[%s1 + $0x158] sm:$0xff]
  %v2417 = vld [vmem:[%s1 + $0x160] sm:$0xff]
  %v2418 = vld [vmem:[%s1 + $0x168] sm:$0xff]
  %v2419 = vld [vmem:[%s1 + $0x170] sm:$0xff]
  %v2420 = vld [vmem:[%s1 + $0x178] sm:$0xff]
  %v2421 = vld [vmem:[%s1 + $0x180] sm:$0xff]
  %v2422 = vld [vmem:[%s1 + $0x188] sm:$0xff]
  %v2423 = vld [vmem:[%s1 + $0x190] sm:$0xff]
  %v2424 = vld [vmem:[%s1 + $0x198] sm:$0xff]
  %v2425 = vld [vmem:[%s1 + $0x1a0] sm:$0xff]
  %v2426 = vld [vmem:[%s1 + $0x1a8] sm:$0xff]
  %v2427 = vld [vmem:[%s1 + $0x1b0] sm:$0xff]
  %v2428 = vld [vmem:[%s1 + $0x1b8] sm:$0xff]
  %v2429 = vld [vmem:[%s1 + $0x1c0] sm:$0xff]
  %v2430 = vld [vmem:[%s1 + $0x1c8] sm:$0xff]
  %v2431 = vld [vmem:[%s1 + $0x1d0] sm:$0xff]
  %v2432 = vld [vmem:[%s1 + $0x1d8] sm:$0xff]
  %v2433 = vld [vmem:[%s1 + $0x1e0] sm:$0xff]
  %v2434 = vld [vmem:[%s1 + $0x1e8] sm:$0xff]
  %v2435 = vld [vmem:[%s1 + $0x1f0] sm:$0xff]
  %v2436 = vld [vmem:[%s1 + $0x1f8] sm:$0xff]
  %v2437 = vld [vmem:[%s1 + $0x200] sm:$0xff]
  %v2438 = vld [vmem:[%s1 + $0x208] sm:$0xff]
  %v2439 = vld [vmem:[%s1 + $0x210] sm:$0xff]
  %v2440 = vld [vmem:[%s1 + $0x218] sm:$0xff]
  %v2441 = vld [vmem:[%s1 + $0x220] sm:$0xff]
  %v2442 = vld [vmem:[%s1 + $0x228] sm:$0xff]
  %v2443 = vld [vmem:[%s1 + $0x230] sm:$0xff]
  %v2444 = vld [vmem:[%s1 + $0x238] sm:$0xff]
  %v2445 = vld [vmem:[%s1 + $0x240] sm:$0xff]
  %v2446 = vld [vmem:[%s1 + $0x248] sm:$0xff]
  %v2447 = vld [vmem:[%s1 + $0x250] sm:$0xff]
  %v2448 = vld [vmem:[%s1 + $0x258] sm:$0xff]
  %v2449 = vld [vmem:[%s1 + $0x260] sm:$0xff]
  %v2450 = vld [vmem:[%s1 + $0x268] sm:$0xff]
  %v2451 = vld [vmem:[%s1 + $0x270] sm:$0xff]
  %v2452 = vld [vmem:[%s1 + $0x278] sm:$0xff]
  %v2453 = vld [vmem:[%s1 + $0x280] sm:$0xff]
  %v2454 = vld [vmem:[%s1 + $0x288] sm:$0xff]
  %v2455 = vld [vmem:[%s1 + $0x290] sm:$0xff]
  %v2456 = vld [vmem:[%s1 + $0x298] sm:$0xff]
  %v2457 = vld [vmem:[%s1 + $0x2a0] sm:$0xff]
  %v2458 = vld [vmem:[%s1 + $0x2a8] sm:$0xff]
  %v2459 = vld [vmem:[%s1 + $0x2b0] sm:$0xff]
  %v2460 = vld [vmem:[%s1 + $0x2b8] sm:$0xff]
  %v2461 = vld [vmem:[%s1 + $0x2c0] sm:$0xff]
  %v2462 = vld [vmem:[%s1 + $0x2c8] sm:$0xff]
  %v2463 = vld [vmem:[%s1 + $0x2d0] sm:$0xff]
  %v2464 = vld [vmem:[%s1 + $0x2d8] sm:$0xff]
  %v2465 = vld [vmem:[%s1 + $0x2e0] sm:$0xff]
  %v2466 = vld [vmem:[%s1 + $0x2e8] sm:$0xff]
  %v2467 = vld [vmem:[%s1 + $0x2f0] sm:$0xff]
  %v2468 = vld [vmem:[%s1 + $0x2f8] sm:$0xff]
  %v2469 = vld [vmem:[%s1 + $0x300] sm:$0xff]
  %v2470 = vld [vmem:[%s1 + $0x308] sm:$0xff]
  %v2471 = vld [vmem:[%s1 + $0x310] sm:$0xff]
  %v2472 = vld [vmem:[%s1 + $0x318] sm:$0xff]
  %v2473 = vld [vmem:[%s1 + $0x320] sm:$0xff]
  %v2474 = vld [vmem:[%s1 + $0x328] sm:$0xff]
  %v2475 = vld [vmem:[%s1 + $0x330] sm:$0xff]
  %v2476 = vld [vmem:[%s1 + $0x338] sm:$0xff]
  %v2477 = vld [vmem:[%s1 + $0x340] sm:$0xff]
  %v2478 = vld [vmem:[%s1 + $0x348] sm:$0xff]
  %v2479 = vld [vmem:[%s1 + $0x350] sm:$0xff]
  %v2480 = vld [vmem:[%s1 + $0x358] sm:$0xff]
  %v2481 = vld [vmem:[%s1 + $0x360] sm:$0xff]
  %v2482 = vld [vmem:[%s1 + $0x368] sm:$0xff]
  %v2483 = vld [vmem:[%s1 + $0x370] sm:$0xff]
  %v2484 = vld [vmem:[%s1 + $0x378] sm:$0xff]
  %v2485 = vld [vmem:[%s1 + $0x380] sm:$0xff]
  %v2486 = vld [vmem:[%s1 + $0x388] sm:$0xff]
  %v2487 = vld [vmem:[%s1 + $0x390] sm:$0xff]
  %v2488 = vld [vmem:[%s1 + $0x398] sm:$0xff]
  %v2489 = vld [vmem:[%s1 + $0x3a0] sm:$0xff]
  %v2490 = vld [vmem:[%s1 + $0x3a8] sm:$0xff]
  %v2491 = vld [vmem:[%s1 + $0x3b0] sm:$0xff]
  %v2492 = vld [vmem:[%s1 + $0x3b8] sm:$0xff]
  %v2493 = vld [vmem:[%s1 + $0x3c0] sm:$0xff]
  %v2494 = vld [vmem:[%s1 + $0x3c8] sm:$0xff]
  %v2495 = vld [vmem:[%s1 + $0x3d0] sm:$0xff]
  %v2496 = vld [vmem:[%s1 + $0x3d8] sm:$0xff]
  %v2497 = vld [vmem:[%s1 + $0x3e0] sm:$0xff]
  %v2498 = vld [vmem:[%s1 + $0x3e8] sm:$0xff]
  %v2499 = vld [vmem:[%s1 + $0x3f0] sm:$0xff]
  %v2500 = vld [vmem:[%s1 + $0x3f8] sm:$0xff]
  %v2501 = vld [vmem:[%s1 + $0x400] sm:$0xff]
  %v2502 = vld [vmem:[%s1 + $0x408] sm:$0xff]
  %v2503 = vld [vmem:[%s1 + $0x410] sm:$0xff]
  %v2504 = vld [vmem:[%s1 + $0x418] sm:$0xff]
  %v2505 = vld [vmem:[%s1 + $0x420] sm:$0xff]
  %v2506 = vld [vmem:[%s1 + $0x428] sm:$0xff]
  %v2507 = vld [vmem:[%s1 + $0x430] sm:$0xff]
  %v2508 = vld [vmem:[%s1 + $0x438] sm:$0xff]
  %v2509 = vld [vmem:[%s1 + $0x440] sm:$0xff]
  %v2510 = vld [vmem:[%s1 + $0x448] sm:$0xff]
  %v2511 = vld [vmem:[%s1 + $0x450] sm:$0xff]
  %v2512 = vld [vmem:[%s1 + $0x458] sm:$0xff]
  %v2513 = vld [vmem:[%s1 + $0x460] sm:$0xff]
  %v2514 = vld [vmem:[%s1 + $0x468] sm:$0xff]
  %v2515 = vld [vmem:[%s1 + $0x470] sm:$0xff]
  %v2516 = vld [vmem:[%s1 + $0x478] sm:$0xff]
  %v2517 = vld [vmem:[%s1 + $0x480] sm:$0xff]
  %v2518 = vld [vmem:[%s1 + $0x488] sm:$0xff]
  %v2519 = vld [vmem:[%s1 + $0x490] sm:$0xff]
  %v2520 = vld [vmem:[%s1 + $0x498] sm:$0xff]
  %v2521 = vld [vmem:[%s1 + $0x4a0] sm:$0xff]
  %v2522 = vld [vmem:[%s1 + $0x4a8] sm:$0xff]
  %v2523 = vld [vmem:[%s1 + $0x4b0] sm:$0xff]
  %v2524 = vld [vmem:[%s1 + $0x4b8] sm:$0xff]
  %v2525 = vld [vmem:[%s1 + $0x4c0] sm:$0xff]
  %v2526 = vld [vmem:[%s1 + $0x4c8] sm:$0xff]
  %v2527 = vld [vmem:[%s1 + $0x4d0] sm:$0xff]
  %v2528 = vld [vmem:[%s1 + $0x4d8] sm:$0xff]
  %v2529 = vld [vmem:[%s1 + $0x4e0] sm:$0xff]
  %v2530 = vld [vmem:[%s1 + $0x4e8] sm:$0xff]
  %v2531 = vld [vmem:[%s1 + $0x4f0] sm:$0xff]
  %v2532 = vld [vmem:[%s1 + $0x4f8] sm:$0xff]
  %v2533 = vld [vmem:[%s1 + $0x500] sm:$0xff]
  %v2534 = vld [vmem:[%s1 + $0x508] sm:$0xff]
  %v2535 = vld [vmem:[%s1 + $0x510] sm:$0xff]
  %v2536 = vld [vmem:[%s1 + $0x518] sm:$0xff]
  %v2537 = vld [vmem:[%s1 + $0x520] sm:$0xff]
  %v2538 = vld [vmem:[%s1 + $0x528] sm:$0xff]
  %v2539 = vld [vmem:[%s1 + $0x530] sm:$0xff]
  %v2540 = vld [vmem:[%s1 + $0x538] sm:$0xff]
  %v2541 = vld [vmem:[%s1 + $0x540] sm:$0xff]
  %v2542 = vld [vmem:[%s1 + $0x548] sm:$0xff]
  %v2543 = vld [vmem:[%s1 + $0x550] sm:$0xff]
  %v2544 = vld [vmem:[%s1 + $0x558] sm:$0xff]
  %v2545 = vld [vmem:[%s1 + $0x560] sm:$0xff]
  %v2546 = vld [vmem:[%s1 + $0x568] sm:$0xff]
  %v2547 = vld [vmem:[%s1 + $0x570] sm:$0xff]
  %v2548 = vld [vmem:[%s1 + $0x578] sm:$0xff]
  %v2549 = vld [vmem:[%s1 + $0x580] sm:$0xff]
  %v2550 = vld [vmem:[%s1 + $0x588] sm:$0xff]
  %v2551 = vld [vmem:[%s1 + $0x590] sm:$0xff]
  %v2552 = vld [vmem:[%s1 + $0x598] sm:$0xff]
  %v2553 = vld [vmem:[%s1 + $0x5a0] sm:$0xff]
  %v2554 = vld [vmem:[%s1 + $0x5a8] sm:$0xff]
  %v2555 = vld [vmem:[%s1 + $0x5b0] sm:$0xff]
  %v2556 = vld [vmem:[%s1 + $0x5b8] sm:$0xff]
  %v2557 = vld [vmem:[%s1 + $0x5c0] sm:$0xff]
  %v2558 = vld [vmem:[%s1 + $0x5c8] sm:$0xff]
  %v2559 = vld [vmem:[%s1 + $0x5d0] sm:$0xff]
  %v2560 = vld [vmem:[%s1 + $0x5d8] sm:$0xff]
  %v2561 = vld [vmem:[%s1 + $0x5e0] sm:$0xff]
  %v2562 = vld [vmem:[%s1 + $0x5e8] sm:$0xff]
  %v2563 = vld [vmem:[%s1 + $0x5f0] sm:$0xff]
  %v2564 = vld [vmem:[%s1 + $0x5f8] sm:$0xff]
  %v2565 = vld [vmem:[%s1 + $0x600] sm:$0xff]
  %v2566 = vld [vmem:[%s1 + $0x608] sm:$0xff]
  %v2567 = vld [vmem:[%s1 + $0x610] sm:$0xff]
  %v2568 = vld [vmem:[%s1 + $0x618] sm:$0xff]
  %v2569 = vld [vmem:[%s1 + $0x620] sm:$0xff]
  %v2570 = vld [vmem:[%s1 + $0x628] sm:$0xff]
  %v2571 = vld [vmem:[%s1 + $0x630] sm:$0xff]
  %v2572 = vld [vmem:[%s1 + $0x638] sm:$0xff]
  %v2573 = vld [vmem:[%s1 + $0x640] sm:$0xff]
  %v2574 = vld [vmem:[%s1 + $0x648] sm:$0xff]
  %v2575 = vld [vmem:[%s1 + $0x650] sm:$0xff]
  %v2576 = vld [vmem:[%s1 + $0x658] sm:$0xff]
  %v2577 = vld [vmem:[%s1 + $0x660] sm:$0xff]
  %v2578 = vld [vmem:[%s1 + $0x668] sm:$0xff]
  %v2579 = vld [vmem:[%s1 + $0x670] sm:$0xff]
  %v2580 = vld [vmem:[%s1 + $0x678] sm:$0xff]
  %v2581 = vld [vmem:[%s1 + $0x680] sm:$0xff]
  %v2582 = vld [vmem:[%s1 + $0x688] sm:$0xff]
  %v2583 = vld [vmem:[%s1 + $0x690] sm:$0xff]
  %v2584 = vld [vmem:[%s1 + $0x698] sm:$0xff]
  %v2585 = vld [vmem:[%s1 + $0x6a0] sm:$0xff]
  %v2586 = vld [vmem:[%s1 + $0x6a8] sm:$0xff]
  %v2587 = vld [vmem:[%s1 + $0x6b0] sm:$0xff]
  %v2588 = vld [vmem:[%s1 + $0x6b8] sm:$0xff]
  %v2589 = vld [vmem:[%s1 + $0x6c0] sm:$0xff]
  %v2590 = vld [vmem:[%s1 + $0x6c8] sm:$0xff]
  %v2591 = vld [vmem:[%s1 + $0x6d0] sm:$0xff]
  %v2592 = vld [vmem:[%s1 + $0x6d8] sm:$0xff]
  %v2593 = vld [vmem:[%s1 + $0x6e0] sm:$0xff]
  %v2594 = vld [vmem:[%s1 + $0x6e8] sm:$0xff]
  %v2595 = vld [vmem:[%s1 + $0x6f0] sm:$0xff]
  %v2596 = vld [vmem:[%s1 + $0x6f8] sm:$0xff]
  %v2597 = vld [vmem:[%s1 + $0x700] sm:$0xff]
  %v2598 = vld [vmem:[%s1 + $0x708] sm:$0xff]
  %v2599 = vld [vmem:[%s1 + $0x710] sm:$0xff]
  %v2600 = vld [vmem:[%s1 + $0x718] sm:$0xff]
  %v2601 = vld [vmem:[%s1 + $0x720] sm:$0xff]
  %v2602 = vld [vmem:[%s1 + $0x728] sm:$0xff]
  %v2603 = vld [vmem:[%s1 + $0x730] sm:$0xff]
  %v2604 = vld [vmem:[%s1 + $0x738] sm:$0xff]
  %v2605 = vld [vmem:[%s1 + $0x740] sm:$0xff]
  %v2606 = vld [vmem:[%s1 + $0x748] sm:$0xff]
  %v2607 = vld [vmem:[%s1 + $0x750] sm:$0xff]
  %v2608 = vld [vmem:[%s1 + $0x758] sm:$0xff]
  %v2609 = vld [vmem:[%s1 + $0x760] sm:$0xff]
  %v2610 = vld [vmem:[%s1 + $0x768] sm:$0xff]
  %v2611 = vld [vmem:[%s1 + $0x770] sm:$0xff]
  %v2612 = vld [vmem:[%s1 + $0x778] sm:$0xff]
  %v2613 = vld [vmem:[%s1 + $0x780] sm:$0xff]
  %v2614 = vld [vmem:[%s1 + $0x788] sm:$0xff]
  %v2615 = vld [vmem:[%s1 + $0x790] sm:$0xff]
  %v2616 = vld [vmem:[%s1 + $0x798] sm:$0xff]
  %v2617 = vld [vmem:[%s1 + $0x7a0] sm:$0xff]
  %v2618 = vld [vmem:[%s1 + $0x7a8] sm:$0xff]
  %v2619 = vld [vmem:[%s1 + $0x7b0] sm:$0xff]
  %v2620 = vld [vmem:[%s1 + $0x7b8] sm:$0xff]
  %v2621 = vld [vmem:[%s1 + $0x7c0] sm:$0xff]
  %v2622 = vld [vmem:[%s1 + $0x7c8] sm:$0xff]
  %v2623 = vld [vmem:[%s1 + $0x7d0] sm:$0xff]
  %v2624 = vld [vmem:[%s1 + $0x7d8] sm:$0xff]
  %v2625 = vld [vmem:[%s1 + $0x7e0] sm:$0xff]
  %v2626 = vld [vmem:[%s1 + $0x7e8] sm:$0xff]
  %v2627 = vld [vmem:[%s1 + $0x7f0] sm:$0xff]
  %v2628 = vld [vmem:[%s1 + $0x7f8] sm:$0xff]
  %v2629 = vld [vmem:[%s1 + $0x800] sm:$0xff]
  %v2630 = vld [vmem:[%s1 + $0x808] sm:$0xff]
  %v2631 = vld [vmem:[%s1 + $0x810] sm:$0xff]
  %v2632 = vld [vmem:[%s1 + $0x818] sm:$0xff]
  %v2633 = vld [vmem:[%s1 + $0x820] sm:$0xff]
  %v2634 = vld [vmem:[%s1 + $0x828] sm:$0xff]
  %v2635 = vld [vmem:[%s1 + $0x830] sm:$0xff]
  %v2636 = vld [vmem:[%s1 + $0x838] sm:$0xff]
  %v2637 = vld [vmem:[%s1 + $0x840] sm:$0xff]
  %v2638 = vld [vmem:[%s1 + $0x848] sm:$0xff]
  %v2639 = vld [vmem:[%s1 + $0x850] sm:$0xff]
  %v2640 = vld [vmem:[%s1 + $0x858] sm:$0xff]
  %v2641 = vld [vmem:[%s1 + $0x860] sm:$0xff]
  %v2642 = vld [vmem:[%s1 + $0x868] sm:$0xff]
  %v2643 = vld [vmem:[%s1 + $0x870] sm:$0xff]
  %v2644 = vld [vmem:[%s1 + $0x878] sm:$0xff]
  %v2645 = vld [vmem:[%s1 + $0x880] sm:$0xff]
  %v2646 = vld [vmem:[%s1 + $0x888] sm:$0xff]
  %v2647 = vld [vmem:[%s1 + $0x890] sm:$0xff]
  %v2648 = vld [vmem:[%s1 + $0x898] sm:$0xff]
  %v2649 = vld [vmem:[%s1 + $0x8a0] sm:$0xff]
  %v2650 = vld [vmem:[%s1 + $0x8a8] sm:$0xff]
  %v2651 = vld [vmem:[%s1 + $0x8b0] sm:$0xff]
  %v2652 = vld [vmem:[%s1 + $0x8b8] sm:$0xff]
  %v2653 = vld [vmem:[%s1 + $0x8c0] sm:$0xff]
  %v2654 = vld [vmem:[%s1 + $0x8c8] sm:$0xff]
  %v2655 = vld [vmem:[%s1 + $0x8d0] sm:$0xff]
  %v2656 = vld [vmem:[%s1 + $0x8d8] sm:$0xff]
  %v2657 = vld [vmem:[%s1 + $0x8e0] sm:$0xff]
  %v2658 = vld [vmem:[%s1 + $0x8e8] sm:$0xff]
  %v2659 = vld [vmem:[%s1 + $0x8f0] sm:$0xff]
  %v2660 = vld [vmem:[%s1 + $0x8f8] sm:$0xff]
  %v2661 = vld [vmem:[%s1 + $0x900] sm:$0xff]
  %v2662 = vld [vmem:[%s1 + $0x908] sm:$0xff]
  %v2663 = vld [vmem:[%s1 + $0x910] sm:$0xff]
  %v2664 = vld [vmem:[%s1 + $0x918] sm:$0xff]
  %v2665 = vld [vmem:[%s1 + $0x920] sm:$0xff]
  %v2666 = vld [vmem:[%s1 + $0x928] sm:$0xff]
  %v2667 = vld [vmem:[%s1 + $0x930] sm:$0xff]
  %v2668 = vld [vmem:[%s1 + $0x938] sm:$0xff]
  %v2669 = vld [vmem:[%s1 + $0x940] sm:$0xff]
  %v2670 = vld [vmem:[%s1 + $0x948] sm:$0xff]
  %v2671 = vld [vmem:[%s1 + $0x950] sm:$0xff]
  %v2672 = vld [vmem:[%s1 + $0x958] sm:$0xff]
  %v2673 = vld [vmem:[%s1 + $0x960] sm:$0xff]
  %v2674 = vld [vmem:[%s1 + $0x968] sm:$0xff]
  %v2675 = vld [vmem:[%s1 + $0x970] sm:$0xff]
  %v2676 = vld [vmem:[%s1 + $0x978] sm:$0xff]
  %v2677 = vld [vmem:[%s1 + $0x980] sm:$0xff]
  %v2678 = vld [vmem:[%s1 + $0x988] sm:$0xff]
  %v2679 = vld [vmem:[%s1 + $0x990] sm:$0xff]
  %v2680 = vld [vmem:[%s1 + $0x998] sm:$0xff]
  %v2681 = vld [vmem:[%s1 + $0x9a0] sm:$0xff]
  %v2682 = vld [vmem:[%s1 + $0x9a8] sm:$0xff]
  %v2683 = vld [vmem:[%s1 + $0x9b0] sm:$0xff]
  %v2684 = vld [vmem:[%s1 + $0x9b8] sm:$0xff]
  %v2685 = vld [vmem:[%s1 + $0x9c0] sm:$0xff]
  %v2686 = vld [vmem:[%s1 + $0x9c8] sm:$0xff]
  %v2687 = vld [vmem:[%s1 + $0x9d0] sm:$0xff]
  %v2688 = vld [vmem:[%s1 + $0x9d8] sm:$0xff]
  %v2689 = vld [vmem:[%s1 + $0x9e0] sm:$0xff]
  %v2690 = vld [vmem:[%s1 + $0x9e8] sm:$0xff]
  %v2691 = vld [vmem:[%s1 + $0x9f0] sm:$0xff]
  %v2692 = vld [vmem:[%s1 + $0x9f8] sm:$0xff]
  %v2693 = vld [vmem:[%s1 + $0xa00] sm:$0xff]
  %v2694 = vld [vmem:[%s1 + $0xa08] sm:$0xff]
  %v2695 = vld [vmem:[%s1 + $0xa10] sm:$0xff]
  %v2696 = vld [vmem:[%s1 + $0xa18] sm:$0xff]
  %v2697 = vld [vmem:[%s1 + $0xa20] sm:$0xff]
  %v2698 = vld [vmem:[%s1 + $0xa28] sm:$0xff]
  %v2699 = vld [vmem:[%s1 + $0xa30] sm:$0xff]
  %v2700 = vld [vmem:[%s1 + $0xa38] sm:$0xff]
  %v2701 = vld [vmem:[%s1 + $0xa40] sm:$0xff]
  %v2702 = vld [vmem:[%s1 + $0xa48] sm:$0xff]
  %v2703 = vld [vmem:[%s1 + $0xa50] sm:$0xff]
  %v2704 = vld [vmem:[%s1 + $0xa58] sm:$0xff]
  %v2705 = vld [vmem:[%s1 + $0xa60] sm:$0xff]
  %v2706 = vld [vmem:[%s1 + $0xa68] sm:$0xff]
  %v2707 = vld [vmem:[%s1 + $0xa70] sm:$0xff]
  %v2708 = vld [vmem:[%s1 + $0xa78] sm:$0xff]
  %2710 = vset.pattern.permute.xlu0 0
  %2711 = vperm.xlu0 %2710, %v1702
  %v2712 = vpop.permute.xlu0 %2711
  %2715 = vset.pattern.permute.xlu0 0
  %2716 = vperm.xlu0 %2715, %v1704
  %v2717 = vpop.permute.xlu0 %2716
  %2720 = vset.pattern.permute.xlu0 0
  %2721 = vperm.xlu0 %2720, %v1706
  %v2722 = vpop.permute.xlu0 %2721
  %2725 = vset.pattern.permute.xlu0 0
  %2726 = vperm.xlu0 %2725, %v1708
  %v2727 = vpop.permute.xlu0 %2726
  %2730 = vset.pattern.permute.xlu0 0
  %2731 = vperm.xlu0 %2730, %v1710
  %v2732 = vpop.permute.xlu0 %2731
  %2735 = vset.pattern.permute.xlu0 0
  %2736 = vperm.xlu0 %2735, %v1712
  %v2737 = vpop.permute.xlu0 %2736
  %2740 = vset.pattern.permute.xlu0 0
  %2741 = vperm.xlu0 %2740, %v1714
  %v2742 = vpop.permute.xlu0 %2741
  %2745 = vset.pattern.permute.xlu0 0
  %2746 = vperm.xlu0 %2745, %v1716
  %v2747 = vpop.permute.xlu0 %2746
  %2750 = vset.pattern.permute.xlu0 0
  %2751 = vperm.xlu0 %2750, %v1718
  %v2752 = vpop.permute.xlu0 %2751
  %2755 = vset.pattern.permute.xlu0 0
  %2756 = vperm.xlu0 %2755, %v1720
  %v2757 = vpop.permute.xlu0 %2756
  %2760 = vset.pattern.permute.xlu0 0
  %2761 = vperm.xlu0 %2760, %v1722
  %v2762 = vpop.permute.xlu0 %2761
  %2765 = vset.pattern.permute.xlu0 0
  %2766 = vperm.xlu0 %2765, %v1724
  %v2767 = vpop.permute.xlu0 %2766
  %2770 = vset.pattern.permute.xlu0 0
  %2771 = vperm.xlu0 %2770, %v1726
  %v2772 = vpop.permute.xlu0 %2771
  %2775 = vset.pattern.permute.xlu0 0
  %2776 = vperm.xlu0 %2775, %v1728
  %v2777 = vpop.permute.xlu0 %2776
  %2780 = vset.pattern.permute.xlu0 0
  %2781 = vperm.xlu0 %2780, %v1730
  %v2782 = vpop.permute.xlu0 %2781
  %2785 = vset.pattern.permute.xlu0 0
  %2786 = vperm.xlu0 %2785, %v1732
  %v2787 = vpop.permute.xlu0 %2786
  %2790 = vset.pattern.permute.xlu0 0
  %2791 = vperm.xlu0 %2790, %v1734
  %v2792 = vpop.permute.xlu0 %2791
  %2795 = vset.pattern.permute.xlu0 0
  %2796 = vperm.xlu0 %2795, %v1736
  %v2797 = vpop.permute.xlu0 %2796
  %2800 = vset.pattern.permute.xlu0 0
  %2801 = vperm.xlu0 %2800, %v1738
  %v2802 = vpop.permute.xlu0 %2801
  %2805 = vset.pattern.permute.xlu0 0
  %2806 = vperm.xlu0 %2805, %v1740
  %v2807 = vpop.permute.xlu0 %2806
  %2810 = vset.pattern.permute.xlu0 0
  %2811 = vperm.xlu0 %2810, %v1742
  %v2812 = vpop.permute.xlu0 %2811
  %2815 = vset.pattern.permute.xlu0 0
  %2816 = vperm.xlu0 %2815, %v1744
  %v2817 = vpop.permute.xlu0 %2816
  %2820 = vset.pattern.permute.xlu0 0
  %2821 = vperm.xlu0 %2820, %v1746
  %v2822 = vpop.permute.xlu0 %2821
  %2825 = vset.pattern.permute.xlu0 0
  %2826 = vperm.xlu0 %2825, %v1748
  %v2827 = vpop.permute.xlu0 %2826
  %2830 = vset.pattern.permute.xlu0 0
  %2831 = vperm.xlu0 %2830, %v1750
  %v2832 = vpop.permute.xlu0 %2831
  %2835 = vset.pattern.permute.xlu0 0
  %2836 = vperm.xlu0 %2835, %v1752
  %v2837 = vpop.permute.xlu0 %2836
  %2840 = vset.pattern.permute.xlu0 0
  %2841 = vperm.xlu0 %2840, %v1754
  %v2842 = vpop.permute.xlu0 %2841
  %2845 = vset.pattern.permute.xlu0 0
  %2846 = vperm.xlu0 %2845, %v1756
  %v2847 = vpop.permute.xlu0 %2846
  %2850 = vset.pattern.permute.xlu0 0
  %2851 = vperm.xlu0 %2850, %v1758
  %v2852 = vpop.permute.xlu0 %2851
  %2855 = vset.pattern.permute.xlu0 0
  %2856 = vperm.xlu0 %2855, %v1760
  %v2857 = vpop.permute.xlu0 %2856
  %2860 = vset.pattern.permute.xlu0 0
  %2861 = vperm.xlu0 %2860, %v1762
  %v2862 = vpop.permute.xlu0 %2861
  %2865 = vset.pattern.permute.xlu0 0
  %2866 = vperm.xlu0 %2865, %v1764
  %v2867 = vpop.permute.xlu0 %2866
  %2870 = vset.pattern.permute.xlu0 0
  %2871 = vperm.xlu0 %2870, %v1766
  %v2872 = vpop.permute.xlu0 %2871
  %2875 = vset.pattern.permute.xlu0 0
  %2876 = vperm.xlu0 %2875, %v1768
  %v2877 = vpop.permute.xlu0 %2876
  %2880 = vset.pattern.permute.xlu0 0
  %2881 = vperm.xlu0 %2880, %v1770
  %v2882 = vpop.permute.xlu0 %2881
  %2885 = vset.pattern.permute.xlu0 0
  %2886 = vperm.xlu0 %2885, %v1772
  %v2887 = vpop.permute.xlu0 %2886
  %2890 = vset.pattern.permute.xlu0 0
  %2891 = vperm.xlu0 %2890, %v1774
  %v2892 = vpop.permute.xlu0 %2891
  %2895 = vset.pattern.permute.xlu0 0
  %2896 = vperm.xlu0 %2895, %v1776
  %v2897 = vpop.permute.xlu0 %2896
  %2900 = vset.pattern.permute.xlu0 0
  %2901 = vperm.xlu0 %2900, %v1778
  %v2902 = vpop.permute.xlu0 %2901
  %2905 = vset.pattern.permute.xlu0 0
  %2906 = vperm.xlu0 %2905, %v1780
  %v2907 = vpop.permute.xlu0 %2906
  %2910 = vset.pattern.permute.xlu0 0
  %2911 = vperm.xlu0 %2910, %v1782
  %v2912 = vpop.permute.xlu0 %2911
  %2915 = vset.pattern.permute.xlu0 0
  %2916 = vperm.xlu0 %2915, %v1784
  %v2917 = vpop.permute.xlu0 %2916
  %2920 = vset.pattern.permute.xlu0 0
  %2921 = vperm.xlu0 %2920, %v1786
  %v2922 = vpop.permute.xlu0 %2921
  %2925 = vset.pattern.permute.xlu0 0
  %2926 = vperm.xlu0 %2925, %v1788
  %v2927 = vpop.permute.xlu0 %2926
  %2930 = vset.pattern.permute.xlu0 0
  %2931 = vperm.xlu0 %2930, %v1790
  %v2932 = vpop.permute.xlu0 %2931
  %2935 = vset.pattern.permute.xlu0 0
  %2936 = vperm.xlu0 %2935, %v1792
  %v2937 = vpop.permute.xlu0 %2936
  %2940 = vset.pattern.permute.xlu0 0
  %2941 = vperm.xlu0 %2940, %v1794
  %v2942 = vpop.permute.xlu0 %2941
  %2945 = vset.pattern.permute.xlu0 0
  %2946 = vperm.xlu0 %2945, %v1796
  %v2947 = vpop.permute.xlu0 %2946
  %2950 = vset.pattern.permute.xlu0 0
  %2951 = vperm.xlu0 %2950, %v1798
  %v2952 = vpop.permute.xlu0 %2951
  %2955 = vset.pattern.permute.xlu0 0
  %2956 = vperm.xlu0 %2955, %v1800
  %v2957 = vpop.permute.xlu0 %2956
  %2960 = vset.pattern.permute.xlu0 0
  %2961 = vperm.xlu0 %2960, %v1802
  %v2962 = vpop.permute.xlu0 %2961
  %2965 = vset.pattern.permute.xlu0 0
  %2966 = vperm.xlu0 %2965, %v1804
  %v2967 = vpop.permute.xlu0 %2966
  %2970 = vset.pattern.permute.xlu0 0
  %2971 = vperm.xlu0 %2970, %v1806
  %v2972 = vpop.permute.xlu0 %2971
  %2975 = vset.pattern.permute.xlu0 0
  %2976 = vperm.xlu0 %2975, %v1808
  %v2977 = vpop.permute.xlu0 %2976
  %2980 = vset.pattern.permute.xlu0 0
  %2981 = vperm.xlu0 %2980, %v1810
  %v2982 = vpop.permute.xlu0 %2981
  %2985 = vset.pattern.permute.xlu0 0
  %2986 = vperm.xlu0 %2985, %v1812
  %v2987 = vpop.permute.xlu0 %2986
  %2990 = vset.pattern.permute.xlu0 0
  %2991 = vperm.xlu0 %2990, %v1814
  %v2992 = vpop.permute.xlu0 %2991
  %2995 = vset.pattern.permute.xlu0 0
  %2996 = vperm.xlu0 %2995, %v1816
  %v2997 = vpop.permute.xlu0 %2996
  %3000 = vset.pattern.permute.xlu0 0
  %3001 = vperm.xlu0 %3000, %v1818
  %v3002 = vpop.permute.xlu0 %3001
  %3005 = vset.pattern.permute.xlu0 0
  %3006 = vperm.xlu0 %3005, %v1820
  %v3007 = vpop.permute.xlu0 %3006
  %3010 = vset.pattern.permute.xlu0 0
  %3011 = vperm.xlu0 %3010, %v1822
  %v3012 = vpop.permute.xlu0 %3011
  %3015 = vset.pattern.permute.xlu0 0
  %3016 = vperm.xlu0 %3015, %v1824
  %v3017 = vpop.permute.xlu0 %3016
  %3020 = vset.pattern.permute.xlu0 0
  %3021 = vperm.xlu0 %3020, %v1826
  %v3022 = vpop.permute.xlu0 %3021
  %3025 = vset.pattern.permute.xlu0 0
  %3026 = vperm.xlu0 %3025, %v1828
  %v3027 = vpop.permute.xlu0 %3026
  %3030 = vset.pattern.permute.xlu0 0
  %3031 = vperm.xlu0 %3030, %v1830
  %v3032 = vpop.permute.xlu0 %3031
  %3035 = vset.pattern.permute.xlu0 0
  %3036 = vperm.xlu0 %3035, %v1832
  %v3037 = vpop.permute.xlu0 %3036
  %3040 = vset.pattern.permute.xlu0 0
  %3041 = vperm.xlu0 %3040, %v1834
  %v3042 = vpop.permute.xlu0 %3041
  %3045 = vset.pattern.permute.xlu0 0
  %3046 = vperm.xlu0 %3045, %v1836
  %v3047 = vpop.permute.xlu0 %3046
  %3050 = vset.pattern.permute.xlu0 0
  %3051 = vperm.xlu0 %3050, %v1838
  %v3052 = vpop.permute.xlu0 %3051
  %3055 = vset.pattern.permute.xlu0 0
  %3056 = vperm.xlu0 %3055, %v1840
  %v3057 = vpop.permute.xlu0 %3056
  %3060 = vset.pattern.permute.xlu0 0
  %3061 = vperm.xlu0 %3060, %v1842
  %v3062 = vpop.permute.xlu0 %3061
  %3065 = vset.pattern.permute.xlu0 0
  %3066 = vperm.xlu0 %3065, %v1844
  %v3067 = vpop.permute.xlu0 %3066
  %3070 = vset.pattern.permute.xlu0 0
  %3071 = vperm.xlu0 %3070, %v1846
  %v3072 = vpop.permute.xlu0 %3071
  %3075 = vset.pattern.permute.xlu0 0
  %3076 = vperm.xlu0 %3075, %v1848
  %v3077 = vpop.permute.xlu0 %3076
  %3080 = vset.pattern.permute.xlu0 0
  %3081 = vperm.xlu0 %3080, %v1850
  %v3082 = vpop.permute.xlu0 %3081
  %3085 = vset.pattern.permute.xlu0 0
  %3086 = vperm.xlu0 %3085, %v1852
  %v3087 = vpop.permute.xlu0 %3086
  %3090 = vset.pattern.permute.xlu0 0
  %3091 = vperm.xlu0 %3090, %v1854
  %v3092 = vpop.permute.xlu0 %3091
  %3095 = vset.pattern.permute.xlu0 0
  %3096 = vperm.xlu0 %3095, %v1856
  %v3097 = vpop.permute.xlu0 %3096
  %3100 = vset.pattern.permute.xlu0 0
  %3101 = vperm.xlu0 %3100, %v1858
  %v3102 = vpop.permute.xlu0 %3101
  %3105 = vset.pattern.permute.xlu0 0
  %3106 = vperm.xlu0 %3105, %v1860
  %v3107 = vpop.permute.xlu0 %3106
  %3110 = vset.pattern.permute.xlu0 0
  %3111 = vperm.xlu0 %3110, %v1862
  %v3112 = vpop.permute.xlu0 %3111
  %3115 = vset.pattern.permute.xlu0 0
  %3116 = vperm.xlu0 %3115, %v1864
  %v3117 = vpop.permute.xlu0 %3116
  %3120 = vset.pattern.permute.xlu0 0
  %3121 = vperm.xlu0 %3120, %v1866
  %v3122 = vpop.permute.xlu0 %3121
  %3125 = vset.pattern.permute.xlu0 0
  %3126 = vperm.xlu0 %3125, %v1868
  %v3127 = vpop.permute.xlu0 %3126
  %3130 = vset.pattern.permute.xlu0 0
  %3131 = vperm.xlu0 %3130, %v1870
  %v3132 = vpop.permute.xlu0 %3131
  %3135 = vset.pattern.permute.xlu0 0
  %3136 = vperm.xlu0 %3135, %v1872
  %v3137 = vpop.permute.xlu0 %3136
  %3140 = vset.pattern.permute.xlu0 0
  %3141 = vperm.xlu0 %3140, %v1874
  %v3142 = vpop.permute.xlu0 %3141
  %3145 = vset.pattern.permute.xlu0 0
  %3146 = vperm.xlu0 %3145, %v1876
  %v3147 = vpop.permute.xlu0 %3146
  %3150 = vset.pattern.permute.xlu0 0
  %3151 = vperm.xlu0 %3150, %v1878
  %v3152 = vpop.permute.xlu0 %3151
  %3155 = vset.pattern.permute.xlu0 0
  %3156 = vperm.xlu0 %3155, %v1880
  %v3157 = vpop.permute.xlu0 %3156
  %3160 = vset.pattern.permute.xlu0 0
  %3161 = vperm.xlu0 %3160, %v1882
  %v3162 = vpop.permute.xlu0 %3161
  %3165 = vset.pattern.permute.xlu0 0
  %3166 = vperm.xlu0 %3165, %v1884
  %v3167 = vpop.permute.xlu0 %3166
  %3170 = vset.pattern.permute.xlu0 0
  %3171 = vperm.xlu0 %3170, %v1886
  %v3172 = vpop.permute.xlu0 %3171
  %3175 = vset.pattern.permute.xlu0 0
  %3176 = vperm.xlu0 %3175, %v1888
  %v3177 = vpop.permute.xlu0 %3176
  %3180 = vset.pattern.permute.xlu0 0
  %3181 = vperm.xlu0 %3180, %v1890
  %v3182 = vpop.permute.xlu0 %3181
  %3185 = vset.pattern.permute.xlu0 0
  %3186 = vperm.xlu0 %3185, %v1892
  %v3187 = vpop.permute.xlu0 %3186
  %3190 = vset.pattern.permute.xlu0 0
  %3191 = vperm.xlu0 %3190, %v1894
  %v3192 = vpop.permute.xlu0 %3191
  %3195 = vset.pattern.permute.xlu0 0
  %3196 = vperm.xlu0 %3195, %v1896
  %v3197 = vpop.permute.xlu0 %3196
  %3200 = vset.pattern.permute.xlu0 0
  %3201 = vperm.xlu0 %3200, %v1898
  %v3202 = vpop.permute.xlu0 %3201
  %3205 = vset.pattern.permute.xlu0 0
  %3206 = vperm.xlu0 %3205, %v1900
  %v3207 = vpop.permute.xlu0 %3206
  %3210 = vset.pattern.permute.xlu0 0
  %3211 = vperm.xlu0 %3210, %v1902
  %v3212 = vpop.permute.xlu0 %3211
  %3215 = vset.pattern.permute.xlu0 0
  %3216 = vperm.xlu0 %3215, %v1904
  %v3217 = vpop.permute.xlu0 %3216
  %3220 = vset.pattern.permute.xlu0 0
  %3221 = vperm.xlu0 %3220, %v1906
  %v3222 = vpop.permute.xlu0 %3221
  %3225 = vset.pattern.permute.xlu0 0
  %3226 = vperm.xlu0 %3225, %v1908
  %v3227 = vpop.permute.xlu0 %3226
  %3230 = vset.pattern.permute.xlu0 0
  %3231 = vperm.xlu0 %3230, %v1910
  %v3232 = vpop.permute.xlu0 %3231
  %3235 = vset.pattern.permute.xlu0 0
  %3236 = vperm.xlu0 %3235, %v1912
  %v3237 = vpop.permute.xlu0 %3236
  %3240 = vset.pattern.permute.xlu0 0
  %3241 = vperm.xlu0 %3240, %v1914
  %v3242 = vpop.permute.xlu0 %3241
  %3245 = vset.pattern.permute.xlu0 0
  %3246 = vperm.xlu0 %3245, %v1916
  %v3247 = vpop.permute.xlu0 %3246
  %3250 = vset.pattern.permute.xlu0 0
  %3251 = vperm.xlu0 %3250, %v1918
  %v3252 = vpop.permute.xlu0 %3251
  %3255 = vset.pattern.permute.xlu0 0
  %3256 = vperm.xlu0 %3255, %v1920
  %v3257 = vpop.permute.xlu0 %3256
  %3260 = vset.pattern.permute.xlu0 0
  %3261 = vperm.xlu0 %3260, %v1922
  %v3262 = vpop.permute.xlu0 %3261
  %3265 = vset.pattern.permute.xlu0 0
  %3266 = vperm.xlu0 %3265, %v1924
  %v3267 = vpop.permute.xlu0 %3266
  %3270 = vset.pattern.permute.xlu0 0
  %3271 = vperm.xlu0 %3270, %v1926
  %v3272 = vpop.permute.xlu0 %3271
  %3275 = vset.pattern.permute.xlu0 0
  %3276 = vperm.xlu0 %3275, %v1928
  %v3277 = vpop.permute.xlu0 %3276
  %3280 = vset.pattern.permute.xlu0 0
  %3281 = vperm.xlu0 %3280, %v1930
  %v3282 = vpop.permute.xlu0 %3281
  %3285 = vset.pattern.permute.xlu0 0
  %3286 = vperm.xlu0 %3285, %v1932
  %v3287 = vpop.permute.xlu0 %3286
  %3290 = vset.pattern.permute.xlu0 0
  %3291 = vperm.xlu0 %3290, %v1934
  %v3292 = vpop.permute.xlu0 %3291
  %3295 = vset.pattern.permute.xlu0 0
  %3296 = vperm.xlu0 %3295, %v1936
  %v3297 = vpop.permute.xlu0 %3296
  %3300 = vset.pattern.permute.xlu0 0
  %3301 = vperm.xlu0 %3300, %v1938
  %v3302 = vpop.permute.xlu0 %3301
  %3305 = vset.pattern.permute.xlu0 0
  %3306 = vperm.xlu0 %3305, %v1940
  %v3307 = vpop.permute.xlu0 %3306
  %3310 = vset.pattern.permute.xlu0 0
  %3311 = vperm.xlu0 %3310, %v1942
  %v3312 = vpop.permute.xlu0 %3311
  %3315 = vset.pattern.permute.xlu0 0
  %3316 = vperm.xlu0 %3315, %v1944
  %v3317 = vpop.permute.xlu0 %3316
  %3320 = vset.pattern.permute.xlu0 0
  %3321 = vperm.xlu0 %3320, %v1946
  %v3322 = vpop.permute.xlu0 %3321
  %3325 = vset.pattern.permute.xlu0 0
  %3326 = vperm.xlu0 %3325, %v1948
  %v3327 = vpop.permute.xlu0 %3326
  %3330 = vset.pattern.permute.xlu0 0
  %3331 = vperm.xlu0 %3330, %v1950
  %v3332 = vpop.permute.xlu0 %3331
  %3335 = vset.pattern.permute.xlu0 0
  %3336 = vperm.xlu0 %3335, %v1952
  %v3337 = vpop.permute.xlu0 %3336
  %3340 = vset.pattern.permute.xlu0 0
  %3341 = vperm.xlu0 %3340, %v1954
  %v3342 = vpop.permute.xlu0 %3341
  %3345 = vset.pattern.permute.xlu0 0
  %3346 = vperm.xlu0 %3345, %v1956
  %v3347 = vpop.permute.xlu0 %3346
  %3350 = vset.pattern.permute.xlu0 0
  %3351 = vperm.xlu0 %3350, %v1958
  %v3352 = vpop.permute.xlu0 %3351
  %3355 = vset.pattern.permute.xlu0 0
  %3356 = vperm.xlu0 %3355, %v1960
  %v3357 = vpop.permute.xlu0 %3356
  %3360 = vset.pattern.permute.xlu0 0
  %3361 = vperm.xlu0 %3360, %v1962
  %v3362 = vpop.permute.xlu0 %3361
  %3365 = vset.pattern.permute.xlu0 0
  %3366 = vperm.xlu0 %3365, %v1964
  %v3367 = vpop.permute.xlu0 %3366
  %3370 = vset.pattern.permute.xlu0 0
  %3371 = vperm.xlu0 %3370, %v1966
  %v3372 = vpop.permute.xlu0 %3371
  %3375 = vset.pattern.permute.xlu0 0
  %3376 = vperm.xlu0 %3375, %v1968
  %v3377 = vpop.permute.xlu0 %3376
  %3380 = vset.pattern.permute.xlu0 0
  %3381 = vperm.xlu0 %3380, %v1970
  %v3382 = vpop.permute.xlu0 %3381
  %3385 = vset.pattern.permute.xlu0 0
  %3386 = vperm.xlu0 %3385, %v1972
  %v3387 = vpop.permute.xlu0 %3386
  %3390 = vset.pattern.permute.xlu0 0
  %3391 = vperm.xlu0 %3390, %v1974
  %v3392 = vpop.permute.xlu0 %3391
  %3395 = vset.pattern.permute.xlu0 0
  %3396 = vperm.xlu0 %3395, %v1976
  %v3397 = vpop.permute.xlu0 %3396
  %3400 = vset.pattern.permute.xlu0 0
  %3401 = vperm.xlu0 %3400, %v1978
  %v3402 = vpop.permute.xlu0 %3401
  %3405 = vset.pattern.permute.xlu0 0
  %3406 = vperm.xlu0 %3405, %v1980
  %v3407 = vpop.permute.xlu0 %3406
  %3410 = vset.pattern.permute.xlu0 0
  %3411 = vperm.xlu0 %3410, %v1982
  %v3412 = vpop.permute.xlu0 %3411
  %3415 = vset.pattern.permute.xlu0 0
  %3416 = vperm.xlu0 %3415, %v1984
  %v3417 = vpop.permute.xlu0 %3416
  %3420 = vset.pattern.permute.xlu0 0
  %3421 = vperm.xlu0 %3420, %v1986
  %v3422 = vpop.permute.xlu0 %3421
  %3425 = vset.pattern.permute.xlu0 0
  %3426 = vperm.xlu0 %3425, %v1988
  %v3427 = vpop.permute.xlu0 %3426
  %3430 = vset.pattern.permute.xlu0 0
  %3431 = vperm.xlu0 %3430, %v1990
  %v3432 = vpop.permute.xlu0 %3431
  %3435 = vset.pattern.permute.xlu0 0
  %3436 = vperm.xlu0 %3435, %v1992
  %v3437 = vpop.permute.xlu0 %3436
  %3440 = vset.pattern.permute.xlu0 0
  %3441 = vperm.xlu0 %3440, %v1994
  %v3442 = vpop.permute.xlu0 %3441
  %3445 = vset.pattern.permute.xlu0 0
  %3446 = vperm.xlu0 %3445, %v1996
  %v3447 = vpop.permute.xlu0 %3446
  %3450 = vset.pattern.permute.xlu0 0
  %3451 = vperm.xlu0 %3450, %v1998
  %v3452 = vpop.permute.xlu0 %3451
  %3455 = vset.pattern.permute.xlu0 0
  %3456 = vperm.xlu0 %3455, %v2000
  %v3457 = vpop.permute.xlu0 %3456
  %3460 = vset.pattern.permute.xlu0 0
  %3461 = vperm.xlu0 %3460, %v2002
  %v3462 = vpop.permute.xlu0 %3461
  %3465 = vset.pattern.permute.xlu0 0
  %3466 = vperm.xlu0 %3465, %v2004
  %v3467 = vpop.permute.xlu0 %3466
  %3470 = vset.pattern.permute.xlu0 0
  %3471 = vperm.xlu0 %3470, %v2006
  %v3472 = vpop.permute.xlu0 %3471
  %3475 = vset.pattern.permute.xlu0 0
  %3476 = vperm.xlu0 %3475, %v2008
  %v3477 = vpop.permute.xlu0 %3476
  %3480 = vset.pattern.permute.xlu0 0
  %3481 = vperm.xlu0 %3480, %v2010
  %v3482 = vpop.permute.xlu0 %3481
  %3485 = vset.pattern.permute.xlu0 0
  %3486 = vperm.xlu0 %3485, %v2012
  %v3487 = vpop.permute.xlu0 %3486
  %3490 = vset.pattern.permute.xlu0 0
  %3491 = vperm.xlu0 %3490, %v2014
  %v3492 = vpop.permute.xlu0 %3491
  %3495 = vset.pattern.permute.xlu0 0
  %3496 = vperm.xlu0 %3495, %v2016
  %v3497 = vpop.permute.xlu0 %3496
  %3500 = vset.pattern.permute.xlu0 0
  %3501 = vperm.xlu0 %3500, %v2018
  %v3502 = vpop.permute.xlu0 %3501
  %3505 = vset.pattern.permute.xlu0 0
  %3506 = vperm.xlu0 %3505, %v2020
  %v3507 = vpop.permute.xlu0 %3506
  %3510 = vset.pattern.permute.xlu0 0
  %3511 = vperm.xlu0 %3510, %v2022
  %v3512 = vpop.permute.xlu0 %3511
  %3515 = vset.pattern.permute.xlu0 0
  %3516 = vperm.xlu0 %3515, %v2024
  %v3517 = vpop.permute.xlu0 %3516
  %3520 = vset.pattern.permute.xlu0 0
  %3521 = vperm.xlu0 %3520, %v2026
  %v3522 = vpop.permute.xlu0 %3521
  %3525 = vset.pattern.permute.xlu0 0
  %3526 = vperm.xlu0 %3525, %v2028
  %v3527 = vpop.permute.xlu0 %3526
  %3530 = vset.pattern.permute.xlu0 0
  %3531 = vperm.xlu0 %3530, %v2030
  %v3532 = vpop.permute.xlu0 %3531
  %3535 = vset.pattern.permute.xlu0 0
  %3536 = vperm.xlu0 %3535, %v2032
  %v3537 = vpop.permute.xlu0 %3536
  %3540 = vset.pattern.permute.xlu0 0
  %3541 = vperm.xlu0 %3540, %v2034
  %v3542 = vpop.permute.xlu0 %3541
  %3545 = vset.pattern.permute.xlu0 0
  %3546 = vperm.xlu0 %3545, %v2036
  %v3547 = vpop.permute.xlu0 %3546
  %3550 = vset.pattern.permute.xlu0 0
  %3551 = vperm.xlu0 %3550, %v2038
  %v3552 = vpop.permute.xlu0 %3551
  %3555 = vset.pattern.permute.xlu0 0
  %3556 = vperm.xlu0 %3555, %v2040
  %v3557 = vpop.permute.xlu0 %3556
  %3560 = vset.pattern.permute.xlu0 0
  %3561 = vperm.xlu0 %3560, %v2042
  %v3562 = vpop.permute.xlu0 %3561
  %3565 = vset.pattern.permute.xlu0 0
  %3566 = vperm.xlu0 %3565, %v2044
  %v3567 = vpop.permute.xlu0 %3566
  %3570 = vset.pattern.permute.xlu0 0
  %3571 = vperm.xlu0 %3570, %v2046
  %v3572 = vpop.permute.xlu0 %3571
  %3575 = vset.pattern.permute.xlu0 0
  %3576 = vperm.xlu0 %3575, %v2048
  %v3577 = vpop.permute.xlu0 %3576
  %3580 = vset.pattern.permute.xlu0 0
  %3581 = vperm.xlu0 %3580, %v2050
  %v3582 = vpop.permute.xlu0 %3581
  %3585 = vset.pattern.permute.xlu0 0
  %3586 = vperm.xlu0 %3585, %v2052
  %v3587 = vpop.permute.xlu0 %3586
  %3590 = vset.pattern.permute.xlu0 0
  %3591 = vperm.xlu0 %3590, %v2054
  %v3592 = vpop.permute.xlu0 %3591
  %3595 = vset.pattern.permute.xlu0 0
  %3596 = vperm.xlu0 %3595, %v2056
  %v3597 = vpop.permute.xlu0 %3596
  %3600 = vset.pattern.permute.xlu0 0
  %3601 = vperm.xlu0 %3600, %v2058
  %v3602 = vpop.permute.xlu0 %3601
  %3605 = vset.pattern.permute.xlu0 0
  %3606 = vperm.xlu0 %3605, %v2060
  %v3607 = vpop.permute.xlu0 %3606
  %3610 = vset.pattern.permute.xlu0 0
  %3611 = vperm.xlu0 %3610, %v2062
  %v3612 = vpop.permute.xlu0 %3611
  %3615 = vset.pattern.permute.xlu0 0
  %3616 = vperm.xlu0 %3615, %v2064
  %v3617 = vpop.permute.xlu0 %3616
  %3620 = vset.pattern.permute.xlu0 0
  %3621 = vperm.xlu0 %3620, %v2066
  %v3622 = vpop.permute.xlu0 %3621
  %3625 = vset.pattern.permute.xlu0 0
  %3626 = vperm.xlu0 %3625, %v2068
  %v3627 = vpop.permute.xlu0 %3626
  %3630 = vset.pattern.permute.xlu0 0
  %3631 = vperm.xlu0 %3630, %v2070
  %v3632 = vpop.permute.xlu0 %3631
  %3635 = vset.pattern.permute.xlu0 0
  %3636 = vperm.xlu0 %3635, %v2072
  %v3637 = vpop.permute.xlu0 %3636
  %3640 = vset.pattern.permute.xlu0 0
  %3641 = vperm.xlu0 %3640, %v2074
  %v3642 = vpop.permute.xlu0 %3641
  %3645 = vset.pattern.permute.xlu0 0
  %3646 = vperm.xlu0 %3645, %v2076
  %v3647 = vpop.permute.xlu0 %3646
  %3650 = vset.pattern.permute.xlu0 0
  %3651 = vperm.xlu0 %3650, %v2078
  %v3652 = vpop.permute.xlu0 %3651
  %3655 = vset.pattern.permute.xlu0 0
  %3656 = vperm.xlu0 %3655, %v2080
  %v3657 = vpop.permute.xlu0 %3656
  %3660 = vset.pattern.permute.xlu0 0
  %3661 = vperm.xlu0 %3660, %v2082
  %v3662 = vpop.permute.xlu0 %3661
  %3665 = vset.pattern.permute.xlu0 0
  %3666 = vperm.xlu0 %3665, %v2084
  %v3667 = vpop.permute.xlu0 %3666
  %3670 = vset.pattern.permute.xlu0 0
  %3671 = vperm.xlu0 %3670, %v2086
  %v3672 = vpop.permute.xlu0 %3671
  %3675 = vset.pattern.permute.xlu0 0
  %3676 = vperm.xlu0 %3675, %v2088
  %v3677 = vpop.permute.xlu0 %3676
  %3680 = vset.pattern.permute.xlu0 0
  %3681 = vperm.xlu0 %3680, %v2090
  %v3682 = vpop.permute.xlu0 %3681
  %3685 = vset.pattern.permute.xlu0 0
  %3686 = vperm.xlu0 %3685, %v2092
  %v3687 = vpop.permute.xlu0 %3686
  %3690 = vset.pattern.permute.xlu0 0
  %3691 = vperm.xlu0 %3690, %v2094
  %v3692 = vpop.permute.xlu0 %3691
  %3695 = vset.pattern.permute.xlu0 0
  %3696 = vperm.xlu0 %3695, %v2096
  %v3697 = vpop.permute.xlu0 %3696
  %3700 = vset.pattern.permute.xlu0 0
  %3701 = vperm.xlu0 %3700, %v2098
  %v3702 = vpop.permute.xlu0 %3701
  %3705 = vset.pattern.permute.xlu0 0
  %3706 = vperm.xlu0 %3705, %v2100
  %v3707 = vpop.permute.xlu0 %3706
  %3710 = vset.pattern.permute.xlu0 0
  %3711 = vperm.xlu0 %3710, %v2102
  %v3712 = vpop.permute.xlu0 %3711
  %3715 = vset.pattern.permute.xlu0 0
  %3716 = vperm.xlu0 %3715, %v2104
  %v3717 = vpop.permute.xlu0 %3716
  %3720 = vset.pattern.permute.xlu0 0
  %3721 = vperm.xlu0 %3720, %v2106
  %v3722 = vpop.permute.xlu0 %3721
  %3725 = vset.pattern.permute.xlu0 0
  %3726 = vperm.xlu0 %3725, %v2108
  %v3727 = vpop.permute.xlu0 %3726
  %3730 = vset.pattern.permute.xlu0 0
  %3731 = vperm.xlu0 %3730, %v2110
  %v3732 = vpop.permute.xlu0 %3731
  %3735 = vset.pattern.permute.xlu0 0
  %3736 = vperm.xlu0 %3735, %v2112
  %v3737 = vpop.permute.xlu0 %3736
  %3740 = vset.pattern.permute.xlu0 0
  %3741 = vperm.xlu0 %3740, %v2114
  %v3742 = vpop.permute.xlu0 %3741
  %3745 = vset.pattern.permute.xlu0 0
  %3746 = vperm.xlu0 %3745, %v2116
  %v3747 = vpop.permute.xlu0 %3746
  %3750 = vset.pattern.permute.xlu0 0
  %3751 = vperm.xlu0 %3750, %v2118
  %v3752 = vpop.permute.xlu0 %3751
  %3755 = vset.pattern.permute.xlu0 0
  %3756 = vperm.xlu0 %3755, %v2120
  %v3757 = vpop.permute.xlu0 %3756
  %3760 = vset.pattern.permute.xlu0 0
  %3761 = vperm.xlu0 %3760, %v2122
  %v3762 = vpop.permute.xlu0 %3761
  %3765 = vset.pattern.permute.xlu0 0
  %3766 = vperm.xlu0 %3765, %v2124
  %v3767 = vpop.permute.xlu0 %3766
  %3770 = vset.pattern.permute.xlu0 0
  %3771 = vperm.xlu0 %3770, %v2126
  %v3772 = vpop.permute.xlu0 %3771
  %3775 = vset.pattern.permute.xlu0 0
  %3776 = vperm.xlu0 %3775, %v2128
  %v3777 = vpop.permute.xlu0 %3776
  %3780 = vset.pattern.permute.xlu0 0
  %3781 = vperm.xlu0 %3780, %v2130
  %v3782 = vpop.permute.xlu0 %3781
  %3785 = vset.pattern.permute.xlu0 0
  %3786 = vperm.xlu0 %3785, %v2132
  %v3787 = vpop.permute.xlu0 %3786
  %3790 = vset.pattern.permute.xlu0 0
  %3791 = vperm.xlu0 %3790, %v2134
  %v3792 = vpop.permute.xlu0 %3791
  %3795 = vset.pattern.permute.xlu0 0
  %3796 = vperm.xlu0 %3795, %v2136
  %v3797 = vpop.permute.xlu0 %3796
  %3800 = vset.pattern.permute.xlu0 0
  %3801 = vperm.xlu0 %3800, %v2138
  %v3802 = vpop.permute.xlu0 %3801
  %3805 = vset.pattern.permute.xlu0 0
  %3806 = vperm.xlu0 %3805, %v2140
  %v3807 = vpop.permute.xlu0 %3806
  %3810 = vset.pattern.permute.xlu0 0
  %3811 = vperm.xlu0 %3810, %v2142
  %v3812 = vpop.permute.xlu0 %3811
  %3815 = vset.pattern.permute.xlu0 0
  %3816 = vperm.xlu0 %3815, %v2144
  %v3817 = vpop.permute.xlu0 %3816
  %3820 = vset.pattern.permute.xlu0 0
  %3821 = vperm.xlu0 %3820, %v2146
  %v3822 = vpop.permute.xlu0 %3821
  %3825 = vset.pattern.permute.xlu0 0
  %3826 = vperm.xlu0 %3825, %v2148
  %v3827 = vpop.permute.xlu0 %3826
  %3830 = vset.pattern.permute.xlu0 0
  %3831 = vperm.xlu0 %3830, %v2150
  %v3832 = vpop.permute.xlu0 %3831
  %3835 = vset.pattern.permute.xlu0 0
  %3836 = vperm.xlu0 %3835, %v2152
  %v3837 = vpop.permute.xlu0 %3836
  %3840 = vset.pattern.permute.xlu0 0
  %3841 = vperm.xlu0 %3840, %v2154
  %v3842 = vpop.permute.xlu0 %3841
  %3845 = vset.pattern.permute.xlu0 0
  %3846 = vperm.xlu0 %3845, %v2156
  %v3847 = vpop.permute.xlu0 %3846
  %3850 = vset.pattern.permute.xlu0 0
  %3851 = vperm.xlu0 %3850, %v2158
  %v3852 = vpop.permute.xlu0 %3851
  %3855 = vset.pattern.permute.xlu0 0
  %3856 = vperm.xlu0 %3855, %v2160
  %v3857 = vpop.permute.xlu0 %3856
  %3860 = vset.pattern.permute.xlu0 0
  %3861 = vperm.xlu0 %3860, %v2162
  %v3862 = vpop.permute.xlu0 %3861
  %3865 = vset.pattern.permute.xlu0 0
  %3866 = vperm.xlu0 %3865, %v2164
  %v3867 = vpop.permute.xlu0 %3866
  %3870 = vset.pattern.permute.xlu0 0
  %3871 = vperm.xlu0 %3870, %v2166
  %v3872 = vpop.permute.xlu0 %3871
  %3875 = vset.pattern.permute.xlu0 0
  %3876 = vperm.xlu0 %3875, %v2168
  %v3877 = vpop.permute.xlu0 %3876
  %3880 = vset.pattern.permute.xlu0 0
  %3881 = vperm.xlu0 %3880, %v2170
  %v3882 = vpop.permute.xlu0 %3881
  %3885 = vset.pattern.permute.xlu0 0
  %3886 = vperm.xlu0 %3885, %v2172
  %v3887 = vpop.permute.xlu0 %3886
  %3890 = vset.pattern.permute.xlu0 0
  %3891 = vperm.xlu0 %3890, %v2174
  %v3892 = vpop.permute.xlu0 %3891
  %3895 = vset.pattern.permute.xlu0 0
  %3896 = vperm.xlu0 %3895, %v2176
  %v3897 = vpop.permute.xlu0 %3896
  %3900 = vset.pattern.permute.xlu0 0
  %3901 = vperm.xlu0 %3900, %v2178
  %v3902 = vpop.permute.xlu0 %3901
  %3905 = vset.pattern.permute.xlu0 0
  %3906 = vperm.xlu0 %3905, %v2180
  %v3907 = vpop.permute.xlu0 %3906
  %3910 = vset.pattern.permute.xlu0 0
  %3911 = vperm.xlu0 %3910, %v2182
  %v3912 = vpop.permute.xlu0 %3911
  %3915 = vset.pattern.permute.xlu0 0
  %3916 = vperm.xlu0 %3915, %v2184
  %v3917 = vpop.permute.xlu0 %3916
  %3920 = vset.pattern.permute.xlu0 0
  %3921 = vperm.xlu0 %3920, %v2186
  %v3922 = vpop.permute.xlu0 %3921
  %3925 = vset.pattern.permute.xlu0 0
  %3926 = vperm.xlu0 %3925, %v2188
  %v3927 = vpop.permute.xlu0 %3926
  %3930 = vset.pattern.permute.xlu0 0
  %3931 = vperm.xlu0 %3930, %v2190
  %v3932 = vpop.permute.xlu0 %3931
  %3935 = vset.pattern.permute.xlu0 0
  %3936 = vperm.xlu0 %3935, %v2192
  %v3937 = vpop.permute.xlu0 %3936
  %3940 = vset.pattern.permute.xlu0 0
  %3941 = vperm.xlu0 %3940, %v2194
  %v3942 = vpop.permute.xlu0 %3941
  %3945 = vset.pattern.permute.xlu0 0
  %3946 = vperm.xlu0 %3945, %v2196
  %v3947 = vpop.permute.xlu0 %3946
  %3950 = vset.pattern.permute.xlu0 0
  %3951 = vperm.xlu0 %3950, %v2198
  %v3952 = vpop.permute.xlu0 %3951
  %3955 = vset.pattern.permute.xlu0 0
  %3956 = vperm.xlu0 %3955, %v2200
  %v3957 = vpop.permute.xlu0 %3956
  %3960 = vset.pattern.permute.xlu0 0
  %3961 = vperm.xlu0 %3960, %v2202
  %v3962 = vpop.permute.xlu0 %3961
  %3965 = vset.pattern.permute.xlu0 0
  %3966 = vperm.xlu0 %3965, %v2204
  %v3967 = vpop.permute.xlu0 %3966
  %3970 = vset.pattern.permute.xlu0 0
  %3971 = vperm.xlu0 %3970, %v2206
  %v3972 = vpop.permute.xlu0 %3971
  %3975 = vset.pattern.permute.xlu0 0
  %3976 = vperm.xlu0 %3975, %v2208
  %v3977 = vpop.permute.xlu0 %3976
  %3980 = vset.pattern.permute.xlu0 0
  %3981 = vperm.xlu0 %3980, %v2210
  %v3982 = vpop.permute.xlu0 %3981
  %3985 = vset.pattern.permute.xlu0 0
  %3986 = vperm.xlu0 %3985, %v2212
  %v3987 = vpop.permute.xlu0 %3986
  %3990 = vset.pattern.permute.xlu0 0
  %3991 = vperm.xlu0 %3990, %v2214
  %v3992 = vpop.permute.xlu0 %3991
  %3995 = vset.pattern.permute.xlu0 0
  %3996 = vperm.xlu0 %3995, %v2216
  %v3997 = vpop.permute.xlu0 %3996
  %4000 = vset.pattern.permute.xlu0 0
  %4001 = vperm.xlu0 %4000, %v2218
  %v4002 = vpop.permute.xlu0 %4001
  %4005 = vset.pattern.permute.xlu0 0
  %4006 = vperm.xlu0 %4005, %v2220
  %v4007 = vpop.permute.xlu0 %4006
  %4010 = vset.pattern.permute.xlu0 0
  %4011 = vperm.xlu0 %4010, %v2222
  %v4012 = vpop.permute.xlu0 %4011
  %4015 = vset.pattern.permute.xlu0 0
  %4016 = vperm.xlu0 %4015, %v2224
  %v4017 = vpop.permute.xlu0 %4016
  %4020 = vset.pattern.permute.xlu0 0
  %4021 = vperm.xlu0 %4020, %v2226
  %v4022 = vpop.permute.xlu0 %4021
  %4025 = vset.pattern.permute.xlu0 0
  %4026 = vperm.xlu0 %4025, %v2228
  %v4027 = vpop.permute.xlu0 %4026
  %4030 = vset.pattern.permute.xlu0 0
  %4031 = vperm.xlu0 %4030, %v2230
  %v4032 = vpop.permute.xlu0 %4031
  %4035 = vset.pattern.permute.xlu0 0
  %4036 = vperm.xlu0 %4035, %v2232
  %v4037 = vpop.permute.xlu0 %4036
  %4040 = vset.pattern.permute.xlu0 0
  %4041 = vperm.xlu0 %4040, %v2234
  %v4042 = vpop.permute.xlu0 %4041
  %4045 = vset.pattern.permute.xlu0 0
  %4046 = vperm.xlu0 %4045, %v2236
  %v4047 = vpop.permute.xlu0 %4046
  %4050 = vset.pattern.permute.xlu0 0
  %4051 = vperm.xlu0 %4050, %v2238
  %v4052 = vpop.permute.xlu0 %4051
  %4055 = vset.pattern.permute.xlu0 0
  %4056 = vperm.xlu0 %4055, %v2240
  %v4057 = vpop.permute.xlu0 %4056
  %4060 = vset.pattern.permute.xlu0 0
  %4061 = vperm.xlu0 %4060, %v2242
  %v4062 = vpop.permute.xlu0 %4061
  %4065 = vset.pattern.permute.xlu0 0
  %4066 = vperm.xlu0 %4065, %v2244
  %v4067 = vpop.permute.xlu0 %4066
  %4070 = vset.pattern.permute.xlu0 0
  %4071 = vperm.xlu0 %4070, %v2246
  %v4072 = vpop.permute.xlu0 %4071
  %4075 = vset.pattern.permute.xlu0 0
  %4076 = vperm.xlu0 %4075, %v2248
  %v4077 = vpop.permute.xlu0 %4076
  %4080 = vset.pattern.permute.xlu0 0
  %4081 = vperm.xlu0 %4080, %v2250
  %v4082 = vpop.permute.xlu0 %4081
  %4085 = vset.pattern.permute.xlu0 0
  %4086 = vperm.xlu0 %4085, %v2252
  %v4087 = vpop.permute.xlu0 %4086
  %4090 = vset.pattern.permute.xlu0 0
  %4091 = vperm.xlu0 %4090, %v2254
  %v4092 = vpop.permute.xlu0 %4091
  %4095 = vset.pattern.permute.xlu0 0
  %4096 = vperm.xlu0 %4095, %v2256
  %v4097 = vpop.permute.xlu0 %4096
  %4100 = vset.pattern.permute.xlu0 0
  %4101 = vperm.xlu0 %4100, %v2258
  %v4102 = vpop.permute.xlu0 %4101
  %4105 = vset.pattern.permute.xlu0 0
  %4106 = vperm.xlu0 %4105, %v2260
  %v4107 = vpop.permute.xlu0 %4106
  %4110 = vset.pattern.permute.xlu0 0
  %4111 = vperm.xlu0 %4110, %v2262
  %v4112 = vpop.permute.xlu0 %4111
  %4115 = vset.pattern.permute.xlu0 0
  %4116 = vperm.xlu0 %4115, %v2264
  %v4117 = vpop.permute.xlu0 %4116
  %4120 = vset.pattern.permute.xlu0 0
  %4121 = vperm.xlu0 %4120, %v2266
  %v4122 = vpop.permute.xlu0 %4121
  %4125 = vset.pattern.permute.xlu0 0
  %4126 = vperm.xlu0 %4125, %v2268
  %v4127 = vpop.permute.xlu0 %4126
  %4130 = vset.pattern.permute.xlu0 0
  %4131 = vperm.xlu0 %4130, %v2270
  %v4132 = vpop.permute.xlu0 %4131
  %4135 = vset.pattern.permute.xlu0 0
  %4136 = vperm.xlu0 %4135, %v2272
  %v4137 = vpop.permute.xlu0 %4136
  %4140 = vset.pattern.permute.xlu0 0
  %4141 = vperm.xlu0 %4140, %v2274
  %v4142 = vpop.permute.xlu0 %4141
  %4145 = vset.pattern.permute.xlu0 0
  %4146 = vperm.xlu0 %4145, %v2276
  %v4147 = vpop.permute.xlu0 %4146
  %4150 = vset.pattern.permute.xlu0 0
  %4151 = vperm.xlu0 %4150, %v2278
  %v4152 = vpop.permute.xlu0 %4151
  %4155 = vset.pattern.permute.xlu0 0
  %4156 = vperm.xlu0 %4155, %v2280
  %v4157 = vpop.permute.xlu0 %4156
  %4160 = vset.pattern.permute.xlu0 0
  %4161 = vperm.xlu0 %4160, %v2282
  %v4162 = vpop.permute.xlu0 %4161
  %4165 = vset.pattern.permute.xlu0 0
  %4166 = vperm.xlu0 %4165, %v2284
  %v4167 = vpop.permute.xlu0 %4166
  %4170 = vset.pattern.permute.xlu0 0
  %4171 = vperm.xlu0 %4170, %v2286
  %v4172 = vpop.permute.xlu0 %4171
  %4175 = vset.pattern.permute.xlu0 0
  %4176 = vperm.xlu0 %4175, %v2288
  %v4177 = vpop.permute.xlu0 %4176
  %4180 = vset.pattern.permute.xlu0 0
  %4181 = vperm.xlu0 %4180, %v2290
  %v4182 = vpop.permute.xlu0 %4181
  %4185 = vset.pattern.permute.xlu0 0
  %4186 = vperm.xlu0 %4185, %v2292
  %v4187 = vpop.permute.xlu0 %4186
  %4190 = vset.pattern.permute.xlu0 0
  %4191 = vperm.xlu0 %4190, %v2294
  %v4192 = vpop.permute.xlu0 %4191
  %4195 = vset.pattern.permute.xlu0 0
  %4196 = vperm.xlu0 %4195, %v2296
  %v4197 = vpop.permute.xlu0 %4196
  %4200 = vset.pattern.permute.xlu0 0
  %4201 = vperm.xlu0 %4200, %v2298
  %v4202 = vpop.permute.xlu0 %4201
  %4205 = vset.pattern.permute.xlu0 0
  %4206 = vperm.xlu0 %4205, %v2300
  %v4207 = vpop.permute.xlu0 %4206
  %4210 = vset.pattern.permute.xlu0 0
  %4211 = vperm.xlu0 %4210, %v2302
  %v4212 = vpop.permute.xlu0 %4211
  %4215 = vset.pattern.permute.xlu0 0
  %4216 = vperm.xlu0 %4215, %v2304
  %v4217 = vpop.permute.xlu0 %4216
  %4220 = vset.pattern.permute.xlu0 0
  %4221 = vperm.xlu0 %4220, %v2306
  %v4222 = vpop.permute.xlu0 %4221
  %4225 = vset.pattern.permute.xlu0 0
  %4226 = vperm.xlu0 %4225, %v2308
  %v4227 = vpop.permute.xlu0 %4226
  %4230 = vset.pattern.permute.xlu0 0
  %4231 = vperm.xlu0 %4230, %v2310
  %v4232 = vpop.permute.xlu0 %4231
  %4235 = vset.pattern.permute.xlu0 0
  %4236 = vperm.xlu0 %4235, %v2312
  %v4237 = vpop.permute.xlu0 %4236
  %4240 = vset.pattern.permute.xlu0 0
  %4241 = vperm.xlu0 %4240, %v2314
  %v4242 = vpop.permute.xlu0 %4241
  %4245 = vset.pattern.permute.xlu0 0
  %4246 = vperm.xlu0 %4245, %v2316
  %v4247 = vpop.permute.xlu0 %4246
  %4250 = vset.pattern.permute.xlu0 0
  %4251 = vperm.xlu0 %4250, %v2318
  %v4252 = vpop.permute.xlu0 %4251
  %4255 = vset.pattern.permute.xlu0 0
  %4256 = vperm.xlu0 %4255, %v2320
  %v4257 = vpop.permute.xlu0 %4256
  %4260 = vset.pattern.permute.xlu0 0
  %4261 = vperm.xlu0 %4260, %v2322
  %v4262 = vpop.permute.xlu0 %4261
  %4265 = vset.pattern.permute.xlu0 0
  %4266 = vperm.xlu0 %4265, %v2324
  %v4267 = vpop.permute.xlu0 %4266
  %4270 = vset.pattern.permute.xlu0 0
  %4271 = vperm.xlu0 %4270, %v2326
  %v4272 = vpop.permute.xlu0 %4271
  %4275 = vset.pattern.permute.xlu0 0
  %4276 = vperm.xlu0 %4275, %v2328
  %v4277 = vpop.permute.xlu0 %4276
  %4280 = vset.pattern.permute.xlu0 0
  %4281 = vperm.xlu0 %4280, %v2330
  %v4282 = vpop.permute.xlu0 %4281
  %4285 = vset.pattern.permute.xlu0 0
  %4286 = vperm.xlu0 %4285, %v2332
  %v4287 = vpop.permute.xlu0 %4286
  %4290 = vset.pattern.permute.xlu0 0
  %4291 = vperm.xlu0 %4290, %v2334
  %v4292 = vpop.permute.xlu0 %4291
  %4295 = vset.pattern.permute.xlu0 0
  %4296 = vperm.xlu0 %4295, %v2336
  %v4297 = vpop.permute.xlu0 %4296
  %4300 = vset.pattern.permute.xlu0 0
  %4301 = vperm.xlu0 %4300, %v2338
  %v4302 = vpop.permute.xlu0 %4301
  %4305 = vset.pattern.permute.xlu0 0
  %4306 = vperm.xlu0 %4305, %v2340
  %v4307 = vpop.permute.xlu0 %4306
  %4310 = vset.pattern.permute.xlu0 0
  %4311 = vperm.xlu0 %4310, %v2342
  %v4312 = vpop.permute.xlu0 %4311
  %4315 = vset.pattern.permute.xlu0 0
  %4316 = vperm.xlu0 %4315, %v2344
  %v4317 = vpop.permute.xlu0 %4316
  %4320 = vset.pattern.permute.xlu0 0
  %4321 = vperm.xlu0 %4320, %v2346
  %v4322 = vpop.permute.xlu0 %4321
  %4325 = vset.pattern.permute.xlu0 0
  %4326 = vperm.xlu0 %4325, %v2348
  %v4327 = vpop.permute.xlu0 %4326
  %4330 = vset.pattern.permute.xlu0 0
  %4331 = vperm.xlu0 %4330, %v2350
  %v4332 = vpop.permute.xlu0 %4331
  %4335 = vset.pattern.permute.xlu0 0
  %4336 = vperm.xlu0 %4335, %v2352
  %v4337 = vpop.permute.xlu0 %4336
  %4340 = vset.pattern.permute.xlu0 0
  %4341 = vperm.xlu0 %4340, %v2354
  %v4342 = vpop.permute.xlu0 %4341
  %4345 = vset.pattern.permute.xlu0 0
  %4346 = vperm.xlu0 %4345, %v2356
  %v4347 = vpop.permute.xlu0 %4346
  %4350 = vset.pattern.permute.xlu0 0
  %4351 = vperm.xlu0 %4350, %v2358
  %v4352 = vpop.permute.xlu0 %4351
  %4355 = vset.pattern.permute.xlu0 0
  %4356 = vperm.xlu0 %4355, %v2360
  %v4357 = vpop.permute.xlu0 %4356
  %4360 = vset.pattern.permute.xlu0 0
  %4361 = vperm.xlu0 %4360, %v2362
  %v4362 = vpop.permute.xlu0 %4361
  %4365 = vset.pattern.permute.xlu0 0
  %4366 = vperm.xlu0 %4365, %v2364
  %v4367 = vpop.permute.xlu0 %4366
  %4370 = vset.pattern.permute.xlu0 0
  %4371 = vperm.xlu0 %4370, %v2366
  %v4372 = vpop.permute.xlu0 %4371
  %4375 = vset.pattern.permute.xlu0 0
  %4376 = vperm.xlu0 %4375, %v2368
  %v4377 = vpop.permute.xlu0 %4376
  %4380 = vset.pattern.permute.xlu0 0
  %4381 = vperm.xlu0 %4380, %v2370
  %v4382 = vpop.permute.xlu0 %4381
  %4385 = vset.pattern.permute.xlu0 0
  %4386 = vperm.xlu0 %4385, %v2372
  %v4387 = vpop.permute.xlu0 %4386
  %v4389 = vmul.f32 %v2712, %v2373
  %v4390 = vmul.f32 %v2717, %v2374
  %v4391 = vmul.f32 %v2722, %v2375
  %v4392 = vmul.f32 %v2727, %v2376
  %v4393 = vmul.f32 %v2732, %v2377
  %v4394 = vmul.f32 %v2737, %v2378
  %v4395 = vmul.f32 %v2742, %v2379
  %v4396 = vmul.f32 %v2747, %v2380
  %v4397 = vmul.f32 %v2752, %v2381
  %v4398 = vmul.f32 %v2757, %v2382
  %v4399 = vmul.f32 %v2762, %v2383
  %v4400 = vmul.f32 %v2767, %v2384
  %v4401 = vmul.f32 %v2772, %v2385
  %v4402 = vmul.f32 %v2777, %v2386
  %v4403 = vmul.f32 %v2782, %v2387
  %v4404 = vmul.f32 %v2787, %v2388
  %v4405 = vmul.f32 %v2792, %v2389
  %v4406 = vmul.f32 %v2797, %v2390
  %v4407 = vmul.f32 %v2802, %v2391
  %v4408 = vmul.f32 %v2807, %v2392
  %v4409 = vmul.f32 %v2812, %v2393
  %v4410 = vmul.f32 %v2817, %v2394
  %v4411 = vmul.f32 %v2822, %v2395
  %v4412 = vmul.f32 %v2827, %v2396
  %v4413 = vmul.f32 %v2832, %v2397
  %v4414 = vmul.f32 %v2837, %v2398
  %v4415 = vmul.f32 %v2842, %v2399
  %v4416 = vmul.f32 %v2847, %v2400
  %v4417 = vmul.f32 %v2852, %v2401
  %v4418 = vmul.f32 %v2857, %v2402
  %v4419 = vmul.f32 %v2862, %v2403
  %v4420 = vmul.f32 %v2867, %v2404
  %v4421 = vmul.f32 %v2872, %v2405
  %v4422 = vmul.f32 %v2877, %v2406
  %v4423 = vmul.f32 %v2882, %v2407
  %v4424 = vmul.f32 %v2887, %v2408
  %v4425 = vmul.f32 %v2892, %v2409
  %v4426 = vmul.f32 %v2897, %v2410
  %v4427 = vmul.f32 %v2902, %v2411
  %v4428 = vmul.f32 %v2907, %v2412
  %v4429 = vmul.f32 %v2912, %v2413
  %v4430 = vmul.f32 %v2917, %v2414
  %v4431 = vmul.f32 %v2922, %v2415
  %v4432 = vmul.f32 %v2927, %v2416
  %v4433 = vmul.f32 %v2932, %v2417
  %v4434 = vmul.f32 %v2937, %v2418
  %v4435 = vmul.f32 %v2942, %v2419
  %v4436 = vmul.f32 %v2947, %v2420
  %v4437 = vmul.f32 %v2952, %v2421
  %v4438 = vmul.f32 %v2957, %v2422
  %v4439 = vmul.f32 %v2962, %v2423
  %v4440 = vmul.f32 %v2967, %v2424
  %v4441 = vmul.f32 %v2972, %v2425
  %v4442 = vmul.f32 %v2977, %v2426
  %v4443 = vmul.f32 %v2982, %v2427
  %v4444 = vmul.f32 %v2987, %v2428
  %v4445 = vmul.f32 %v2992, %v2429
  %v4446 = vmul.f32 %v2997, %v2430
  %v4447 = vmul.f32 %v3002, %v2431
  %v4448 = vmul.f32 %v3007, %v2432
  %v4449 = vmul.f32 %v3012, %v2433
  %v4450 = vmul.f32 %v3017, %v2434
  %v4451 = vmul.f32 %v3022, %v2435
  %v4452 = vmul.f32 %v3027, %v2436
  %v4453 = vmul.f32 %v3032, %v2437
  %v4454 = vmul.f32 %v3037, %v2438
  %v4455 = vmul.f32 %v3042, %v2439
  %v4456 = vmul.f32 %v3047, %v2440
  %v4457 = vmul.f32 %v3052, %v2441
  %v4458 = vmul.f32 %v3057, %v2442
  %v4459 = vmul.f32 %v3062, %v2443
  %v4460 = vmul.f32 %v3067, %v2444
  %v4461 = vmul.f32 %v3072, %v2445
  %v4462 = vmul.f32 %v3077, %v2446
  %v4463 = vmul.f32 %v3082, %v2447
  %v4464 = vmul.f32 %v3087, %v2448
  %v4465 = vmul.f32 %v3092, %v2449
  %v4466 = vmul.f32 %v3097, %v2450
  %v4467 = vmul.f32 %v3102, %v2451
  %v4468 = vmul.f32 %v3107, %v2452
  %v4469 = vmul.f32 %v3112, %v2453
  %v4470 = vmul.f32 %v3117, %v2454
  %v4471 = vmul.f32 %v3122, %v2455
  %v4472 = vmul.f32 %v3127, %v2456
  %v4473 = vmul.f32 %v3132, %v2457
  %v4474 = vmul.f32 %v3137, %v2458
  %v4475 = vmul.f32 %v3142, %v2459
  %v4476 = vmul.f32 %v3147, %v2460
  %v4477 = vmul.f32 %v3152, %v2461
  %v4478 = vmul.f32 %v3157, %v2462
  %v4479 = vmul.f32 %v3162, %v2463
  %v4480 = vmul.f32 %v3167, %v2464
  %v4481 = vmul.f32 %v3172, %v2465
  %v4482 = vmul.f32 %v3177, %v2466
  %v4483 = vmul.f32 %v3182, %v2467
  %v4484 = vmul.f32 %v3187, %v2468
  %v4485 = vmul.f32 %v3192, %v2469
  %v4486 = vmul.f32 %v3197, %v2470
  %v4487 = vmul.f32 %v3202, %v2471
  %v4488 = vmul.f32 %v3207, %v2472
  %v4489 = vmul.f32 %v3212, %v2473
  %v4490 = vmul.f32 %v3217, %v2474
  %v4491 = vmul.f32 %v3222, %v2475
  %v4492 = vmul.f32 %v3227, %v2476
  %v4493 = vmul.f32 %v3232, %v2477
  %v4494 = vmul.f32 %v3237, %v2478
  %v4495 = vmul.f32 %v3242, %v2479
  %v4496 = vmul.f32 %v3247, %v2480
  %v4497 = vmul.f32 %v3252, %v2481
  %v4498 = vmul.f32 %v3257, %v2482
  %v4499 = vmul.f32 %v3262, %v2483
  %v4500 = vmul.f32 %v3267, %v2484
  %v4501 = vmul.f32 %v3272, %v2485
  %v4502 = vmul.f32 %v3277, %v2486
  %v4503 = vmul.f32 %v3282, %v2487
  %v4504 = vmul.f32 %v3287, %v2488
  %v4505 = vmul.f32 %v3292, %v2489
  %v4506 = vmul.f32 %v3297, %v2490
  %v4507 = vmul.f32 %v3302, %v2491
  %v4508 = vmul.f32 %v3307, %v2492
  %v4509 = vmul.f32 %v3312, %v2493
  %v4510 = vmul.f32 %v3317, %v2494
  %v4511 = vmul.f32 %v3322, %v2495
  %v4512 = vmul.f32 %v3327, %v2496
  %v4513 = vmul.f32 %v3332, %v2497
  %v4514 = vmul.f32 %v3337, %v2498
  %v4515 = vmul.f32 %v3342, %v2499
  %v4516 = vmul.f32 %v3347, %v2500
  %v4517 = vmul.f32 %v3352, %v2501
  %v4518 = vmul.f32 %v3357, %v2502
  %v4519 = vmul.f32 %v3362, %v2503
  %v4520 = vmul.f32 %v3367, %v2504
  %v4521 = vmul.f32 %v3372, %v2505
  %v4522 = vmul.f32 %v3377, %v2506
  %v4523 = vmul.f32 %v3382, %v2507
  %v4524 = vmul.f32 %v3387, %v2508
  %v4525 = vmul.f32 %v3392, %v2509
  %v4526 = vmul.f32 %v3397, %v2510
  %v4527 = vmul.f32 %v3402, %v2511
  %v4528 = vmul.f32 %v3407, %v2512
  %v4529 = vmul.f32 %v3412, %v2513
  %v4530 = vmul.f32 %v3417, %v2514
  %v4531 = vmul.f32 %v3422, %v2515
  %v4532 = vmul.f32 %v3427, %v2516
  %v4533 = vmul.f32 %v3432, %v2517
  %v4534 = vmul.f32 %v3437, %v2518
  %v4535 = vmul.f32 %v3442, %v2519
  %v4536 = vmul.f32 %v3447, %v2520
  %v4537 = vmul.f32 %v3452, %v2521
  %v4538 = vmul.f32 %v3457, %v2522
  %v4539 = vmul.f32 %v3462, %v2523
  %v4540 = vmul.f32 %v3467, %v2524
  %v4541 = vmul.f32 %v3472, %v2525
  %v4542 = vmul.f32 %v3477, %v2526
  %v4543 = vmul.f32 %v3482, %v2527
  %v4544 = vmul.f32 %v3487, %v2528
  %v4545 = vmul.f32 %v3492, %v2529
  %v4546 = vmul.f32 %v3497, %v2530
  %v4547 = vmul.f32 %v3502, %v2531
  %v4548 = vmul.f32 %v3507, %v2532
  %v4549 = vmul.f32 %v3512, %v2533
  %v4550 = vmul.f32 %v3517, %v2534
  %v4551 = vmul.f32 %v3522, %v2535
  %v4552 = vmul.f32 %v3527, %v2536
  %v4553 = vmul.f32 %v3532, %v2537
  %v4554 = vmul.f32 %v3537, %v2538
  %v4555 = vmul.f32 %v3542, %v2539
  %v4556 = vmul.f32 %v3547, %v2540
  %v4557 = vmul.f32 %v3552, %v2541
  %v4558 = vmul.f32 %v3557, %v2542
  %v4559 = vmul.f32 %v3562, %v2543
  %v4560 = vmul.f32 %v3567, %v2544
  %v4561 = vmul.f32 %v3572, %v2545
  %v4562 = vmul.f32 %v3577, %v2546
  %v4563 = vmul.f32 %v3582, %v2547
  %v4564 = vmul.f32 %v3587, %v2548
  %v4565 = vmul.f32 %v3592, %v2549
  %v4566 = vmul.f32 %v3597, %v2550
  %v4567 = vmul.f32 %v3602, %v2551
  %v4568 = vmul.f32 %v3607, %v2552
  %v4569 = vmul.f32 %v3612, %v2553
  %v4570 = vmul.f32 %v3617, %v2554
  %v4571 = vmul.f32 %v3622, %v2555
  %v4572 = vmul.f32 %v3627, %v2556
  %v4573 = vmul.f32 %v3632, %v2557
  %v4574 = vmul.f32 %v3637, %v2558
  %v4575 = vmul.f32 %v3642, %v2559
  %v4576 = vmul.f32 %v3647, %v2560
  %v4577 = vmul.f32 %v3652, %v2561
  %v4578 = vmul.f32 %v3657, %v2562
  %v4579 = vmul.f32 %v3662, %v2563
  %v4580 = vmul.f32 %v3667, %v2564
  %v4581 = vmul.f32 %v3672, %v2565
  %v4582 = vmul.f32 %v3677, %v2566
  %v4583 = vmul.f32 %v3682, %v2567
  %v4584 = vmul.f32 %v3687, %v2568
  %v4585 = vmul.f32 %v3692, %v2569
  %v4586 = vmul.f32 %v3697, %v2570
  %v4587 = vmul.f32 %v3702, %v2571
  %v4588 = vmul.f32 %v3707, %v2572
  %v4589 = vmul.f32 %v3712, %v2573
  %v4590 = vmul.f32 %v3717, %v2574
  %v4591 = vmul.f32 %v3722, %v2575
  %v4592 = vmul.f32 %v3727, %v2576
  %v4593 = vmul.f32 %v3732, %v2577
  %v4594 = vmul.f32 %v3737, %v2578
  %v4595 = vmul.f32 %v3742, %v2579
  %v4596 = vmul.f32 %v3747, %v2580
  %v4597 = vmul.f32 %v3752, %v2581
  %v4598 = vmul.f32 %v3757, %v2582
  %v4599 = vmul.f32 %v3762, %v2583
  %v4600 = vmul.f32 %v3767, %v2584
  %v4601 = vmul.f32 %v3772, %v2585
  %v4602 = vmul.f32 %v3777, %v2586
  %v4603 = vmul.f32 %v3782, %v2587
  %v4604 = vmul.f32 %v3787, %v2588
  %v4605 = vmul.f32 %v3792, %v2589
  %v4606 = vmul.f32 %v3797, %v2590
  %v4607 = vmul.f32 %v3802, %v2591
  %v4608 = vmul.f32 %v3807, %v2592
  %v4609 = vmul.f32 %v3812, %v2593
  %v4610 = vmul.f32 %v3817, %v2594
  %v4611 = vmul.f32 %v3822, %v2595
  %v4612 = vmul.f32 %v3827, %v2596
  %v4613 = vmul.f32 %v3832, %v2597
  %v4614 = vmul.f32 %v3837, %v2598
  %v4615 = vmul.f32 %v3842, %v2599
  %v4616 = vmul.f32 %v3847, %v2600
  %v4617 = vmul.f32 %v3852, %v2601
  %v4618 = vmul.f32 %v3857, %v2602
  %v4619 = vmul.f32 %v3862, %v2603
  %v4620 = vmul.f32 %v3867, %v2604
  %v4621 = vmul.f32 %v3872, %v2605
  %v4622 = vmul.f32 %v3877, %v2606
  %v4623 = vmul.f32 %v3882, %v2607
  %v4624 = vmul.f32 %v3887, %v2608
  %v4625 = vmul.f32 %v3892, %v2609
  %v4626 = vmul.f32 %v3897, %v2610
  %v4627 = vmul.f32 %v3902, %v2611
  %v4628 = vmul.f32 %v3907, %v2612
  %v4629 = vmul.f32 %v3912, %v2613
  %v4630 = vmul.f32 %v3917, %v2614
  %v4631 = vmul.f32 %v3922, %v2615
  %v4632 = vmul.f32 %v3927, %v2616
  %v4633 = vmul.f32 %v3932, %v2617
  %v4634 = vmul.f32 %v3937, %v2618
  %v4635 = vmul.f32 %v3942, %v2619
  %v4636 = vmul.f32 %v3947, %v2620
  %v4637 = vmul.f32 %v3952, %v2621
  %v4638 = vmul.f32 %v3957, %v2622
  %v4639 = vmul.f32 %v3962, %v2623
  %v4640 = vmul.f32 %v3967, %v2624
  %v4641 = vmul.f32 %v3972, %v2625
  %v4642 = vmul.f32 %v3977, %v2626
  %v4643 = vmul.f32 %v3982, %v2627
  %v4644 = vmul.f32 %v3987, %v2628
  %v4645 = vmul.f32 %v3992, %v2629
  %v4646 = vmul.f32 %v3997, %v2630
  %v4647 = vmul.f32 %v4002, %v2631
  %v4648 = vmul.f32 %v4007, %v2632
  %v4649 = vmul.f32 %v4012, %v2633
  %v4650 = vmul.f32 %v4017, %v2634
  %v4651 = vmul.f32 %v4022, %v2635
  %v4652 = vmul.f32 %v4027, %v2636
  %v4653 = vmul.f32 %v4032, %v2637
  %v4654 = vmul.f32 %v4037, %v2638
  %v4655 = vmul.f32 %v4042, %v2639
  %v4656 = vmul.f32 %v4047, %v2640
  %v4657 = vmul.f32 %v4052, %v2641
  %v4658 = vmul.f32 %v4057, %v2642
  %v4659 = vmul.f32 %v4062, %v2643
  %v4660 = vmul.f32 %v4067, %v2644
  %v4661 = vmul.f32 %v4072, %v2645
  %v4662 = vmul.f32 %v4077, %v2646
  %v4663 = vmul.f32 %v4082, %v2647
  %v4664 = vmul.f32 %v4087, %v2648
  %v4665 = vmul.f32 %v4092, %v2649
  %v4666 = vmul.f32 %v4097, %v2650
  %v4667 = vmul.f32 %v4102, %v2651
  %v4668 = vmul.f32 %v4107, %v2652
  %v4669 = vmul.f32 %v4112, %v2653
  %v4670 = vmul.f32 %v4117, %v2654
  %v4671 = vmul.f32 %v4122, %v2655
  %v4672 = vmul.f32 %v4127, %v2656
  %v4673 = vmul.f32 %v4132, %v2657
  %v4674 = vmul.f32 %v4137, %v2658
  %v4675 = vmul.f32 %v4142, %v2659
  %v4676 = vmul.f32 %v4147, %v2660
  %v4677 = vmul.f32 %v4152, %v2661
  %v4678 = vmul.f32 %v4157, %v2662
  %v4679 = vmul.f32 %v4162, %v2663
  %v4680 = vmul.f32 %v4167, %v2664
  %v4681 = vmul.f32 %v4172, %v2665
  %v4682 = vmul.f32 %v4177, %v2666
  %v4683 = vmul.f32 %v4182, %v2667
  %v4684 = vmul.f32 %v4187, %v2668
  %v4685 = vmul.f32 %v4192, %v2669
  %v4686 = vmul.f32 %v4197, %v2670
  %v4687 = vmul.f32 %v4202, %v2671
  %v4688 = vmul.f32 %v4207, %v2672
  %v4689 = vmul.f32 %v4212, %v2673
  %v4690 = vmul.f32 %v4217, %v2674
  %v4691 = vmul.f32 %v4222, %v2675
  %v4692 = vmul.f32 %v4227, %v2676
  %v4693 = vmul.f32 %v4232, %v2677
  %v4694 = vmul.f32 %v4237, %v2678
  %v4695 = vmul.f32 %v4242, %v2679
  %v4696 = vmul.f32 %v4247, %v2680
  %v4697 = vmul.f32 %v4252, %v2681
  %v4698 = vmul.f32 %v4257, %v2682
  %v4699 = vmul.f32 %v4262, %v2683
  %v4700 = vmul.f32 %v4267, %v2684
  %v4701 = vmul.f32 %v4272, %v2685
  %v4702 = vmul.f32 %v4277, %v2686
  %v4703 = vmul.f32 %v4282, %v2687
  %v4704 = vmul.f32 %v4287, %v2688
  %v4705 = vmul.f32 %v4292, %v2689
  %v4706 = vmul.f32 %v4297, %v2690
  %v4707 = vmul.f32 %v4302, %v2691
  %v4708 = vmul.f32 %v4307, %v2692
  %v4709 = vmul.f32 %v4312, %v2693
  %v4710 = vmul.f32 %v4317, %v2694
  %v4711 = vmul.f32 %v4322, %v2695
  %v4712 = vmul.f32 %v4327, %v2696
  %v4713 = vmul.f32 %v4332, %v2697
  %v4714 = vmul.f32 %v4337, %v2698
  %v4715 = vmul.f32 %v4342, %v2699
  %v4716 = vmul.f32 %v4347, %v2700
  %v4717 = vmul.f32 %v4352, %v2701
  %v4718 = vmul.f32 %v4357, %v2702
  %v4719 = vmul.f32 %v4362, %v2703
  %v4720 = vmul.f32 %v4367, %v2704
  %v4721 = vmul.f32 %v4372, %v2705
  %v4722 = vmul.f32 %v4377, %v2706
  %v4723 = vmul.f32 %v4382, %v2707
  %v4724 = vmul.f32 %v4387, %v2708
  %v4725 = vpack.c.bf16 %v4390, %v4389
  %v4726 = vpack.c.bf16 %v4392, %v4391
  %v4727 = vpack.c.bf16 %v4394, %v4393
  %v4728 = vpack.c.bf16 %v4396, %v4395
  %v4729 = vpack.c.bf16 %v4398, %v4397
  %v4730 = vpack.c.bf16 %v4400, %v4399
  %v4731 = vpack.c.bf16 %v4402, %v4401
  %v4732 = vpack.c.bf16 %v4404, %v4403
  %v4733 = vpack.c.bf16 %v4406, %v4405
  %v4734 = vpack.c.bf16 %v4408, %v4407
  %v4735 = vpack.c.bf16 %v4410, %v4409
  %v4736 = vpack.c.bf16 %v4412, %v4411
  %v4737 = vpack.c.bf16 %v4414, %v4413
  %v4738 = vpack.c.bf16 %v4416, %v4415
  %v4739 = vpack.c.bf16 %v4418, %v4417
  %v4740 = vpack.c.bf16 %v4420, %v4419
  %v4741 = vpack.c.bf16 %v4422, %v4421
  %v4742 = vpack.c.bf16 %v4424, %v4423
  %v4743 = vpack.c.bf16 %v4426, %v4425
  %v4744 = vpack.c.bf16 %v4428, %v4427
  %v4745 = vpack.c.bf16 %v4430, %v4429
  %v4746 = vpack.c.bf16 %v4432, %v4431
  %v4747 = vpack.c.bf16 %v4434, %v4433
  %v4748 = vpack.c.bf16 %v4436, %v4435
  %v4749 = vpack.c.bf16 %v4438, %v4437
  %v4750 = vpack.c.bf16 %v4440, %v4439
  %v4751 = vpack.c.bf16 %v4442, %v4441
  %v4752 = vpack.c.bf16 %v4444, %v4443
  %v4753 = vpack.c.bf16 %v4446, %v4445
  %v4754 = vpack.c.bf16 %v4448, %v4447
  %v4755 = vpack.c.bf16 %v4450, %v4449
  %v4756 = vpack.c.bf16 %v4452, %v4451
  %v4757 = vpack.c.bf16 %v4454, %v4453
  %v4758 = vpack.c.bf16 %v4456, %v4455
  %v4759 = vpack.c.bf16 %v4458, %v4457
  %v4760 = vpack.c.bf16 %v4460, %v4459
  %v4761 = vpack.c.bf16 %v4462, %v4461
  %v4762 = vpack.c.bf16 %v4464, %v4463
  %v4763 = vpack.c.bf16 %v4466, %v4465
  %v4764 = vpack.c.bf16 %v4468, %v4467
  %v4765 = vpack.c.bf16 %v4470, %v4469
  %v4766 = vpack.c.bf16 %v4472, %v4471
  %v4767 = vpack.c.bf16 %v4474, %v4473
  %v4768 = vpack.c.bf16 %v4476, %v4475
  %v4769 = vpack.c.bf16 %v4478, %v4477
  %v4770 = vpack.c.bf16 %v4480, %v4479
  %v4771 = vpack.c.bf16 %v4482, %v4481
  %v4772 = vpack.c.bf16 %v4484, %v4483
  %v4773 = vpack.c.bf16 %v4486, %v4485
  %v4774 = vpack.c.bf16 %v4488, %v4487
  %v4775 = vpack.c.bf16 %v4490, %v4489
  %v4776 = vpack.c.bf16 %v4492, %v4491
  %v4777 = vpack.c.bf16 %v4494, %v4493
  %v4778 = vpack.c.bf16 %v4496, %v4495
  %v4779 = vpack.c.bf16 %v4498, %v4497
  %v4780 = vpack.c.bf16 %v4500, %v4499
  %v4781 = vpack.c.bf16 %v4502, %v4501
  %v4782 = vpack.c.bf16 %v4504, %v4503
  %v4783 = vpack.c.bf16 %v4506, %v4505
  %v4784 = vpack.c.bf16 %v4508, %v4507
  %v4785 = vpack.c.bf16 %v4510, %v4509
  %v4786 = vpack.c.bf16 %v4512, %v4511
  %v4787 = vpack.c.bf16 %v4514, %v4513
  %v4788 = vpack.c.bf16 %v4516, %v4515
  %v4789 = vpack.c.bf16 %v4518, %v4517
  %v4790 = vpack.c.bf16 %v4520, %v4519
  %v4791 = vpack.c.bf16 %v4522, %v4521
  %v4792 = vpack.c.bf16 %v4524, %v4523
  %v4793 = vpack.c.bf16 %v4526, %v4525
  %v4794 = vpack.c.bf16 %v4528, %v4527
  %v4795 = vpack.c.bf16 %v4530, %v4529
  %v4796 = vpack.c.bf16 %v4532, %v4531
  %v4797 = vpack.c.bf16 %v4534, %v4533
  %v4798 = vpack.c.bf16 %v4536, %v4535
  %v4799 = vpack.c.bf16 %v4538, %v4537
  %v4800 = vpack.c.bf16 %v4540, %v4539
  %v4801 = vpack.c.bf16 %v4542, %v4541
  %v4802 = vpack.c.bf16 %v4544, %v4543
  %v4803 = vpack.c.bf16 %v4546, %v4545
  %v4804 = vpack.c.bf16 %v4548, %v4547
  %v4805 = vpack.c.bf16 %v4550, %v4549
  %v4806 = vpack.c.bf16 %v4552, %v4551
  %v4807 = vpack.c.bf16 %v4554, %v4553
  %v4808 = vpack.c.bf16 %v4556, %v4555
  %v4809 = vpack.c.bf16 %v4558, %v4557
  %v4810 = vpack.c.bf16 %v4560, %v4559
  %v4811 = vpack.c.bf16 %v4562, %v4561
  %v4812 = vpack.c.bf16 %v4564, %v4563
  %v4813 = vpack.c.bf16 %v4566, %v4565
  %v4814 = vpack.c.bf16 %v4568, %v4567
  %v4815 = vpack.c.bf16 %v4570, %v4569
  %v4816 = vpack.c.bf16 %v4572, %v4571
  %v4817 = vpack.c.bf16 %v4574, %v4573
  %v4818 = vpack.c.bf16 %v4576, %v4575
  %v4819 = vpack.c.bf16 %v4578, %v4577
  %v4820 = vpack.c.bf16 %v4580, %v4579
  %v4821 = vpack.c.bf16 %v4582, %v4581
  %v4822 = vpack.c.bf16 %v4584, %v4583
  %v4823 = vpack.c.bf16 %v4586, %v4585
  %v4824 = vpack.c.bf16 %v4588, %v4587
  %v4825 = vpack.c.bf16 %v4590, %v4589
  %v4826 = vpack.c.bf16 %v4592, %v4591
  %v4827 = vpack.c.bf16 %v4594, %v4593
  %v4828 = vpack.c.bf16 %v4596, %v4595
  %v4829 = vpack.c.bf16 %v4598, %v4597
  %v4830 = vpack.c.bf16 %v4600, %v4599
  %v4831 = vpack.c.bf16 %v4602, %v4601
  %v4832 = vpack.c.bf16 %v4604, %v4603
  %v4833 = vpack.c.bf16 %v4606, %v4605
  %v4834 = vpack.c.bf16 %v4608, %v4607
  %v4835 = vpack.c.bf16 %v4610, %v4609
  %v4836 = vpack.c.bf16 %v4612, %v4611
  %v4837 = vpack.c.bf16 %v4614, %v4613
  %v4838 = vpack.c.bf16 %v4616, %v4615
  %v4839 = vpack.c.bf16 %v4618, %v4617
  %v4840 = vpack.c.bf16 %v4620, %v4619
  %v4841 = vpack.c.bf16 %v4622, %v4621
  %v4842 = vpack.c.bf16 %v4624, %v4623
  %v4843 = vpack.c.bf16 %v4626, %v4625
  %v4844 = vpack.c.bf16 %v4628, %v4627
  %v4845 = vpack.c.bf16 %v4630, %v4629
  %v4846 = vpack.c.bf16 %v4632, %v4631
  %v4847 = vpack.c.bf16 %v4634, %v4633
  %v4848 = vpack.c.bf16 %v4636, %v4635
  %v4849 = vpack.c.bf16 %v4638, %v4637
  %v4850 = vpack.c.bf16 %v4640, %v4639
  %v4851 = vpack.c.bf16 %v4642, %v4641
  %v4852 = vpack.c.bf16 %v4644, %v4643
  %v4853 = vpack.c.bf16 %v4646, %v4645
  %v4854 = vpack.c.bf16 %v4648, %v4647
  %v4855 = vpack.c.bf16 %v4650, %v4649
  %v4856 = vpack.c.bf16 %v4652, %v4651
  %v4857 = vpack.c.bf16 %v4654, %v4653
  %v4858 = vpack.c.bf16 %v4656, %v4655
  %v4859 = vpack.c.bf16 %v4658, %v4657
  %v4860 = vpack.c.bf16 %v4660, %v4659
  %v4861 = vpack.c.bf16 %v4662, %v4661
  %v4862 = vpack.c.bf16 %v4664, %v4663
  %v4863 = vpack.c.bf16 %v4666, %v4665
  %v4864 = vpack.c.bf16 %v4668, %v4667
  %v4865 = vpack.c.bf16 %v4670, %v4669
  %v4866 = vpack.c.bf16 %v4672, %v4671
  %v4867 = vpack.c.bf16 %v4674, %v4673
  %v4868 = vpack.c.bf16 %v4676, %v4675
  %v4869 = vpack.c.bf16 %v4678, %v4677
  %v4870 = vpack.c.bf16 %v4680, %v4679
  %v4871 = vpack.c.bf16 %v4682, %v4681
  %v4872 = vpack.c.bf16 %v4684, %v4683
  %v4873 = vpack.c.bf16 %v4686, %v4685
  %v4874 = vpack.c.bf16 %v4688, %v4687
  %v4875 = vpack.c.bf16 %v4690, %v4689
  %v4876 = vpack.c.bf16 %v4692, %v4691
  %v4877 = vpack.c.bf16 %v4694, %v4693
  %v4878 = vpack.c.bf16 %v4696, %v4695
  %v4879 = vpack.c.bf16 %v4698, %v4697
  %v4880 = vpack.c.bf16 %v4700, %v4699
  %v4881 = vpack.c.bf16 %v4702, %v4701
  %v4882 = vpack.c.bf16 %v4704, %v4703
  %v4883 = vpack.c.bf16 %v4706, %v4705
  %v4884 = vpack.c.bf16 %v4708, %v4707
  %v4885 = vpack.c.bf16 %v4710, %v4709
  %v4886 = vpack.c.bf16 %v4712, %v4711
  %v4887 = vpack.c.bf16 %v4714, %v4713
  %v4888 = vpack.c.bf16 %v4716, %v4715
  %v4889 = vpack.c.bf16 %v4718, %v4717
  %v4890 = vpack.c.bf16 %v4720, %v4719
  %v4891 = vpack.c.bf16 %v4722, %v4721
  %v4892 = vpack.c.bf16 %v4724, %v4723
  %v4893 = vld [vmem:[%s2] sm:$0xff]
  %v4894 = vld [vmem:[%s2 + $0x8] sm:$0xff]
  %v4895 = vld [vmem:[%s2 + $0x10] sm:$0xff]
  %v4896 = vld [vmem:[%s2 + $0x18] sm:$0xff]
  %v4897 = vld [vmem:[%s2 + $0x20] sm:$0xff]
  %v4898 = vld [vmem:[%s2 + $0x28] sm:$0xff]
  %v4899 = vld [vmem:[%s2 + $0x30] sm:$0xff]
  %v4900 = vld [vmem:[%s2 + $0x38] sm:$0xff]
  %v4901 = vld [vmem:[%s2 + $0x40] sm:$0xff]
  %v4902 = vld [vmem:[%s2 + $0x48] sm:$0xff]
  %v4903 = vld [vmem:[%s2 + $0x50] sm:$0xf]
  %v4904 = vld [vmem:[%s2 + $0x54] sm:$0xff]
  %v4905 = vld [vmem:[%s2 + $0x5c] sm:$0xff]
  %v4906 = vld [vmem:[%s2 + $0x64] sm:$0xff]
  %v4907 = vld [vmem:[%s2 + $0x6c] sm:$0xff]
  %v4908 = vld [vmem:[%s2 + $0x74] sm:$0xff]
  %v4909 = vld [vmem:[%s2 + $0x7c] sm:$0xff]
  %v4910 = vld [vmem:[%s2 + $0x84] sm:$0xff]
  %v4911 = vld [vmem:[%s2 + $0x8c] sm:$0xff]
  %v4912 = vld [vmem:[%s2 + $0x94] sm:$0xff]
  %v4913 = vld [vmem:[%s2 + $0x9c] sm:$0xff]
  %v4914 = vld [vmem:[%s2 + $0xa4] sm:$0xf]
  %v4915 = vld [vmem:[%s2 + $0xa8] sm:$0xff]
  %v4916 = vld [vmem:[%s2 + $0xb0] sm:$0xff]
  %v4917 = vld [vmem:[%s2 + $0xb8] sm:$0xff]
  %v4918 = vld [vmem:[%s2 + $0xc0] sm:$0xff]
  %v4919 = vld [vmem:[%s2 + $0xc8] sm:$0xff]
  %v4920 = vld [vmem:[%s2 + $0xd0] sm:$0xff]
  %v4921 = vld [vmem:[%s2 + $0xd8] sm:$0xff]
  %v4922 = vld [vmem:[%s2 + $0xe0] sm:$0xff]
  %v4923 = vld [vmem:[%s2 + $0xe8] sm:$0xff]
  %v4924 = vld [vmem:[%s2 + $0xf0] sm:$0xff]
  %v4925 = vld [vmem:[%s2 + $0xf8] sm:$0xf]
  %v4926 = vld [vmem:[%s2 + $0xfc] sm:$0xff]
  %v4927 = vld [vmem:[%s2 + $0x104] sm:$0xff]
  %v4928 = vld [vmem:[%s2 + $0x10c] sm:$0xff]
  %v4929 = vld [vmem:[%s2 + $0x114] sm:$0xff]
  %v4930 = vld [vmem:[%s2 + $0x11c] sm:$0xff]
  %v4931 = vld [vmem:[%s2 + $0x124] sm:$0xff]
  %v4932 = vld [vmem:[%s2 + $0x12c] sm:$0xff]
  %v4933 = vld [vmem:[%s2 + $0x134] sm:$0xff]
  %v4934 = vld [vmem:[%s2 + $0x13c] sm:$0xff]
  %v4935 = vld [vmem:[%s2 + $0x144] sm:$0xff]
  %v4936 = vld [vmem:[%s2 + $0x14c] sm:$0xf]
  %v4937 = vld [vmem:[%s2 + $0x150] sm:$0xff]
  %v4938 = vld [vmem:[%s2 + $0x158] sm:$0xff]
  %v4939 = vld [vmem:[%s2 + $0x160] sm:$0xff]
  %v4940 = vld [vmem:[%s2 + $0x168] sm:$0xff]
  %v4941 = vld [vmem:[%s2 + $0x170] sm:$0xff]
  %v4942 = vld [vmem:[%s2 + $0x178] sm:$0xff]
  %v4943 = vld [vmem:[%s2 + $0x180] sm:$0xff]
  %v4944 = vld [vmem:[%s2 + $0x188] sm:$0xff]
  %v4945 = vld [vmem:[%s2 + $0x190] sm:$0xff]
  %v4946 = vld [vmem:[%s2 + $0x198] sm:$0xff]
  %v4947 = vld [vmem:[%s2 + $0x1a0] sm:$0xf]
  %v4948 = vld [vmem:[%s2 + $0x1a4] sm:$0xff]
  %v4949 = vld [vmem:[%s2 + $0x1ac] sm:$0xff]
  %v4950 = vld [vmem:[%s2 + $0x1b4] sm:$0xff]
  %v4951 = vld [vmem:[%s2 + $0x1bc] sm:$0xff]
  %v4952 = vld [vmem:[%s2 + $0x1c4] sm:$0xff]
  %v4953 = vld [vmem:[%s2 + $0x1cc] sm:$0xff]
  %v4954 = vld [vmem:[%s2 + $0x1d4] sm:$0xff]
  %v4955 = vld [vmem:[%s2 + $0x1dc] sm:$0xff]
  %v4956 = vld [vmem:[%s2 + $0x1e4] sm:$0xff]
  %v4957 = vld [vmem:[%s2 + $0x1ec] sm:$0xff]
  %v4958 = vld [vmem:[%s2 + $0x1f4] sm:$0xf]
  %v4959 = vld [vmem:[%s2 + $0x1f8] sm:$0xff]
  %v4960 = vld [vmem:[%s2 + $0x200] sm:$0xff]
  %v4961 = vld [vmem:[%s2 + $0x208] sm:$0xff]
  %v4962 = vld [vmem:[%s2 + $0x210] sm:$0xff]
  %v4963 = vld [vmem:[%s2 + $0x218] sm:$0xff]
  %v4964 = vld [vmem:[%s2 + $0x220] sm:$0xff]
  %v4965 = vld [vmem:[%s2 + $0x228] sm:$0xff]
  %v4966 = vld [vmem:[%s2 + $0x230] sm:$0xff]
  %v4967 = vld [vmem:[%s2 + $0x238] sm:$0xff]
  %v4968 = vld [vmem:[%s2 + $0x240] sm:$0xff]
  %v4969 = vld [vmem:[%s2 + $0x248] sm:$0xf]
  %v4970 = vld [vmem:[%s2 + $0x24c] sm:$0xff]
  %v4971 = vld [vmem:[%s2 + $0x254] sm:$0xff]
  %v4972 = vld [vmem:[%s2 + $0x25c] sm:$0xff]
  %v4973 = vld [vmem:[%s2 + $0x264] sm:$0xff]
  %v4974 = vld [vmem:[%s2 + $0x26c] sm:$0xff]
  %v4975 = vld [vmem:[%s2 + $0x274] sm:$0xff]
  %v4976 = vld [vmem:[%s2 + $0x27c] sm:$0xff]
  %v4977 = vld [vmem:[%s2 + $0x284] sm:$0xff]
  %v4978 = vld [vmem:[%s2 + $0x28c] sm:$0xff]
  %v4979 = vld [vmem:[%s2 + $0x294] sm:$0xff]
  %v4980 = vld [vmem:[%s2 + $0x29c] sm:$0xf]
  %v4981 = vld [vmem:[%s2 + $0x2a0] sm:$0xff]
  %v4982 = vld [vmem:[%s2 + $0x2a8] sm:$0xff]
  %v4983 = vld [vmem:[%s2 + $0x2b0] sm:$0xff]
  %v4984 = vld [vmem:[%s2 + $0x2b8] sm:$0xff]
  %v4985 = vld [vmem:[%s2 + $0x2c0] sm:$0xff]
  %v4986 = vld [vmem:[%s2 + $0x2c8] sm:$0xff]
  %v4987 = vld [vmem:[%s2 + $0x2d0] sm:$0xff]
  %v4988 = vld [vmem:[%s2 + $0x2d8] sm:$0xff]
  %v4989 = vld [vmem:[%s2 + $0x2e0] sm:$0xff]
  %v4990 = vld [vmem:[%s2 + $0x2e8] sm:$0xff]
  %v4991 = vld [vmem:[%s2 + $0x2f0] sm:$0xf]
  %v4992 = vld [vmem:[%s2 + $0x2f4] sm:$0xff]
  %v4993 = vld [vmem:[%s2 + $0x2fc] sm:$0xff]
  %v4994 = vld [vmem:[%s2 + $0x304] sm:$0xff]
  %v4995 = vld [vmem:[%s2 + $0x30c] sm:$0xff]
  %v4996 = vld [vmem:[%s2 + $0x314] sm:$0xff]
  %v4997 = vld [vmem:[%s2 + $0x31c] sm:$0xff]
  %v4998 = vld [vmem:[%s2 + $0x324] sm:$0xff]
  %v4999 = vld [vmem:[%s2 + $0x32c] sm:$0xff]
  %v5000 = vld [vmem:[%s2 + $0x334] sm:$0xff]
  %v5001 = vld [vmem:[%s2 + $0x33c] sm:$0xff]
  %v5002 = vld [vmem:[%s2 + $0x344] sm:$0xf]
  %v5003 = vld [vmem:[%s2 + $0x348] sm:$0xff]
  %v5004 = vld [vmem:[%s2 + $0x350] sm:$0xff]
  %v5005 = vld [vmem:[%s2 + $0x358] sm:$0xff]
  %v5006 = vld [vmem:[%s2 + $0x360] sm:$0xff]
  %v5007 = vld [vmem:[%s2 + $0x368] sm:$0xff]
  %v5008 = vld [vmem:[%s2 + $0x370] sm:$0xff]
  %v5009 = vld [vmem:[%s2 + $0x378] sm:$0xff]
  %v5010 = vld [vmem:[%s2 + $0x380] sm:$0xff]
  %v5011 = vld [vmem:[%s2 + $0x388] sm:$0xff]
  %v5012 = vld [vmem:[%s2 + $0x390] sm:$0xff]
  %v5013 = vld [vmem:[%s2 + $0x398] sm:$0xf]
  %v5014 = vld [vmem:[%s2 + $0x39c] sm:$0xff]
  %v5015 = vld [vmem:[%s2 + $0x3a4] sm:$0xff]
  %v5016 = vld [vmem:[%s2 + $0x3ac] sm:$0xff]
  %v5017 = vld [vmem:[%s2 + $0x3b4] sm:$0xff]
  %v5018 = vld [vmem:[%s2 + $0x3bc] sm:$0xff]
  %v5019 = vld [vmem:[%s2 + $0x3c4] sm:$0xff]
  %v5020 = vld [vmem:[%s2 + $0x3cc] sm:$0xff]
  %v5021 = vld [vmem:[%s2 + $0x3d4] sm:$0xff]
  %v5022 = vld [vmem:[%s2 + $0x3dc] sm:$0xff]
  %v5023 = vld [vmem:[%s2 + $0x3e4] sm:$0xff]
  %v5024 = vld [vmem:[%s2 + $0x3ec] sm:$0xf]
  %v5025 = vld [vmem:[%s2 + $0x3f0] sm:$0xff]
  %v5026 = vld [vmem:[%s2 + $0x3f8] sm:$0xff]
  %v5027 = vld [vmem:[%s2 + $0x400] sm:$0xff]
  %v5028 = vld [vmem:[%s2 + $0x408] sm:$0xff]
  %v5029 = vld [vmem:[%s2 + $0x410] sm:$0xff]
  %v5030 = vld [vmem:[%s2 + $0x418] sm:$0xff]
  %v5031 = vld [vmem:[%s2 + $0x420] sm:$0xff]
  %v5032 = vld [vmem:[%s2 + $0x428] sm:$0xff]
  %v5033 = vld [vmem:[%s2 + $0x430] sm:$0xff]
  %v5034 = vld [vmem:[%s2 + $0x438] sm:$0xff]
  %v5035 = vld [vmem:[%s2 + $0x440] sm:$0xf]
  %v5036 = vld [vmem:[%s2 + $0x444] sm:$0xff]
  %v5037 = vld [vmem:[%s2 + $0x44c] sm:$0xff]
  %v5038 = vld [vmem:[%s2 + $0x454] sm:$0xff]
  %v5039 = vld [vmem:[%s2 + $0x45c] sm:$0xff]
  %v5040 = vld [vmem:[%s2 + $0x464] sm:$0xff]
  %v5041 = vld [vmem:[%s2 + $0x46c] sm:$0xff]
  %v5042 = vld [vmem:[%s2 + $0x474] sm:$0xff]
  %v5043 = vld [vmem:[%s2 + $0x47c] sm:$0xff]
  %v5044 = vld [vmem:[%s2 + $0x484] sm:$0xff]
  %v5045 = vld [vmem:[%s2 + $0x48c] sm:$0xff]
  %v5046 = vld [vmem:[%s2 + $0x494] sm:$0xf]
  %v5047 = vld [vmem:[%s2 + $0x498] sm:$0xff]
  %v5048 = vld [vmem:[%s2 + $0x4a0] sm:$0xff]
  %v5049 = vld [vmem:[%s2 + $0x4a8] sm:$0xff]
  %v5050 = vld [vmem:[%s2 + $0x4b0] sm:$0xff]
  %v5051 = vld [vmem:[%s2 + $0x4b8] sm:$0xff]
  %v5052 = vld [vmem:[%s2 + $0x4c0] sm:$0xff]
  %v5053 = vld [vmem:[%s2 + $0x4c8] sm:$0xff]
  %v5054 = vld [vmem:[%s2 + $0x4d0] sm:$0xff]
  %v5055 = vld [vmem:[%s2 + $0x4d8] sm:$0xff]
  %v5056 = vld [vmem:[%s2 + $0x4e0] sm:$0xff]
  %v5057 = vld [vmem:[%s2 + $0x4e8] sm:$0xf]
  %v5058 = vld [vmem:[%s2 + $0x4ec] sm:$0xff]
  %v5059 = vld [vmem:[%s2 + $0x4f4] sm:$0xff]
  %v5060 = vld [vmem:[%s2 + $0x4fc] sm:$0xff]
  %v5061 = vld [vmem:[%s2 + $0x504] sm:$0xff]
  %v5062 = vld [vmem:[%s2 + $0x50c] sm:$0xff]
  %v5063 = vld [vmem:[%s2 + $0x514] sm:$0xff]
  %v5064 = vld [vmem:[%s2 + $0x51c] sm:$0xff]
  %v5065 = vld [vmem:[%s2 + $0x524] sm:$0xff]
  %v5066 = vld [vmem:[%s2 + $0x52c] sm:$0xff]
  %v5067 = vld [vmem:[%s2 + $0x534] sm:$0xff]
  %v5068 = vld [vmem:[%s2 + $0x53c] sm:$0xf]
  %v5069 = vld [vmem:[%s2 + $0x540] sm:$0xff]
  %v5070 = vld [vmem:[%s2 + $0x548] sm:$0xff]
  %v5071 = vld [vmem:[%s2 + $0x550] sm:$0xff]
  %v5072 = vld [vmem:[%s2 + $0x558] sm:$0xff]
  %v5073 = vld [vmem:[%s2 + $0x560] sm:$0xff]
  %v5074 = vld [vmem:[%s2 + $0x568] sm:$0xff]
  %v5075 = vld [vmem:[%s2 + $0x570] sm:$0xff]
  %v5076 = vld [vmem:[%s2 + $0x578] sm:$0xff]
  %v5077 = vld [vmem:[%s2 + $0x580] sm:$0xff]
  %v5078 = vld [vmem:[%s2 + $0x588] sm:$0xff]
  %v5079 = vld [vmem:[%s2 + $0x590] sm:$0xf]
  %v5080 = vld [vmem:[%s2 + $0x594] sm:$0xff]
  %v5081 = vld [vmem:[%s2 + $0x59c] sm:$0xff]
  %v5082 = vld [vmem:[%s2 + $0x5a4] sm:$0xff]
  %v5083 = vld [vmem:[%s2 + $0x5ac] sm:$0xff]
  %v5084 = vld [vmem:[%s2 + $0x5b4] sm:$0xff]
  %v5085 = vld [vmem:[%s2 + $0x5bc] sm:$0xff]
  %v5086 = vld [vmem:[%s2 + $0x5c4] sm:$0xff]
  %v5087 = vld [vmem:[%s2 + $0x5cc] sm:$0xff]
  %v5088 = vld [vmem:[%s2 + $0x5d4] sm:$0xff]
  %v5089 = vld [vmem:[%s2 + $0x5dc] sm:$0xff]
  %v5090 = vld [vmem:[%s2 + $0x5e4] sm:$0xf]
  %v5091 = vld [vmem:[%s2 + $0x5e8] sm:$0xff]
  %v5092 = vld [vmem:[%s2 + $0x5f0] sm:$0xff]
  %v5093 = vld [vmem:[%s2 + $0x5f8] sm:$0xff]
  %v5094 = vld [vmem:[%s2 + $0x600] sm:$0xff]
  %v5095 = vld [vmem:[%s2 + $0x608] sm:$0xff]
  %v5096 = vld [vmem:[%s2 + $0x610] sm:$0xff]
  %v5097 = vld [vmem:[%s2 + $0x618] sm:$0xff]
  %v5098 = vld [vmem:[%s2 + $0x620] sm:$0xff]
  %v5099 = vld [vmem:[%s2 + $0x628] sm:$0xff]
  %v5100 = vld [vmem:[%s2 + $0x630] sm:$0xff]
  %v5101 = vld [vmem:[%s2 + $0x638] sm:$0xf]
  %v5102 = vld [vmem:[%s2 + $0x63c] sm:$0xff]
  %v5103 = vld [vmem:[%s2 + $0x644] sm:$0xff]
  %v5104 = vld [vmem:[%s2 + $0x64c] sm:$0xff]
  %v5105 = vld [vmem:[%s2 + $0x654] sm:$0xff]
  %v5106 = vld [vmem:[%s2 + $0x65c] sm:$0xff]
  %v5107 = vld [vmem:[%s2 + $0x664] sm:$0xff]
  %v5108 = vld [vmem:[%s2 + $0x66c] sm:$0xff]
  %v5109 = vld [vmem:[%s2 + $0x674] sm:$0xff]
  %v5110 = vld [vmem:[%s2 + $0x67c] sm:$0xff]
  %v5111 = vld [vmem:[%s2 + $0x684] sm:$0xff]
  %v5112 = vld [vmem:[%s2 + $0x68c] sm:$0xf]
  %v5113 = vld [vmem:[%s2 + $0x690] sm:$0xff]
  %v5114 = vld [vmem:[%s2 + $0x698] sm:$0xff]
  %v5115 = vld [vmem:[%s2 + $0x6a0] sm:$0xff]
  %v5116 = vld [vmem:[%s2 + $0x6a8] sm:$0xff]
  %v5117 = vld [vmem:[%s2 + $0x6b0] sm:$0xff]
  %v5118 = vld [vmem:[%s2 + $0x6b8] sm:$0xff]
  %v5119 = vld [vmem:[%s2 + $0x6c0] sm:$0xff]
  %v5120 = vld [vmem:[%s2 + $0x6c8] sm:$0xff]
  %v5121 = vld [vmem:[%s2 + $0x6d0] sm:$0xff]
  %v5122 = vld [vmem:[%s2 + $0x6d8] sm:$0xff]
  %v5123 = vld [vmem:[%s2 + $0x6e0] sm:$0xf]
  %v5124 = vld [vmem:[%s2 + $0x6e4] sm:$0xff]
  %v5125 = vld [vmem:[%s2 + $0x6ec] sm:$0xff]
  %v5126 = vld [vmem:[%s2 + $0x6f4] sm:$0xff]
  %v5127 = vld [vmem:[%s2 + $0x6fc] sm:$0xff]
  %v5128 = vld [vmem:[%s2 + $0x704] sm:$0xff]
  %v5129 = vld [vmem:[%s2 + $0x70c] sm:$0xff]
  %v5130 = vld [vmem:[%s2 + $0x714] sm:$0xff]
  %v5131 = vld [vmem:[%s2 + $0x71c] sm:$0xff]
  %v5132 = vld [vmem:[%s2 + $0x724] sm:$0xff]
  %v5133 = vld [vmem:[%s2 + $0x72c] sm:$0xff]
  %v5134 = vld [vmem:[%s2 + $0x734] sm:$0xf]
  %v5135 = vld [vmem:[%s2 + $0x738] sm:$0xff]
  %v5136 = vld [vmem:[%s2 + $0x740] sm:$0xff]
  %v5137 = vld [vmem:[%s2 + $0x748] sm:$0xff]
  %v5138 = vld [vmem:[%s2 + $0x750] sm:$0xff]
  %v5139 = vld [vmem:[%s2 + $0x758] sm:$0xff]
  %v5140 = vld [vmem:[%s2 + $0x760] sm:$0xff]
  %v5141 = vld [vmem:[%s2 + $0x768] sm:$0xff]
  %v5142 = vld [vmem:[%s2 + $0x770] sm:$0xff]
  %v5143 = vld [vmem:[%s2 + $0x778] sm:$0xff]
  %v5144 = vld [vmem:[%s2 + $0x780] sm:$0xff]
  %v5145 = vld [vmem:[%s2 + $0x788] sm:$0xf]
  %v5146 = vld [vmem:[%s2 + $0x78c] sm:$0xff]
  %v5147 = vld [vmem:[%s2 + $0x794] sm:$0xff]
  %v5148 = vld [vmem:[%s2 + $0x79c] sm:$0xff]
  %v5149 = vld [vmem:[%s2 + $0x7a4] sm:$0xff]
  %v5150 = vld [vmem:[%s2 + $0x7ac] sm:$0xff]
  %v5151 = vld [vmem:[%s2 + $0x7b4] sm:$0xff]
  %v5152 = vld [vmem:[%s2 + $0x7bc] sm:$0xff]
  %v5153 = vld [vmem:[%s2 + $0x7c4] sm:$0xff]
  %v5154 = vld [vmem:[%s2 + $0x7cc] sm:$0xff]
  %v5155 = vld [vmem:[%s2 + $0x7d4] sm:$0xff]
  %v5156 = vld [vmem:[%s2 + $0x7dc] sm:$0xf]
  %v5157 = vld [vmem:[%s2 + $0x7e0] sm:$0xff]
  %v5158 = vld [vmem:[%s2 + $0x7e8] sm:$0xff]
  %v5159 = vld [vmem:[%s2 + $0x7f0] sm:$0xff]
  %v5160 = vld [vmem:[%s2 + $0x7f8] sm:$0xff]
  %v5161 = vld [vmem:[%s2 + $0x800] sm:$0xff]
  %v5162 = vld [vmem:[%s2 + $0x808] sm:$0xff]
  %v5163 = vld [vmem:[%s2 + $0x810] sm:$0xff]
  %v5164 = vld [vmem:[%s2 + $0x818] sm:$0xff]
  %v5165 = vld [vmem:[%s2 + $0x820] sm:$0xff]
  %v5166 = vld [vmem:[%s2 + $0x828] sm:$0xff]
  %v5167 = vld [vmem:[%s2 + $0x830] sm:$0xf]
  %v5168 = vld [vmem:[%s2 + $0x834] sm:$0xff]
  %v5169 = vld [vmem:[%s2 + $0x83c] sm:$0xff]
  %v5170 = vld [vmem:[%s2 + $0x844] sm:$0xff]
  %v5171 = vld [vmem:[%s2 + $0x84c] sm:$0xff]
  %v5172 = vld [vmem:[%s2 + $0x854] sm:$0xff]
  %v5173 = vld [vmem:[%s2 + $0x85c] sm:$0xff]
  %v5174 = vld [vmem:[%s2 + $0x864] sm:$0xff]
  %v5175 = vld [vmem:[%s2 + $0x86c] sm:$0xff]
  %v5176 = vld [vmem:[%s2 + $0x874] sm:$0xff]
  %v5177 = vld [vmem:[%s2 + $0x87c] sm:$0xff]
  %v5178 = vld [vmem:[%s2 + $0x884] sm:$0xf]
  %v5179 = vld [vmem:[%s2 + $0x888] sm:$0xff]
  %v5180 = vld [vmem:[%s2 + $0x890] sm:$0xff]
  %v5181 = vld [vmem:[%s2 + $0x898] sm:$0xff]
  %v5182 = vld [vmem:[%s2 + $0x8a0] sm:$0xff]
  %v5183 = vld [vmem:[%s2 + $0x8a8] sm:$0xff]
  %v5184 = vld [vmem:[%s2 + $0x8b0] sm:$0xff]
  %v5185 = vld [vmem:[%s2 + $0x8b8] sm:$0xff]
  %v5186 = vld [vmem:[%s2 + $0x8c0] sm:$0xff]
  %v5187 = vld [vmem:[%s2 + $0x8c8] sm:$0xff]
  %v5188 = vld [vmem:[%s2 + $0x8d0] sm:$0xff]
  %v5189 = vld [vmem:[%s2 + $0x8d8] sm:$0xf]
  %v5190 = vld [vmem:[%s2 + $0x8dc] sm:$0xff]
  %v5191 = vld [vmem:[%s2 + $0x8e4] sm:$0xff]
  %v5192 = vld [vmem:[%s2 + $0x8ec] sm:$0xff]
  %v5193 = vld [vmem:[%s2 + $0x8f4] sm:$0xff]
  %v5194 = vld [vmem:[%s2 + $0x8fc] sm:$0xff]
  %v5195 = vld [vmem:[%s2 + $0x904] sm:$0xff]
  %v5196 = vld [vmem:[%s2 + $0x90c] sm:$0xff]
  %v5197 = vld [vmem:[%s2 + $0x914] sm:$0xff]
  %v5198 = vld [vmem:[%s2 + $0x91c] sm:$0xff]
  %v5199 = vld [vmem:[%s2 + $0x924] sm:$0xff]
  %v5200 = vld [vmem:[%s2 + $0x92c] sm:$0xf]
  %v5201 = vld [vmem:[%s2 + $0x930] sm:$0xff]
  %v5202 = vld [vmem:[%s2 + $0x938] sm:$0xff]
  %v5203 = vld [vmem:[%s2 + $0x940] sm:$0xff]
  %v5204 = vld [vmem:[%s2 + $0x948] sm:$0xff]
  %v5205 = vld [vmem:[%s2 + $0x950] sm:$0xff]
  %v5206 = vld [vmem:[%s2 + $0x958] sm:$0xff]
  %v5207 = vld [vmem:[%s2 + $0x960] sm:$0xff]
  %v5208 = vld [vmem:[%s2 + $0x968] sm:$0xff]
  %v5209 = vld [vmem:[%s2 + $0x970] sm:$0xff]
  %v5210 = vld [vmem:[%s2 + $0x978] sm:$0xff]
  %v5211 = vld [vmem:[%s2 + $0x980] sm:$0xf]
  %v5212 = vld [vmem:[%s2 + $0x984] sm:$0xff]
  %v5213 = vld [vmem:[%s2 + $0x98c] sm:$0xff]
  %v5214 = vld [vmem:[%s2 + $0x994] sm:$0xff]
  %v5215 = vld [vmem:[%s2 + $0x99c] sm:$0xff]
  %v5216 = vld [vmem:[%s2 + $0x9a4] sm:$0xff]
  %v5217 = vld [vmem:[%s2 + $0x9ac] sm:$0xff]
  %v5218 = vld [vmem:[%s2 + $0x9b4] sm:$0xff]
  %v5219 = vld [vmem:[%s2 + $0x9bc] sm:$0xff]
  %v5220 = vld [vmem:[%s2 + $0x9c4] sm:$0xff]
  %v5221 = vld [vmem:[%s2 + $0x9cc] sm:$0xff]
  %v5222 = vld [vmem:[%s2 + $0x9d4] sm:$0xf]
  %v5223 = vld [vmem:[%s2 + $0x9d8] sm:$0xff]
  %v5224 = vld [vmem:[%s2 + $0x9e0] sm:$0xff]
  %v5225 = vld [vmem:[%s2 + $0x9e8] sm:$0xff]
  %v5226 = vld [vmem:[%s2 + $0x9f0] sm:$0xff]
  %v5227 = vld [vmem:[%s2 + $0x9f8] sm:$0xff]
  %v5228 = vld [vmem:[%s2 + $0xa00] sm:$0xff]
  %v5229 = vld [vmem:[%s2 + $0xa08] sm:$0xff]
  %v5230 = vld [vmem:[%s2 + $0xa10] sm:$0xff]
  %v5231 = vld [vmem:[%s2 + $0xa18] sm:$0xff]
  %v5232 = vld [vmem:[%s2 + $0xa20] sm:$0xff]
  %v5233 = vld [vmem:[%s2 + $0xa28] sm:$0xf]
  %v5234 = vld [vmem:[%s2 + $0xa2c] sm:$0xff]
  %v5235 = vld [vmem:[%s2 + $0xa34] sm:$0xff]
  %v5236 = vld [vmem:[%s2 + $0xa3c] sm:$0xff]
  %v5237 = vld [vmem:[%s2 + $0xa44] sm:$0xff]
  %v5238 = vld [vmem:[%s2 + $0xa4c] sm:$0xff]
  %v5239 = vld [vmem:[%s2 + $0xa54] sm:$0xff]
  %v5240 = vld [vmem:[%s2 + $0xa5c] sm:$0xff]
  %v5241 = vld [vmem:[%s2 + $0xa64] sm:$0xff]
  %v5242 = vld [vmem:[%s2 + $0xa6c] sm:$0xff]
  %v5243 = vld [vmem:[%s2 + $0xa74] sm:$0xff]
  %v5244 = vld [vmem:[%s2 + $0xa7c] sm:$0xf]
  %v5245 = vld [vmem:[%s2 + $0xa80] sm:$0xff]
  %v5246 = vld [vmem:[%s2 + $0xa88] sm:$0xff]
  %v5247 = vld [vmem:[%s2 + $0xa90] sm:$0xff]
  %v5248 = vld [vmem:[%s2 + $0xa98] sm:$0xff]
  %v5249 = vld [vmem:[%s2 + $0xaa0] sm:$0xff]
  %v5250 = vld [vmem:[%s2 + $0xaa8] sm:$0xff]
  %v5251 = vld [vmem:[%s2 + $0xab0] sm:$0xff]
  %v5252 = vld [vmem:[%s2 + $0xab8] sm:$0xff]
  %v5253 = vld [vmem:[%s2 + $0xac0] sm:$0xff]
  %v5254 = vld [vmem:[%s2 + $0xac8] sm:$0xff]
  %v5255 = vld [vmem:[%s2 + $0xad0] sm:$0xf]
  %v5256 = vld [vmem:[%s2 + $0xad4] sm:$0xff]
  %v5257 = vld [vmem:[%s2 + $0xadc] sm:$0xff]
  %v5258 = vld [vmem:[%s2 + $0xae4] sm:$0xff]
  %v5259 = vld [vmem:[%s2 + $0xaec] sm:$0xff]
  %v5260 = vld [vmem:[%s2 + $0xaf4] sm:$0xff]
  %v5261 = vld [vmem:[%s2 + $0xafc] sm:$0xff]
  %v5262 = vld [vmem:[%s2 + $0xb04] sm:$0xff]
  %v5263 = vld [vmem:[%s2 + $0xb0c] sm:$0xff]
  %v5264 = vld [vmem:[%s2 + $0xb14] sm:$0xff]
  %v5265 = vld [vmem:[%s2 + $0xb1c] sm:$0xff]
  %v5266 = vld [vmem:[%s2 + $0xb24] sm:$0xf]
  %v5267 = vld [vmem:[%s2 + $0xb28] sm:$0xff]
  %v5268 = vld [vmem:[%s2 + $0xb30] sm:$0xff]
  %v5269 = vld [vmem:[%s2 + $0xb38] sm:$0xff]
  %v5270 = vld [vmem:[%s2 + $0xb40] sm:$0xff]
  %v5271 = vld [vmem:[%s2 + $0xb48] sm:$0xff]
  %v5272 = vld [vmem:[%s2 + $0xb50] sm:$0xff]
  %v5273 = vld [vmem:[%s2 + $0xb58] sm:$0xff]
  %v5274 = vld [vmem:[%s2 + $0xb60] sm:$0xff]
  %v5275 = vld [vmem:[%s2 + $0xb68] sm:$0xff]
  %v5276 = vld [vmem:[%s2 + $0xb70] sm:$0xff]
  %v5277 = vld [vmem:[%s2 + $0xb78] sm:$0xf]
  %v5278 = vld [vmem:[%s2 + $0xb7c] sm:$0xff]
  %v5279 = vld [vmem:[%s2 + $0xb84] sm:$0xff]
  %v5280 = vld [vmem:[%s2 + $0xb8c] sm:$0xff]
  %v5281 = vld [vmem:[%s2 + $0xb94] sm:$0xff]
  %v5282 = vld [vmem:[%s2 + $0xb9c] sm:$0xff]
  %v5283 = vld [vmem:[%s2 + $0xba4] sm:$0xff]
  %v5284 = vld [vmem:[%s2 + $0xbac] sm:$0xff]
  %v5285 = vld [vmem:[%s2 + $0xbb4] sm:$0xff]
  %v5286 = vld [vmem:[%s2 + $0xbbc] sm:$0xff]
  %v5287 = vld [vmem:[%s2 + $0xbc4] sm:$0xff]
  %v5288 = vld [vmem:[%s2 + $0xbcc] sm:$0xf]
  %v5289 = vld [vmem:[%s2 + $0xbd0] sm:$0xff]
  %v5290 = vld [vmem:[%s2 + $0xbd8] sm:$0xff]
  %v5291 = vld [vmem:[%s2 + $0xbe0] sm:$0xff]
  %v5292 = vld [vmem:[%s2 + $0xbe8] sm:$0xff]
  %v5293 = vld [vmem:[%s2 + $0xbf0] sm:$0xff]
  %v5294 = vld [vmem:[%s2 + $0xbf8] sm:$0xff]
  %v5295 = vld [vmem:[%s2 + $0xc00] sm:$0xff]
  %v5296 = vld [vmem:[%s2 + $0xc08] sm:$0xff]
  %v5297 = vld [vmem:[%s2 + $0xc10] sm:$0xff]
  %v5298 = vld [vmem:[%s2 + $0xc18] sm:$0xff]
  %v5299 = vld [vmem:[%s2 + $0xc20] sm:$0xf]
  %v5300 = vld [vmem:[%s2 + $0xc24] sm:$0xff]
  %v5301 = vld [vmem:[%s2 + $0xc2c] sm:$0xff]
  %v5302 = vld [vmem:[%s2 + $0xc34] sm:$0xff]
  %v5303 = vld [vmem:[%s2 + $0xc3c] sm:$0xff]
  %v5304 = vld [vmem:[%s2 + $0xc44] sm:$0xff]
  %v5305 = vld [vmem:[%s2 + $0xc4c] sm:$0xff]
  %v5306 = vld [vmem:[%s2 + $0xc54] sm:$0xff]
  %v5307 = vld [vmem:[%s2 + $0xc5c] sm:$0xff]
  %v5308 = vld [vmem:[%s2 + $0xc64] sm:$0xff]
  %v5309 = vld [vmem:[%s2 + $0xc6c] sm:$0xff]
  %v5310 = vld [vmem:[%s2 + $0xc74] sm:$0xf]
  %v5311 = vld [vmem:[%s2 + $0xc78] sm:$0xff]
  %v5312 = vld [vmem:[%s2 + $0xc80] sm:$0xff]
  %v5313 = vld [vmem:[%s2 + $0xc88] sm:$0xff]
  %v5314 = vld [vmem:[%s2 + $0xc90] sm:$0xff]
  %v5315 = vld [vmem:[%s2 + $0xc98] sm:$0xff]
  %v5316 = vld [vmem:[%s2 + $0xca0] sm:$0xff]
  %v5317 = vld [vmem:[%s2 + $0xca8] sm:$0xff]
  %v5318 = vld [vmem:[%s2 + $0xcb0] sm:$0xff]
  %v5319 = vld [vmem:[%s2 + $0xcb8] sm:$0xff]
  %v5320 = vld [vmem:[%s2 + $0xcc0] sm:$0xff]
  %v5321 = vld [vmem:[%s2 + $0xcc8] sm:$0xf]
  %v5322 = vld [vmem:[%s2 + $0xccc] sm:$0xff]
  %v5323 = vld [vmem:[%s2 + $0xcd4] sm:$0xff]
  %v5324 = vld [vmem:[%s2 + $0xcdc] sm:$0xff]
  %v5325 = vld [vmem:[%s2 + $0xce4] sm:$0xff]
  %v5326 = vld [vmem:[%s2 + $0xcec] sm:$0xff]
  %v5327 = vld [vmem:[%s2 + $0xcf4] sm:$0xff]
  %v5328 = vld [vmem:[%s2 + $0xcfc] sm:$0xff]
  %v5329 = vld [vmem:[%s2 + $0xd04] sm:$0xff]
  %v5330 = vld [vmem:[%s2 + $0xd0c] sm:$0xff]
  %v5331 = vld [vmem:[%s2 + $0xd14] sm:$0xff]
  %v5332 = vld [vmem:[%s2 + $0xd1c] sm:$0xf]
  %v5333 = vld [vmem:[%s2 + $0xd20] sm:$0xff]
  %v5334 = vld [vmem:[%s2 + $0xd28] sm:$0xff]
  %v5335 = vld [vmem:[%s2 + $0xd30] sm:$0xff]
  %v5336 = vld [vmem:[%s2 + $0xd38] sm:$0xff]
  %v5337 = vld [vmem:[%s2 + $0xd40] sm:$0xff]
  %v5338 = vld [vmem:[%s2 + $0xd48] sm:$0xff]
  %v5339 = vld [vmem:[%s2 + $0xd50] sm:$0xff]
  %v5340 = vld [vmem:[%s2 + $0xd58] sm:$0xff]
  %v5341 = vld [vmem:[%s2 + $0xd60] sm:$0xff]
  %v5342 = vld [vmem:[%s2 + $0xd68] sm:$0xff]
  %v5343 = vld [vmem:[%s2 + $0xd70] sm:$0xf]
  %v5344 = vld [vmem:[%s2 + $0xd74] sm:$0xff]
  %v5345 = vld [vmem:[%s2 + $0xd7c] sm:$0xff]
  %v5346 = vld [vmem:[%s2 + $0xd84] sm:$0xff]
  %v5347 = vld [vmem:[%s2 + $0xd8c] sm:$0xff]
  %v5348 = vld [vmem:[%s2 + $0xd94] sm:$0xff]
  %v5349 = vld [vmem:[%s2 + $0xd9c] sm:$0xff]
  %v5350 = vld [vmem:[%s2 + $0xda4] sm:$0xff]
  %v5351 = vld [vmem:[%s2 + $0xdac] sm:$0xff]
  %v5352 = vld [vmem:[%s2 + $0xdb4] sm:$0xff]
  %v5353 = vld [vmem:[%s2 + $0xdbc] sm:$0xff]
  %v5354 = vld [vmem:[%s2 + $0xdc4] sm:$0xf]
  %v5355 = vld [vmem:[%s2 + $0xdc8] sm:$0xff]
  %v5356 = vld [vmem:[%s2 + $0xdd0] sm:$0xff]
  %v5357 = vld [vmem:[%s2 + $0xdd8] sm:$0xff]
  %v5358 = vld [vmem:[%s2 + $0xde0] sm:$0xff]
  %v5359 = vld [vmem:[%s2 + $0xde8] sm:$0xff]
  %v5360 = vld [vmem:[%s2 + $0xdf0] sm:$0xff]
  %v5361 = vld [vmem:[%s2 + $0xdf8] sm:$0xff]
  %v5362 = vld [vmem:[%s2 + $0xe00] sm:$0xff]
  %v5363 = vld [vmem:[%s2 + $0xe08] sm:$0xff]
  %v5364 = vld [vmem:[%s2 + $0xe10] sm:$0xff]
  %v5365 = vld [vmem:[%s2 + $0xe18] sm:$0xf]
  %v5366 = vld [vmem:[%s2 + $0xe1c] sm:$0xff]
  %v5367 = vld [vmem:[%s2 + $0xe24] sm:$0xff]
  %v5368 = vld [vmem:[%s2 + $0xe2c] sm:$0xff]
  %v5369 = vld [vmem:[%s2 + $0xe34] sm:$0xff]
  %v5370 = vld [vmem:[%s2 + $0xe3c] sm:$0xff]
  %v5371 = vld [vmem:[%s2 + $0xe44] sm:$0xff]
  %v5372 = vld [vmem:[%s2 + $0xe4c] sm:$0xff]
  %v5373 = vld [vmem:[%s2 + $0xe54] sm:$0xff]
  %v5374 = vld [vmem:[%s2 + $0xe5c] sm:$0xff]
  %v5375 = vld [vmem:[%s2 + $0xe64] sm:$0xff]
  %v5376 = vld [vmem:[%s2 + $0xe6c] sm:$0xf]
  %v5377 = vld [vmem:[%s2 + $0xe70] sm:$0xff]
  %v5378 = vld [vmem:[%s2 + $0xe78] sm:$0xff]
  %v5379 = vld [vmem:[%s2 + $0xe80] sm:$0xff]
  %v5380 = vld [vmem:[%s2 + $0xe88] sm:$0xff]
  %v5381 = vld [vmem:[%s2 + $0xe90] sm:$0xff]
  %v5382 = vld [vmem:[%s2 + $0xe98] sm:$0xff]
  %v5383 = vld [vmem:[%s2 + $0xea0] sm:$0xff]
  %v5384 = vld [vmem:[%s2 + $0xea8] sm:$0xff]
  %v5385 = vld [vmem:[%s2 + $0xeb0] sm:$0xff]
  %v5386 = vld [vmem:[%s2 + $0xeb8] sm:$0xff]
  %v5387 = vld [vmem:[%s2 + $0xec0] sm:$0xf]
  %v5388 = vld [vmem:[%s2 + $0xec4] sm:$0xff]
  %v5389 = vld [vmem:[%s2 + $0xecc] sm:$0xff]
  %v5390 = vld [vmem:[%s2 + $0xed4] sm:$0xff]
  %v5391 = vld [vmem:[%s2 + $0xedc] sm:$0xff]
  %v5392 = vld [vmem:[%s2 + $0xee4] sm:$0xff]
  %v5393 = vld [vmem:[%s2 + $0xeec] sm:$0xff]
  %v5394 = vld [vmem:[%s2 + $0xef4] sm:$0xff]
  %v5395 = vld [vmem:[%s2 + $0xefc] sm:$0xff]
  %v5396 = vld [vmem:[%s2 + $0xf04] sm:$0xff]
  %v5397 = vld [vmem:[%s2 + $0xf0c] sm:$0xff]
  %v5398 = vld [vmem:[%s2 + $0xf14] sm:$0xf]
  %v5399 = vld [vmem:[%s2 + $0xf18] sm:$0xff]
  %v5400 = vld [vmem:[%s2 + $0xf20] sm:$0xff]
  %v5401 = vld [vmem:[%s2 + $0xf28] sm:$0xff]
  %v5402 = vld [vmem:[%s2 + $0xf30] sm:$0xff]
  %v5403 = vld [vmem:[%s2 + $0xf38] sm:$0xff]
  %v5404 = vld [vmem:[%s2 + $0xf40] sm:$0xff]
  %v5405 = vld [vmem:[%s2 + $0xf48] sm:$0xff]
  %v5406 = vld [vmem:[%s2 + $0xf50] sm:$0xff]
  %v5407 = vld [vmem:[%s2 + $0xf58] sm:$0xff]
  %v5408 = vld [vmem:[%s2 + $0xf60] sm:$0xff]
  %v5409 = vld [vmem:[%s2 + $0xf68] sm:$0xf]
  %v5410 = vld [vmem:[%s2 + $0xf6c] sm:$0xff]
  %v5411 = vld [vmem:[%s2 + $0xf74] sm:$0xff]
  %v5412 = vld [vmem:[%s2 + $0xf7c] sm:$0xff]
  %v5413 = vld [vmem:[%s2 + $0xf84] sm:$0xff]
  %v5414 = vld [vmem:[%s2 + $0xf8c] sm:$0xff]
  %v5415 = vld [vmem:[%s2 + $0xf94] sm:$0xff]
  %v5416 = vld [vmem:[%s2 + $0xf9c] sm:$0xff]
  %v5417 = vld [vmem:[%s2 + $0xfa4] sm:$0xff]
  %v5418 = vld [vmem:[%s2 + $0xfac] sm:$0xff]
  %v5419 = vld [vmem:[%s2 + $0xfb4] sm:$0xff]
  %v5420 = vld [vmem:[%s2 + $0xfbc] sm:$0xf]
  %v5421 = vld [vmem:[%s2 + $0xfc0] sm:$0xff]
  %v5422 = vld [vmem:[%s2 + $0xfc8] sm:$0xff]
  %v5423 = vld [vmem:[%s2 + $0xfd0] sm:$0xff]
  %v5424 = vld [vmem:[%s2 + $0xfd8] sm:$0xff]
  %v5425 = vld [vmem:[%s2 + $0xfe0] sm:$0xff]
  %v5426 = vld [vmem:[%s2 + $0xfe8] sm:$0xff]
  %v5427 = vld [vmem:[%s2 + $0xff0] sm:$0xff]
  %v5428 = vld [vmem:[%s2 + $0xff8] sm:$0xff]
  %v5429 = vld [vmem:[%s2 + $0x1000] sm:$0xff]
  %v5430 = vld [vmem:[%s2 + $0x1008] sm:$0xff]
  %v5431 = vld [vmem:[%s2 + $0x1010] sm:$0xf]
  %v5432 = vld [vmem:[%s2 + $0x1014] sm:$0xff]
  %v5433 = vld [vmem:[%s2 + $0x101c] sm:$0xff]
  %v5434 = vld [vmem:[%s2 + $0x1024] sm:$0xff]
  %v5435 = vld [vmem:[%s2 + $0x102c] sm:$0xff]
  %v5436 = vld [vmem:[%s2 + $0x1034] sm:$0xff]
  %v5437 = vld [vmem:[%s2 + $0x103c] sm:$0xff]
  %v5438 = vld [vmem:[%s2 + $0x1044] sm:$0xff]
  %v5439 = vld [vmem:[%s2 + $0x104c] sm:$0xff]
  %v5440 = vld [vmem:[%s2 + $0x1054] sm:$0xff]
  %v5441 = vld [vmem:[%s2 + $0x105c] sm:$0xff]
  %v5442 = vld [vmem:[%s2 + $0x1064] sm:$0xf]
  %v5443 = vld [vmem:[%s2 + $0x1068] sm:$0xff]
  %v5444 = vld [vmem:[%s2 + $0x1070] sm:$0xff]
  %v5445 = vld [vmem:[%s2 + $0x1078] sm:$0xff]
  %v5446 = vld [vmem:[%s2 + $0x1080] sm:$0xff]
  %v5447 = vld [vmem:[%s2 + $0x1088] sm:$0xff]
  %v5448 = vld [vmem:[%s2 + $0x1090] sm:$0xff]
  %v5449 = vld [vmem:[%s2 + $0x1098] sm:$0xff]
  %v5450 = vld [vmem:[%s2 + $0x10a0] sm:$0xff]
  %v5451 = vld [vmem:[%s2 + $0x10a8] sm:$0xff]
  %v5452 = vld [vmem:[%s2 + $0x10b0] sm:$0xff]
  %v5453 = vld [vmem:[%s2 + $0x10b8] sm:$0xf]
  %v5454 = vld [vmem:[%s2 + $0x10bc] sm:$0xff]
  %v5455 = vld [vmem:[%s2 + $0x10c4] sm:$0xff]
  %v5456 = vld [vmem:[%s2 + $0x10cc] sm:$0xff]
  %v5457 = vld [vmem:[%s2 + $0x10d4] sm:$0xff]
  %v5458 = vld [vmem:[%s2 + $0x10dc] sm:$0xff]
  %v5459 = vld [vmem:[%s2 + $0x10e4] sm:$0xff]
  %v5460 = vld [vmem:[%s2 + $0x10ec] sm:$0xff]
  %v5461 = vld [vmem:[%s2 + $0x10f4] sm:$0xff]
  %v5462 = vld [vmem:[%s2 + $0x10fc] sm:$0xff]
  %v5463 = vld [vmem:[%s2 + $0x1104] sm:$0xff]
  %v5464 = vld [vmem:[%s2 + $0x110c] sm:$0xf]
  %v5465 = vld [vmem:[%s2 + $0x1110] sm:$0xff]
  %v5466 = vld [vmem:[%s2 + $0x1118] sm:$0xff]
  %v5467 = vld [vmem:[%s2 + $0x1120] sm:$0xff]
  %v5468 = vld [vmem:[%s2 + $0x1128] sm:$0xff]
  %v5469 = vld [vmem:[%s2 + $0x1130] sm:$0xff]
  %v5470 = vld [vmem:[%s2 + $0x1138] sm:$0xff]
  %v5471 = vld [vmem:[%s2 + $0x1140] sm:$0xff]
  %v5472 = vld [vmem:[%s2 + $0x1148] sm:$0xff]
  %v5473 = vld [vmem:[%s2 + $0x1150] sm:$0xff]
  %v5474 = vld [vmem:[%s2 + $0x1158] sm:$0xff]
  %v5475 = vld [vmem:[%s2 + $0x1160] sm:$0xf]
  %v5476 = vld [vmem:[%s2 + $0x1164] sm:$0xff]
  %v5477 = vld [vmem:[%s2 + $0x116c] sm:$0xff]
  %v5478 = vld [vmem:[%s2 + $0x1174] sm:$0xff]
  %v5479 = vld [vmem:[%s2 + $0x117c] sm:$0xff]
  %v5480 = vld [vmem:[%s2 + $0x1184] sm:$0xff]
  %v5481 = vld [vmem:[%s2 + $0x118c] sm:$0xff]
  %v5482 = vld [vmem:[%s2 + $0x1194] sm:$0xff]
  %v5483 = vld [vmem:[%s2 + $0x119c] sm:$0xff]
  %v5484 = vld [vmem:[%s2 + $0x11a4] sm:$0xff]
  %v5485 = vld [vmem:[%s2 + $0x11ac] sm:$0xff]
  %v5486 = vld [vmem:[%s2 + $0x11b4] sm:$0xf]
  %v5487 = vld [vmem:[%s2 + $0x11b8] sm:$0xff]
  %v5488 = vld [vmem:[%s2 + $0x11c0] sm:$0xff]
  %v5489 = vld [vmem:[%s2 + $0x11c8] sm:$0xff]
  %v5490 = vld [vmem:[%s2 + $0x11d0] sm:$0xff]
  %v5491 = vld [vmem:[%s2 + $0x11d8] sm:$0xff]
  %v5492 = vld [vmem:[%s2 + $0x11e0] sm:$0xff]
  %v5493 = vld [vmem:[%s2 + $0x11e8] sm:$0xff]
  %v5494 = vld [vmem:[%s2 + $0x11f0] sm:$0xff]
  %v5495 = vld [vmem:[%s2 + $0x11f8] sm:$0xff]
  %v5496 = vld [vmem:[%s2 + $0x1200] sm:$0xff]
  %v5497 = vld [vmem:[%s2 + $0x1208] sm:$0xf]
  %v5498 = vld [vmem:[%s2 + $0x120c] sm:$0xff]
  %v5499 = vld [vmem:[%s2 + $0x1214] sm:$0xff]
  %v5500 = vld [vmem:[%s2 + $0x121c] sm:$0xff]
  %v5501 = vld [vmem:[%s2 + $0x1224] sm:$0xff]
  %v5502 = vld [vmem:[%s2 + $0x122c] sm:$0xff]
  %v5503 = vld [vmem:[%s2 + $0x1234] sm:$0xff]
  %v5504 = vld [vmem:[%s2 + $0x123c] sm:$0xff]
  %v5505 = vld [vmem:[%s2 + $0x1244] sm:$0xff]
  %v5506 = vld [vmem:[%s2 + $0x124c] sm:$0xff]
  %v5507 = vld [vmem:[%s2 + $0x1254] sm:$0xff]
  %v5508 = vld [vmem:[%s2 + $0x125c] sm:$0xf]
  %v6125 = vunpack.c.l.b16 %v4893
  %v6126 = vunpack.c.h.b16 %v4893
  %v6127 = vunpack.c.l.b16 %v4894
  %v6128 = vunpack.c.h.b16 %v4894
  %v6129 = vunpack.c.l.b16 %v4895
  %v6130 = vunpack.c.h.b16 %v4895
  %v6131 = vunpack.c.l.b16 %v4896
  %v6132 = vunpack.c.h.b16 %v4896
  %v6133 = vunpack.c.l.b16 %v4897
  %v6134 = vunpack.c.h.b16 %v4897
  %v6135 = vunpack.c.l.b16 %v4898
  %v6136 = vunpack.c.h.b16 %v4898
  %v6137 = vunpack.c.l.b16 %v4899
  %v6138 = vunpack.c.h.b16 %v4899
  %v6139 = vunpack.c.l.b16 %v4900
  %v6140 = vunpack.c.h.b16 %v4900
  %v6141 = vunpack.c.l.b16 %v4901
  %v6142 = vunpack.c.h.b16 %v4901
  %v6143 = vunpack.c.l.b16 %v4902
  %v6144 = vunpack.c.h.b16 %v4902
  %v6145 = vunpack.c.l.b16 %v4903
  %v6146 = vunpack.c.l.b16 %v4904
  %v6147 = vunpack.c.h.b16 %v4904
  %v6148 = vunpack.c.l.b16 %v4905
  %v6149 = vunpack.c.h.b16 %v4905
  %v6150 = vunpack.c.l.b16 %v4906
  %v6151 = vunpack.c.h.b16 %v4906
  %v6152 = vunpack.c.l.b16 %v4907
  %v6153 = vunpack.c.h.b16 %v4907
  %v6154 = vunpack.c.l.b16 %v4908
  %v6155 = vunpack.c.h.b16 %v4908
  %v6156 = vunpack.c.l.b16 %v4909
  %v6157 = vunpack.c.h.b16 %v4909
  %v6158 = vunpack.c.l.b16 %v4910
  %v6159 = vunpack.c.h.b16 %v4910
  %v6160 = vunpack.c.l.b16 %v4911
  %v6161 = vunpack.c.h.b16 %v4911
  %v6162 = vunpack.c.l.b16 %v4912
  %v6163 = vunpack.c.h.b16 %v4912
  %v6164 = vunpack.c.l.b16 %v4913
  %v6165 = vunpack.c.h.b16 %v4913
  %v6166 = vunpack.c.l.b16 %v4914
  %v6167 = vunpack.c.l.b16 %v4915
  %v6168 = vunpack.c.h.b16 %v4915
  %v6169 = vunpack.c.l.b16 %v4916
  %v6170 = vunpack.c.h.b16 %v4916
  %v6171 = vunpack.c.l.b16 %v4917
  %v6172 = vunpack.c.h.b16 %v4917
  %v6173 = vunpack.c.l.b16 %v4918
  %v6174 = vunpack.c.h.b16 %v4918
  %v6175 = vunpack.c.l.b16 %v4919
  %v6176 = vunpack.c.h.b16 %v4919
  %v6177 = vunpack.c.l.b16 %v4920
  %v6178 = vunpack.c.h.b16 %v4920
  %v6179 = vunpack.c.l.b16 %v4921
  %v6180 = vunpack.c.h.b16 %v4921
  %v6181 = vunpack.c.l.b16 %v4922
  %v6182 = vunpack.c.h.b16 %v4922
  %v6183 = vunpack.c.l.b16 %v4923
  %v6184 = vunpack.c.h.b16 %v4923
  %v6185 = vunpack.c.l.b16 %v4924
  %v6186 = vunpack.c.h.b16 %v4924
  %v6187 = vunpack.c.l.b16 %v4925
  %v6188 = vunpack.c.l.b16 %v4926
  %v6189 = vunpack.c.h.b16 %v4926
  %v6190 = vunpack.c.l.b16 %v4927
  %v6191 = vunpack.c.h.b16 %v4927
  %v6192 = vunpack.c.l.b16 %v4928
  %v6193 = vunpack.c.h.b16 %v4928
  %v6194 = vunpack.c.l.b16 %v4929
  %v6195 = vunpack.c.h.b16 %v4929
  %v6196 = vunpack.c.l.b16 %v4930
  %v6197 = vunpack.c.h.b16 %v4930
  %v6198 = vunpack.c.l.b16 %v4931
  %v6199 = vunpack.c.h.b16 %v4931
  %v6200 = vunpack.c.l.b16 %v4932
  %v6201 = vunpack.c.h.b16 %v4932
  %v6202 = vunpack.c.l.b16 %v4933
  %v6203 = vunpack.c.h.b16 %v4933
  %v6204 = vunpack.c.l.b16 %v4934
  %v6205 = vunpack.c.h.b16 %v4934
  %v6206 = vunpack.c.l.b16 %v4935
  %v6207 = vunpack.c.h.b16 %v4935
  %v6208 = vunpack.c.l.b16 %v4936
  %v6209 = vunpack.c.l.b16 %v4937
  %v6210 = vunpack.c.h.b16 %v4937
  %v6211 = vunpack.c.l.b16 %v4938
  %v6212 = vunpack.c.h.b16 %v4938
  %v6213 = vunpack.c.l.b16 %v4939
  %v6214 = vunpack.c.h.b16 %v4939
  %v6215 = vunpack.c.l.b16 %v4940
  %v6216 = vunpack.c.h.b16 %v4940
  %v6217 = vunpack.c.l.b16 %v4941
  %v6218 = vunpack.c.h.b16 %v4941
  %v6219 = vunpack.c.l.b16 %v4942
  %v6220 = vunpack.c.h.b16 %v4942
  %v6221 = vunpack.c.l.b16 %v4943
  %v6222 = vunpack.c.h.b16 %v4943
  %v6223 = vunpack.c.l.b16 %v4944
  %v6224 = vunpack.c.h.b16 %v4944
  %v6225 = vunpack.c.l.b16 %v4945
  %v6226 = vunpack.c.h.b16 %v4945
  %v6227 = vunpack.c.l.b16 %v4946
  %v6228 = vunpack.c.h.b16 %v4946
  %v6229 = vunpack.c.l.b16 %v4947
  %v6230 = vunpack.c.l.b16 %v4948
  %v6231 = vunpack.c.h.b16 %v4948
  %v6232 = vunpack.c.l.b16 %v4949
  %v6233 = vunpack.c.h.b16 %v4949
  %v6234 = vunpack.c.l.b16 %v4950
  %v6235 = vunpack.c.h.b16 %v4950
  %v6236 = vunpack.c.l.b16 %v4951
  %v6237 = vunpack.c.h.b16 %v4951
  %v6238 = vunpack.c.l.b16 %v4952
  %v6239 = vunpack.c.h.b16 %v4952
  %v6240 = vunpack.c.l.b16 %v4953
  %v6241 = vunpack.c.h.b16 %v4953
  %v6242 = vunpack.c.l.b16 %v4954
  %v6243 = vunpack.c.h.b16 %v4954
  %v6244 = vunpack.c.l.b16 %v4955
  %v6245 = vunpack.c.h.b16 %v4955
  %v6246 = vunpack.c.l.b16 %v4956
  %v6247 = vunpack.c.h.b16 %v4956
  %v6248 = vunpack.c.l.b16 %v4957
  %v6249 = vunpack.c.h.b16 %v4957
  %v6250 = vunpack.c.l.b16 %v4958
  %v6251 = vunpack.c.l.b16 %v4959
  %v6252 = vunpack.c.h.b16 %v4959
  %v6253 = vunpack.c.l.b16 %v4960
  %v6254 = vunpack.c.h.b16 %v4960
  %v6255 = vunpack.c.l.b16 %v4961
  %v6256 = vunpack.c.h.b16 %v4961
  %v6257 = vunpack.c.l.b16 %v4962
  %v6258 = vunpack.c.h.b16 %v4962
  %v6259 = vunpack.c.l.b16 %v4963
  %v6260 = vunpack.c.h.b16 %v4963
  %v6261 = vunpack.c.l.b16 %v4964
  %v6262 = vunpack.c.h.b16 %v4964
  %v6263 = vunpack.c.l.b16 %v4965
  %v6264 = vunpack.c.h.b16 %v4965
  %v6265 = vunpack.c.l.b16 %v4966
  %v6266 = vunpack.c.h.b16 %v4966
  %v6267 = vunpack.c.l.b16 %v4967
  %v6268 = vunpack.c.h.b16 %v4967
  %v6269 = vunpack.c.l.b16 %v4968
  %v6270 = vunpack.c.h.b16 %v4968
  %v6271 = vunpack.c.l.b16 %v4969
  %v6272 = vunpack.c.l.b16 %v4970
  %v6273 = vunpack.c.h.b16 %v4970
  %v6274 = vunpack.c.l.b16 %v4971
  %v6275 = vunpack.c.h.b16 %v4971
  %v6276 = vunpack.c.l.b16 %v4972
  %v6277 = vunpack.c.h.b16 %v4972
  %v6278 = vunpack.c.l.b16 %v4973
  %v6279 = vunpack.c.h.b16 %v4973
  %v6280 = vunpack.c.l.b16 %v4974
  %v6281 = vunpack.c.h.b16 %v4974
  %v6282 = vunpack.c.l.b16 %v4975
  %v6283 = vunpack.c.h.b16 %v4975
  %v6284 = vunpack.c.l.b16 %v4976
  %v6285 = vunpack.c.h.b16 %v4976
  %v6286 = vunpack.c.l.b16 %v4977
  %v6287 = vunpack.c.h.b16 %v4977
  %v6288 = vunpack.c.l.b16 %v4978
  %v6289 = vunpack.c.h.b16 %v4978
  %v6290 = vunpack.c.l.b16 %v4979
  %v6291 = vunpack.c.h.b16 %v4979
  %v6292 = vunpack.c.l.b16 %v4980
  %v6293 = vunpack.c.l.b16 %v4981
  %v6294 = vunpack.c.h.b16 %v4981
  %v6295 = vunpack.c.l.b16 %v4982
  %v6296 = vunpack.c.h.b16 %v4982
  %v6297 = vunpack.c.l.b16 %v4983
  %v6298 = vunpack.c.h.b16 %v4983
  %v6299 = vunpack.c.l.b16 %v4984
  %v6300 = vunpack.c.h.b16 %v4984
  %v6301 = vunpack.c.l.b16 %v4985
  %v6302 = vunpack.c.h.b16 %v4985
  %v6303 = vunpack.c.l.b16 %v4986
  %v6304 = vunpack.c.h.b16 %v4986
  %v6305 = vunpack.c.l.b16 %v4987
  %v6306 = vunpack.c.h.b16 %v4987
  %v6307 = vunpack.c.l.b16 %v4988
  %v6308 = vunpack.c.h.b16 %v4988
  %v6309 = vunpack.c.l.b16 %v4989
  %v6310 = vunpack.c.h.b16 %v4989
  %v6311 = vunpack.c.l.b16 %v4990
  %v6312 = vunpack.c.h.b16 %v4990
  %v6313 = vunpack.c.l.b16 %v4991
  %v6314 = vunpack.c.l.b16 %v4992
  %v6315 = vunpack.c.h.b16 %v4992
  %v6316 = vunpack.c.l.b16 %v4993
  %v6317 = vunpack.c.h.b16 %v4993
  %v6318 = vunpack.c.l.b16 %v4994
  %v6319 = vunpack.c.h.b16 %v4994
  %v6320 = vunpack.c.l.b16 %v4995
  %v6321 = vunpack.c.h.b16 %v4995
  %v6322 = vunpack.c.l.b16 %v4996
  %v6323 = vunpack.c.h.b16 %v4996
  %v6324 = vunpack.c.l.b16 %v4997
  %v6325 = vunpack.c.h.b16 %v4997
  %v6326 = vunpack.c.l.b16 %v4998
  %v6327 = vunpack.c.h.b16 %v4998
  %v6328 = vunpack.c.l.b16 %v4999
  %v6329 = vunpack.c.h.b16 %v4999
  %v6330 = vunpack.c.l.b16 %v5000
  %v6331 = vunpack.c.h.b16 %v5000
  %v6332 = vunpack.c.l.b16 %v5001
  %v6333 = vunpack.c.h.b16 %v5001
  %v6334 = vunpack.c.l.b16 %v5002
  %v6335 = vunpack.c.l.b16 %v5003
  %v6336 = vunpack.c.h.b16 %v5003
  %v6337 = vunpack.c.l.b16 %v5004
  %v6338 = vunpack.c.h.b16 %v5004
  %v6339 = vunpack.c.l.b16 %v5005
  %v6340 = vunpack.c.h.b16 %v5005
  %v6341 = vunpack.c.l.b16 %v5006
  %v6342 = vunpack.c.h.b16 %v5006
  %v6343 = vunpack.c.l.b16 %v5007
  %v6344 = vunpack.c.h.b16 %v5007
  %v6345 = vunpack.c.l.b16 %v5008
  %v6346 = vunpack.c.h.b16 %v5008
  %v6347 = vunpack.c.l.b16 %v5009
  %v6348 = vunpack.c.h.b16 %v5009
  %v6349 = vunpack.c.l.b16 %v5010
  %v6350 = vunpack.c.h.b16 %v5010
  %v6351 = vunpack.c.l.b16 %v5011
  %v6352 = vunpack.c.h.b16 %v5011
  %v6353 = vunpack.c.l.b16 %v5012
  %v6354 = vunpack.c.h.b16 %v5012
  %v6355 = vunpack.c.l.b16 %v5013
  %v6356 = vunpack.c.l.b16 %v5014
  %v6357 = vunpack.c.h.b16 %v5014
  %v6358 = vunpack.c.l.b16 %v5015
  %v6359 = vunpack.c.h.b16 %v5015
  %v6360 = vunpack.c.l.b16 %v5016
  %v6361 = vunpack.c.h.b16 %v5016
  %v6362 = vunpack.c.l.b16 %v5017
  %v6363 = vunpack.c.h.b16 %v5017
  %v6364 = vunpack.c.l.b16 %v5018
  %v6365 = vunpack.c.h.b16 %v5018
  %v6366 = vunpack.c.l.b16 %v5019
  %v6367 = vunpack.c.h.b16 %v5019
  %v6368 = vunpack.c.l.b16 %v5020
  %v6369 = vunpack.c.h.b16 %v5020
  %v6370 = vunpack.c.l.b16 %v5021
  %v6371 = vunpack.c.h.b16 %v5021
  %v6372 = vunpack.c.l.b16 %v5022
  %v6373 = vunpack.c.h.b16 %v5022
  %v6374 = vunpack.c.l.b16 %v5023
  %v6375 = vunpack.c.h.b16 %v5023
  %v6376 = vunpack.c.l.b16 %v5024
  %v6377 = vunpack.c.l.b16 %v5025
  %v6378 = vunpack.c.h.b16 %v5025
  %v6379 = vunpack.c.l.b16 %v5026
  %v6380 = vunpack.c.h.b16 %v5026
  %v6381 = vunpack.c.l.b16 %v5027
  %v6382 = vunpack.c.h.b16 %v5027
  %v6383 = vunpack.c.l.b16 %v5028
  %v6384 = vunpack.c.h.b16 %v5028
  %v6385 = vunpack.c.l.b16 %v5029
  %v6386 = vunpack.c.h.b16 %v5029
  %v6387 = vunpack.c.l.b16 %v5030
  %v6388 = vunpack.c.h.b16 %v5030
  %v6389 = vunpack.c.l.b16 %v5031
  %v6390 = vunpack.c.h.b16 %v5031
  %v6391 = vunpack.c.l.b16 %v5032
  %v6392 = vunpack.c.h.b16 %v5032
  %v6393 = vunpack.c.l.b16 %v5033
  %v6394 = vunpack.c.h.b16 %v5033
  %v6395 = vunpack.c.l.b16 %v5034
  %v6396 = vunpack.c.h.b16 %v5034
  %v6397 = vunpack.c.l.b16 %v5035
  %v6398 = vunpack.c.l.b16 %v5036
  %v6399 = vunpack.c.h.b16 %v5036
  %v6400 = vunpack.c.l.b16 %v5037
  %v6401 = vunpack.c.h.b16 %v5037
  %v6402 = vunpack.c.l.b16 %v5038
  %v6403 = vunpack.c.h.b16 %v5038
  %v6404 = vunpack.c.l.b16 %v5039
  %v6405 = vunpack.c.h.b16 %v5039
  %v6406 = vunpack.c.l.b16 %v5040
  %v6407 = vunpack.c.h.b16 %v5040
  %v6408 = vunpack.c.l.b16 %v5041
  %v6409 = vunpack.c.h.b16 %v5041
  %v6410 = vunpack.c.l.b16 %v5042
  %v6411 = vunpack.c.h.b16 %v5042
  %v6412 = vunpack.c.l.b16 %v5043
  %v6413 = vunpack.c.h.b16 %v5043
  %v6414 = vunpack.c.l.b16 %v5044
  %v6415 = vunpack.c.h.b16 %v5044
  %v6416 = vunpack.c.l.b16 %v5045
  %v6417 = vunpack.c.h.b16 %v5045
  %v6418 = vunpack.c.l.b16 %v5046
  %v6419 = vunpack.c.l.b16 %v5047
  %v6420 = vunpack.c.h.b16 %v5047
  %v6421 = vunpack.c.l.b16 %v5048
  %v6422 = vunpack.c.h.b16 %v5048
  %v6423 = vunpack.c.l.b16 %v5049
  %v6424 = vunpack.c.h.b16 %v5049
  %v6425 = vunpack.c.l.b16 %v5050
  %v6426 = vunpack.c.h.b16 %v5050
  %v6427 = vunpack.c.l.b16 %v5051
  %v6428 = vunpack.c.h.b16 %v5051
  %v6429 = vunpack.c.l.b16 %v5052
  %v6430 = vunpack.c.h.b16 %v5052
  %v6431 = vunpack.c.l.b16 %v5053
  %v6432 = vunpack.c.h.b16 %v5053
  %v6433 = vunpack.c.l.b16 %v5054
  %v6434 = vunpack.c.h.b16 %v5054
  %v6435 = vunpack.c.l.b16 %v5055
  %v6436 = vunpack.c.h.b16 %v5055
  %v6437 = vunpack.c.l.b16 %v5056
  %v6438 = vunpack.c.h.b16 %v5056
  %v6439 = vunpack.c.l.b16 %v5057
  %v6440 = vunpack.c.l.b16 %v5058
  %v6441 = vunpack.c.h.b16 %v5058
  %v6442 = vunpack.c.l.b16 %v5059
  %v6443 = vunpack.c.h.b16 %v5059
  %v6444 = vunpack.c.l.b16 %v5060
  %v6445 = vunpack.c.h.b16 %v5060
  %v6446 = vunpack.c.l.b16 %v5061
  %v6447 = vunpack.c.h.b16 %v5061
  %v6448 = vunpack.c.l.b16 %v5062
  %v6449 = vunpack.c.h.b16 %v5062
  %v6450 = vunpack.c.l.b16 %v5063
  %v6451 = vunpack.c.h.b16 %v5063
  %v6452 = vunpack.c.l.b16 %v5064
  %v6453 = vunpack.c.h.b16 %v5064
  %v6454 = vunpack.c.l.b16 %v5065
  %v6455 = vunpack.c.h.b16 %v5065
  %v6456 = vunpack.c.l.b16 %v5066
  %v6457 = vunpack.c.h.b16 %v5066
  %v6458 = vunpack.c.l.b16 %v5067
  %v6459 = vunpack.c.h.b16 %v5067
  %v6460 = vunpack.c.l.b16 %v5068
  %v6461 = vunpack.c.l.b16 %v5069
  %v6462 = vunpack.c.h.b16 %v5069
  %v6463 = vunpack.c.l.b16 %v5070
  %v6464 = vunpack.c.h.b16 %v5070
  %v6465 = vunpack.c.l.b16 %v5071
  %v6466 = vunpack.c.h.b16 %v5071
  %v6467 = vunpack.c.l.b16 %v5072
  %v6468 = vunpack.c.h.b16 %v5072
  %v6469 = vunpack.c.l.b16 %v5073
  %v6470 = vunpack.c.h.b16 %v5073
  %v6471 = vunpack.c.l.b16 %v5074
  %v6472 = vunpack.c.h.b16 %v5074
  %v6473 = vunpack.c.l.b16 %v5075
  %v6474 = vunpack.c.h.b16 %v5075
  %v6475 = vunpack.c.l.b16 %v5076
  %v6476 = vunpack.c.h.b16 %v5076
  %v6477 = vunpack.c.l.b16 %v5077
  %v6478 = vunpack.c.h.b16 %v5077
  %v6479 = vunpack.c.l.b16 %v5078
  %v6480 = vunpack.c.h.b16 %v5078
  %v6481 = vunpack.c.l.b16 %v5079
  %v6482 = vunpack.c.l.b16 %v5080
  %v6483 = vunpack.c.h.b16 %v5080
  %v6484 = vunpack.c.l.b16 %v5081
  %v6485 = vunpack.c.h.b16 %v5081
  %v6486 = vunpack.c.l.b16 %v5082
  %v6487 = vunpack.c.h.b16 %v5082
  %v6488 = vunpack.c.l.b16 %v5083
  %v6489 = vunpack.c.h.b16 %v5083
  %v6490 = vunpack.c.l.b16 %v5084
  %v6491 = vunpack.c.h.b16 %v5084
  %v6492 = vunpack.c.l.b16 %v5085
  %v6493 = vunpack.c.h.b16 %v5085
  %v6494 = vunpack.c.l.b16 %v5086
  %v6495 = vunpack.c.h.b16 %v5086
  %v6496 = vunpack.c.l.b16 %v5087
  %v6497 = vunpack.c.h.b16 %v5087
  %v6498 = vunpack.c.l.b16 %v5088
  %v6499 = vunpack.c.h.b16 %v5088
  %v6500 = vunpack.c.l.b16 %v5089
  %v6501 = vunpack.c.h.b16 %v5089
  %v6502 = vunpack.c.l.b16 %v5090
  %v6503 = vunpack.c.l.b16 %v5091
  %v6504 = vunpack.c.h.b16 %v5091
  %v6505 = vunpack.c.l.b16 %v5092
  %v6506 = vunpack.c.h.b16 %v5092
  %v6507 = vunpack.c.l.b16 %v5093
  %v6508 = vunpack.c.h.b16 %v5093
  %v6509 = vunpack.c.l.b16 %v5094
  %v6510 = vunpack.c.h.b16 %v5094
  %v6511 = vunpack.c.l.b16 %v5095
  %v6512 = vunpack.c.h.b16 %v5095
  %v6513 = vunpack.c.l.b16 %v5096
  %v6514 = vunpack.c.h.b16 %v5096
  %v6515 = vunpack.c.l.b16 %v5097
  %v6516 = vunpack.c.h.b16 %v5097
  %v6517 = vunpack.c.l.b16 %v5098
  %v6518 = vunpack.c.h.b16 %v5098
  %v6519 = vunpack.c.l.b16 %v5099
  %v6520 = vunpack.c.h.b16 %v5099
  %v6521 = vunpack.c.l.b16 %v5100
  %v6522 = vunpack.c.h.b16 %v5100
  %v6523 = vunpack.c.l.b16 %v5101
  %v6524 = vunpack.c.l.b16 %v5102
  %v6525 = vunpack.c.h.b16 %v5102
  %v6526 = vunpack.c.l.b16 %v5103
  %v6527 = vunpack.c.h.b16 %v5103
  %v6528 = vunpack.c.l.b16 %v5104
  %v6529 = vunpack.c.h.b16 %v5104
  %v6530 = vunpack.c.l.b16 %v5105
  %v6531 = vunpack.c.h.b16 %v5105
  %v6532 = vunpack.c.l.b16 %v5106
  %v6533 = vunpack.c.h.b16 %v5106
  %v6534 = vunpack.c.l.b16 %v5107
  %v6535 = vunpack.c.h.b16 %v5107
  %v6536 = vunpack.c.l.b16 %v5108
  %v6537 = vunpack.c.h.b16 %v5108
  %v6538 = vunpack.c.l.b16 %v5109
  %v6539 = vunpack.c.h.b16 %v5109
  %v6540 = vunpack.c.l.b16 %v5110
  %v6541 = vunpack.c.h.b16 %v5110
  %v6542 = vunpack.c.l.b16 %v5111
  %v6543 = vunpack.c.h.b16 %v5111
  %v6544 = vunpack.c.l.b16 %v5112
  %v6545 = vunpack.c.l.b16 %v5113
  %v6546 = vunpack.c.h.b16 %v5113
  %v6547 = vunpack.c.l.b16 %v5114
  %v6548 = vunpack.c.h.b16 %v5114
  %v6549 = vunpack.c.l.b16 %v5115
  %v6550 = vunpack.c.h.b16 %v5115
  %v6551 = vunpack.c.l.b16 %v5116
  %v6552 = vunpack.c.h.b16 %v5116
  %v6553 = vunpack.c.l.b16 %v5117
  %v6554 = vunpack.c.h.b16 %v5117
  %v6555 = vunpack.c.l.b16 %v5118
  %v6556 = vunpack.c.h.b16 %v5118
  %v6557 = vunpack.c.l.b16 %v5119
  %v6558 = vunpack.c.h.b16 %v5119
  %v6559 = vunpack.c.l.b16 %v5120
  %v6560 = vunpack.c.h.b16 %v5120
  %v6561 = vunpack.c.l.b16 %v5121
  %v6562 = vunpack.c.h.b16 %v5121
  %v6563 = vunpack.c.l.b16 %v5122
  %v6564 = vunpack.c.h.b16 %v5122
  %v6565 = vunpack.c.l.b16 %v5123
  %v6566 = vunpack.c.l.b16 %v5124
  %v6567 = vunpack.c.h.b16 %v5124
  %v6568 = vunpack.c.l.b16 %v5125
  %v6569 = vunpack.c.h.b16 %v5125
  %v6570 = vunpack.c.l.b16 %v5126
  %v6571 = vunpack.c.h.b16 %v5126
  %v6572 = vunpack.c.l.b16 %v5127
  %v6573 = vunpack.c.h.b16 %v5127
  %v6574 = vunpack.c.l.b16 %v5128
  %v6575 = vunpack.c.h.b16 %v5128
  %v6576 = vunpack.c.l.b16 %v5129
  %v6577 = vunpack.c.h.b16 %v5129
  %v6578 = vunpack.c.l.b16 %v5130
  %v6579 = vunpack.c.h.b16 %v5130
  %v6580 = vunpack.c.l.b16 %v5131
  %v6581 = vunpack.c.h.b16 %v5131
  %v6582 = vunpack.c.l.b16 %v5132
  %v6583 = vunpack.c.h.b16 %v5132
  %v6584 = vunpack.c.l.b16 %v5133
  %v6585 = vunpack.c.h.b16 %v5133
  %v6586 = vunpack.c.l.b16 %v5134
  %v6587 = vunpack.c.l.b16 %v5135
  %v6588 = vunpack.c.h.b16 %v5135
  %v6589 = vunpack.c.l.b16 %v5136
  %v6590 = vunpack.c.h.b16 %v5136
  %v6591 = vunpack.c.l.b16 %v5137
  %v6592 = vunpack.c.h.b16 %v5137
  %v6593 = vunpack.c.l.b16 %v5138
  %v6594 = vunpack.c.h.b16 %v5138
  %v6595 = vunpack.c.l.b16 %v5139
  %v6596 = vunpack.c.h.b16 %v5139
  %v6597 = vunpack.c.l.b16 %v5140
  %v6598 = vunpack.c.h.b16 %v5140
  %v6599 = vunpack.c.l.b16 %v5141
  %v6600 = vunpack.c.h.b16 %v5141
  %v6601 = vunpack.c.l.b16 %v5142
  %v6602 = vunpack.c.h.b16 %v5142
  %v6603 = vunpack.c.l.b16 %v5143
  %v6604 = vunpack.c.h.b16 %v5143
  %v6605 = vunpack.c.l.b16 %v5144
  %v6606 = vunpack.c.h.b16 %v5144
  %v6607 = vunpack.c.l.b16 %v5145
  %v6608 = vunpack.c.l.b16 %v5146
  %v6609 = vunpack.c.h.b16 %v5146
  %v6610 = vunpack.c.l.b16 %v5147
  %v6611 = vunpack.c.h.b16 %v5147
  %v6612 = vunpack.c.l.b16 %v5148
  %v6613 = vunpack.c.h.b16 %v5148
  %v6614 = vunpack.c.l.b16 %v5149
  %v6615 = vunpack.c.h.b16 %v5149
  %v6616 = vunpack.c.l.b16 %v5150
  %v6617 = vunpack.c.h.b16 %v5150
  %v6618 = vunpack.c.l.b16 %v5151
  %v6619 = vunpack.c.h.b16 %v5151
  %v6620 = vunpack.c.l.b16 %v5152
  %v6621 = vunpack.c.h.b16 %v5152
  %v6622 = vunpack.c.l.b16 %v5153
  %v6623 = vunpack.c.h.b16 %v5153
  %v6624 = vunpack.c.l.b16 %v5154
  %v6625 = vunpack.c.h.b16 %v5154
  %v6626 = vunpack.c.l.b16 %v5155
  %v6627 = vunpack.c.h.b16 %v5155
  %v6628 = vunpack.c.l.b16 %v5156
  %v6629 = vunpack.c.l.b16 %v5157
  %v6630 = vunpack.c.h.b16 %v5157
  %v6631 = vunpack.c.l.b16 %v5158
  %v6632 = vunpack.c.h.b16 %v5158
  %v6633 = vunpack.c.l.b16 %v5159
  %v6634 = vunpack.c.h.b16 %v5159
  %v6635 = vunpack.c.l.b16 %v5160
  %v6636 = vunpack.c.h.b16 %v5160
  %v6637 = vunpack.c.l.b16 %v5161
  %v6638 = vunpack.c.h.b16 %v5161
  %v6639 = vunpack.c.l.b16 %v5162
  %v6640 = vunpack.c.h.b16 %v5162
  %v6641 = vunpack.c.l.b16 %v5163
  %v6642 = vunpack.c.h.b16 %v5163
  %v6643 = vunpack.c.l.b16 %v5164
  %v6644 = vunpack.c.h.b16 %v5164
  %v6645 = vunpack.c.l.b16 %v5165
  %v6646 = vunpack.c.h.b16 %v5165
  %v6647 = vunpack.c.l.b16 %v5166
  %v6648 = vunpack.c.h.b16 %v5166
  %v6649 = vunpack.c.l.b16 %v5167
  %v6650 = vunpack.c.l.b16 %v5168
  %v6651 = vunpack.c.h.b16 %v5168
  %v6652 = vunpack.c.l.b16 %v5169
  %v6653 = vunpack.c.h.b16 %v5169
  %v6654 = vunpack.c.l.b16 %v5170
  %v6655 = vunpack.c.h.b16 %v5170
  %v6656 = vunpack.c.l.b16 %v5171
  %v6657 = vunpack.c.h.b16 %v5171
  %v6658 = vunpack.c.l.b16 %v5172
  %v6659 = vunpack.c.h.b16 %v5172
  %v6660 = vunpack.c.l.b16 %v5173
  %v6661 = vunpack.c.h.b16 %v5173
  %v6662 = vunpack.c.l.b16 %v5174
  %v6663 = vunpack.c.h.b16 %v5174
  %v6664 = vunpack.c.l.b16 %v5175
  %v6665 = vunpack.c.h.b16 %v5175
  %v6666 = vunpack.c.l.b16 %v5176
  %v6667 = vunpack.c.h.b16 %v5176
  %v6668 = vunpack.c.l.b16 %v5177
  %v6669 = vunpack.c.h.b16 %v5177
  %v6670 = vunpack.c.l.b16 %v5178
  %v6671 = vunpack.c.l.b16 %v5179
  %v6672 = vunpack.c.h.b16 %v5179
  %v6673 = vunpack.c.l.b16 %v5180
  %v6674 = vunpack.c.h.b16 %v5180
  %v6675 = vunpack.c.l.b16 %v5181
  %v6676 = vunpack.c.h.b16 %v5181
  %v6677 = vunpack.c.l.b16 %v5182
  %v6678 = vunpack.c.h.b16 %v5182
  %v6679 = vunpack.c.l.b16 %v5183
  %v6680 = vunpack.c.h.b16 %v5183
  %v6681 = vunpack.c.l.b16 %v5184
  %v6682 = vunpack.c.h.b16 %v5184
  %v6683 = vunpack.c.l.b16 %v5185
  %v6684 = vunpack.c.h.b16 %v5185
  %v6685 = vunpack.c.l.b16 %v5186
  %v6686 = vunpack.c.h.b16 %v5186
  %v6687 = vunpack.c.l.b16 %v5187
  %v6688 = vunpack.c.h.b16 %v5187
  %v6689 = vunpack.c.l.b16 %v5188
  %v6690 = vunpack.c.h.b16 %v5188
  %v6691 = vunpack.c.l.b16 %v5189
  %v6692 = vunpack.c.l.b16 %v5190
  %v6693 = vunpack.c.h.b16 %v5190
  %v6694 = vunpack.c.l.b16 %v5191
  %v6695 = vunpack.c.h.b16 %v5191
  %v6696 = vunpack.c.l.b16 %v5192
  %v6697 = vunpack.c.h.b16 %v5192
  %v6698 = vunpack.c.l.b16 %v5193
  %v6699 = vunpack.c.h.b16 %v5193
  %v6700 = vunpack.c.l.b16 %v5194
  %v6701 = vunpack.c.h.b16 %v5194
  %v6702 = vunpack.c.l.b16 %v5195
  %v6703 = vunpack.c.h.b16 %v5195
  %v6704 = vunpack.c.l.b16 %v5196
  %v6705 = vunpack.c.h.b16 %v5196
  %v6706 = vunpack.c.l.b16 %v5197
  %v6707 = vunpack.c.h.b16 %v5197
  %v6708 = vunpack.c.l.b16 %v5198
  %v6709 = vunpack.c.h.b16 %v5198
  %v6710 = vunpack.c.l.b16 %v5199
  %v6711 = vunpack.c.h.b16 %v5199
  %v6712 = vunpack.c.l.b16 %v5200
  %v6713 = vunpack.c.l.b16 %v5201
  %v6714 = vunpack.c.h.b16 %v5201
  %v6715 = vunpack.c.l.b16 %v5202
  %v6716 = vunpack.c.h.b16 %v5202
  %v6717 = vunpack.c.l.b16 %v5203
  %v6718 = vunpack.c.h.b16 %v5203
  %v6719 = vunpack.c.l.b16 %v5204
  %v6720 = vunpack.c.h.b16 %v5204
  %v6721 = vunpack.c.l.b16 %v5205
  %v6722 = vunpack.c.h.b16 %v5205
  %v6723 = vunpack.c.l.b16 %v5206
  %v6724 = vunpack.c.h.b16 %v5206
  %v6725 = vunpack.c.l.b16 %v5207
  %v6726 = vunpack.c.h.b16 %v5207
  %v6727 = vunpack.c.l.b16 %v5208
  %v6728 = vunpack.c.h.b16 %v5208
  %v6729 = vunpack.c.l.b16 %v5209
  %v6730 = vunpack.c.h.b16 %v5209
  %v6731 = vunpack.c.l.b16 %v5210
  %v6732 = vunpack.c.h.b16 %v5210
  %v6733 = vunpack.c.l.b16 %v5211
  %v6734 = vunpack.c.l.b16 %v5212
  %v6735 = vunpack.c.h.b16 %v5212
  %v6736 = vunpack.c.l.b16 %v5213
  %v6737 = vunpack.c.h.b16 %v5213
  %v6738 = vunpack.c.l.b16 %v5214
  %v6739 = vunpack.c.h.b16 %v5214
  %v6740 = vunpack.c.l.b16 %v5215
  %v6741 = vunpack.c.h.b16 %v5215
  %v6742 = vunpack.c.l.b16 %v5216
  %v6743 = vunpack.c.h.b16 %v5216
  %v6744 = vunpack.c.l.b16 %v5217
  %v6745 = vunpack.c.h.b16 %v5217
  %v6746 = vunpack.c.l.b16 %v5218
  %v6747 = vunpack.c.h.b16 %v5218
  %v6748 = vunpack.c.l.b16 %v5219
  %v6749 = vunpack.c.h.b16 %v5219
  %v6750 = vunpack.c.l.b16 %v5220
  %v6751 = vunpack.c.h.b16 %v5220
  %v6752 = vunpack.c.l.b16 %v5221
  %v6753 = vunpack.c.h.b16 %v5221
  %v6754 = vunpack.c.l.b16 %v5222
  %v6755 = vunpack.c.l.b16 %v5223
  %v6756 = vunpack.c.h.b16 %v5223
  %v6757 = vunpack.c.l.b16 %v5224
  %v6758 = vunpack.c.h.b16 %v5224
  %v6759 = vunpack.c.l.b16 %v5225
  %v6760 = vunpack.c.h.b16 %v5225
  %v6761 = vunpack.c.l.b16 %v5226
  %v6762 = vunpack.c.h.b16 %v5226
  %v6763 = vunpack.c.l.b16 %v5227
  %v6764 = vunpack.c.h.b16 %v5227
  %v6765 = vunpack.c.l.b16 %v5228
  %v6766 = vunpack.c.h.b16 %v5228
  %v6767 = vunpack.c.l.b16 %v5229
  %v6768 = vunpack.c.h.b16 %v5229
  %v6769 = vunpack.c.l.b16 %v5230
  %v6770 = vunpack.c.h.b16 %v5230
  %v6771 = vunpack.c.l.b16 %v5231
  %v6772 = vunpack.c.h.b16 %v5231
  %v6773 = vunpack.c.l.b16 %v5232
  %v6774 = vunpack.c.h.b16 %v5232
  %v6775 = vunpack.c.l.b16 %v5233
  %v6776 = vunpack.c.l.b16 %v5234
  %v6777 = vunpack.c.h.b16 %v5234
  %v6778 = vunpack.c.l.b16 %v5235
  %v6779 = vunpack.c.h.b16 %v5235
  %v6780 = vunpack.c.l.b16 %v5236
  %v6781 = vunpack.c.h.b16 %v5236
  %v6782 = vunpack.c.l.b16 %v5237
  %v6783 = vunpack.c.h.b16 %v5237
  %v6784 = vunpack.c.l.b16 %v5238
  %v6785 = vunpack.c.h.b16 %v5238
  %v6786 = vunpack.c.l.b16 %v5239
  %v6787 = vunpack.c.h.b16 %v5239
  %v6788 = vunpack.c.l.b16 %v5240
  %v6789 = vunpack.c.h.b16 %v5240
  %v6790 = vunpack.c.l.b16 %v5241
  %v6791 = vunpack.c.h.b16 %v5241
  %v6792 = vunpack.c.l.b16 %v5242
  %v6793 = vunpack.c.h.b16 %v5242
  %v6794 = vunpack.c.l.b16 %v5243
  %v6795 = vunpack.c.h.b16 %v5243
  %v6796 = vunpack.c.l.b16 %v5244
  %v6797 = vunpack.c.l.b16 %v5245
  %v6798 = vunpack.c.h.b16 %v5245
  %v6799 = vunpack.c.l.b16 %v5246
  %v6800 = vunpack.c.h.b16 %v5246
  %v6801 = vunpack.c.l.b16 %v5247
  %v6802 = vunpack.c.h.b16 %v5247
  %v6803 = vunpack.c.l.b16 %v5248
  %v6804 = vunpack.c.h.b16 %v5248
  %v6805 = vunpack.c.l.b16 %v5249
  %v6806 = vunpack.c.h.b16 %v5249
  %v6807 = vunpack.c.l.b16 %v5250
  %v6808 = vunpack.c.h.b16 %v5250
  %v6809 = vunpack.c.l.b16 %v5251
  %v6810 = vunpack.c.h.b16 %v5251
  %v6811 = vunpack.c.l.b16 %v5252
  %v6812 = vunpack.c.h.b16 %v5252
  %v6813 = vunpack.c.l.b16 %v5253
  %v6814 = vunpack.c.h.b16 %v5253
  %v6815 = vunpack.c.l.b16 %v5254
  %v6816 = vunpack.c.h.b16 %v5254
  %v6817 = vunpack.c.l.b16 %v5255
  %v6818 = vunpack.c.l.b16 %v5256
  %v6819 = vunpack.c.h.b16 %v5256
  %v6820 = vunpack.c.l.b16 %v5257
  %v6821 = vunpack.c.h.b16 %v5257
  %v6822 = vunpack.c.l.b16 %v5258
  %v6823 = vunpack.c.h.b16 %v5258
  %v6824 = vunpack.c.l.b16 %v5259
  %v6825 = vunpack.c.h.b16 %v5259
  %v6826 = vunpack.c.l.b16 %v5260
  %v6827 = vunpack.c.h.b16 %v5260
  %v6828 = vunpack.c.l.b16 %v5261
  %v6829 = vunpack.c.h.b16 %v5261
  %v6830 = vunpack.c.l.b16 %v5262
  %v6831 = vunpack.c.h.b16 %v5262
  %v6832 = vunpack.c.l.b16 %v5263
  %v6833 = vunpack.c.h.b16 %v5263
  %v6834 = vunpack.c.l.b16 %v5264
  %v6835 = vunpack.c.h.b16 %v5264
  %v6836 = vunpack.c.l.b16 %v5265
  %v6837 = vunpack.c.h.b16 %v5265
  %v6838 = vunpack.c.l.b16 %v5266
  %v6839 = vunpack.c.l.b16 %v5267
  %v6840 = vunpack.c.h.b16 %v5267
  %v6841 = vunpack.c.l.b16 %v5268
  %v6842 = vunpack.c.h.b16 %v5268
  %v6843 = vunpack.c.l.b16 %v5269
  %v6844 = vunpack.c.h.b16 %v5269
  %v6845 = vunpack.c.l.b16 %v5270
  %v6846 = vunpack.c.h.b16 %v5270
  %v6847 = vunpack.c.l.b16 %v5271
  %v6848 = vunpack.c.h.b16 %v5271
  %v6849 = vunpack.c.l.b16 %v5272
  %v6850 = vunpack.c.h.b16 %v5272
  %v6851 = vunpack.c.l.b16 %v5273
  %v6852 = vunpack.c.h.b16 %v5273
  %v6853 = vunpack.c.l.b16 %v5274
  %v6854 = vunpack.c.h.b16 %v5274
  %v6855 = vunpack.c.l.b16 %v5275
  %v6856 = vunpack.c.h.b16 %v5275
  %v6857 = vunpack.c.l.b16 %v5276
  %v6858 = vunpack.c.h.b16 %v5276
  %v6859 = vunpack.c.l.b16 %v5277
  %v6860 = vunpack.c.l.b16 %v5278
  %v6861 = vunpack.c.h.b16 %v5278
  %v6862 = vunpack.c.l.b16 %v5279
  %v6863 = vunpack.c.h.b16 %v5279
  %v6864 = vunpack.c.l.b16 %v5280
  %v6865 = vunpack.c.h.b16 %v5280
  %v6866 = vunpack.c.l.b16 %v5281
  %v6867 = vunpack.c.h.b16 %v5281
  %v6868 = vunpack.c.l.b16 %v5282
  %v6869 = vunpack.c.h.b16 %v5282
  %v6870 = vunpack.c.l.b16 %v5283
  %v6871 = vunpack.c.h.b16 %v5283
  %v6872 = vunpack.c.l.b16 %v5284
  %v6873 = vunpack.c.h.b16 %v5284
  %v6874 = vunpack.c.l.b16 %v5285
  %v6875 = vunpack.c.h.b16 %v5285
  %v6876 = vunpack.c.l.b16 %v5286
  %v6877 = vunpack.c.h.b16 %v5286
  %v6878 = vunpack.c.l.b16 %v5287
  %v6879 = vunpack.c.h.b16 %v5287
  %v6880 = vunpack.c.l.b16 %v5288
  %v6881 = vunpack.c.l.b16 %v5289
  %v6882 = vunpack.c.h.b16 %v5289
  %v6883 = vunpack.c.l.b16 %v5290
  %v6884 = vunpack.c.h.b16 %v5290
  %v6885 = vunpack.c.l.b16 %v5291
  %v6886 = vunpack.c.h.b16 %v5291
  %v6887 = vunpack.c.l.b16 %v5292
  %v6888 = vunpack.c.h.b16 %v5292
  %v6889 = vunpack.c.l.b16 %v5293
  %v6890 = vunpack.c.h.b16 %v5293
  %v6891 = vunpack.c.l.b16 %v5294
  %v6892 = vunpack.c.h.b16 %v5294
  %v6893 = vunpack.c.l.b16 %v5295
  %v6894 = vunpack.c.h.b16 %v5295
  %v6895 = vunpack.c.l.b16 %v5296
  %v6896 = vunpack.c.h.b16 %v5296
  %v6897 = vunpack.c.l.b16 %v5297
  %v6898 = vunpack.c.h.b16 %v5297
  %v6899 = vunpack.c.l.b16 %v5298
  %v6900 = vunpack.c.h.b16 %v5298
  %v6901 = vunpack.c.l.b16 %v5299
  %v6902 = vunpack.c.l.b16 %v5300
  %v6903 = vunpack.c.h.b16 %v5300
  %v6904 = vunpack.c.l.b16 %v5301
  %v6905 = vunpack.c.h.b16 %v5301
  %v6906 = vunpack.c.l.b16 %v5302
  %v6907 = vunpack.c.h.b16 %v5302
  %v6908 = vunpack.c.l.b16 %v5303
  %v6909 = vunpack.c.h.b16 %v5303
  %v6910 = vunpack.c.l.b16 %v5304
  %v6911 = vunpack.c.h.b16 %v5304
  %v6912 = vunpack.c.l.b16 %v5305
  %v6913 = vunpack.c.h.b16 %v5305
  %v6914 = vunpack.c.l.b16 %v5306
  %v6915 = vunpack.c.h.b16 %v5306
  %v6916 = vunpack.c.l.b16 %v5307
  %v6917 = vunpack.c.h.b16 %v5307
  %v6918 = vunpack.c.l.b16 %v5308
  %v6919 = vunpack.c.h.b16 %v5308
  %v6920 = vunpack.c.l.b16 %v5309
  %v6921 = vunpack.c.h.b16 %v5309
  %v6922 = vunpack.c.l.b16 %v5310
  %v6923 = vunpack.c.l.b16 %v5311
  %v6924 = vunpack.c.h.b16 %v5311
  %v6925 = vunpack.c.l.b16 %v5312
  %v6926 = vunpack.c.h.b16 %v5312
  %v6927 = vunpack.c.l.b16 %v5313
  %v6928 = vunpack.c.h.b16 %v5313
  %v6929 = vunpack.c.l.b16 %v5314
  %v6930 = vunpack.c.h.b16 %v5314
  %v6931 = vunpack.c.l.b16 %v5315
  %v6932 = vunpack.c.h.b16 %v5315
  %v6933 = vunpack.c.l.b16 %v5316
  %v6934 = vunpack.c.h.b16 %v5316
  %v6935 = vunpack.c.l.b16 %v5317
  %v6936 = vunpack.c.h.b16 %v5317
  %v6937 = vunpack.c.l.b16 %v5318
  %v6938 = vunpack.c.h.b16 %v5318
  %v6939 = vunpack.c.l.b16 %v5319
  %v6940 = vunpack.c.h.b16 %v5319
  %v6941 = vunpack.c.l.b16 %v5320
  %v6942 = vunpack.c.h.b16 %v5320
  %v6943 = vunpack.c.l.b16 %v5321
  %v6944 = vunpack.c.l.b16 %v5322
  %v6945 = vunpack.c.h.b16 %v5322
  %v6946 = vunpack.c.l.b16 %v5323
  %v6947 = vunpack.c.h.b16 %v5323
  %v6948 = vunpack.c.l.b16 %v5324
  %v6949 = vunpack.c.h.b16 %v5324
  %v6950 = vunpack.c.l.b16 %v5325
  %v6951 = vunpack.c.h.b16 %v5325
  %v6952 = vunpack.c.l.b16 %v5326
  %v6953 = vunpack.c.h.b16 %v5326
  %v6954 = vunpack.c.l.b16 %v5327
  %v6955 = vunpack.c.h.b16 %v5327
  %v6956 = vunpack.c.l.b16 %v5328
  %v6957 = vunpack.c.h.b16 %v5328
  %v6958 = vunpack.c.l.b16 %v5329
  %v6959 = vunpack.c.h.b16 %v5329
  %v6960 = vunpack.c.l.b16 %v5330
  %v6961 = vunpack.c.h.b16 %v5330
  %v6962 = vunpack.c.l.b16 %v5331
  %v6963 = vunpack.c.h.b16 %v5331
  %v6964 = vunpack.c.l.b16 %v5332
  %v6965 = vunpack.c.l.b16 %v5333
  %v6966 = vunpack.c.h.b16 %v5333
  %v6967 = vunpack.c.l.b16 %v5334
  %v6968 = vunpack.c.h.b16 %v5334
  %v6969 = vunpack.c.l.b16 %v5335
  %v6970 = vunpack.c.h.b16 %v5335
  %v6971 = vunpack.c.l.b16 %v5336
  %v6972 = vunpack.c.h.b16 %v5336
  %v6973 = vunpack.c.l.b16 %v5337
  %v6974 = vunpack.c.h.b16 %v5337
  %v6975 = vunpack.c.l.b16 %v5338
  %v6976 = vunpack.c.h.b16 %v5338
  %v6977 = vunpack.c.l.b16 %v5339
  %v6978 = vunpack.c.h.b16 %v5339
  %v6979 = vunpack.c.l.b16 %v5340
  %v6980 = vunpack.c.h.b16 %v5340
  %v6981 = vunpack.c.l.b16 %v5341
  %v6982 = vunpack.c.h.b16 %v5341
  %v6983 = vunpack.c.l.b16 %v5342
  %v6984 = vunpack.c.h.b16 %v5342
  %v6985 = vunpack.c.l.b16 %v5343
  %v6986 = vunpack.c.l.b16 %v5344
  %v6987 = vunpack.c.h.b16 %v5344
  %v6988 = vunpack.c.l.b16 %v5345
  %v6989 = vunpack.c.h.b16 %v5345
  %v6990 = vunpack.c.l.b16 %v5346
  %v6991 = vunpack.c.h.b16 %v5346
  %v6992 = vunpack.c.l.b16 %v5347
  %v6993 = vunpack.c.h.b16 %v5347
  %v6994 = vunpack.c.l.b16 %v5348
  %v6995 = vunpack.c.h.b16 %v5348
  %v6996 = vunpack.c.l.b16 %v5349
  %v6997 = vunpack.c.h.b16 %v5349
  %v6998 = vunpack.c.l.b16 %v5350
  %v6999 = vunpack.c.h.b16 %v5350
  %v7000 = vunpack.c.l.b16 %v5351
  %v7001 = vunpack.c.h.b16 %v5351
  %v7002 = vunpack.c.l.b16 %v5352
  %v7003 = vunpack.c.h.b16 %v5352
  %v7004 = vunpack.c.l.b16 %v5353
  %v7005 = vunpack.c.h.b16 %v5353
  %v7006 = vunpack.c.l.b16 %v5354
  %v7007 = vunpack.c.l.b16 %v5355
  %v7008 = vunpack.c.h.b16 %v5355
  %v7009 = vunpack.c.l.b16 %v5356
  %v7010 = vunpack.c.h.b16 %v5356
  %v7011 = vunpack.c.l.b16 %v5357
  %v7012 = vunpack.c.h.b16 %v5357
  %v7013 = vunpack.c.l.b16 %v5358
  %v7014 = vunpack.c.h.b16 %v5358
  %v7015 = vunpack.c.l.b16 %v5359
  %v7016 = vunpack.c.h.b16 %v5359
  %v7017 = vunpack.c.l.b16 %v5360
  %v7018 = vunpack.c.h.b16 %v5360
  %v7019 = vunpack.c.l.b16 %v5361
  %v7020 = vunpack.c.h.b16 %v5361
  %v7021 = vunpack.c.l.b16 %v5362
  %v7022 = vunpack.c.h.b16 %v5362
  %v7023 = vunpack.c.l.b16 %v5363
  %v7024 = vunpack.c.h.b16 %v5363
  %v7025 = vunpack.c.l.b16 %v5364
  %v7026 = vunpack.c.h.b16 %v5364
  %v7027 = vunpack.c.l.b16 %v5365
  %v7028 = vunpack.c.l.b16 %v5366
  %v7029 = vunpack.c.h.b16 %v5366
  %v7030 = vunpack.c.l.b16 %v5367
  %v7031 = vunpack.c.h.b16 %v5367
  %v7032 = vunpack.c.l.b16 %v5368
  %v7033 = vunpack.c.h.b16 %v5368
  %v7034 = vunpack.c.l.b16 %v5369
  %v7035 = vunpack.c.h.b16 %v5369
  %v7036 = vunpack.c.l.b16 %v5370
  %v7037 = vunpack.c.h.b16 %v5370
  %v7038 = vunpack.c.l.b16 %v5371
  %v7039 = vunpack.c.h.b16 %v5371
  %v7040 = vunpack.c.l.b16 %v5372
  %v7041 = vunpack.c.h.b16 %v5372
  %v7042 = vunpack.c.l.b16 %v5373
  %v7043 = vunpack.c.h.b16 %v5373
  %v7044 = vunpack.c.l.b16 %v5374
  %v7045 = vunpack.c.h.b16 %v5374
  %v7046 = vunpack.c.l.b16 %v5375
  %v7047 = vunpack.c.h.b16 %v5375
  %v7048 = vunpack.c.l.b16 %v5376
  %v7049 = vunpack.c.l.b16 %v5377
  %v7050 = vunpack.c.h.b16 %v5377
  %v7051 = vunpack.c.l.b16 %v5378
  %v7052 = vunpack.c.h.b16 %v5378
  %v7053 = vunpack.c.l.b16 %v5379
  %v7054 = vunpack.c.h.b16 %v5379
  %v7055 = vunpack.c.l.b16 %v5380
  %v7056 = vunpack.c.h.b16 %v5380
  %v7057 = vunpack.c.l.b16 %v5381
  %v7058 = vunpack.c.h.b16 %v5381
  %v7059 = vunpack.c.l.b16 %v5382
  %v7060 = vunpack.c.h.b16 %v5382
  %v7061 = vunpack.c.l.b16 %v5383
  %v7062 = vunpack.c.h.b16 %v5383
  %v7063 = vunpack.c.l.b16 %v5384
  %v7064 = vunpack.c.h.b16 %v5384
  %v7065 = vunpack.c.l.b16 %v5385
  %v7066 = vunpack.c.h.b16 %v5385
  %v7067 = vunpack.c.l.b16 %v5386
  %v7068 = vunpack.c.h.b16 %v5386
  %v7069 = vunpack.c.l.b16 %v5387
  %v7070 = vunpack.c.l.b16 %v5388
  %v7071 = vunpack.c.h.b16 %v5388
  %v7072 = vunpack.c.l.b16 %v5389
  %v7073 = vunpack.c.h.b16 %v5389
  %v7074 = vunpack.c.l.b16 %v5390
  %v7075 = vunpack.c.h.b16 %v5390
  %v7076 = vunpack.c.l.b16 %v5391
  %v7077 = vunpack.c.h.b16 %v5391
  %v7078 = vunpack.c.l.b16 %v5392
  %v7079 = vunpack.c.h.b16 %v5392
  %v7080 = vunpack.c.l.b16 %v5393
  %v7081 = vunpack.c.h.b16 %v5393
  %v7082 = vunpack.c.l.b16 %v5394
  %v7083 = vunpack.c.h.b16 %v5394
  %v7084 = vunpack.c.l.b16 %v5395
  %v7085 = vunpack.c.h.b16 %v5395
  %v7086 = vunpack.c.l.b16 %v5396
  %v7087 = vunpack.c.h.b16 %v5396
  %v7088 = vunpack.c.l.b16 %v5397
  %v7089 = vunpack.c.h.b16 %v5397
  %v7090 = vunpack.c.l.b16 %v5398
  %v7091 = vunpack.c.l.b16 %v5399
  %v7092 = vunpack.c.h.b16 %v5399
  %v7093 = vunpack.c.l.b16 %v5400
  %v7094 = vunpack.c.h.b16 %v5400
  %v7095 = vunpack.c.l.b16 %v5401
  %v7096 = vunpack.c.h.b16 %v5401
  %v7097 = vunpack.c.l.b16 %v5402
  %v7098 = vunpack.c.h.b16 %v5402
  %v7099 = vunpack.c.l.b16 %v5403
  %v7100 = vunpack.c.h.b16 %v5403
  %v7101 = vunpack.c.l.b16 %v5404
  %v7102 = vunpack.c.h.b16 %v5404
  %v7103 = vunpack.c.l.b16 %v5405
  %v7104 = vunpack.c.h.b16 %v5405
  %v7105 = vunpack.c.l.b16 %v5406
  %v7106 = vunpack.c.h.b16 %v5406
  %v7107 = vunpack.c.l.b16 %v5407
  %v7108 = vunpack.c.h.b16 %v5407
  %v7109 = vunpack.c.l.b16 %v5408
  %v7110 = vunpack.c.h.b16 %v5408
  %v7111 = vunpack.c.l.b16 %v5409
  %v7112 = vunpack.c.l.b16 %v5410
  %v7113 = vunpack.c.h.b16 %v5410
  %v7114 = vunpack.c.l.b16 %v5411
  %v7115 = vunpack.c.h.b16 %v5411
  %v7116 = vunpack.c.l.b16 %v5412
  %v7117 = vunpack.c.h.b16 %v5412
  %v7118 = vunpack.c.l.b16 %v5413
  %v7119 = vunpack.c.h.b16 %v5413
  %v7120 = vunpack.c.l.b16 %v5414
  %v7121 = vunpack.c.h.b16 %v5414
  %v7122 = vunpack.c.l.b16 %v5415
  %v7123 = vunpack.c.h.b16 %v5415
  %v7124 = vunpack.c.l.b16 %v5416
  %v7125 = vunpack.c.h.b16 %v5416
  %v7126 = vunpack.c.l.b16 %v5417
  %v7127 = vunpack.c.h.b16 %v5417
  %v7128 = vunpack.c.l.b16 %v5418
  %v7129 = vunpack.c.h.b16 %v5418
  %v7130 = vunpack.c.l.b16 %v5419
  %v7131 = vunpack.c.h.b16 %v5419
  %v7132 = vunpack.c.l.b16 %v5420
  %v7133 = vunpack.c.l.b16 %v5421
  %v7134 = vunpack.c.h.b16 %v5421
  %v7135 = vunpack.c.l.b16 %v5422
  %v7136 = vunpack.c.h.b16 %v5422
  %v7137 = vunpack.c.l.b16 %v5423
  %v7138 = vunpack.c.h.b16 %v5423
  %v7139 = vunpack.c.l.b16 %v5424
  %v7140 = vunpack.c.h.b16 %v5424
  %v7141 = vunpack.c.l.b16 %v5425
  %v7142 = vunpack.c.h.b16 %v5425
  %v7143 = vunpack.c.l.b16 %v5426
  %v7144 = vunpack.c.h.b16 %v5426
  %v7145 = vunpack.c.l.b16 %v5427
  %v7146 = vunpack.c.h.b16 %v5427
  %v7147 = vunpack.c.l.b16 %v5428
  %v7148 = vunpack.c.h.b16 %v5428
  %v7149 = vunpack.c.l.b16 %v5429
  %v7150 = vunpack.c.h.b16 %v5429
  %v7151 = vunpack.c.l.b16 %v5430
  %v7152 = vunpack.c.h.b16 %v5430
  %v7153 = vunpack.c.l.b16 %v5431
  %v7154 = vunpack.c.l.b16 %v5432
  %v7155 = vunpack.c.h.b16 %v5432
  %v7156 = vunpack.c.l.b16 %v5433
  %v7157 = vunpack.c.h.b16 %v5433
  %v7158 = vunpack.c.l.b16 %v5434
  %v7159 = vunpack.c.h.b16 %v5434
  %v7160 = vunpack.c.l.b16 %v5435
  %v7161 = vunpack.c.h.b16 %v5435
  %v7162 = vunpack.c.l.b16 %v5436
  %v7163 = vunpack.c.h.b16 %v5436
  %v7164 = vunpack.c.l.b16 %v5437
  %v7165 = vunpack.c.h.b16 %v5437
  %v7166 = vunpack.c.l.b16 %v5438
  %v7167 = vunpack.c.h.b16 %v5438
  %v7168 = vunpack.c.l.b16 %v5439
  %v7169 = vunpack.c.h.b16 %v5439
  %v7170 = vunpack.c.l.b16 %v5440
  %v7171 = vunpack.c.h.b16 %v5440
  %v7172 = vunpack.c.l.b16 %v5441
  %v7173 = vunpack.c.h.b16 %v5441
  %v7174 = vunpack.c.l.b16 %v5442
  %v7175 = vunpack.c.l.b16 %v5443
  %v7176 = vunpack.c.h.b16 %v5443
  %v7177 = vunpack.c.l.b16 %v5444
  %v7178 = vunpack.c.h.b16 %v5444
  %v7179 = vunpack.c.l.b16 %v5445
  %v7180 = vunpack.c.h.b16 %v5445
  %v7181 = vunpack.c.l.b16 %v5446
  %v7182 = vunpack.c.h.b16 %v5446
  %v7183 = vunpack.c.l.b16 %v5447
  %v7184 = vunpack.c.h.b16 %v5447
  %v7185 = vunpack.c.l.b16 %v5448
  %v7186 = vunpack.c.h.b16 %v5448
  %v7187 = vunpack.c.l.b16 %v5449
  %v7188 = vunpack.c.h.b16 %v5449
  %v7189 = vunpack.c.l.b16 %v5450
  %v7190 = vunpack.c.h.b16 %v5450
  %v7191 = vunpack.c.l.b16 %v5451
  %v7192 = vunpack.c.h.b16 %v5451
  %v7193 = vunpack.c.l.b16 %v5452
  %v7194 = vunpack.c.h.b16 %v5452
  %v7195 = vunpack.c.l.b16 %v5453
  %v7196 = vunpack.c.l.b16 %v5454
  %v7197 = vunpack.c.h.b16 %v5454
  %v7198 = vunpack.c.l.b16 %v5455
  %v7199 = vunpack.c.h.b16 %v5455
  %v7200 = vunpack.c.l.b16 %v5456
  %v7201 = vunpack.c.h.b16 %v5456
  %v7202 = vunpack.c.l.b16 %v5457
  %v7203 = vunpack.c.h.b16 %v5457
  %v7204 = vunpack.c.l.b16 %v5458
  %v7205 = vunpack.c.h.b16 %v5458
  %v7206 = vunpack.c.l.b16 %v5459
  %v7207 = vunpack.c.h.b16 %v5459
  %v7208 = vunpack.c.l.b16 %v5460
  %v7209 = vunpack.c.h.b16 %v5460
  %v7210 = vunpack.c.l.b16 %v5461
  %v7211 = vunpack.c.h.b16 %v5461
  %v7212 = vunpack.c.l.b16 %v5462
  %v7213 = vunpack.c.h.b16 %v5462
  %v7214 = vunpack.c.l.b16 %v5463
  %v7215 = vunpack.c.h.b16 %v5463
  %v7216 = vunpack.c.l.b16 %v5464
  %v7217 = vunpack.c.l.b16 %v5465
  %v7218 = vunpack.c.h.b16 %v5465
  %v7219 = vunpack.c.l.b16 %v5466
  %v7220 = vunpack.c.h.b16 %v5466
  %v7221 = vunpack.c.l.b16 %v5467
  %v7222 = vunpack.c.h.b16 %v5467
  %v7223 = vunpack.c.l.b16 %v5468
  %v7224 = vunpack.c.h.b16 %v5468
  %v7225 = vunpack.c.l.b16 %v5469
  %v7226 = vunpack.c.h.b16 %v5469
  %v7227 = vunpack.c.l.b16 %v5470
  %v7228 = vunpack.c.h.b16 %v5470
  %v7229 = vunpack.c.l.b16 %v5471
  %v7230 = vunpack.c.h.b16 %v5471
  %v7231 = vunpack.c.l.b16 %v5472
  %v7232 = vunpack.c.h.b16 %v5472
  %v7233 = vunpack.c.l.b16 %v5473
  %v7234 = vunpack.c.h.b16 %v5473
  %v7235 = vunpack.c.l.b16 %v5474
  %v7236 = vunpack.c.h.b16 %v5474
  %v7237 = vunpack.c.l.b16 %v5475
  %v7238 = vunpack.c.l.b16 %v5476
  %v7239 = vunpack.c.h.b16 %v5476
  %v7240 = vunpack.c.l.b16 %v5477
  %v7241 = vunpack.c.h.b16 %v5477
  %v7242 = vunpack.c.l.b16 %v5478
  %v7243 = vunpack.c.h.b16 %v5478
  %v7244 = vunpack.c.l.b16 %v5479
  %v7245 = vunpack.c.h.b16 %v5479
  %v7246 = vunpack.c.l.b16 %v5480
  %v7247 = vunpack.c.h.b16 %v5480
  %v7248 = vunpack.c.l.b16 %v5481
  %v7249 = vunpack.c.h.b16 %v5481
  %v7250 = vunpack.c.l.b16 %v5482
  %v7251 = vunpack.c.h.b16 %v5482
  %v7252 = vunpack.c.l.b16 %v5483
  %v7253 = vunpack.c.h.b16 %v5483
  %v7254 = vunpack.c.l.b16 %v5484
  %v7255 = vunpack.c.h.b16 %v5484
  %v7256 = vunpack.c.l.b16 %v5485
  %v7257 = vunpack.c.h.b16 %v5485
  %v7258 = vunpack.c.l.b16 %v5486
  %v7259 = vunpack.c.l.b16 %v5487
  %v7260 = vunpack.c.h.b16 %v5487
  %v7261 = vunpack.c.l.b16 %v5488
  %v7262 = vunpack.c.h.b16 %v5488
  %v7263 = vunpack.c.l.b16 %v5489
  %v7264 = vunpack.c.h.b16 %v5489
  %v7265 = vunpack.c.l.b16 %v5490
  %v7266 = vunpack.c.h.b16 %v5490
  %v7267 = vunpack.c.l.b16 %v5491
  %v7268 = vunpack.c.h.b16 %v5491
  %v7269 = vunpack.c.l.b16 %v5492
  %v7270 = vunpack.c.h.b16 %v5492
  %v7271 = vunpack.c.l.b16 %v5493
  %v7272 = vunpack.c.h.b16 %v5493
  %v7273 = vunpack.c.l.b16 %v5494
  %v7274 = vunpack.c.h.b16 %v5494
  %v7275 = vunpack.c.l.b16 %v5495
  %v7276 = vunpack.c.h.b16 %v5495
  %v7277 = vunpack.c.l.b16 %v5496
  %v7278 = vunpack.c.h.b16 %v5496
  %v7279 = vunpack.c.l.b16 %v5497
  %v7280 = vunpack.c.l.b16 %v5498
  %v7281 = vunpack.c.h.b16 %v5498
  %v7282 = vunpack.c.l.b16 %v5499
  %v7283 = vunpack.c.h.b16 %v5499
  %v7284 = vunpack.c.l.b16 %v5500
  %v7285 = vunpack.c.h.b16 %v5500
  %v7286 = vunpack.c.l.b16 %v5501
  %v7287 = vunpack.c.h.b16 %v5501
  %v7288 = vunpack.c.l.b16 %v5502
  %v7289 = vunpack.c.h.b16 %v5502
  %v7290 = vunpack.c.l.b16 %v5503
  %v7291 = vunpack.c.h.b16 %v5503
  %v7292 = vunpack.c.l.b16 %v5504
  %v7293 = vunpack.c.h.b16 %v5504
  %v7294 = vunpack.c.l.b16 %v5505
  %v7295 = vunpack.c.h.b16 %v5505
  %v7296 = vunpack.c.l.b16 %v5506
  %v7297 = vunpack.c.h.b16 %v5506
  %v7298 = vunpack.c.l.b16 %v5507
  %v7299 = vunpack.c.h.b16 %v5507
  %v7300 = vunpack.c.l.b16 %v5508
  %v7301 = vpack.c.b16 %v6146, %v6125
  %v7302 = vpack.c.b16 %v6147, %v6126
  %v7303 = vpack.c.b16 %v6148, %v6127
  %v7304 = vpack.c.b16 %v6149, %v6128
  %v7305 = vpack.c.b16 %v6150, %v6129
  %v7306 = vpack.c.b16 %v6151, %v6130
  %v7307 = vpack.c.b16 %v6152, %v6131
  %v7308 = vpack.c.b16 %v6153, %v6132
  %v7309 = vpack.c.b16 %v6154, %v6133
  %v7310 = vpack.c.b16 %v6155, %v6134
  %v7311 = vpack.c.b16 %v6156, %v6135
  %v7312 = vpack.c.b16 %v6157, %v6136
  %v7313 = vpack.c.b16 %v6158, %v6137
  %v7314 = vpack.c.b16 %v6159, %v6138
  %v7315 = vpack.c.b16 %v6160, %v6139
  %v7316 = vpack.c.b16 %v6161, %v6140
  %v7317 = vpack.c.b16 %v6162, %v6141
  %v7318 = vpack.c.b16 %v6163, %v6142
  %v7319 = vpack.c.b16 %v6164, %v6143
  %v7320 = vpack.c.b16 %v6165, %v6144
  %v7321 = vpack.c.b16 %v6166, %v6145
  %v7322 = vpack.c.b16 %v6188, %v6167
  %v7323 = vpack.c.b16 %v6189, %v6168
  %v7324 = vpack.c.b16 %v6190, %v6169
  %v7325 = vpack.c.b16 %v6191, %v6170
  %v7326 = vpack.c.b16 %v6192, %v6171
  %v7327 = vpack.c.b16 %v6193, %v6172
  %v7328 = vpack.c.b16 %v6194, %v6173
  %v7329 = vpack.c.b16 %v6195, %v6174
  %v7330 = vpack.c.b16 %v6196, %v6175
  %v7331 = vpack.c.b16 %v6197, %v6176
  %v7332 = vpack.c.b16 %v6198, %v6177
  %v7333 = vpack.c.b16 %v6199, %v6178
  %v7334 = vpack.c.b16 %v6200, %v6179
  %v7335 = vpack.c.b16 %v6201, %v6180
  %v7336 = vpack.c.b16 %v6202, %v6181
  %v7337 = vpack.c.b16 %v6203, %v6182
  %v7338 = vpack.c.b16 %v6204, %v6183
  %v7339 = vpack.c.b16 %v6205, %v6184
  %v7340 = vpack.c.b16 %v6206, %v6185
  %v7341 = vpack.c.b16 %v6207, %v6186
  %v7342 = vpack.c.b16 %v6208, %v6187
  %v7343 = vpack.c.b16 %v6230, %v6209
  %v7344 = vpack.c.b16 %v6231, %v6210
  %v7345 = vpack.c.b16 %v6232, %v6211
  %v7346 = vpack.c.b16 %v6233, %v6212
  %v7347 = vpack.c.b16 %v6234, %v6213
  %v7348 = vpack.c.b16 %v6235, %v6214
  %v7349 = vpack.c.b16 %v6236, %v6215
  %v7350 = vpack.c.b16 %v6237, %v6216
  %v7351 = vpack.c.b16 %v6238, %v6217
  %v7352 = vpack.c.b16 %v6239, %v6218
  %v7353 = vpack.c.b16 %v6240, %v6219
  %v7354 = vpack.c.b16 %v6241, %v6220
  %v7355 = vpack.c.b16 %v6242, %v6221
  %v7356 = vpack.c.b16 %v6243, %v6222
  %v7357 = vpack.c.b16 %v6244, %v6223
  %v7358 = vpack.c.b16 %v6245, %v6224
  %v7359 = vpack.c.b16 %v6246, %v6225
  %v7360 = vpack.c.b16 %v6247, %v6226
  %v7361 = vpack.c.b16 %v6248, %v6227
  %v7362 = vpack.c.b16 %v6249, %v6228
  %v7363 = vpack.c.b16 %v6250, %v6229
  %v7364 = vpack.c.b16 %v6272, %v6251
  %v7365 = vpack.c.b16 %v6273, %v6252
  %v7366 = vpack.c.b16 %v6274, %v6253
  %v7367 = vpack.c.b16 %v6275, %v6254
  %v7368 = vpack.c.b16 %v6276, %v6255
  %v7369 = vpack.c.b16 %v6277, %v6256
  %v7370 = vpack.c.b16 %v6278, %v6257
  %v7371 = vpack.c.b16 %v6279, %v6258
  %v7372 = vpack.c.b16 %v6280, %v6259
  %v7373 = vpack.c.b16 %v6281, %v6260
  %v7374 = vpack.c.b16 %v6282, %v6261
  %v7375 = vpack.c.b16 %v6283, %v6262
  %v7376 = vpack.c.b16 %v6284, %v6263
  %v7377 = vpack.c.b16 %v6285, %v6264
  %v7378 = vpack.c.b16 %v6286, %v6265
  %v7379 = vpack.c.b16 %v6287, %v6266
  %v7380 = vpack.c.b16 %v6288, %v6267
  %v7381 = vpack.c.b16 %v6289, %v6268
  %v7382 = vpack.c.b16 %v6290, %v6269
  %v7383 = vpack.c.b16 %v6291, %v6270
  %v7384 = vpack.c.b16 %v6292, %v6271
  %v7385 = vpack.c.b16 %v6314, %v6293
  %v7386 = vpack.c.b16 %v6315, %v6294
  %v7387 = vpack.c.b16 %v6316, %v6295
  %v7388 = vpack.c.b16 %v6317, %v6296
  %v7389 = vpack.c.b16 %v6318, %v6297
  %v7390 = vpack.c.b16 %v6319, %v6298
  %v7391 = vpack.c.b16 %v6320, %v6299
  %v7392 = vpack.c.b16 %v6321, %v6300
  %v7393 = vpack.c.b16 %v6322, %v6301
  %v7394 = vpack.c.b16 %v6323, %v6302
  %v7395 = vpack.c.b16 %v6324, %v6303
  %v7396 = vpack.c.b16 %v6325, %v6304
  %v7397 = vpack.c.b16 %v6326, %v6305
  %v7398 = vpack.c.b16 %v6327, %v6306
  %v7399 = vpack.c.b16 %v6328, %v6307
  %v7400 = vpack.c.b16 %v6329, %v6308
  %v7401 = vpack.c.b16 %v6330, %v6309
  %v7402 = vpack.c.b16 %v6331, %v6310
  %v7403 = vpack.c.b16 %v6332, %v6311
  %v7404 = vpack.c.b16 %v6333, %v6312
  %v7405 = vpack.c.b16 %v6334, %v6313
  %v7406 = vpack.c.b16 %v6356, %v6335
  %v7407 = vpack.c.b16 %v6357, %v6336
  %v7408 = vpack.c.b16 %v6358, %v6337
  %v7409 = vpack.c.b16 %v6359, %v6338
  %v7410 = vpack.c.b16 %v6360, %v6339
  %v7411 = vpack.c.b16 %v6361, %v6340
  %v7412 = vpack.c.b16 %v6362, %v6341
  %v7413 = vpack.c.b16 %v6363, %v6342
  %v7414 = vpack.c.b16 %v6364, %v6343
  %v7415 = vpack.c.b16 %v6365, %v6344
  %v7416 = vpack.c.b16 %v6366, %v6345
  %v7417 = vpack.c.b16 %v6367, %v6346
  %v7418 = vpack.c.b16 %v6368, %v6347
  %v7419 = vpack.c.b16 %v6369, %v6348
  %v7420 = vpack.c.b16 %v6370, %v6349
  %v7421 = vpack.c.b16 %v6371, %v6350
  %v7422 = vpack.c.b16 %v6372, %v6351
  %v7423 = vpack.c.b16 %v6373, %v6352
  %v7424 = vpack.c.b16 %v6374, %v6353
  %v7425 = vpack.c.b16 %v6375, %v6354
  %v7426 = vpack.c.b16 %v6376, %v6355
  %v7427 = vpack.c.b16 %v6398, %v6377
  %v7428 = vpack.c.b16 %v6399, %v6378
  %v7429 = vpack.c.b16 %v6400, %v6379
  %v7430 = vpack.c.b16 %v6401, %v6380
  %v7431 = vpack.c.b16 %v6402, %v6381
  %v7432 = vpack.c.b16 %v6403, %v6382
  %v7433 = vpack.c.b16 %v6404, %v6383
  %v7434 = vpack.c.b16 %v6405, %v6384
  %v7435 = vpack.c.b16 %v6406, %v6385
  %v7436 = vpack.c.b16 %v6407, %v6386
  %v7437 = vpack.c.b16 %v6408, %v6387
  %v7438 = vpack.c.b16 %v6409, %v6388
  %v7439 = vpack.c.b16 %v6410, %v6389
  %v7440 = vpack.c.b16 %v6411, %v6390
  %v7441 = vpack.c.b16 %v6412, %v6391
  %v7442 = vpack.c.b16 %v6413, %v6392
  %v7443 = vpack.c.b16 %v6414, %v6393
  %v7444 = vpack.c.b16 %v6415, %v6394
  %v7445 = vpack.c.b16 %v6416, %v6395
  %v7446 = vpack.c.b16 %v6417, %v6396
  %v7447 = vpack.c.b16 %v6418, %v6397
  %v7448 = vpack.c.b16 %v6440, %v6419
  %v7449 = vpack.c.b16 %v6441, %v6420
  %v7450 = vpack.c.b16 %v6442, %v6421
  %v7451 = vpack.c.b16 %v6443, %v6422
  %v7452 = vpack.c.b16 %v6444, %v6423
  %v7453 = vpack.c.b16 %v6445, %v6424
  %v7454 = vpack.c.b16 %v6446, %v6425
  %v7455 = vpack.c.b16 %v6447, %v6426
  %v7456 = vpack.c.b16 %v6448, %v6427
  %v7457 = vpack.c.b16 %v6449, %v6428
  %v7458 = vpack.c.b16 %v6450, %v6429
  %v7459 = vpack.c.b16 %v6451, %v6430
  %v7460 = vpack.c.b16 %v6452, %v6431
  %v7461 = vpack.c.b16 %v6453, %v6432
  %v7462 = vpack.c.b16 %v6454, %v6433
  %v7463 = vpack.c.b16 %v6455, %v6434
  %v7464 = vpack.c.b16 %v6456, %v6435
  %v7465 = vpack.c.b16 %v6457, %v6436
  %v7466 = vpack.c.b16 %v6458, %v6437
  %v7467 = vpack.c.b16 %v6459, %v6438
  %v7468 = vpack.c.b16 %v6460, %v6439
  %v7469 = vpack.c.b16 %v6482, %v6461
  %v7470 = vpack.c.b16 %v6483, %v6462
  %v7471 = vpack.c.b16 %v6484, %v6463
  %v7472 = vpack.c.b16 %v6485, %v6464
  %v7473 = vpack.c.b16 %v6486, %v6465
  %v7474 = vpack.c.b16 %v6487, %v6466
  %v7475 = vpack.c.b16 %v6488, %v6467
  %v7476 = vpack.c.b16 %v6489, %v6468
  %v7477 = vpack.c.b16 %v6490, %v6469
  %v7478 = vpack.c.b16 %v6491, %v6470
  %v7479 = vpack.c.b16 %v6492, %v6471
  %v7480 = vpack.c.b16 %v6493, %v6472
  %v7481 = vpack.c.b16 %v6494, %v6473
  %v7482 = vpack.c.b16 %v6495, %v6474
  %v7483 = vpack.c.b16 %v6496, %v6475
  %v7484 = vpack.c.b16 %v6497, %v6476
  %v7485 = vpack.c.b16 %v6498, %v6477
  %v7486 = vpack.c.b16 %v6499, %v6478
  %v7487 = vpack.c.b16 %v6500, %v6479
  %v7488 = vpack.c.b16 %v6501, %v6480
  %v7489 = vpack.c.b16 %v6502, %v6481
  %v7490 = vpack.c.b16 %v6524, %v6503
  %v7491 = vpack.c.b16 %v6525, %v6504
  %v7492 = vpack.c.b16 %v6526, %v6505
  %v7493 = vpack.c.b16 %v6527, %v6506
  %v7494 = vpack.c.b16 %v6528, %v6507
  %v7495 = vpack.c.b16 %v6529, %v6508
  %v7496 = vpack.c.b16 %v6530, %v6509
  %v7497 = vpack.c.b16 %v6531, %v6510
  %v7498 = vpack.c.b16 %v6532, %v6511
  %v7499 = vpack.c.b16 %v6533, %v6512
  %v7500 = vpack.c.b16 %v6534, %v6513
  %v7501 = vpack.c.b16 %v6535, %v6514
  %v7502 = vpack.c.b16 %v6536, %v6515
  %v7503 = vpack.c.b16 %v6537, %v6516
  %v7504 = vpack.c.b16 %v6538, %v6517
  %v7505 = vpack.c.b16 %v6539, %v6518
  %v7506 = vpack.c.b16 %v6540, %v6519
  %v7507 = vpack.c.b16 %v6541, %v6520
  %v7508 = vpack.c.b16 %v6542, %v6521
  %v7509 = vpack.c.b16 %v6543, %v6522
  %v7510 = vpack.c.b16 %v6544, %v6523
  %v7511 = vpack.c.b16 %v6566, %v6545
  %v7512 = vpack.c.b16 %v6567, %v6546
  %v7513 = vpack.c.b16 %v6568, %v6547
  %v7514 = vpack.c.b16 %v6569, %v6548
  %v7515 = vpack.c.b16 %v6570, %v6549
  %v7516 = vpack.c.b16 %v6571, %v6550
  %v7517 = vpack.c.b16 %v6572, %v6551
  %v7518 = vpack.c.b16 %v6573, %v6552
  %v7519 = vpack.c.b16 %v6574, %v6553
  %v7520 = vpack.c.b16 %v6575, %v6554
  %v7521 = vpack.c.b16 %v6576, %v6555
  %v7522 = vpack.c.b16 %v6577, %v6556
  %v7523 = vpack.c.b16 %v6578, %v6557
  %v7524 = vpack.c.b16 %v6579, %v6558
  %v7525 = vpack.c.b16 %v6580, %v6559
  %v7526 = vpack.c.b16 %v6581, %v6560
  %v7527 = vpack.c.b16 %v6582, %v6561
  %v7528 = vpack.c.b16 %v6583, %v6562
  %v7529 = vpack.c.b16 %v6584, %v6563
  %v7530 = vpack.c.b16 %v6585, %v6564
  %v7531 = vpack.c.b16 %v6586, %v6565
  %v7532 = vpack.c.b16 %v6608, %v6587
  %v7533 = vpack.c.b16 %v6609, %v6588
  %v7534 = vpack.c.b16 %v6610, %v6589
  %v7535 = vpack.c.b16 %v6611, %v6590
  %v7536 = vpack.c.b16 %v6612, %v6591
  %v7537 = vpack.c.b16 %v6613, %v6592
  %v7538 = vpack.c.b16 %v6614, %v6593
  %v7539 = vpack.c.b16 %v6615, %v6594
  %v7540 = vpack.c.b16 %v6616, %v6595
  %v7541 = vpack.c.b16 %v6617, %v6596
  %v7542 = vpack.c.b16 %v6618, %v6597
  %v7543 = vpack.c.b16 %v6619, %v6598
  %v7544 = vpack.c.b16 %v6620, %v6599
  %v7545 = vpack.c.b16 %v6621, %v6600
  %v7546 = vpack.c.b16 %v6622, %v6601
  %v7547 = vpack.c.b16 %v6623, %v6602
  %v7548 = vpack.c.b16 %v6624, %v6603
  %v7549 = vpack.c.b16 %v6625, %v6604
  %v7550 = vpack.c.b16 %v6626, %v6605
  %v7551 = vpack.c.b16 %v6627, %v6606
  %v7552 = vpack.c.b16 %v6628, %v6607
  %v7553 = vpack.c.b16 %v6650, %v6629
  %v7554 = vpack.c.b16 %v6651, %v6630
  %v7555 = vpack.c.b16 %v6652, %v6631
  %v7556 = vpack.c.b16 %v6653, %v6632
  %v7557 = vpack.c.b16 %v6654, %v6633
  %v7558 = vpack.c.b16 %v6655, %v6634
  %v7559 = vpack.c.b16 %v6656, %v6635
  %v7560 = vpack.c.b16 %v6657, %v6636
  %v7561 = vpack.c.b16 %v6658, %v6637
  %v7562 = vpack.c.b16 %v6659, %v6638
  %v7563 = vpack.c.b16 %v6660, %v6639
  %v7564 = vpack.c.b16 %v6661, %v6640
  %v7565 = vpack.c.b16 %v6662, %v6641
  %v7566 = vpack.c.b16 %v6663, %v6642
  %v7567 = vpack.c.b16 %v6664, %v6643
  %v7568 = vpack.c.b16 %v6665, %v6644
  %v7569 = vpack.c.b16 %v6666, %v6645
  %v7570 = vpack.c.b16 %v6667, %v6646
  %v7571 = vpack.c.b16 %v6668, %v6647
  %v7572 = vpack.c.b16 %v6669, %v6648
  %v7573 = vpack.c.b16 %v6670, %v6649
  %v7574 = vpack.c.b16 %v6692, %v6671
  %v7575 = vpack.c.b16 %v6693, %v6672
  %v7576 = vpack.c.b16 %v6694, %v6673
  %v7577 = vpack.c.b16 %v6695, %v6674
  %v7578 = vpack.c.b16 %v6696, %v6675
  %v7579 = vpack.c.b16 %v6697, %v6676
  %v7580 = vpack.c.b16 %v6698, %v6677
  %v7581 = vpack.c.b16 %v6699, %v6678
  %v7582 = vpack.c.b16 %v6700, %v6679
  %v7583 = vpack.c.b16 %v6701, %v6680
  %v7584 = vpack.c.b16 %v6702, %v6681
  %v7585 = vpack.c.b16 %v6703, %v6682
  %v7586 = vpack.c.b16 %v6704, %v6683
  %v7587 = vpack.c.b16 %v6705, %v6684
  %v7588 = vpack.c.b16 %v6706, %v6685
  %v7589 = vpack.c.b16 %v6707, %v6686
  %v7590 = vpack.c.b16 %v6708, %v6687
  %v7591 = vpack.c.b16 %v6709, %v6688
  %v7592 = vpack.c.b16 %v6710, %v6689
  %v7593 = vpack.c.b16 %v6711, %v6690
  %v7594 = vpack.c.b16 %v6712, %v6691
  %v7595 = vpack.c.b16 %v6734, %v6713
  %v7596 = vpack.c.b16 %v6735, %v6714
  %v7597 = vpack.c.b16 %v6736, %v6715
  %v7598 = vpack.c.b16 %v6737, %v6716
  %v7599 = vpack.c.b16 %v6738, %v6717
  %v7600 = vpack.c.b16 %v6739, %v6718
  %v7601 = vpack.c.b16 %v6740, %v6719
  %v7602 = vpack.c.b16 %v6741, %v6720
  %v7603 = vpack.c.b16 %v6742, %v6721
  %v7604 = vpack.c.b16 %v6743, %v6722
  %v7605 = vpack.c.b16 %v6744, %v6723
  %v7606 = vpack.c.b16 %v6745, %v6724
  %v7607 = vpack.c.b16 %v6746, %v6725
  %v7608 = vpack.c.b16 %v6747, %v6726
  %v7609 = vpack.c.b16 %v6748, %v6727
  %v7610 = vpack.c.b16 %v6749, %v6728
  %v7611 = vpack.c.b16 %v6750, %v6729
  %v7612 = vpack.c.b16 %v6751, %v6730
  %v7613 = vpack.c.b16 %v6752, %v6731
  %v7614 = vpack.c.b16 %v6753, %v6732
  %v7615 = vpack.c.b16 %v6754, %v6733
  %v7616 = vpack.c.b16 %v6776, %v6755
  %v7617 = vpack.c.b16 %v6777, %v6756
  %v7618 = vpack.c.b16 %v6778, %v6757
  %v7619 = vpack.c.b16 %v6779, %v6758
  %v7620 = vpack.c.b16 %v6780, %v6759
  %v7621 = vpack.c.b16 %v6781, %v6760
  %v7622 = vpack.c.b16 %v6782, %v6761
  %v7623 = vpack.c.b16 %v6783, %v6762
  %v7624 = vpack.c.b16 %v6784, %v6763
  %v7625 = vpack.c.b16 %v6785, %v6764
  %v7626 = vpack.c.b16 %v6786, %v6765
  %v7627 = vpack.c.b16 %v6787, %v6766
  %v7628 = vpack.c.b16 %v6788, %v6767
  %v7629 = vpack.c.b16 %v6789, %v6768
  %v7630 = vpack.c.b16 %v6790, %v6769
  %v7631 = vpack.c.b16 %v6791, %v6770
  %v7632 = vpack.c.b16 %v6792, %v6771
  %v7633 = vpack.c.b16 %v6793, %v6772
  %v7634 = vpack.c.b16 %v6794, %v6773
  %v7635 = vpack.c.b16 %v6795, %v6774
  %v7636 = vpack.c.b16 %v6796, %v6775
  %v7637 = vpack.c.b16 %v6818, %v6797
  %v7638 = vpack.c.b16 %v6819, %v6798
  %v7639 = vpack.c.b16 %v6820, %v6799
  %v7640 = vpack.c.b16 %v6821, %v6800
  %v7641 = vpack.c.b16 %v6822, %v6801
  %v7642 = vpack.c.b16 %v6823, %v6802
  %v7643 = vpack.c.b16 %v6824, %v6803
  %v7644 = vpack.c.b16 %v6825, %v6804
  %v7645 = vpack.c.b16 %v6826, %v6805
  %v7646 = vpack.c.b16 %v6827, %v6806
  %v7647 = vpack.c.b16 %v6828, %v6807
  %v7648 = vpack.c.b16 %v6829, %v6808
  %v7649 = vpack.c.b16 %v6830, %v6809
  %v7650 = vpack.c.b16 %v6831, %v6810
  %v7651 = vpack.c.b16 %v6832, %v6811
  %v7652 = vpack.c.b16 %v6833, %v6812
  %v7653 = vpack.c.b16 %v6834, %v6813
  %v7654 = vpack.c.b16 %v6835, %v6814
  %v7655 = vpack.c.b16 %v6836, %v6815
  %v7656 = vpack.c.b16 %v6837, %v6816
  %v7657 = vpack.c.b16 %v6838, %v6817
  %v7658 = vpack.c.b16 %v6860, %v6839
  %v7659 = vpack.c.b16 %v6861, %v6840
  %v7660 = vpack.c.b16 %v6862, %v6841
  %v7661 = vpack.c.b16 %v6863, %v6842
  %v7662 = vpack.c.b16 %v6864, %v6843
  %v7663 = vpack.c.b16 %v6865, %v6844
  %v7664 = vpack.c.b16 %v6866, %v6845
  %v7665 = vpack.c.b16 %v6867, %v6846
  %v7666 = vpack.c.b16 %v6868, %v6847
  %v7667 = vpack.c.b16 %v6869, %v6848
  %v7668 = vpack.c.b16 %v6870, %v6849
  %v7669 = vpack.c.b16 %v6871, %v6850
  %v7670 = vpack.c.b16 %v6872, %v6851
  %v7671 = vpack.c.b16 %v6873, %v6852
  %v7672 = vpack.c.b16 %v6874, %v6853
  %v7673 = vpack.c.b16 %v6875, %v6854
  %v7674 = vpack.c.b16 %v6876, %v6855
  %v7675 = vpack.c.b16 %v6877, %v6856
  %v7676 = vpack.c.b16 %v6878, %v6857
  %v7677 = vpack.c.b16 %v6879, %v6858
  %v7678 = vpack.c.b16 %v6880, %v6859
  %v7679 = vpack.c.b16 %v6902, %v6881
  %v7680 = vpack.c.b16 %v6903, %v6882
  %v7681 = vpack.c.b16 %v6904, %v6883
  %v7682 = vpack.c.b16 %v6905, %v6884
  %v7683 = vpack.c.b16 %v6906, %v6885
  %v7684 = vpack.c.b16 %v6907, %v6886
  %v7685 = vpack.c.b16 %v6908, %v6887
  %v7686 = vpack.c.b16 %v6909, %v6888
  %v7687 = vpack.c.b16 %v6910, %v6889
  %v7688 = vpack.c.b16 %v6911, %v6890
  %v7689 = vpack.c.b16 %v6912, %v6891
  %v7690 = vpack.c.b16 %v6913, %v6892
  %v7691 = vpack.c.b16 %v6914, %v6893
  %v7692 = vpack.c.b16 %v6915, %v6894
  %v7693 = vpack.c.b16 %v6916, %v6895
  %v7694 = vpack.c.b16 %v6917, %v6896
  %v7695 = vpack.c.b16 %v6918, %v6897
  %v7696 = vpack.c.b16 %v6919, %v6898
  %v7697 = vpack.c.b16 %v6920, %v6899
  %v7698 = vpack.c.b16 %v6921, %v6900
  %v7699 = vpack.c.b16 %v6922, %v6901
  %v7700 = vpack.c.b16 %v6944, %v6923
  %v7701 = vpack.c.b16 %v6945, %v6924
  %v7702 = vpack.c.b16 %v6946, %v6925
  %v7703 = vpack.c.b16 %v6947, %v6926
  %v7704 = vpack.c.b16 %v6948, %v6927
  %v7705 = vpack.c.b16 %v6949, %v6928
  %v7706 = vpack.c.b16 %v6950, %v6929
  %v7707 = vpack.c.b16 %v6951, %v6930
  %v7708 = vpack.c.b16 %v6952, %v6931
  %v7709 = vpack.c.b16 %v6953, %v6932
  %v7710 = vpack.c.b16 %v6954, %v6933
  %v7711 = vpack.c.b16 %v6955, %v6934
  %v7712 = vpack.c.b16 %v6956, %v6935
  %v7713 = vpack.c.b16 %v6957, %v6936
  %v7714 = vpack.c.b16 %v6958, %v6937
  %v7715 = vpack.c.b16 %v6959, %v6938
  %v7716 = vpack.c.b16 %v6960, %v6939
  %v7717 = vpack.c.b16 %v6961, %v6940
  %v7718 = vpack.c.b16 %v6962, %v6941
  %v7719 = vpack.c.b16 %v6963, %v6942
  %v7720 = vpack.c.b16 %v6964, %v6943
  %v7721 = vpack.c.b16 %v6986, %v6965
  %v7722 = vpack.c.b16 %v6987, %v6966
  %v7723 = vpack.c.b16 %v6988, %v6967
  %v7724 = vpack.c.b16 %v6989, %v6968
  %v7725 = vpack.c.b16 %v6990, %v6969
  %v7726 = vpack.c.b16 %v6991, %v6970
  %v7727 = vpack.c.b16 %v6992, %v6971
  %v7728 = vpack.c.b16 %v6993, %v6972
  %v7729 = vpack.c.b16 %v6994, %v6973
  %v7730 = vpack.c.b16 %v6995, %v6974
  %v7731 = vpack.c.b16 %v6996, %v6975
  %v7732 = vpack.c.b16 %v6997, %v6976
  %v7733 = vpack.c.b16 %v6998, %v6977
  %v7734 = vpack.c.b16 %v6999, %v6978
  %v7735 = vpack.c.b16 %v7000, %v6979
  %v7736 = vpack.c.b16 %v7001, %v6980
  %v7737 = vpack.c.b16 %v7002, %v6981
  %v7738 = vpack.c.b16 %v7003, %v6982
  %v7739 = vpack.c.b16 %v7004, %v6983
  %v7740 = vpack.c.b16 %v7005, %v6984
  %v7741 = vpack.c.b16 %v7006, %v6985
  %v7742 = vpack.c.b16 %v7028, %v7007
  %v7743 = vpack.c.b16 %v7029, %v7008
  %v7744 = vpack.c.b16 %v7030, %v7009
  %v7745 = vpack.c.b16 %v7031, %v7010
  %v7746 = vpack.c.b16 %v7032, %v7011
  %v7747 = vpack.c.b16 %v7033, %v7012
  %v7748 = vpack.c.b16 %v7034, %v7013
  %v7749 = vpack.c.b16 %v7035, %v7014
  %v7750 = vpack.c.b16 %v7036, %v7015
  %v7751 = vpack.c.b16 %v7037, %v7016
  %v7752 = vpack.c.b16 %v7038, %v7017
  %v7753 = vpack.c.b16 %v7039, %v7018
  %v7754 = vpack.c.b16 %v7040, %v7019
  %v7755 = vpack.c.b16 %v7041, %v7020
  %v7756 = vpack.c.b16 %v7042, %v7021
  %v7757 = vpack.c.b16 %v7043, %v7022
  %v7758 = vpack.c.b16 %v7044, %v7023
  %v7759 = vpack.c.b16 %v7045, %v7024
  %v7760 = vpack.c.b16 %v7046, %v7025
  %v7761 = vpack.c.b16 %v7047, %v7026
  %v7762 = vpack.c.b16 %v7048, %v7027
  %v7763 = vpack.c.b16 %v7070, %v7049
  %v7764 = vpack.c.b16 %v7071, %v7050
  %v7765 = vpack.c.b16 %v7072, %v7051
  %v7766 = vpack.c.b16 %v7073, %v7052
  %v7767 = vpack.c.b16 %v7074, %v7053
  %v7768 = vpack.c.b16 %v7075, %v7054
  %v7769 = vpack.c.b16 %v7076, %v7055
  %v7770 = vpack.c.b16 %v7077, %v7056
  %v7771 = vpack.c.b16 %v7078, %v7057
  %v7772 = vpack.c.b16 %v7079, %v7058
  %v7773 = vpack.c.b16 %v7080, %v7059
  %v7774 = vpack.c.b16 %v7081, %v7060
  %v7775 = vpack.c.b16 %v7082, %v7061
  %v7776 = vpack.c.b16 %v7083, %v7062
  %v7777 = vpack.c.b16 %v7084, %v7063
  %v7778 = vpack.c.b16 %v7085, %v7064
  %v7779 = vpack.c.b16 %v7086, %v7065
  %v7780 = vpack.c.b16 %v7087, %v7066
  %v7781 = vpack.c.b16 %v7088, %v7067
  %v7782 = vpack.c.b16 %v7089, %v7068
  %v7783 = vpack.c.b16 %v7090, %v7069
  %v7784 = vpack.c.b16 %v7112, %v7091
  %v7785 = vpack.c.b16 %v7113, %v7092
  %v7786 = vpack.c.b16 %v7114, %v7093
  %v7787 = vpack.c.b16 %v7115, %v7094
  %v7788 = vpack.c.b16 %v7116, %v7095
  %v7789 = vpack.c.b16 %v7117, %v7096
  %v7790 = vpack.c.b16 %v7118, %v7097
  %v7791 = vpack.c.b16 %v7119, %v7098
  %v7792 = vpack.c.b16 %v7120, %v7099
  %v7793 = vpack.c.b16 %v7121, %v7100
  %v7794 = vpack.c.b16 %v7122, %v7101
  %v7795 = vpack.c.b16 %v7123, %v7102
  %v7796 = vpack.c.b16 %v7124, %v7103
  %v7797 = vpack.c.b16 %v7125, %v7104
  %v7798 = vpack.c.b16 %v7126, %v7105
  %v7799 = vpack.c.b16 %v7127, %v7106
  %v7800 = vpack.c.b16 %v7128, %v7107
  %v7801 = vpack.c.b16 %v7129, %v7108
  %v7802 = vpack.c.b16 %v7130, %v7109
  %v7803 = vpack.c.b16 %v7131, %v7110
  %v7804 = vpack.c.b16 %v7132, %v7111
  %v7805 = vpack.c.b16 %v7154, %v7133
  %v7806 = vpack.c.b16 %v7155, %v7134
  %v7807 = vpack.c.b16 %v7156, %v7135
  %v7808 = vpack.c.b16 %v7157, %v7136
  %v7809 = vpack.c.b16 %v7158, %v7137
  %v7810 = vpack.c.b16 %v7159, %v7138
  %v7811 = vpack.c.b16 %v7160, %v7139
  %v7812 = vpack.c.b16 %v7161, %v7140
  %v7813 = vpack.c.b16 %v7162, %v7141
  %v7814 = vpack.c.b16 %v7163, %v7142
  %v7815 = vpack.c.b16 %v7164, %v7143
  %v7816 = vpack.c.b16 %v7165, %v7144
  %v7817 = vpack.c.b16 %v7166, %v7145
  %v7818 = vpack.c.b16 %v7167, %v7146
  %v7819 = vpack.c.b16 %v7168, %v7147
  %v7820 = vpack.c.b16 %v7169, %v7148
  %v7821 = vpack.c.b16 %v7170, %v7149
  %v7822 = vpack.c.b16 %v7171, %v7150
  %v7823 = vpack.c.b16 %v7172, %v7151
  %v7824 = vpack.c.b16 %v7173, %v7152
  %v7825 = vpack.c.b16 %v7174, %v7153
  %v7826 = vpack.c.b16 %v7196, %v7175
  %v7827 = vpack.c.b16 %v7197, %v7176
  %v7828 = vpack.c.b16 %v7198, %v7177
  %v7829 = vpack.c.b16 %v7199, %v7178
  %v7830 = vpack.c.b16 %v7200, %v7179
  %v7831 = vpack.c.b16 %v7201, %v7180
  %v7832 = vpack.c.b16 %v7202, %v7181
  %v7833 = vpack.c.b16 %v7203, %v7182
  %v7834 = vpack.c.b16 %v7204, %v7183
  %v7835 = vpack.c.b16 %v7205, %v7184
  %v7836 = vpack.c.b16 %v7206, %v7185
  %v7837 = vpack.c.b16 %v7207, %v7186
  %v7838 = vpack.c.b16 %v7208, %v7187
  %v7839 = vpack.c.b16 %v7209, %v7188
  %v7840 = vpack.c.b16 %v7210, %v7189
  %v7841 = vpack.c.b16 %v7211, %v7190
  %v7842 = vpack.c.b16 %v7212, %v7191
  %v7843 = vpack.c.b16 %v7213, %v7192
  %v7844 = vpack.c.b16 %v7214, %v7193
  %v7845 = vpack.c.b16 %v7215, %v7194
  %v7846 = vpack.c.b16 %v7216, %v7195
  %v7847 = vpack.c.b16 %v7238, %v7217
  %v7848 = vpack.c.b16 %v7239, %v7218
  %v7849 = vpack.c.b16 %v7240, %v7219
  %v7850 = vpack.c.b16 %v7241, %v7220
  %v7851 = vpack.c.b16 %v7242, %v7221
  %v7852 = vpack.c.b16 %v7243, %v7222
  %v7853 = vpack.c.b16 %v7244, %v7223
  %v7854 = vpack.c.b16 %v7245, %v7224
  %v7855 = vpack.c.b16 %v7246, %v7225
  %v7856 = vpack.c.b16 %v7247, %v7226
  %v7857 = vpack.c.b16 %v7248, %v7227
  %v7858 = vpack.c.b16 %v7249, %v7228
  %v7859 = vpack.c.b16 %v7250, %v7229
  %v7860 = vpack.c.b16 %v7251, %v7230
  %v7861 = vpack.c.b16 %v7252, %v7231
  %v7862 = vpack.c.b16 %v7253, %v7232
  %v7863 = vpack.c.b16 %v7254, %v7233
  %v7864 = vpack.c.b16 %v7255, %v7234
  %v7865 = vpack.c.b16 %v7256, %v7235
  %v7866 = vpack.c.b16 %v7257, %v7236
  %v7867 = vpack.c.b16 %v7258, %v7237
  %v7868 = vpack.c.b16 %v7280, %v7259
  %v7869 = vpack.c.b16 %v7281, %v7260
  %v7870 = vpack.c.b16 %v7282, %v7261
  %v7871 = vpack.c.b16 %v7283, %v7262
  %v7872 = vpack.c.b16 %v7284, %v7263
  %v7873 = vpack.c.b16 %v7285, %v7264
  %v7874 = vpack.c.b16 %v7286, %v7265
  %v7875 = vpack.c.b16 %v7287, %v7266
  %v7876 = vpack.c.b16 %v7288, %v7267
  %v7877 = vpack.c.b16 %v7289, %v7268
  %v7878 = vpack.c.b16 %v7290, %v7269
  %v7879 = vpack.c.b16 %v7291, %v7270
  %v7880 = vpack.c.b16 %v7292, %v7271
  %v7881 = vpack.c.b16 %v7293, %v7272
  %v7882 = vpack.c.b16 %v7294, %v7273
  %v7883 = vpack.c.b16 %v7295, %v7274
  %v7884 = vpack.c.b16 %v7296, %v7275
  %v7885 = vpack.c.b16 %v7297, %v7276
  %v7886 = vpack.c.b16 %v7298, %v7277
  %v7887 = vpack.c.b16 %v7299, %v7278
  %v7888 = vpack.c.b16 %v7300, %v7279
  %8477 = vmatprep.subr.bf16.mxu0 0
  %8478 = vmatpush1.bf16.msra.mxu0 %v4725
  %8479 = vmatprep.subr.bf16.mxu0 0
  %8480 = vmatpush1.bf16.msra.mxu0 %v4726
  %8481 = vmatprep.subr.bf16.mxu0 0
  %8482 = vmatpush1.bf16.msra.mxu0 %v4727
  %8483 = vmatprep.subr.bf16.mxu0 0
  %8484 = vmatpush1.bf16.msra.mxu0 %v4728
  %8485 = vmatprep.subr.bf16.mxu0 0
  %8486 = vmatpush1.bf16.msra.mxu0 %v4729
  %8487 = vmatprep.subr.bf16.mxu0 0
  %8488 = vmatpush1.bf16.msra.mxu0 %v4730
  %8489 = vmatprep.subr.bf16.mxu0 0
  %8490 = vmatpush1.bf16.msra.mxu0 %v4731
  %8491 = vmatprep.subr.bf16.mxu0 0
  %8492 = vmatpush1.bf16.msra.mxu0 %v4732
  %8493 = vmatprep.subr.bf16.mxu0 0
  %8494 = vmatpush1.bf16.msra.mxu0 %v4733
  %8495 = vmatprep.subr.bf16.mxu0 0
  %8496 = vmatpush1.bf16.msra.mxu0 %v4734
  %8497 = vmatprep.subr.bf16.mxu0 0
  %8498 = vmatpush1.bf16.msra.mxu0 %v4735
  %8499 = vmatprep.subr.bf16.mxu0 0
  %8500 = vmatpush1.bf16.msra.mxu0 %v4736
  %8501 = vmatprep.subr.bf16.mxu0 0
  %8502 = vmatpush1.bf16.msra.mxu0 %v4737
  %8503 = vmatprep.subr.bf16.mxu0 0
  %8504 = vmatpush1.bf16.msra.mxu0 %v4738
  %8505 = vmatprep.subr.bf16.mxu0 0
  %8506 = vmatpush1.bf16.msra.mxu0 %v4739
  %8507 = vmatprep.subr.bf16.mxu0 0
  %8508 = vmatpush1.bf16.msra.mxu0 %v4740
  %8509 = vmatprep.mubr.bf16.mxu0 %v7302
  %8510 = vmatmul.mubr.bf16.gmra.mrb[0].mxu0 %v7301
  %v8511 = vpop.f32.mrb[0].mxu0
  %v8512 = vadd.f32 0.0, %v8511
  %v8513 = vpop.f32.mrb[0].mxu0
  %v8514 = vpop.f32.mrb[0].mxu0
  %v8515 = vadd.f32 0.0, %v8514
  %v8516 = vpop.f32.mrb[0].mxu0
  %8517 = vmatprep.mubr.bf16.mxu0 %v7323
  %8518 = vmatmul.mubr.bf16.gmra.mrb[0].mxu0 %v7322
  %v8519 = vpop.f32.mrb[0].mxu0
  %v8520 = vadd.f32 0.0, %v8519
  %v8521 = vpop.f32.mrb[0].mxu0
  %v8522 = vpop.f32.mrb[0].mxu0
  %v8523 = vadd.f32 0.0, %v8522
  %v8524 = vpop.f32.mrb[0].mxu0
  %8525 = vmatprep.mubr.bf16.mxu0 %v7344
  %8526 = vmatmul.mubr.bf16.gmra.mrb[0].mxu0 %v7343
  %v8527 = vpop.f32.mrb[0].mxu0
  %v8528 = vadd.f32 0.0, %v8527
  %v8529 = vpop.f32.mrb[0].mxu0
  %v8530 = vpop.f32.mrb[0].mxu0
  %v8531 = vadd.f32 0.0, %v8530
  %v8532 = vpop.f32.mrb[0].mxu0
  %8533 = vmatprep.mubr.bf16.mxu0 %v7365
  %8534 = vmatmul.mubr.bf16.gmra.mrb[0].mxu0 %v7364
  %v8535 = vpop.f32.mrb[0].mxu0
  %v8536 = vadd.f32 0.0, %v8535
  %v8537 = vpop.f32.mrb[0].mxu0
  %v8538 = vpop.f32.mrb[0].mxu0
  %v8539 = vadd.f32 0.0, %v8538
  %v8540 = vpop.f32.mrb[0].mxu0
  %8541 = vmatprep.mubr.bf16.mxu0 %v7386
  %8542 = vmatmul.mubr.bf16.gmra.mrb[0].mxu0 %v7385
  %v8543 = vpop.f32.mrb[0].mxu0
  %v8544 = vadd.f32 0.0, %v8543
  %v8545 = vpop.f32.mrb[0].mxu0
  %v8546 = vpop.f32.mrb[0].mxu0
  %v8547 = vadd.f32 0.0, %v8546
  %v8548 = vpop.f32.mrb[0].mxu0
  %8549 = vmatprep.mubr.bf16.mxu0 %v7407
  %8550 = vmatmul.mubr.bf16.gmra.mrb[0].mxu0 %v7406
  %v8551 = vpop.f32.mrb[0].mxu0
  %v8552 = vadd.f32 0.0, %v8551
  %v8553 = vpop.f32.mrb[0].mxu0
  %v8554 = vpop.f32.mrb[0].mxu0
  %v8555 = vadd.f32 0.0, %v8554
  %v8556 = vpop.f32.mrb[0].mxu0
  %8557 = vmatprep.mubr.bf16.mxu0 %v7428
  %8558 = vmatmul.mubr.bf16.gmra.mrb[0].mxu0 %v7427
  %v8559 = vpop.f32.mrb[0].mxu0
  %v8560 = vadd.f32 0.0, %v8559
  %v8561 = vpop.f32.mrb[0].mxu0
  %v8562 = vpop.f32.mrb[0].mxu0
  %v8563 = vadd.f32 0.0, %v8562
  %v8564 = vpop.f32.mrb[0].mxu0
  %8565 = vmatprep.mubr.bf16.mxu0 %v7449
  %8566 = vmatmul.mubr.bf16.gmra.mrb[0].mxu0 %v7448
  %v8567 = vpop.f32.mrb[0].mxu0
  %v8568 = vadd.f32 0.0, %v8567
  %v8569 = vpop.f32.mrb[0].mxu0
  %v8570 = vpop.f32.mrb[0].mxu0
  %v8571 = vadd.f32 0.0, %v8570
  %v8572 = vpop.f32.mrb[0].mxu0
  %8573 = vmatprep.mubr.bf16.mxu0 %v7470
  %8574 = vmatmul.mubr.bf16.gmra.mrb[0].mxu0 %v7469
  %v8575 = vpop.f32.mrb[0].mxu0
  %v8576 = vadd.f32 0.0, %v8575
  %v8577 = vpop.f32.mrb[0].mxu0
  %v8578 = vpop.f32.mrb[0].mxu0
  %v8579 = vadd.f32 0.0, %v8578
  %v8580 = vpop.f32.mrb[0].mxu0
  %8581 = vmatprep.mubr.bf16.mxu0 %v7491
  %8582 = vmatmul.mubr.bf16.gmra.mrb[0].mxu0 %v7490
  %v8583 = vpop.f32.mrb[0].mxu0
  %v8584 = vadd.f32 0.0, %v8583
  %v8585 = vpop.f32.mrb[0].mxu0
  %v8586 = vpop.f32.mrb[0].mxu0
  %v8587 = vadd.f32 0.0, %v8586
  %v8588 = vpop.f32.mrb[0].mxu0
  %8589 = vmatprep.mubr.bf16.mxu0 %v7512
  %8590 = vmatmul.mubr.bf16.gmra.mrb[0].mxu0 %v7511
  %v8591 = vpop.f32.mrb[0].mxu0
  %v8592 = vadd.f32 0.0, %v8591
  %v8593 = vpop.f32.mrb[0].mxu0
  %v8594 = vpop.f32.mrb[0].mxu0
  %v8595 = vadd.f32 0.0, %v8594
  %v8596 = vpop.f32.mrb[0].mxu0
  %8597 = vmatprep.mubr.bf16.mxu0 %v7533
  %8598 = vmatmul.mubr.bf16.gmra.mrb[0].mxu0 %v7532
  %v8599 = vpop.f32.mrb[0].mxu0
  %v8600 = vadd.f32 0.0, %v8599
  %v8601 = vpop.f32.mrb[0].mxu0
  %v8602 = vpop.f32.mrb[0].mxu0
  %v8603 = vadd.f32 0.0, %v8602
  %v8604 = vpop.f32.mrb[0].mxu0
  %8605 = vmatprep.mubr.bf16.mxu0 %v7554
  %8606 = vmatmul.mubr.bf16.gmra.mrb[0].mxu0 %v7553
  %v8607 = vpop.f32.mrb[0].mxu0
  %v8608 = vadd.f32 0.0, %v8607
  %v8609 = vpop.f32.mrb[0].mxu0
  %v8610 = vpop.f32.mrb[0].mxu0
  %v8611 = vadd.f32 0.0, %v8610
  %v8612 = vpop.f32.mrb[0].mxu0
  %8613 = vmatprep.mubr.bf16.mxu0 %v7575
  %8614 = vmatmul.mubr.bf16.gmra.mrb[0].mxu0 %v7574
  %v8615 = vpop.f32.mrb[0].mxu0
  %v8616 = vadd.f32 0.0, %v8615
  %v8617 = vpop.f32.mrb[0].mxu0
  %v8618 = vpop.f32.mrb[0].mxu0
  %v8619 = vadd.f32 0.0, %v8618
  %v8620 = vpop.f32.mrb[0].mxu0
  %8621 = vmatprep.mubr.bf16.mxu0 %v7596
  %8622 = vmatmul.mubr.bf16.gmra.mrb[0].mxu0 %v7595
  %v8623 = vpop.f32.mrb[0].mxu0
  %v8624 = vadd.f32 0.0, %v8623
  %v8625 = vpop.f32.mrb[0].mxu0
  %v8626 = vpop.f32.mrb[0].mxu0
  %v8627 = vadd.f32 0.0, %v8626
  %v8628 = vpop.f32.mrb[0].mxu0
  %8629 = vmatprep.mubr.bf16.mxu0 %v7617
  %8630 = vmatmul.mubr.bf16.gmra.mrb[0].mxu0 %v7616
  %v8631 = vpop.f32.mrb[0].mxu0
  %v8632 = vadd.f32 0.0, %v8631
  %v8633 = vpop.f32.mrb[0].mxu0
  %v8634 = vpop.f32.mrb[0].mxu0
  %v8635 = vadd.f32 0.0, %v8634
  %v8636 = vpop.f32.mrb[0].mxu0
  %8637 = vmatprep.mubr.bf16.mxu0 %v7638
  %8638 = vmatmul.mubr.bf16.gmra.mrb[0].mxu0 %v7637
  %v8639 = vpop.f32.mrb[0].mxu0
  %v8640 = vadd.f32 0.0, %v8639
  %v8641 = vpop.f32.mrb[0].mxu0
  %v8642 = vpop.f32.mrb[0].mxu0
  %v8643 = vadd.f32 0.0, %v8642
  %v8644 = vpop.f32.mrb[0].mxu0
  %8645 = vmatprep.mubr.bf16.mxu0 %v7659
  %8646 = vmatmul.mubr.bf16.gmra.mrb[0].mxu0 %v7658
  %v8647 = vpop.f32.mrb[0].mxu0
  %v8648 = vadd.f32 0.0, %v8647
  %v8649 = vpop.f32.mrb[0].mxu0
  %v8650 = vpop.f32.mrb[0].mxu0
  %v8651 = vadd.f32 0.0, %v8650
  %v8652 = vpop.f32.mrb[0].mxu0
  %8653 = vmatprep.mubr.bf16.mxu0 %v7680
  %8654 = vmatmul.mubr.bf16.gmra.mrb[0].mxu0 %v7679
  %v8655 = vpop.f32.mrb[0].mxu0
  %v8656 = vadd.f32 0.0, %v8655
  %v8657 = vpop.f32.mrb[0].mxu0
  %v8658 = vpop.f32.mrb[0].mxu0
  %v8659 = vadd.f32 0.0, %v8658
  %v8660 = vpop.f32.mrb[0].mxu0
  %8661 = vmatprep.mubr.bf16.mxu0 %v7701
  %8662 = vmatmul.mubr.bf16.gmra.mrb[0].mxu0 %v7700
  %v8663 = vpop.f32.mrb[0].mxu0
  %v8664 = vadd.f32 0.0, %v8663
  %v8665 = vpop.f32.mrb[0].mxu0
  %v8666 = vpop.f32.mrb[0].mxu0
  %v8667 = vadd.f32 0.0, %v8666
  %v8668 = vpop.f32.mrb[0].mxu0
  %8669 = vmatprep.mubr.bf16.mxu0 %v7722
  %8670 = vmatmul.mubr.bf16.gmra.mrb[0].mxu0 %v7721
  %v8671 = vpop.f32.mrb[0].mxu0
  %v8672 = vadd.f32 0.0, %v8671
  %v8673 = vpop.f32.mrb[0].mxu0
  %v8674 = vpop.f32.mrb[0].mxu0
  %v8675 = vadd.f32 0.0, %v8674
  %v8676 = vpop.f32.mrb[0].mxu0
  %8677 = vmatprep.mubr.bf16.mxu0 %v7743
  %8678 = vmatmul.mubr.bf16.gmra.mrb[0].mxu0 %v7742
  %v8679 = vpop.f32.mrb[0].mxu0
  %v8680 = vadd.f32 0.0, %v8679
  %v8681 = vpop.f32.mrb[0].mxu0
  %v8682 = vpop.f32.mrb[0].mxu0
  %v8683 = vadd.f32 0.0, %v8682
  %v8684 = vpop.f32.mrb[0].mxu0
  %8685 = vmatprep.mubr.bf16.mxu0 %v7764
  %8686 = vmatmul.mubr.bf16.gmra.mrb[0].mxu0 %v7763
  %v8687 = vpop.f32.mrb[0].mxu0
  %v8688 = vadd.f32 0.0, %v8687
  %v8689 = vpop.f32.mrb[0].mxu0
  %v8690 = vpop.f32.mrb[0].mxu0
  %v8691 = vadd.f32 0.0, %v8690
  %v8692 = vpop.f32.mrb[0].mxu0
  %8693 = vmatprep.mubr.bf16.mxu0 %v7785
  %8694 = vmatmul.mubr.bf16.gmra.mrb[0].mxu0 %v7784
  %v8695 = vpop.f32.mrb[0].mxu0
  %v8696 = vadd.f32 0.0, %v8695
  %v8697 = vpop.f32.mrb[0].mxu0
  %v8698 = vpop.f32.mrb[0].mxu0
  %v8699 = vadd.f32 0.0, %v8698
  %v8700 = vpop.f32.mrb[0].mxu0
  %8701 = vmatprep.mubr.bf16.mxu0 %v7806
  %8702 = vmatmul.mubr.bf16.gmra.mrb[0].mxu0 %v7805
  %v8703 = vpop.f32.mrb[0].mxu0
  %v8704 = vadd.f32 0.0, %v8703
  %v8705 = vpop.f32.mrb[0].mxu0
  %v8706 = vpop.f32.mrb[0].mxu0
  %v8707 = vadd.f32 0.0, %v8706
  %v8708 = vpop.f32.mrb[0].mxu0
  %8709 = vmatprep.mubr.bf16.mxu0 %v7827
  %8710 = vmatmul.mubr.bf16.gmra.mrb[0].mxu0 %v7826
  %v8711 = vpop.f32.mrb[0].mxu0
  %v8712 = vadd.f32 0.0, %v8711
  %v8713 = vpop.f32.mrb[0].mxu0
  %v8714 = vpop.f32.mrb[0].mxu0
  %v8715 = vadd.f32 0.0, %v8714
  %v8716 = vpop.f32.mrb[0].mxu0
  %8717 = vmatprep.mubr.bf16.mxu0 %v7848
  %8718 = vmatmul.mubr.bf16.gmra.mrb[0].mxu0 %v7847
  %v8719 = vpop.f32.mrb[0].mxu0
  %v8720 = vadd.f32 0.0, %v8719
  %v8721 = vpop.f32.mrb[0].mxu0
  %v8722 = vpop.f32.mrb[0].mxu0
  %v8723 = vadd.f32 0.0, %v8722
  %v8724 = vpop.f32.mrb[0].mxu0
  %8725 = vmatprep.mubr.bf16.mxu0 %v7869
  %8726 = vmatmul.mubr.bf16.gmra.mrb[0].mxu0 %v7868
  %v8727 = vpop.f32.mrb[0].mxu0
  %v8728 = vadd.f32 0.0, %v8727
  %v8729 = vpop.f32.mrb[0].mxu0
  %v8730 = vpop.f32.mrb[0].mxu0
  %v8731 = vadd.f32 0.0, %v8730
  %v8732 = vpop.f32.mrb[0].mxu0
  %8733 = vdwg.mxu0
  %8734 = vmatprep.subr.bf16.mxu0 0
  %8735 = vmatpush1.bf16.msra.mxu0 %v4741
  %8736 = vmatprep.subr.bf16.mxu0 0
  %8737 = vmatpush1.bf16.msra.mxu0 %v4742
  %8738 = vmatprep.subr.bf16.mxu0 0
  %8739 = vmatpush1.bf16.msra.mxu0 %v4743
  %8740 = vmatprep.subr.bf16.mxu0 0
  %8741 = vmatpush1.bf16.msra.mxu0 %v4744
  %8742 = vmatprep.subr.bf16.mxu0 0
  %8743 = vmatpush1.bf16.msra.mxu0 %v4745
  %8744 = vmatprep.subr.bf16.mxu0 0
  %8745 = vmatpush1.bf16.msra.mxu0 %v4746
  %8746 = vmatprep.subr.bf16.mxu0 0
  %8747 = vmatpush1.bf16.msra.mxu0 %v4747
  %8748 = vmatprep.subr.bf16.mxu0 0
  %8749 = vmatpush1.bf16.msra.mxu0 %v4748
  %8750 = vmatprep.subr.bf16.mxu0 0
  %8751 = vmatpush1.bf16.msra.mxu0 %v4749
  %8752 = vmatprep.subr.bf16.mxu0 0
  %8753 = vmatpush1.bf16.msra.mxu0 %v4750
  %8754 = vmatprep.subr.bf16.mxu0 0
  %8755 = vmatpush1.bf16.msra.mxu0 %v4751
  %8756 = vmatprep.subr.bf16.mxu0 0
  %8757 = vmatpush1.bf16.msra.mxu0 %v4752
  %8758 = vmatprep.subr.bf16.mxu0 0
  %8759 = vmatpush1.bf16.msra.mxu0 %v4753
  %8760 = vmatprep.subr.bf16.mxu0 0
  %8761 = vmatpush1.bf16.msra.mxu0 %v4754
  %8762 = vmatprep.subr.bf16.mxu0 0
  %8763 = vmatpush1.bf16.msra.mxu0 %v4755
  %8764 = vmatprep.subr.bf16.mxu0 0
  %8765 = vmatpush1.bf16.msra.mxu0 %v4756
  %8766 = vmatprep.mubr.bf16.mxu0 %v7304
  %8767 = vmatmul.mubr.bf16.gmra.mrb[0].mxu0 %v7303
  %v8768 = vpop.f32.mrb[0].mxu0
  %v8769 = vadd.f32 %v8512, %v8768
  %v8770 = vpop.f32.mrb[0].mxu0
  %v8771 = vpop.f32.mrb[0].mxu0
  %v8772 = vadd.f32 %v8515, %v8771
  %v8773 = vpop.f32.mrb[0].mxu0
  %8774 = vmatprep.mubr.bf16.mxu0 %v7325
  %8775 = vmatmul.mubr.bf16.gmra.mrb[0].mxu0 %v7324
  %v8776 = vpop.f32.mrb[0].mxu0
  %v8777 = vadd.f32 %v8520, %v8776
  %v8778 = vpop.f32.mrb[0].mxu0
  %v8779 = vpop.f32.mrb[0].mxu0
  %v8780 = vadd.f32 %v8523, %v8779
  %v8781 = vpop.f32.mrb[0].mxu0
  %8782 = vmatprep.mubr.bf16.mxu0 %v7346
  %8783 = vmatmul.mubr.bf16.gmra.mrb[0].mxu0 %v7345
  %v8784 = vpop.f32.mrb[0].mxu0
  %v8785 = vadd.f32 %v8528, %v8784
  %v8786 = vpop.f32.mrb[0].mxu0
  %v8787 = vpop.f32.mrb[0].mxu0
  %v8788 = vadd.f32 %v8531, %v8787
  %v8789 = vpop.f32.mrb[0].mxu0
  %8790 = vmatprep.mubr.bf16.mxu0 %v7367
  %8791 = vmatmul.mubr.bf16.gmra.mrb[0].mxu0 %v7366
  %v8792 = vpop.f32.mrb[0].mxu0
  %v8793 = vadd.f32 %v8536, %v8792
  %v8794 = vpop.f32.mrb[0].mxu0
  %v8795 = vpop.f32.mrb[0].mxu0
  %v8796 = vadd.f32 %v8539, %v8795
  %v8797 = vpop.f32.mrb[0].mxu0
  %8798 = vmatprep.mubr.bf16.mxu0 %v7388
  %8799 = vmatmul.mubr.bf16.gmra.mrb[0].mxu0 %v7387
  %v8800 = vpop.f32.mrb[0].mxu0
  %v8801 = vadd.f32 %v8544, %v8800
  %v8802 = vpop.f32.mrb[0].mxu0
  %v8803 = vpop.f32.mrb[0].mxu0
  %v8804 = vadd.f32 %v8547, %v8803
  %v8805 = vpop.f32.mrb[0].mxu0
  %8806 = vmatprep.mubr.bf16.mxu0 %v7409
  %8807 = vmatmul.mubr.bf16.gmra.mrb[0].mxu0 %v7408
  %v8808 = vpop.f32.mrb[0].mxu0
  %v8809 = vadd.f32 %v8552, %v8808
  %v8810 = vpop.f32.mrb[0].mxu0
  %v8811 = vpop.f32.mrb[0].mxu0
  %v8812 = vadd.f32 %v8555, %v8811
  %v8813 = vpop.f32.mrb[0].mxu0
  %8814 = vmatprep.mubr.bf16.mxu0 %v7430
  %8815 = vmatmul.mubr.bf16.gmra.mrb[0].mxu0 %v7429
  %v8816 = vpop.f32.mrb[0].mxu0
  %v8817 = vadd.f32 %v8560, %v8816
  %v8818 = vpop.f32.mrb[0].mxu0
  %v8819 = vpop.f32.mrb[0].mxu0
  %v8820 = vadd.f32 %v8563, %v8819
  %v8821 = vpop.f32.mrb[0].mxu0
  %8822 = vmatprep.mubr.bf16.mxu0 %v7451
  %8823 = vmatmul.mubr.bf16.gmra.mrb[0].mxu0 %v7450
  %v8824 = vpop.f32.mrb[0].mxu0
  %v8825 = vadd.f32 %v8568, %v8824
  %v8826 = vpop.f32.mrb[0].mxu0
  %v8827 = vpop.f32.mrb[0].mxu0
  %v8828 = vadd.f32 %v8571, %v8827
  %v8829 = vpop.f32.mrb[0].mxu0
  %8830 = vmatprep.mubr.bf16.mxu0 %v7472
  %8831 = vmatmul.mubr.bf16.gmra.mrb[0].mxu0 %v7471
  %v8832 = vpop.f32.mrb[0].mxu0
  %v8833 = vadd.f32 %v8576, %v8832
  %v8834 = vpop.f32.mrb[0].mxu0
  %v8835 = vpop.f32.mrb[0].mxu0
  %v8836 = vadd.f32 %v8579, %v8835
  %v8837 = vpop.f32.mrb[0].mxu0
  %8838 = vmatprep.mubr.bf16.mxu0 %v7493
  %8839 = vmatmul.mubr.bf16.gmra.mrb[0].mxu0 %v7492
  %v8840 = vpop.f32.mrb[0].mxu0
  %v8841 = vadd.f32 %v8584, %v8840
  %v8842 = vpop.f32.mrb[0].mxu0
  %v8843 = vpop.f32.mrb[0].mxu0
  %v8844 = vadd.f32 %v8587, %v8843
  %v8845 = vpop.f32.mrb[0].mxu0
  %8846 = vmatprep.mubr.bf16.mxu0 %v7514
  %8847 = vmatmul.mubr.bf16.gmra.mrb[0].mxu0 %v7513
  %v8848 = vpop.f32.mrb[0].mxu0
  %v8849 = vadd.f32 %v8592, %v8848
  %v8850 = vpop.f32.mrb[0].mxu0
  %v8851 = vpop.f32.mrb[0].mxu0
  %v8852 = vadd.f32 %v8595, %v8851
  %v8853 = vpop.f32.mrb[0].mxu0
  %8854 = vmatprep.mubr.bf16.mxu0 %v7535
  %8855 = vmatmul.mubr.bf16.gmra.mrb[0].mxu0 %v7534
  %v8856 = vpop.f32.mrb[0].mxu0
  %v8857 = vadd.f32 %v8600, %v8856
  %v8858 = vpop.f32.mrb[0].mxu0
  %v8859 = vpop.f32.mrb[0].mxu0
  %v8860 = vadd.f32 %v8603, %v8859
  %v8861 = vpop.f32.mrb[0].mxu0
  %8862 = vmatprep.mubr.bf16.mxu0 %v7556
  %8863 = vmatmul.mubr.bf16.gmra.mrb[0].mxu0 %v7555
  %v8864 = vpop.f32.mrb[0].mxu0
  %v8865 = vadd.f32 %v8608, %v8864
  %v8866 = vpop.f32.mrb[0].mxu0
  %v8867 = vpop.f32.mrb[0].mxu0
  %v8868 = vadd.f32 %v8611, %v8867
  %v8869 = vpop.f32.mrb[0].mxu0
  %8870 = vmatprep.mubr.bf16.mxu0 %v7577
  %8871 = vmatmul.mubr.bf16.gmra.mrb[0].mxu0 %v7576
  %v8872 = vpop.f32.mrb[0].mxu0
  %v8873 = vadd.f32 %v8616, %v8872
  %v8874 = vpop.f32.mrb[0].mxu0
  %v8875 = vpop.f32.mrb[0].mxu0
  %v8876 = vadd.f32 %v8619, %v8875
  %v8877 = vpop.f32.mrb[0].mxu0
  %8878 = vmatprep.mubr.bf16.mxu0 %v7598
  %8879 = vmatmul.mubr.bf16.gmra.mrb[0].mxu0 %v7597
  %v8880 = vpop.f32.mrb[0].mxu0
  %v8881 = vadd.f32 %v8624, %v8880
  %v8882 = vpop.f32.mrb[0].mxu0
  %v8883 = vpop.f32.mrb[0].mxu0
  %v8884 = vadd.f32 %v8627, %v8883
  %v8885 = vpop.f32.mrb[0].mxu0
  %8886 = vmatprep.mubr.bf16.mxu0 %v7619
  %8887 = vmatmul.mubr.bf16.gmra.mrb[0].mxu0 %v7618
  %v8888 = vpop.f32.mrb[0].mxu0
  %v8889 = vadd.f32 %v8632, %v8888
  %v8890 = vpop.f32.mrb[0].mxu0
  %v8891 = vpop.f32.mrb[0].mxu0
  %v8892 = vadd.f32 %v8635, %v8891
  %v8893 = vpop.f32.mrb[0].mxu0
  %8894 = vmatprep.mubr.bf16.mxu0 %v7640
  %8895 = vmatmul.mubr.bf16.gmra.mrb[0].mxu0 %v7639
  %v8896 = vpop.f32.mrb[0].mxu0
  %v8897 = vadd.f32 %v8640, %v8896
  %v8898 = vpop.f32.mrb[0].mxu0
  %v8899 = vpop.f32.mrb[0].mxu0
  %v8900 = vadd.f32 %v8643, %v8899
  %v8901 = vpop.f32.mrb[0].mxu0
  %8902 = vmatprep.mubr.bf16.mxu0 %v7661
  %8903 = vmatmul.mubr.bf16.gmra.mrb[0].mxu0 %v7660
  %v8904 = vpop.f32.mrb[0].mxu0
  %v8905 = vadd.f32 %v8648, %v8904
  %v8906 = vpop.f32.mrb[0].mxu0
  %v8907 = vpop.f32.mrb[0].mxu0
  %v8908 = vadd.f32 %v8651, %v8907
  %v8909 = vpop.f32.mrb[0].mxu0
  %8910 = vmatprep.mubr.bf16.mxu0 %v7682
  %8911 = vmatmul.mubr.bf16.gmra.mrb[0].mxu0 %v7681
  %v8912 = vpop.f32.mrb[0].mxu0
  %v8913 = vadd.f32 %v8656, %v8912
  %v8914 = vpop.f32.mrb[0].mxu0
  %v8915 = vpop.f32.mrb[0].mxu0
  %v8916 = vadd.f32 %v8659, %v8915
  %v8917 = vpop.f32.mrb[0].mxu0
  %8918 = vmatprep.mubr.bf16.mxu0 %v7703
  %8919 = vmatmul.mubr.bf16.gmra.mrb[0].mxu0 %v7702
  %v8920 = vpop.f32.mrb[0].mxu0
  %v8921 = vadd.f32 %v8664, %v8920
  %v8922 = vpop.f32.mrb[0].mxu0
  %v8923 = vpop.f32.mrb[0].mxu0
  %v8924 = vadd.f32 %v8667, %v8923
  %v8925 = vpop.f32.mrb[0].mxu0
  %8926 = vmatprep.mubr.bf16.mxu0 %v7724
  %8927 = vmatmul.mubr.bf16.gmra.mrb[0].mxu0 %v7723
  %v8928 = vpop.f32.mrb[0].mxu0
  %v8929 = vadd.f32 %v8672, %v8928
  %v8930 = vpop.f32.mrb[0].mxu0
  %v8931 = vpop.f32.mrb[0].mxu0
  %v8932 = vadd.f32 %v8675, %v8931
  %v8933 = vpop.f32.mrb[0].mxu0
  %8934 = vmatprep.mubr.bf16.mxu0 %v7745
  %8935 = vmatmul.mubr.bf16.gmra.mrb[0].mxu0 %v7744
  %v8936 = vpop.f32.mrb[0].mxu0
  %v8937 = vadd.f32 %v8680, %v8936
  %v8938 = vpop.f32.mrb[0].mxu0
  %v8939 = vpop.f32.mrb[0].mxu0
  %v8940 = vadd.f32 %v8683, %v8939
  %v8941 = vpop.f32.mrb[0].mxu0
  %8942 = vmatprep.mubr.bf16.mxu0 %v7766
  %8943 = vmatmul.mubr.bf16.gmra.mrb[0].mxu0 %v7765
  %v8944 = vpop.f32.mrb[0].mxu0
  %v8945 = vadd.f32 %v8688, %v8944
  %v8946 = vpop.f32.mrb[0].mxu0
  %v8947 = vpop.f32.mrb[0].mxu0
  %v8948 = vadd.f32 %v8691, %v8947
  %v8949 = vpop.f32.mrb[0].mxu0
  %8950 = vmatprep.mubr.bf16.mxu0 %v7787
  %8951 = vmatmul.mubr.bf16.gmra.mrb[0].mxu0 %v7786
  %v8952 = vpop.f32.mrb[0].mxu0
  %v8953 = vadd.f32 %v8696, %v8952
  %v8954 = vpop.f32.mrb[0].mxu0
  %v8955 = vpop.f32.mrb[0].mxu0
  %v8956 = vadd.f32 %v8699, %v8955
  %v8957 = vpop.f32.mrb[0].mxu0
  %8958 = vmatprep.mubr.bf16.mxu0 %v7808
  %8959 = vmatmul.mubr.bf16.gmra.mrb[0].mxu0 %v7807
  %v8960 = vpop.f32.mrb[0].mxu0
  %v8961 = vadd.f32 %v8704, %v8960
  %v8962 = vpop.f32.mrb[0].mxu0
  %v8963 = vpop.f32.mrb[0].mxu0
  %v8964 = vadd.f32 %v8707, %v8963
  %v8965 = vpop.f32.mrb[0].mxu0
  %8966 = vmatprep.mubr.bf16.mxu0 %v7829
  %8967 = vmatmul.mubr.bf16.gmra.mrb[0].mxu0 %v7828
  %v8968 = vpop.f32.mrb[0].mxu0
  %v8969 = vadd.f32 %v8712, %v8968
  %v8970 = vpop.f32.mrb[0].mxu0
  %v8971 = vpop.f32.mrb[0].mxu0
  %v8972 = vadd.f32 %v8715, %v8971
  %v8973 = vpop.f32.mrb[0].mxu0
  %8974 = vmatprep.mubr.bf16.mxu0 %v7850
  %8975 = vmatmul.mubr.bf16.gmra.mrb[0].mxu0 %v7849
  %v8976 = vpop.f32.mrb[0].mxu0
  %v8977 = vadd.f32 %v8720, %v8976
  %v8978 = vpop.f32.mrb[0].mxu0
  %v8979 = vpop.f32.mrb[0].mxu0
  %v8980 = vadd.f32 %v8723, %v8979
  %v8981 = vpop.f32.mrb[0].mxu0
  %8982 = vmatprep.mubr.bf16.mxu0 %v7871
  %8983 = vmatmul.mubr.bf16.gmra.mrb[0].mxu0 %v7870
  %v8984 = vpop.f32.mrb[0].mxu0
  %v8985 = vadd.f32 %v8728, %v8984
  %v8986 = vpop.f32.mrb[0].mxu0
  %v8987 = vpop.f32.mrb[0].mxu0
  %v8988 = vadd.f32 %v8731, %v8987
  %v8989 = vpop.f32.mrb[0].mxu0
  %8990 = vdwg.mxu0
  %8991 = vmatprep.subr.bf16.mxu0 0
  %8992 = vmatpush1.bf16.msra.mxu0 %v4757
  %8993 = vmatprep.subr.bf16.mxu0 0
  %8994 = vmatpush1.bf16.msra.mxu0 %v4758
  %8995 = vmatprep.subr.bf16.mxu0 0
  %8996 = vmatpush1.bf16.msra.mxu0 %v4759
  %8997 = vmatprep.subr.bf16.mxu0 0
  %8998 = vmatpush1.bf16.msra.mxu0 %v4760
  %8999 = vmatprep.subr.bf16.mxu0 0
  %9000 = vmatpush1.bf16.msra.mxu0 %v4761
  %9001 = vmatprep.subr.bf16.mxu0 0
  %9002 = vmatpush1.bf16.msra.mxu0 %v4762
  %9003 = vmatprep.subr.bf16.mxu0 0
  %9004 = vmatpush1.bf16.msra.mxu0 %v4763
  %9005 = vmatprep.subr.bf16.mxu0 0
  %9006 = vmatpush1.bf16.msra.mxu0 %v4764
  %9007 = vmatprep.subr.bf16.mxu0 0
  %9008 = vmatpush1.bf16.msra.mxu0 %v4765
  %9009 = vmatprep.subr.bf16.mxu0 0
  %9010 = vmatpush1.bf16.msra.mxu0 %v4766
  %9011 = vmatprep.subr.bf16.mxu0 0
  %9012 = vmatpush1.bf16.msra.mxu0 %v4767
  %9013 = vmatprep.subr.bf16.mxu0 0
  %9014 = vmatpush1.bf16.msra.mxu0 %v4768
  %9015 = vmatprep.subr.bf16.mxu0 0
  %9016 = vmatpush1.bf16.msra.mxu0 %v4769
  %9017 = vmatprep.subr.bf16.mxu0 0
  %9018 = vmatpush1.bf16.msra.mxu0 %v4770
  %9019 = vmatprep.subr.bf16.mxu0 0
  %9020 = vmatpush1.bf16.msra.mxu0 %v4771
  %9021 = vmatprep.subr.bf16.mxu0 0
  %9022 = vmatpush1.bf16.msra.mxu0 %v4772
  %9023 = vmatprep.mubr.bf16.mxu0 %v7306
  %9024 = vmatmul.mubr.bf16.gmra.mrb[0].mxu0 %v7305
  %v9025 = vpop.f32.mrb[0].mxu0
  %v9026 = vadd.f32 %v8769, %v9025
  %v9027 = vpop.f32.mrb[0].mxu0
  %v9028 = vpop.f32.mrb[0].mxu0
  %v9029 = vadd.f32 %v8772, %v9028
  %v9030 = vpop.f32.mrb[0].mxu0
  %9031 = vmatprep.mubr.bf16.mxu0 %v7327
  %9032 = vmatmul.mubr.bf16.gmra.mrb[0].mxu0 %v7326
  %v9033 = vpop.f32.mrb[0].mxu0
  %v9034 = vadd.f32 %v8777, %v9033
  %v9035 = vpop.f32.mrb[0].mxu0
  %v9036 = vpop.f32.mrb[0].mxu0
  %v9037 = vadd.f32 %v8780, %v9036
  %v9038 = vpop.f32.mrb[0].mxu0
  %9039 = vmatprep.mubr.bf16.mxu0 %v7348
  %9040 = vmatmul.mubr.bf16.gmra.mrb[0].mxu0 %v7347
  %v9041 = vpop.f32.mrb[0].mxu0
  %v9042 = vadd.f32 %v8785, %v9041
  %v9043 = vpop.f32.mrb[0].mxu0
  %v9044 = vpop.f32.mrb[0].mxu0
  %v9045 = vadd.f32 %v8788, %v9044
  %v9046 = vpop.f32.mrb[0].mxu0
  %9047 = vmatprep.mubr.bf16.mxu0 %v7369
  %9048 = vmatmul.mubr.bf16.gmra.mrb[0].mxu0 %v7368
  %v9049 = vpop.f32.mrb[0].mxu0
  %v9050 = vadd.f32 %v8793, %v9049
  %v9051 = vpop.f32.mrb[0].mxu0
  %v9052 = vpop.f32.mrb[0].mxu0
  %v9053 = vadd.f32 %v8796, %v9052
  %v9054 = vpop.f32.mrb[0].mxu0
  %9055 = vmatprep.mubr.bf16.mxu0 %v7390
  %9056 = vmatmul.mubr.bf16.gmra.mrb[0].mxu0 %v7389
  %v9057 = vpop.f32.mrb[0].mxu0
  %v9058 = vadd.f32 %v8801, %v9057
  %v9059 = vpop.f32.mrb[0].mxu0
  %v9060 = vpop.f32.mrb[0].mxu0
  %v9061 = vadd.f32 %v8804, %v9060
  %v9062 = vpop.f32.mrb[0].mxu0
  %9063 = vmatprep.mubr.bf16.mxu0 %v7411
  %9064 = vmatmul.mubr.bf16.gmra.mrb[0].mxu0 %v7410
  %v9065 = vpop.f32.mrb[0].mxu0
  %v9066 = vadd.f32 %v8809, %v9065
  %v9067 = vpop.f32.mrb[0].mxu0
  %v9068 = vpop.f32.mrb[0].mxu0
  %v9069 = vadd.f32 %v8812, %v9068
  %v9070 = vpop.f32.mrb[0].mxu0
  %9071 = vmatprep.mubr.bf16.mxu0 %v7432
  %9072 = vmatmul.mubr.bf16.gmra.mrb[0].mxu0 %v7431
  %v9073 = vpop.f32.mrb[0].mxu0
  %v9074 = vadd.f32 %v8817, %v9073
  %v9075 = vpop.f32.mrb[0].mxu0
  %v9076 = vpop.f32.mrb[0].mxu0
  %v9077 = vadd.f32 %v8820, %v9076
  %v9078 = vpop.f32.mrb[0].mxu0
  %9079 = vmatprep.mubr.bf16.mxu0 %v7453
  %9080 = vmatmul.mubr.bf16.gmra.mrb[0].mxu0 %v7452
  %v9081 = vpop.f32.mrb[0].mxu0
  %v9082 = vadd.f32 %v8825, %v9081
  %v9083 = vpop.f32.mrb[0].mxu0
  %v9084 = vpop.f32.mrb[0].mxu0
  %v9085 = vadd.f32 %v8828, %v9084
  %v9086 = vpop.f32.mrb[0].mxu0
  %9087 = vmatprep.mubr.bf16.mxu0 %v7474
  %9088 = vmatmul.mubr.bf16.gmra.mrb[0].mxu0 %v7473
  %v9089 = vpop.f32.mrb[0].mxu0
  %v9090 = vadd.f32 %v8833, %v9089
  %v9091 = vpop.f32.mrb[0].mxu0
  %v9092 = vpop.f32.mrb[0].mxu0
  %v9093 = vadd.f32 %v8836, %v9092
  %v9094 = vpop.f32.mrb[0].mxu0
  %9095 = vmatprep.mubr.bf16.mxu0 %v7495
  %9096 = vmatmul.mubr.bf16.gmra.mrb[0].mxu0 %v7494
  %v9097 = vpop.f32.mrb[0].mxu0
  %v9098 = vadd.f32 %v8841, %v9097
  %v9099 = vpop.f32.mrb[0].mxu0
  %v9100 = vpop.f32.mrb[0].mxu0
  %v9101 = vadd.f32 %v8844, %v9100
  %v9102 = vpop.f32.mrb[0].mxu0
  %9103 = vmatprep.mubr.bf16.mxu0 %v7516
  %9104 = vmatmul.mubr.bf16.gmra.mrb[0].mxu0 %v7515
  %v9105 = vpop.f32.mrb[0].mxu0
  %v9106 = vadd.f32 %v8849, %v9105
  %v9107 = vpop.f32.mrb[0].mxu0
  %v9108 = vpop.f32.mrb[0].mxu0
  %v9109 = vadd.f32 %v8852, %v9108
  %v9110 = vpop.f32.mrb[0].mxu0
  %9111 = vmatprep.mubr.bf16.mxu0 %v7537
  %9112 = vmatmul.mubr.bf16.gmra.mrb[0].mxu0 %v7536
  %v9113 = vpop.f32.mrb[0].mxu0
  %v9114 = vadd.f32 %v8857, %v9113
  %v9115 = vpop.f32.mrb[0].mxu0
  %v9116 = vpop.f32.mrb[0].mxu0
  %v9117 = vadd.f32 %v8860, %v9116
  %v9118 = vpop.f32.mrb[0].mxu0
  %9119 = vmatprep.mubr.bf16.mxu0 %v7558
  %9120 = vmatmul.mubr.bf16.gmra.mrb[0].mxu0 %v7557
  %v9121 = vpop.f32.mrb[0].mxu0
  %v9122 = vadd.f32 %v8865, %v9121
  %v9123 = vpop.f32.mrb[0].mxu0
  %v9124 = vpop.f32.mrb[0].mxu0
  %v9125 = vadd.f32 %v8868, %v9124
  %v9126 = vpop.f32.mrb[0].mxu0
  %9127 = vmatprep.mubr.bf16.mxu0 %v7579
  %9128 = vmatmul.mubr.bf16.gmra.mrb[0].mxu0 %v7578
  %v9129 = vpop.f32.mrb[0].mxu0
  %v9130 = vadd.f32 %v8873, %v9129
  %v9131 = vpop.f32.mrb[0].mxu0
  %v9132 = vpop.f32.mrb[0].mxu0
  %v9133 = vadd.f32 %v8876, %v9132
  %v9134 = vpop.f32.mrb[0].mxu0
  %9135 = vmatprep.mubr.bf16.mxu0 %v7600
  %9136 = vmatmul.mubr.bf16.gmra.mrb[0].mxu0 %v7599
  %v9137 = vpop.f32.mrb[0].mxu0
  %v9138 = vadd.f32 %v8881, %v9137
  %v9139 = vpop.f32.mrb[0].mxu0
  %v9140 = vpop.f32.mrb[0].mxu0
  %v9141 = vadd.f32 %v8884, %v9140
  %v9142 = vpop.f32.mrb[0].mxu0
  %9143 = vmatprep.mubr.bf16.mxu0 %v7621
  %9144 = vmatmul.mubr.bf16.gmra.mrb[0].mxu0 %v7620
  %v9145 = vpop.f32.mrb[0].mxu0
  %v9146 = vadd.f32 %v8889, %v9145
  %v9147 = vpop.f32.mrb[0].mxu0
  %v9148 = vpop.f32.mrb[0].mxu0
  %v9149 = vadd.f32 %v8892, %v9148
  %v9150 = vpop.f32.mrb[0].mxu0
  %9151 = vmatprep.mubr.bf16.mxu0 %v7642
  %9152 = vmatmul.mubr.bf16.gmra.mrb[0].mxu0 %v7641
  %v9153 = vpop.f32.mrb[0].mxu0
  %v9154 = vadd.f32 %v8897, %v9153
  %v9155 = vpop.f32.mrb[0].mxu0
  %v9156 = vpop.f32.mrb[0].mxu0
  %v9157 = vadd.f32 %v8900, %v9156
  %v9158 = vpop.f32.mrb[0].mxu0
  %9159 = vmatprep.mubr.bf16.mxu0 %v7663
  %9160 = vmatmul.mubr.bf16.gmra.mrb[0].mxu0 %v7662
  %v9161 = vpop.f32.mrb[0].mxu0
  %v9162 = vadd.f32 %v8905, %v9161
  %v9163 = vpop.f32.mrb[0].mxu0
  %v9164 = vpop.f32.mrb[0].mxu0
  %v9165 = vadd.f32 %v8908, %v9164
  %v9166 = vpop.f32.mrb[0].mxu0
  %9167 = vmatprep.mubr.bf16.mxu0 %v7684
  %9168 = vmatmul.mubr.bf16.gmra.mrb[0].mxu0 %v7683
  %v9169 = vpop.f32.mrb[0].mxu0
  %v9170 = vadd.f32 %v8913, %v9169
  %v9171 = vpop.f32.mrb[0].mxu0
  %v9172 = vpop.f32.mrb[0].mxu0
  %v9173 = vadd.f32 %v8916, %v9172
  %v9174 = vpop.f32.mrb[0].mxu0
  %9175 = vmatprep.mubr.bf16.mxu0 %v7705
  %9176 = vmatmul.mubr.bf16.gmra.mrb[0].mxu0 %v7704
  %v9177 = vpop.f32.mrb[0].mxu0
  %v9178 = vadd.f32 %v8921, %v9177
  %v9179 = vpop.f32.mrb[0].mxu0
  %v9180 = vpop.f32.mrb[0].mxu0
  %v9181 = vadd.f32 %v8924, %v9180
  %v9182 = vpop.f32.mrb[0].mxu0
  %9183 = vmatprep.mubr.bf16.mxu0 %v7726
  %9184 = vmatmul.mubr.bf16.gmra.mrb[0].mxu0 %v7725
  %v9185 = vpop.f32.mrb[0].mxu0
  %v9186 = vadd.f32 %v8929, %v9185
  %v9187 = vpop.f32.mrb[0].mxu0
  %v9188 = vpop.f32.mrb[0].mxu0
  %v9189 = vadd.f32 %v8932, %v9188
  %v9190 = vpop.f32.mrb[0].mxu0
  %9191 = vmatprep.mubr.bf16.mxu0 %v7747
  %9192 = vmatmul.mubr.bf16.gmra.mrb[0].mxu0 %v7746
  %v9193 = vpop.f32.mrb[0].mxu0
  %v9194 = vadd.f32 %v8937, %v9193
  %v9195 = vpop.f32.mrb[0].mxu0
  %v9196 = vpop.f32.mrb[0].mxu0
  %v9197 = vadd.f32 %v8940, %v9196
  %v9198 = vpop.f32.mrb[0].mxu0
  %9199 = vmatprep.mubr.bf16.mxu0 %v7768
  %9200 = vmatmul.mubr.bf16.gmra.mrb[0].mxu0 %v7767
  %v9201 = vpop.f32.mrb[0].mxu0
  %v9202 = vadd.f32 %v8945, %v9201
  %v9203 = vpop.f32.mrb[0].mxu0
  %v9204 = vpop.f32.mrb[0].mxu0
  %v9205 = vadd.f32 %v8948, %v9204
  %v9206 = vpop.f32.mrb[0].mxu0
  %9207 = vmatprep.mubr.bf16.mxu0 %v7789
  %9208 = vmatmul.mubr.bf16.gmra.mrb[0].mxu0 %v7788
  %v9209 = vpop.f32.mrb[0].mxu0
  %v9210 = vadd.f32 %v8953, %v9209
  %v9211 = vpop.f32.mrb[0].mxu0
  %v9212 = vpop.f32.mrb[0].mxu0
  %v9213 = vadd.f32 %v8956, %v9212
  %v9214 = vpop.f32.mrb[0].mxu0
  %9215 = vmatprep.mubr.bf16.mxu0 %v7810
  %9216 = vmatmul.mubr.bf16.gmra.mrb[0].mxu0 %v7809
  %v9217 = vpop.f32.mrb[0].mxu0
  %v9218 = vadd.f32 %v8961, %v9217
  %v9219 = vpop.f32.mrb[0].mxu0
  %v9220 = vpop.f32.mrb[0].mxu0
  %v9221 = vadd.f32 %v8964, %v9220
  %v9222 = vpop.f32.mrb[0].mxu0
  %9223 = vmatprep.mubr.bf16.mxu0 %v7831
  %9224 = vmatmul.mubr.bf16.gmra.mrb[0].mxu0 %v7830
  %v9225 = vpop.f32.mrb[0].mxu0
  %v9226 = vadd.f32 %v8969, %v9225
  %v9227 = vpop.f32.mrb[0].mxu0
  %v9228 = vpop.f32.mrb[0].mxu0
  %v9229 = vadd.f32 %v8972, %v9228
  %v9230 = vpop.f32.mrb[0].mxu0
  %9231 = vmatprep.mubr.bf16.mxu0 %v7852
  %9232 = vmatmul.mubr.bf16.gmra.mrb[0].mxu0 %v7851
  %v9233 = vpop.f32.mrb[0].mxu0
  %v9234 = vadd.f32 %v8977, %v9233
  %v9235 = vpop.f32.mrb[0].mxu0
  %v9236 = vpop.f32.mrb[0].mxu0
  %v9237 = vadd.f32 %v8980, %v9236
  %v9238 = vpop.f32.mrb[0].mxu0
  %9239 = vmatprep.mubr.bf16.mxu0 %v7873
  %9240 = vmatmul.mubr.bf16.gmra.mrb[0].mxu0 %v7872
  %v9241 = vpop.f32.mrb[0].mxu0
  %v9242 = vadd.f32 %v8985, %v9241
  %v9243 = vpop.f32.mrb[0].mxu0
  %v9244 = vpop.f32.mrb[0].mxu0
  %v9245 = vadd.f32 %v8988, %v9244
  %v9246 = vpop.f32.mrb[0].mxu0
  %9247 = vdwg.mxu0
  %9248 = vmatprep.subr.bf16.mxu0 0
  %9249 = vmatpush1.bf16.msra.mxu0 %v4773
  %9250 = vmatprep.subr.bf16.mxu0 0
  %9251 = vmatpush1.bf16.msra.mxu0 %v4774
  %9252 = vmatprep.subr.bf16.mxu0 0
  %9253 = vmatpush1.bf16.msra.mxu0 %v4775
  %9254 = vmatprep.subr.bf16.mxu0 0
  %9255 = vmatpush1.bf16.msra.mxu0 %v4776
  %9256 = vmatprep.subr.bf16.mxu0 0
  %9257 = vmatpush1.bf16.msra.mxu0 %v4777
  %9258 = vmatprep.subr.bf16.mxu0 0
  %9259 = vmatpush1.bf16.msra.mxu0 %v4778
  %9260 = vmatprep.subr.bf16.mxu0 0
  %9261 = vmatpush1.bf16.msra.mxu0 %v4779
  %9262 = vmatprep.subr.bf16.mxu0 0
  %9263 = vmatpush1.bf16.msra.mxu0 %v4780
  %9264 = vmatprep.subr.bf16.mxu0 0
  %9265 = vmatpush1.bf16.msra.mxu0 %v4781
  %9266 = vmatprep.subr.bf16.mxu0 0
  %9267 = vmatpush1.bf16.msra.mxu0 %v4782
  %9268 = vmatprep.subr.bf16.mxu0 0
  %9269 = vmatpush1.bf16.msra.mxu0 %v4783
  %9270 = vmatprep.subr.bf16.mxu0 0
  %9271 = vmatpush1.bf16.msra.mxu0 %v4784
  %9272 = vmatprep.subr.bf16.mxu0 0
  %9273 = vmatpush1.bf16.msra.mxu0 %v4785
  %9274 = vmatprep.subr.bf16.mxu0 0
  %9275 = vmatpush1.bf16.msra.mxu0 %v4786
  %9276 = vmatprep.subr.bf16.mxu0 0
  %9277 = vmatpush1.bf16.msra.mxu0 %v4787
  %9278 = vmatprep.subr.bf16.mxu0 0
  %9279 = vmatpush1.bf16.msra.mxu0 %v4788
  %9280 = vmatprep.mubr.bf16.mxu0 %v7308
  %9281 = vmatmul.mubr.bf16.gmra.mrb[0].mxu0 %v7307
  %v9282 = vpop.f32.mrb[0].mxu0
  %v9283 = vadd.f32 %v9026, %v9282
  %v9284 = vpop.f32.mrb[0].mxu0
  %v9285 = vpop.f32.mrb[0].mxu0
  %v9286 = vadd.f32 %v9029, %v9285
  %v9287 = vpop.f32.mrb[0].mxu0
  %9288 = vmatprep.mubr.bf16.mxu0 %v7329
  %9289 = vmatmul.mubr.bf16.gmra.mrb[0].mxu0 %v7328
  %v9290 = vpop.f32.mrb[0].mxu0
  %v9291 = vadd.f32 %v9034, %v9290
  %v9292 = vpop.f32.mrb[0].mxu0
  %v9293 = vpop.f32.mrb[0].mxu0
  %v9294 = vadd.f32 %v9037, %v9293
  %v9295 = vpop.f32.mrb[0].mxu0
  %9296 = vmatprep.mubr.bf16.mxu0 %v7350
  %9297 = vmatmul.mubr.bf16.gmra.mrb[0].mxu0 %v7349
  %v9298 = vpop.f32.mrb[0].mxu0
  %v9299 = vadd.f32 %v9042, %v9298
  %v9300 = vpop.f32.mrb[0].mxu0
  %v9301 = vpop.f32.mrb[0].mxu0
  %v9302 = vadd.f32 %v9045, %v9301
  %v9303 = vpop.f32.mrb[0].mxu0
  %9304 = vmatprep.mubr.bf16.mxu0 %v7371
  %9305 = vmatmul.mubr.bf16.gmra.mrb[0].mxu0 %v7370
  %v9306 = vpop.f32.mrb[0].mxu0
  %v9307 = vadd.f32 %v9050, %v9306
  %v9308 = vpop.f32.mrb[0].mxu0
  %v9309 = vpop.f32.mrb[0].mxu0
  %v9310 = vadd.f32 %v9053, %v9309
  %v9311 = vpop.f32.mrb[0].mxu0
  %9312 = vmatprep.mubr.bf16.mxu0 %v7392
  %9313 = vmatmul.mubr.bf16.gmra.mrb[0].mxu0 %v7391
  %v9314 = vpop.f32.mrb[0].mxu0
  %v9315 = vadd.f32 %v9058, %v9314
  %v9316 = vpop.f32.mrb[0].mxu0
  %v9317 = vpop.f32.mrb[0].mxu0
  %v9318 = vadd.f32 %v9061, %v9317
  %v9319 = vpop.f32.mrb[0].mxu0
  %9320 = vmatprep.mubr.bf16.mxu0 %v7413
  %9321 = vmatmul.mubr.bf16.gmra.mrb[0].mxu0 %v7412
  %v9322 = vpop.f32.mrb[0].mxu0
  %v9323 = vadd.f32 %v9066, %v9322
  %v9324 = vpop.f32.mrb[0].mxu0
  %v9325 = vpop.f32.mrb[0].mxu0
  %v9326 = vadd.f32 %v9069, %v9325
  %v9327 = vpop.f32.mrb[0].mxu0
  %9328 = vmatprep.mubr.bf16.mxu0 %v7434
  %9329 = vmatmul.mubr.bf16.gmra.mrb[0].mxu0 %v7433
  %v9330 = vpop.f32.mrb[0].mxu0
  %v9331 = vadd.f32 %v9074, %v9330
  %v9332 = vpop.f32.mrb[0].mxu0
  %v9333 = vpop.f32.mrb[0].mxu0
  %v9334 = vadd.f32 %v9077, %v9333
  %v9335 = vpop.f32.mrb[0].mxu0
  %9336 = vmatprep.mubr.bf16.mxu0 %v7455
  %9337 = vmatmul.mubr.bf16.gmra.mrb[0].mxu0 %v7454
  %v9338 = vpop.f32.mrb[0].mxu0
  %v9339 = vadd.f32 %v9082, %v9338
  %v9340 = vpop.f32.mrb[0].mxu0
  %v9341 = vpop.f32.mrb[0].mxu0
  %v9342 = vadd.f32 %v9085, %v9341
  %v9343 = vpop.f32.mrb[0].mxu0
  %9344 = vmatprep.mubr.bf16.mxu0 %v7476
  %9345 = vmatmul.mubr.bf16.gmra.mrb[0].mxu0 %v7475
  %v9346 = vpop.f32.mrb[0].mxu0
  %v9347 = vadd.f32 %v9090, %v9346
  %v9348 = vpop.f32.mrb[0].mxu0
  %v9349 = vpop.f32.mrb[0].mxu0
  %v9350 = vadd.f32 %v9093, %v9349
  %v9351 = vpop.f32.mrb[0].mxu0
  %9352 = vmatprep.mubr.bf16.mxu0 %v7497
  %9353 = vmatmul.mubr.bf16.gmra.mrb[0].mxu0 %v7496
  %v9354 = vpop.f32.mrb[0].mxu0
  %v9355 = vadd.f32 %v9098, %v9354
  %v9356 = vpop.f32.mrb[0].mxu0
  %v9357 = vpop.f32.mrb[0].mxu0
  %v9358 = vadd.f32 %v9101, %v9357
  %v9359 = vpop.f32.mrb[0].mxu0
  %9360 = vmatprep.mubr.bf16.mxu0 %v7518
  %9361 = vmatmul.mubr.bf16.gmra.mrb[0].mxu0 %v7517
  %v9362 = vpop.f32.mrb[0].mxu0
  %v9363 = vadd.f32 %v9106, %v9362
  %v9364 = vpop.f32.mrb[0].mxu0
  %v9365 = vpop.f32.mrb[0].mxu0
  %v9366 = vadd.f32 %v9109, %v9365
  %v9367 = vpop.f32.mrb[0].mxu0
  %9368 = vmatprep.mubr.bf16.mxu0 %v7539
  %9369 = vmatmul.mubr.bf16.gmra.mrb[0].mxu0 %v7538
  %v9370 = vpop.f32.mrb[0].mxu0
  %v9371 = vadd.f32 %v9114, %v9370
  %v9372 = vpop.f32.mrb[0].mxu0
  %v9373 = vpop.f32.mrb[0].mxu0
  %v9374 = vadd.f32 %v9117, %v9373
  %v9375 = vpop.f32.mrb[0].mxu0
  %9376 = vmatprep.mubr.bf16.mxu0 %v7560
  %9377 = vmatmul.mubr.bf16.gmra.mrb[0].mxu0 %v7559
  %v9378 = vpop.f32.mrb[0].mxu0
  %v9379 = vadd.f32 %v9122, %v9378
  %v9380 = vpop.f32.mrb[0].mxu0
  %v9381 = vpop.f32.mrb[0].mxu0
  %v9382 = vadd.f32 %v9125, %v9381
  %v9383 = vpop.f32.mrb[0].mxu0
  %9384 = vmatprep.mubr.bf16.mxu0 %v7581
  %9385 = vmatmul.mubr.bf16.gmra.mrb[0].mxu0 %v7580
  %v9386 = vpop.f32.mrb[0].mxu0
  %v9387 = vadd.f32 %v9130, %v9386
  %v9388 = vpop.f32.mrb[0].mxu0
  %v9389 = vpop.f32.mrb[0].mxu0
  %v9390 = vadd.f32 %v9133, %v9389
  %v9391 = vpop.f32.mrb[0].mxu0
  %9392 = vmatprep.mubr.bf16.mxu0 %v7602
  %9393 = vmatmul.mubr.bf16.gmra.mrb[0].mxu0 %v7601
  %v9394 = vpop.f32.mrb[0].mxu0
  %v9395 = vadd.f32 %v9138, %v9394
  %v9396 = vpop.f32.mrb[0].mxu0
  %v9397 = vpop.f32.mrb[0].mxu0
  %v9398 = vadd.f32 %v9141, %v9397
  %v9399 = vpop.f32.mrb[0].mxu0
  %9400 = vmatprep.mubr.bf16.mxu0 %v7623
  %9401 = vmatmul.mubr.bf16.gmra.mrb[0].mxu0 %v7622
  %v9402 = vpop.f32.mrb[0].mxu0
  %v9403 = vadd.f32 %v9146, %v9402
  %v9404 = vpop.f32.mrb[0].mxu0
  %v9405 = vpop.f32.mrb[0].mxu0
  %v9406 = vadd.f32 %v9149, %v9405
  %v9407 = vpop.f32.mrb[0].mxu0
  %9408 = vmatprep.mubr.bf16.mxu0 %v7644
  %9409 = vmatmul.mubr.bf16.gmra.mrb[0].mxu0 %v7643
  %v9410 = vpop.f32.mrb[0].mxu0
  %v9411 = vadd.f32 %v9154, %v9410
  %v9412 = vpop.f32.mrb[0].mxu0
  %v9413 = vpop.f32.mrb[0].mxu0
  %v9414 = vadd.f32 %v9157, %v9413
  %v9415 = vpop.f32.mrb[0].mxu0
  %9416 = vmatprep.mubr.bf16.mxu0 %v7665
  %9417 = vmatmul.mubr.bf16.gmra.mrb[0].mxu0 %v7664
  %v9418 = vpop.f32.mrb[0].mxu0
  %v9419 = vadd.f32 %v9162, %v9418
  %v9420 = vpop.f32.mrb[0].mxu0
  %v9421 = vpop.f32.mrb[0].mxu0
  %v9422 = vadd.f32 %v9165, %v9421
  %v9423 = vpop.f32.mrb[0].mxu0
  %9424 = vmatprep.mubr.bf16.mxu0 %v7686
  %9425 = vmatmul.mubr.bf16.gmra.mrb[0].mxu0 %v7685
  %v9426 = vpop.f32.mrb[0].mxu0
  %v9427 = vadd.f32 %v9170, %v9426
  %v9428 = vpop.f32.mrb[0].mxu0
  %v9429 = vpop.f32.mrb[0].mxu0
  %v9430 = vadd.f32 %v9173, %v9429
  %v9431 = vpop.f32.mrb[0].mxu0
  %9432 = vmatprep.mubr.bf16.mxu0 %v7707
  %9433 = vmatmul.mubr.bf16.gmra.mrb[0].mxu0 %v7706
  %v9434 = vpop.f32.mrb[0].mxu0
  %v9435 = vadd.f32 %v9178, %v9434
  %v9436 = vpop.f32.mrb[0].mxu0
  %v9437 = vpop.f32.mrb[0].mxu0
  %v9438 = vadd.f32 %v9181, %v9437
  %v9439 = vpop.f32.mrb[0].mxu0
  %9440 = vmatprep.mubr.bf16.mxu0 %v7728
  %9441 = vmatmul.mubr.bf16.gmra.mrb[0].mxu0 %v7727
  %v9442 = vpop.f32.mrb[0].mxu0
  %v9443 = vadd.f32 %v9186, %v9442
  %v9444 = vpop.f32.mrb[0].mxu0
  %v9445 = vpop.f32.mrb[0].mxu0
  %v9446 = vadd.f32 %v9189, %v9445
  %v9447 = vpop.f32.mrb[0].mxu0
  %9448 = vmatprep.mubr.bf16.mxu0 %v7749
  %9449 = vmatmul.mubr.bf16.gmra.mrb[0].mxu0 %v7748
  %v9450 = vpop.f32.mrb[0].mxu0
  %v9451 = vadd.f32 %v9194, %v9450
  %v9452 = vpop.f32.mrb[0].mxu0
  %v9453 = vpop.f32.mrb[0].mxu0
  %v9454 = vadd.f32 %v9197, %v9453
  %v9455 = vpop.f32.mrb[0].mxu0
  %9456 = vmatprep.mubr.bf16.mxu0 %v7770
  %9457 = vmatmul.mubr.bf16.gmra.mrb[0].mxu0 %v7769
  %v9458 = vpop.f32.mrb[0].mxu0
  %v9459 = vadd.f32 %v9202, %v9458
  %v9460 = vpop.f32.mrb[0].mxu0
  %v9461 = vpop.f32.mrb[0].mxu0
  %v9462 = vadd.f32 %v9205, %v9461
  %v9463 = vpop.f32.mrb[0].mxu0
  %9464 = vmatprep.mubr.bf16.mxu0 %v7791
  %9465 = vmatmul.mubr.bf16.gmra.mrb[0].mxu0 %v7790
  %v9466 = vpop.f32.mrb[0].mxu0
  %v9467 = vadd.f32 %v9210, %v9466
  %v9468 = vpop.f32.mrb[0].mxu0
  %v9469 = vpop.f32.mrb[0].mxu0
  %v9470 = vadd.f32 %v9213, %v9469
  %v9471 = vpop.f32.mrb[0].mxu0
  %9472 = vmatprep.mubr.bf16.mxu0 %v7812
  %9473 = vmatmul.mubr.bf16.gmra.mrb[0].mxu0 %v7811
  %v9474 = vpop.f32.mrb[0].mxu0
  %v9475 = vadd.f32 %v9218, %v9474
  %v9476 = vpop.f32.mrb[0].mxu0
  %v9477 = vpop.f32.mrb[0].mxu0
  %v9478 = vadd.f32 %v9221, %v9477
  %v9479 = vpop.f32.mrb[0].mxu0
  %9480 = vmatprep.mubr.bf16.mxu0 %v7833
  %9481 = vmatmul.mubr.bf16.gmra.mrb[0].mxu0 %v7832
  %v9482 = vpop.f32.mrb[0].mxu0
  %v9483 = vadd.f32 %v9226, %v9482
  %v9484 = vpop.f32.mrb[0].mxu0
  %v9485 = vpop.f32.mrb[0].mxu0
  %v9486 = vadd.f32 %v9229, %v9485
  %v9487 = vpop.f32.mrb[0].mxu0
  %9488 = vmatprep.mubr.bf16.mxu0 %v7854
  %9489 = vmatmul.mubr.bf16.gmra.mrb[0].mxu0 %v7853
  %v9490 = vpop.f32.mrb[0].mxu0
  %v9491 = vadd.f32 %v9234, %v9490
  %v9492 = vpop.f32.mrb[0].mxu0
  %v9493 = vpop.f32.mrb[0].mxu0
  %v9494 = vadd.f32 %v9237, %v9493
  %v9495 = vpop.f32.mrb[0].mxu0
  %9496 = vmatprep.mubr.bf16.mxu0 %v7875
  %9497 = vmatmul.mubr.bf16.gmra.mrb[0].mxu0 %v7874
  %v9498 = vpop.f32.mrb[0].mxu0
  %v9499 = vadd.f32 %v9242, %v9498
  %v9500 = vpop.f32.mrb[0].mxu0
  %v9501 = vpop.f32.mrb[0].mxu0
  %v9502 = vadd.f32 %v9245, %v9501
  %v9503 = vpop.f32.mrb[0].mxu0
  %9504 = vdwg.mxu0
  %9505 = vmatprep.subr.bf16.mxu0 0
  %9506 = vmatpush1.bf16.msra.mxu0 %v4789
  %9507 = vmatprep.subr.bf16.mxu0 0
  %9508 = vmatpush1.bf16.msra.mxu0 %v4790
  %9509 = vmatprep.subr.bf16.mxu0 0
  %9510 = vmatpush1.bf16.msra.mxu0 %v4791
  %9511 = vmatprep.subr.bf16.mxu0 0
  %9512 = vmatpush1.bf16.msra.mxu0 %v4792
  %9513 = vmatprep.subr.bf16.mxu0 0
  %9514 = vmatpush1.bf16.msra.mxu0 %v4793
  %9515 = vmatprep.subr.bf16.mxu0 0
  %9516 = vmatpush1.bf16.msra.mxu0 %v4794
  %9517 = vmatprep.subr.bf16.mxu0 0
  %9518 = vmatpush1.bf16.msra.mxu0 %v4795
  %9519 = vmatprep.subr.bf16.mxu0 0
  %9520 = vmatpush1.bf16.msra.mxu0 %v4796
  %9521 = vmatprep.subr.bf16.mxu0 0
  %9522 = vmatpush1.bf16.msra.mxu0 %v4797
  %9523 = vmatprep.subr.bf16.mxu0 0
  %9524 = vmatpush1.bf16.msra.mxu0 %v4798
  %9525 = vmatprep.subr.bf16.mxu0 0
  %9526 = vmatpush1.bf16.msra.mxu0 %v4799
  %9527 = vmatprep.subr.bf16.mxu0 0
  %9528 = vmatpush1.bf16.msra.mxu0 %v4800
  %9529 = vmatprep.subr.bf16.mxu0 0
  %9530 = vmatpush1.bf16.msra.mxu0 %v4801
  %9531 = vmatprep.subr.bf16.mxu0 0
  %9532 = vmatpush1.bf16.msra.mxu0 %v4802
  %9533 = vmatprep.subr.bf16.mxu0 0
  %9534 = vmatpush1.bf16.msra.mxu0 %v4803
  %9535 = vmatprep.subr.bf16.mxu0 0
  %9536 = vmatpush1.bf16.msra.mxu0 %v4804
  %9537 = vmatprep.mubr.bf16.mxu0 %v7310
  %9538 = vmatmul.mubr.bf16.gmra.mrb[0].mxu0 %v7309
  %v9539 = vpop.f32.mrb[0].mxu0
  %v9540 = vadd.f32 %v9283, %v9539
  %v9541 = vpop.f32.mrb[0].mxu0
  %v9542 = vpop.f32.mrb[0].mxu0
  %v9543 = vadd.f32 %v9286, %v9542
  %v9544 = vpop.f32.mrb[0].mxu0
  %9545 = vmatprep.mubr.bf16.mxu0 %v7331
  %9546 = vmatmul.mubr.bf16.gmra.mrb[0].mxu0 %v7330
  %v9547 = vpop.f32.mrb[0].mxu0
  %v9548 = vadd.f32 %v9291, %v9547
  %v9549 = vpop.f32.mrb[0].mxu0
  %v9550 = vpop.f32.mrb[0].mxu0
  %v9551 = vadd.f32 %v9294, %v9550
  %v9552 = vpop.f32.mrb[0].mxu0
  %9553 = vmatprep.mubr.bf16.mxu0 %v7352
  %9554 = vmatmul.mubr.bf16.gmra.mrb[0].mxu0 %v7351
  %v9555 = vpop.f32.mrb[0].mxu0
  %v9556 = vadd.f32 %v9299, %v9555
  %v9557 = vpop.f32.mrb[0].mxu0
  %v9558 = vpop.f32.mrb[0].mxu0
  %v9559 = vadd.f32 %v9302, %v9558
  %v9560 = vpop.f32.mrb[0].mxu0
  %9561 = vmatprep.mubr.bf16.mxu0 %v7373
  %9562 = vmatmul.mubr.bf16.gmra.mrb[0].mxu0 %v7372
  %v9563 = vpop.f32.mrb[0].mxu0
  %v9564 = vadd.f32 %v9307, %v9563
  %v9565 = vpop.f32.mrb[0].mxu0
  %v9566 = vpop.f32.mrb[0].mxu0
  %v9567 = vadd.f32 %v9310, %v9566
  %v9568 = vpop.f32.mrb[0].mxu0
  %9569 = vmatprep.mubr.bf16.mxu0 %v7394
  %9570 = vmatmul.mubr.bf16.gmra.mrb[0].mxu0 %v7393
  %v9571 = vpop.f32.mrb[0].mxu0
  %v9572 = vadd.f32 %v9315, %v9571
  %v9573 = vpop.f32.mrb[0].mxu0
  %v9574 = vpop.f32.mrb[0].mxu0
  %v9575 = vadd.f32 %v9318, %v9574
  %v9576 = vpop.f32.mrb[0].mxu0
  %9577 = vmatprep.mubr.bf16.mxu0 %v7415
  %9578 = vmatmul.mubr.bf16.gmra.mrb[0].mxu0 %v7414
  %v9579 = vpop.f32.mrb[0].mxu0
  %v9580 = vadd.f32 %v9323, %v9579
  %v9581 = vpop.f32.mrb[0].mxu0
  %v9582 = vpop.f32.mrb[0].mxu0
  %v9583 = vadd.f32 %v9326, %v9582
  %v9584 = vpop.f32.mrb[0].mxu0
  %9585 = vmatprep.mubr.bf16.mxu0 %v7436
  %9586 = vmatmul.mubr.bf16.gmra.mrb[0].mxu0 %v7435
  %v9587 = vpop.f32.mrb[0].mxu0
  %v9588 = vadd.f32 %v9331, %v9587
  %v9589 = vpop.f32.mrb[0].mxu0
  %v9590 = vpop.f32.mrb[0].mxu0
  %v9591 = vadd.f32 %v9334, %v9590
  %v9592 = vpop.f32.mrb[0].mxu0
  %9593 = vmatprep.mubr.bf16.mxu0 %v7457
  %9594 = vmatmul.mubr.bf16.gmra.mrb[0].mxu0 %v7456
  %v9595 = vpop.f32.mrb[0].mxu0
  %v9596 = vadd.f32 %v9339, %v9595
  %v9597 = vpop.f32.mrb[0].mxu0
  %v9598 = vpop.f32.mrb[0].mxu0
  %v9599 = vadd.f32 %v9342, %v9598
  %v9600 = vpop.f32.mrb[0].mxu0
  %9601 = vmatprep.mubr.bf16.mxu0 %v7478
  %9602 = vmatmul.mubr.bf16.gmra.mrb[0].mxu0 %v7477
  %v9603 = vpop.f32.mrb[0].mxu0
  %v9604 = vadd.f32 %v9347, %v9603
  %v9605 = vpop.f32.mrb[0].mxu0
  %v9606 = vpop.f32.mrb[0].mxu0
  %v9607 = vadd.f32 %v9350, %v9606
  %v9608 = vpop.f32.mrb[0].mxu0
  %9609 = vmatprep.mubr.bf16.mxu0 %v7499
  %9610 = vmatmul.mubr.bf16.gmra.mrb[0].mxu0 %v7498
  %v9611 = vpop.f32.mrb[0].mxu0
  %v9612 = vadd.f32 %v9355, %v9611
  %v9613 = vpop.f32.mrb[0].mxu0
  %v9614 = vpop.f32.mrb[0].mxu0
  %v9615 = vadd.f32 %v9358, %v9614
  %v9616 = vpop.f32.mrb[0].mxu0
  %9617 = vmatprep.mubr.bf16.mxu0 %v7520
  %9618 = vmatmul.mubr.bf16.gmra.mrb[0].mxu0 %v7519
  %v9619 = vpop.f32.mrb[0].mxu0
  %v9620 = vadd.f32 %v9363, %v9619
  %v9621 = vpop.f32.mrb[0].mxu0
  %v9622 = vpop.f32.mrb[0].mxu0
  %v9623 = vadd.f32 %v9366, %v9622
  %v9624 = vpop.f32.mrb[0].mxu0
  %9625 = vmatprep.mubr.bf16.mxu0 %v7541
  %9626 = vmatmul.mubr.bf16.gmra.mrb[0].mxu0 %v7540
  %v9627 = vpop.f32.mrb[0].mxu0
  %v9628 = vadd.f32 %v9371, %v9627
  %v9629 = vpop.f32.mrb[0].mxu0
  %v9630 = vpop.f32.mrb[0].mxu0
  %v9631 = vadd.f32 %v9374, %v9630
  %v9632 = vpop.f32.mrb[0].mxu0
  %9633 = vmatprep.mubr.bf16.mxu0 %v7562
  %9634 = vmatmul.mubr.bf16.gmra.mrb[0].mxu0 %v7561
  %v9635 = vpop.f32.mrb[0].mxu0
  %v9636 = vadd.f32 %v9379, %v9635
  %v9637 = vpop.f32.mrb[0].mxu0
  %v9638 = vpop.f32.mrb[0].mxu0
  %v9639 = vadd.f32 %v9382, %v9638
  %v9640 = vpop.f32.mrb[0].mxu0
  %9641 = vmatprep.mubr.bf16.mxu0 %v7583
  %9642 = vmatmul.mubr.bf16.gmra.mrb[0].mxu0 %v7582
  %v9643 = vpop.f32.mrb[0].mxu0
  %v9644 = vadd.f32 %v9387, %v9643
  %v9645 = vpop.f32.mrb[0].mxu0
  %v9646 = vpop.f32.mrb[0].mxu0
  %v9647 = vadd.f32 %v9390, %v9646
  %v9648 = vpop.f32.mrb[0].mxu0
  %9649 = vmatprep.mubr.bf16.mxu0 %v7604
  %9650 = vmatmul.mubr.bf16.gmra.mrb[0].mxu0 %v7603
  %v9651 = vpop.f32.mrb[0].mxu0
  %v9652 = vadd.f32 %v9395, %v9651
  %v9653 = vpop.f32.mrb[0].mxu0
  %v9654 = vpop.f32.mrb[0].mxu0
  %v9655 = vadd.f32 %v9398, %v9654
  %v9656 = vpop.f32.mrb[0].mxu0
  %9657 = vmatprep.mubr.bf16.mxu0 %v7625
  %9658 = vmatmul.mubr.bf16.gmra.mrb[0].mxu0 %v7624
  %v9659 = vpop.f32.mrb[0].mxu0
  %v9660 = vadd.f32 %v9403, %v9659
  %v9661 = vpop.f32.mrb[0].mxu0
  %v9662 = vpop.f32.mrb[0].mxu0
  %v9663 = vadd.f32 %v9406, %v9662
  %v9664 = vpop.f32.mrb[0].mxu0
  %9665 = vmatprep.mubr.bf16.mxu0 %v7646
  %9666 = vmatmul.mubr.bf16.gmra.mrb[0].mxu0 %v7645
  %v9667 = vpop.f32.mrb[0].mxu0
  %v9668 = vadd.f32 %v9411, %v9667
  %v9669 = vpop.f32.mrb[0].mxu0
  %v9670 = vpop.f32.mrb[0].mxu0
  %v9671 = vadd.f32 %v9414, %v9670
  %v9672 = vpop.f32.mrb[0].mxu0
  %9673 = vmatprep.mubr.bf16.mxu0 %v7667
  %9674 = vmatmul.mubr.bf16.gmra.mrb[0].mxu0 %v7666
  %v9675 = vpop.f32.mrb[0].mxu0
  %v9676 = vadd.f32 %v9419, %v9675
  %v9677 = vpop.f32.mrb[0].mxu0
  %v9678 = vpop.f32.mrb[0].mxu0
  %v9679 = vadd.f32 %v9422, %v9678
  %v9680 = vpop.f32.mrb[0].mxu0
  %9681 = vmatprep.mubr.bf16.mxu0 %v7688
  %9682 = vmatmul.mubr.bf16.gmra.mrb[0].mxu0 %v7687
  %v9683 = vpop.f32.mrb[0].mxu0
  %v9684 = vadd.f32 %v9427, %v9683
  %v9685 = vpop.f32.mrb[0].mxu0
  %v9686 = vpop.f32.mrb[0].mxu0
  %v9687 = vadd.f32 %v9430, %v9686
  %v9688 = vpop.f32.mrb[0].mxu0
  %9689 = vmatprep.mubr.bf16.mxu0 %v7709
  %9690 = vmatmul.mubr.bf16.gmra.mrb[0].mxu0 %v7708
  %v9691 = vpop.f32.mrb[0].mxu0
  %v9692 = vadd.f32 %v9435, %v9691
  %v9693 = vpop.f32.mrb[0].mxu0
  %v9694 = vpop.f32.mrb[0].mxu0
  %v9695 = vadd.f32 %v9438, %v9694
  %v9696 = vpop.f32.mrb[0].mxu0
  %9697 = vmatprep.mubr.bf16.mxu0 %v7730
  %9698 = vmatmul.mubr.bf16.gmra.mrb[0].mxu0 %v7729
  %v9699 = vpop.f32.mrb[0].mxu0
  %v9700 = vadd.f32 %v9443, %v9699
  %v9701 = vpop.f32.mrb[0].mxu0
  %v9702 = vpop.f32.mrb[0].mxu0
  %v9703 = vadd.f32 %v9446, %v9702
  %v9704 = vpop.f32.mrb[0].mxu0
  %9705 = vmatprep.mubr.bf16.mxu0 %v7751
  %9706 = vmatmul.mubr.bf16.gmra.mrb[0].mxu0 %v7750
  %v9707 = vpop.f32.mrb[0].mxu0
  %v9708 = vadd.f32 %v9451, %v9707
  %v9709 = vpop.f32.mrb[0].mxu0
  %v9710 = vpop.f32.mrb[0].mxu0
  %v9711 = vadd.f32 %v9454, %v9710
  %v9712 = vpop.f32.mrb[0].mxu0
  %9713 = vmatprep.mubr.bf16.mxu0 %v7772
  %9714 = vmatmul.mubr.bf16.gmra.mrb[0].mxu0 %v7771
  %v9715 = vpop.f32.mrb[0].mxu0
  %v9716 = vadd.f32 %v9459, %v9715
  %v9717 = vpop.f32.mrb[0].mxu0
  %v9718 = vpop.f32.mrb[0].mxu0
  %v9719 = vadd.f32 %v9462, %v9718
  %v9720 = vpop.f32.mrb[0].mxu0
  %9721 = vmatprep.mubr.bf16.mxu0 %v7793
  %9722 = vmatmul.mubr.bf16.gmra.mrb[0].mxu0 %v7792
  %v9723 = vpop.f32.mrb[0].mxu0
  %v9724 = vadd.f32 %v9467, %v9723
  %v9725 = vpop.f32.mrb[0].mxu0
  %v9726 = vpop.f32.mrb[0].mxu0
  %v9727 = vadd.f32 %v9470, %v9726
  %v9728 = vpop.f32.mrb[0].mxu0
  %9729 = vmatprep.mubr.bf16.mxu0 %v7814
  %9730 = vmatmul.mubr.bf16.gmra.mrb[0].mxu0 %v7813
  %v9731 = vpop.f32.mrb[0].mxu0
  %v9732 = vadd.f32 %v9475, %v9731
  %v9733 = vpop.f32.mrb[0].mxu0
  %v9734 = vpop.f32.mrb[0].mxu0
  %v9735 = vadd.f32 %v9478, %v9734
  %v9736 = vpop.f32.mrb[0].mxu0
  %9737 = vmatprep.mubr.bf16.mxu0 %v7835
  %9738 = vmatmul.mubr.bf16.gmra.mrb[0].mxu0 %v7834
  %v9739 = vpop.f32.mrb[0].mxu0
  %v9740 = vadd.f32 %v9483, %v9739
  %v9741 = vpop.f32.mrb[0].mxu0
  %v9742 = vpop.f32.mrb[0].mxu0
  %v9743 = vadd.f32 %v9486, %v9742
  %v9744 = vpop.f32.mrb[0].mxu0
  %9745 = vmatprep.mubr.bf16.mxu0 %v7856
  %9746 = vmatmul.mubr.bf16.gmra.mrb[0].mxu0 %v7855
  %v9747 = vpop.f32.mrb[0].mxu0
  %v9748 = vadd.f32 %v9491, %v9747
  %v9749 = vpop.f32.mrb[0].mxu0
  %v9750 = vpop.f32.mrb[0].mxu0
  %v9751 = vadd.f32 %v9494, %v9750
  %v9752 = vpop.f32.mrb[0].mxu0
  %9753 = vmatprep.mubr.bf16.mxu0 %v7877
  %9754 = vmatmul.mubr.bf16.gmra.mrb[0].mxu0 %v7876
  %v9755 = vpop.f32.mrb[0].mxu0
  %v9756 = vadd.f32 %v9499, %v9755
  %v9757 = vpop.f32.mrb[0].mxu0
  %v9758 = vpop.f32.mrb[0].mxu0
  %v9759 = vadd.f32 %v9502, %v9758
  %v9760 = vpop.f32.mrb[0].mxu0
  %9761 = vdwg.mxu0
  %9762 = vmatprep.subr.bf16.mxu0 0
  %9763 = vmatpush1.bf16.msra.mxu0 %v4805
  %9764 = vmatprep.subr.bf16.mxu0 0
  %9765 = vmatpush1.bf16.msra.mxu0 %v4806
  %9766 = vmatprep.subr.bf16.mxu0 0
  %9767 = vmatpush1.bf16.msra.mxu0 %v4807
  %9768 = vmatprep.subr.bf16.mxu0 0
  %9769 = vmatpush1.bf16.msra.mxu0 %v4808
  %9770 = vmatprep.subr.bf16.mxu0 0
  %9771 = vmatpush1.bf16.msra.mxu0 %v4809
  %9772 = vmatprep.subr.bf16.mxu0 0
  %9773 = vmatpush1.bf16.msra.mxu0 %v4810
  %9774 = vmatprep.subr.bf16.mxu0 0
  %9775 = vmatpush1.bf16.msra.mxu0 %v4811
  %9776 = vmatprep.subr.bf16.mxu0 0
  %9777 = vmatpush1.bf16.msra.mxu0 %v4812
  %9778 = vmatprep.subr.bf16.mxu0 0
  %9779 = vmatpush1.bf16.msra.mxu0 %v4813
  %9780 = vmatprep.subr.bf16.mxu0 0
  %9781 = vmatpush1.bf16.msra.mxu0 %v4814
  %9782 = vmatprep.subr.bf16.mxu0 0
  %9783 = vmatpush1.bf16.msra.mxu0 %v4815
  %9784 = vmatprep.subr.bf16.mxu0 0
  %9785 = vmatpush1.bf16.msra.mxu0 %v4816
  %9786 = vmatprep.subr.bf16.mxu0 0
  %9787 = vmatpush1.bf16.msra.mxu0 %v4817
  %9788 = vmatprep.subr.bf16.mxu0 0
  %9789 = vmatpush1.bf16.msra.mxu0 %v4818
  %9790 = vmatprep.subr.bf16.mxu0 0
  %9791 = vmatpush1.bf16.msra.mxu0 %v4819
  %9792 = vmatprep.subr.bf16.mxu0 0
  %9793 = vmatpush1.bf16.msra.mxu0 %v4820
  %9794 = vmatprep.mubr.bf16.mxu0 %v7312
  %9795 = vmatmul.mubr.bf16.gmra.mrb[0].mxu0 %v7311
  %v9796 = vpop.f32.mrb[0].mxu0
  %v9797 = vadd.f32 %v9540, %v9796
  %v9798 = vpop.f32.mrb[0].mxu0
  %v9799 = vpop.f32.mrb[0].mxu0
  %v9800 = vadd.f32 %v9543, %v9799
  %v9801 = vpop.f32.mrb[0].mxu0
  %9802 = vmatprep.mubr.bf16.mxu0 %v7333
  %9803 = vmatmul.mubr.bf16.gmra.mrb[0].mxu0 %v7332
  %v9804 = vpop.f32.mrb[0].mxu0
  %v9805 = vadd.f32 %v9548, %v9804
  %v9806 = vpop.f32.mrb[0].mxu0
  %v9807 = vpop.f32.mrb[0].mxu0
  %v9808 = vadd.f32 %v9551, %v9807
  %v9809 = vpop.f32.mrb[0].mxu0
  %9810 = vmatprep.mubr.bf16.mxu0 %v7354
  %9811 = vmatmul.mubr.bf16.gmra.mrb[0].mxu0 %v7353
  %v9812 = vpop.f32.mrb[0].mxu0
  %v9813 = vadd.f32 %v9556, %v9812
  %v9814 = vpop.f32.mrb[0].mxu0
  %v9815 = vpop.f32.mrb[0].mxu0
  %v9816 = vadd.f32 %v9559, %v9815
  %v9817 = vpop.f32.mrb[0].mxu0
  %9818 = vmatprep.mubr.bf16.mxu0 %v7375
  %9819 = vmatmul.mubr.bf16.gmra.mrb[0].mxu0 %v7374
  %v9820 = vpop.f32.mrb[0].mxu0
  %v9821 = vadd.f32 %v9564, %v9820
  %v9822 = vpop.f32.mrb[0].mxu0
  %v9823 = vpop.f32.mrb[0].mxu0
  %v9824 = vadd.f32 %v9567, %v9823
  %v9825 = vpop.f32.mrb[0].mxu0
  %9826 = vmatprep.mubr.bf16.mxu0 %v7396
  %9827 = vmatmul.mubr.bf16.gmra.mrb[0].mxu0 %v7395
  %v9828 = vpop.f32.mrb[0].mxu0
  %v9829 = vadd.f32 %v9572, %v9828
  %v9830 = vpop.f32.mrb[0].mxu0
  %v9831 = vpop.f32.mrb[0].mxu0
  %v9832 = vadd.f32 %v9575, %v9831
  %v9833 = vpop.f32.mrb[0].mxu0
  %9834 = vmatprep.mubr.bf16.mxu0 %v7417
  %9835 = vmatmul.mubr.bf16.gmra.mrb[0].mxu0 %v7416
  %v9836 = vpop.f32.mrb[0].mxu0
  %v9837 = vadd.f32 %v9580, %v9836
  %v9838 = vpop.f32.mrb[0].mxu0
  %v9839 = vpop.f32.mrb[0].mxu0
  %v9840 = vadd.f32 %v9583, %v9839
  %v9841 = vpop.f32.mrb[0].mxu0
  %9842 = vmatprep.mubr.bf16.mxu0 %v7438
  %9843 = vmatmul.mubr.bf16.gmra.mrb[0].mxu0 %v7437
  %v9844 = vpop.f32.mrb[0].mxu0
  %v9845 = vadd.f32 %v9588, %v9844
  %v9846 = vpop.f32.mrb[0].mxu0
  %v9847 = vpop.f32.mrb[0].mxu0
  %v9848 = vadd.f32 %v9591, %v9847
  %v9849 = vpop.f32.mrb[0].mxu0
  %9850 = vmatprep.mubr.bf16.mxu0 %v7459
  %9851 = vmatmul.mubr.bf16.gmra.mrb[0].mxu0 %v7458
  %v9852 = vpop.f32.mrb[0].mxu0
  %v9853 = vadd.f32 %v9596, %v9852
  %v9854 = vpop.f32.mrb[0].mxu0
  %v9855 = vpop.f32.mrb[0].mxu0
  %v9856 = vadd.f32 %v9599, %v9855
  %v9857 = vpop.f32.mrb[0].mxu0
  %9858 = vmatprep.mubr.bf16.mxu0 %v7480
  %9859 = vmatmul.mubr.bf16.gmra.mrb[0].mxu0 %v7479
  %v9860 = vpop.f32.mrb[0].mxu0
  %v9861 = vadd.f32 %v9604, %v9860
  %v9862 = vpop.f32.mrb[0].mxu0
  %v9863 = vpop.f32.mrb[0].mxu0
  %v9864 = vadd.f32 %v9607, %v9863
  %v9865 = vpop.f32.mrb[0].mxu0
  %9866 = vmatprep.mubr.bf16.mxu0 %v7501
  %9867 = vmatmul.mubr.bf16.gmra.mrb[0].mxu0 %v7500
  %v9868 = vpop.f32.mrb[0].mxu0
  %v9869 = vadd.f32 %v9612, %v9868
  %v9870 = vpop.f32.mrb[0].mxu0
  %v9871 = vpop.f32.mrb[0].mxu0
  %v9872 = vadd.f32 %v9615, %v9871
  %v9873 = vpop.f32.mrb[0].mxu0
  %9874 = vmatprep.mubr.bf16.mxu0 %v7522
  %9875 = vmatmul.mubr.bf16.gmra.mrb[0].mxu0 %v7521
  %v9876 = vpop.f32.mrb[0].mxu0
  %v9877 = vadd.f32 %v9620, %v9876
  %v9878 = vpop.f32.mrb[0].mxu0
  %v9879 = vpop.f32.mrb[0].mxu0
  %v9880 = vadd.f32 %v9623, %v9879
  %v9881 = vpop.f32.mrb[0].mxu0
  %9882 = vmatprep.mubr.bf16.mxu0 %v7543
  %9883 = vmatmul.mubr.bf16.gmra.mrb[0].mxu0 %v7542
  %v9884 = vpop.f32.mrb[0].mxu0
  %v9885 = vadd.f32 %v9628, %v9884
  %v9886 = vpop.f32.mrb[0].mxu0
  %v9887 = vpop.f32.mrb[0].mxu0
  %v9888 = vadd.f32 %v9631, %v9887
  %v9889 = vpop.f32.mrb[0].mxu0
  %9890 = vmatprep.mubr.bf16.mxu0 %v7564
  %9891 = vmatmul.mubr.bf16.gmra.mrb[0].mxu0 %v7563
  %v9892 = vpop.f32.mrb[0].mxu0
  %v9893 = vadd.f32 %v9636, %v9892
  %v9894 = vpop.f32.mrb[0].mxu0
  %v9895 = vpop.f32.mrb[0].mxu0
  %v9896 = vadd.f32 %v9639, %v9895
  %v9897 = vpop.f32.mrb[0].mxu0
  %9898 = vmatprep.mubr.bf16.mxu0 %v7585
  %9899 = vmatmul.mubr.bf16.gmra.mrb[0].mxu0 %v7584
  %v9900 = vpop.f32.mrb[0].mxu0
  %v9901 = vadd.f32 %v9644, %v9900
  %v9902 = vpop.f32.mrb[0].mxu0
  %v9903 = vpop.f32.mrb[0].mxu0
  %v9904 = vadd.f32 %v9647, %v9903
  %v9905 = vpop.f32.mrb[0].mxu0
  %9906 = vmatprep.mubr.bf16.mxu0 %v7606
  %9907 = vmatmul.mubr.bf16.gmra.mrb[0].mxu0 %v7605
  %v9908 = vpop.f32.mrb[0].mxu0
  %v9909 = vadd.f32 %v9652, %v9908
  %v9910 = vpop.f32.mrb[0].mxu0
  %v9911 = vpop.f32.mrb[0].mxu0
  %v9912 = vadd.f32 %v9655, %v9911
  %v9913 = vpop.f32.mrb[0].mxu0
  %9914 = vmatprep.mubr.bf16.mxu0 %v7627
  %9915 = vmatmul.mubr.bf16.gmra.mrb[0].mxu0 %v7626
  %v9916 = vpop.f32.mrb[0].mxu0
  %v9917 = vadd.f32 %v9660, %v9916
  %v9918 = vpop.f32.mrb[0].mxu0
  %v9919 = vpop.f32.mrb[0].mxu0
  %v9920 = vadd.f32 %v9663, %v9919
  %v9921 = vpop.f32.mrb[0].mxu0
  %9922 = vmatprep.mubr.bf16.mxu0 %v7648
  %9923 = vmatmul.mubr.bf16.gmra.mrb[0].mxu0 %v7647
  %v9924 = vpop.f32.mrb[0].mxu0
  %v9925 = vadd.f32 %v9668, %v9924
  %v9926 = vpop.f32.mrb[0].mxu0
  %v9927 = vpop.f32.mrb[0].mxu0
  %v9928 = vadd.f32 %v9671, %v9927
  %v9929 = vpop.f32.mrb[0].mxu0
  %9930 = vmatprep.mubr.bf16.mxu0 %v7669
  %9931 = vmatmul.mubr.bf16.gmra.mrb[0].mxu0 %v7668
  %v9932 = vpop.f32.mrb[0].mxu0
  %v9933 = vadd.f32 %v9676, %v9932
  %v9934 = vpop.f32.mrb[0].mxu0
  %v9935 = vpop.f32.mrb[0].mxu0
  %v9936 = vadd.f32 %v9679, %v9935
  %v9937 = vpop.f32.mrb[0].mxu0
  %9938 = vmatprep.mubr.bf16.mxu0 %v7690
  %9939 = vmatmul.mubr.bf16.gmra.mrb[0].mxu0 %v7689
  %v9940 = vpop.f32.mrb[0].mxu0
  %v9941 = vadd.f32 %v9684, %v9940
  %v9942 = vpop.f32.mrb[0].mxu0
  %v9943 = vpop.f32.mrb[0].mxu0
  %v9944 = vadd.f32 %v9687, %v9943
  %v9945 = vpop.f32.mrb[0].mxu0
  %9946 = vmatprep.mubr.bf16.mxu0 %v7711
  %9947 = vmatmul.mubr.bf16.gmra.mrb[0].mxu0 %v7710
  %v9948 = vpop.f32.mrb[0].mxu0
  %v9949 = vadd.f32 %v9692, %v9948
  %v9950 = vpop.f32.mrb[0].mxu0
  %v9951 = vpop.f32.mrb[0].mxu0
  %v9952 = vadd.f32 %v9695, %v9951
  %v9953 = vpop.f32.mrb[0].mxu0
  %9954 = vmatprep.mubr.bf16.mxu0 %v7732
  %9955 = vmatmul.mubr.bf16.gmra.mrb[0].mxu0 %v7731
  %v9956 = vpop.f32.mrb[0].mxu0
  %v9957 = vadd.f32 %v9700, %v9956
  %v9958 = vpop.f32.mrb[0].mxu0
  %v9959 = vpop.f32.mrb[0].mxu0
  %v9960 = vadd.f32 %v9703, %v9959
  %v9961 = vpop.f32.mrb[0].mxu0
  %9962 = vmatprep.mubr.bf16.mxu0 %v7753
  %9963 = vmatmul.mubr.bf16.gmra.mrb[0].mxu0 %v7752
  %v9964 = vpop.f32.mrb[0].mxu0
  %v9965 = vadd.f32 %v9708, %v9964
  %v9966 = vpop.f32.mrb[0].mxu0
  %v9967 = vpop.f32.mrb[0].mxu0
  %v9968 = vadd.f32 %v9711, %v9967
  %v9969 = vpop.f32.mrb[0].mxu0
  %9970 = vmatprep.mubr.bf16.mxu0 %v7774
  %9971 = vmatmul.mubr.bf16.gmra.mrb[0].mxu0 %v7773
  %v9972 = vpop.f32.mrb[0].mxu0
  %v9973 = vadd.f32 %v9716, %v9972
  %v9974 = vpop.f32.mrb[0].mxu0
  %v9975 = vpop.f32.mrb[0].mxu0
  %v9976 = vadd.f32 %v9719, %v9975
  %v9977 = vpop.f32.mrb[0].mxu0
  %9978 = vmatprep.mubr.bf16.mxu0 %v7795
  %9979 = vmatmul.mubr.bf16.gmra.mrb[0].mxu0 %v7794
  %v9980 = vpop.f32.mrb[0].mxu0
  %v9981 = vadd.f32 %v9724, %v9980
  %v9982 = vpop.f32.mrb[0].mxu0
  %v9983 = vpop.f32.mrb[0].mxu0
  %v9984 = vadd.f32 %v9727, %v9983
  %v9985 = vpop.f32.mrb[0].mxu0
  %9986 = vmatprep.mubr.bf16.mxu0 %v7816
  %9987 = vmatmul.mubr.bf16.gmra.mrb[0].mxu0 %v7815
  %v9988 = vpop.f32.mrb[0].mxu0
  %v9989 = vadd.f32 %v9732, %v9988
  %v9990 = vpop.f32.mrb[0].mxu0
  %v9991 = vpop.f32.mrb[0].mxu0
  %v9992 = vadd.f32 %v9735, %v9991
  %v9993 = vpop.f32.mrb[0].mxu0
  %9994 = vmatprep.mubr.bf16.mxu0 %v7837
  %9995 = vmatmul.mubr.bf16.gmra.mrb[0].mxu0 %v7836
  %v9996 = vpop.f32.mrb[0].mxu0
  %v9997 = vadd.f32 %v9740, %v9996
  %v9998 = vpop.f32.mrb[0].mxu0
  %v9999 = vpop.f32.mrb[0].mxu0
  %v10000 = vadd.f32 %v9743, %v9999
  %v10001 = vpop.f32.mrb[0].mxu0
  %10002 = vmatprep.mubr.bf16.mxu0 %v7858
  %10003 = vmatmul.mubr.bf16.gmra.mrb[0].mxu0 %v7857
  %v10004 = vpop.f32.mrb[0].mxu0
  %v10005 = vadd.f32 %v9748, %v10004
  %v10006 = vpop.f32.mrb[0].mxu0
  %v10007 = vpop.f32.mrb[0].mxu0
  %v10008 = vadd.f32 %v9751, %v10007
  %v10009 = vpop.f32.mrb[0].mxu0
  %10010 = vmatprep.mubr.bf16.mxu0 %v7879
  %10011 = vmatmul.mubr.bf16.gmra.mrb[0].mxu0 %v7878
  %v10012 = vpop.f32.mrb[0].mxu0
  %v10013 = vadd.f32 %v9756, %v10012
  %v10014 = vpop.f32.mrb[0].mxu0
  %v10015 = vpop.f32.mrb[0].mxu0
  %v10016 = vadd.f32 %v9759, %v10015
  %v10017 = vpop.f32.mrb[0].mxu0
  %10018 = vdwg.mxu0
  %10019 = vmatprep.subr.bf16.mxu0 0
  %10020 = vmatpush1.bf16.msra.mxu0 %v4821
  %10021 = vmatprep.subr.bf16.mxu0 0
  %10022 = vmatpush1.bf16.msra.mxu0 %v4822
  %10023 = vmatprep.subr.bf16.mxu0 0
  %10024 = vmatpush1.bf16.msra.mxu0 %v4823
  %10025 = vmatprep.subr.bf16.mxu0 0
  %10026 = vmatpush1.bf16.msra.mxu0 %v4824
  %10027 = vmatprep.subr.bf16.mxu0 0
  %10028 = vmatpush1.bf16.msra.mxu0 %v4825
  %10029 = vmatprep.subr.bf16.mxu0 0
  %10030 = vmatpush1.bf16.msra.mxu0 %v4826
  %10031 = vmatprep.subr.bf16.mxu0 0
  %10032 = vmatpush1.bf16.msra.mxu0 %v4827
  %10033 = vmatprep.subr.bf16.mxu0 0
  %10034 = vmatpush1.bf16.msra.mxu0 %v4828
  %10035 = vmatprep.subr.bf16.mxu0 0
  %10036 = vmatpush1.bf16.msra.mxu0 %v4829
  %10037 = vmatprep.subr.bf16.mxu0 0
  %10038 = vmatpush1.bf16.msra.mxu0 %v4830
  %10039 = vmatprep.subr.bf16.mxu0 0
  %10040 = vmatpush1.bf16.msra.mxu0 %v4831
  %10041 = vmatprep.subr.bf16.mxu0 0
  %10042 = vmatpush1.bf16.msra.mxu0 %v4832
  %10043 = vmatprep.subr.bf16.mxu0 0
  %10044 = vmatpush1.bf16.msra.mxu0 %v4833
  %10045 = vmatprep.subr.bf16.mxu0 0
  %10046 = vmatpush1.bf16.msra.mxu0 %v4834
  %10047 = vmatprep.subr.bf16.mxu0 0
  %10048 = vmatpush1.bf16.msra.mxu0 %v4835
  %10049 = vmatprep.subr.bf16.mxu0 0
  %10050 = vmatpush1.bf16.msra.mxu0 %v4836
  %10051 = vmatprep.mubr.bf16.mxu0 %v7314
  %10052 = vmatmul.mubr.bf16.gmra.mrb[0].mxu0 %v7313
  %v10053 = vpop.f32.mrb[0].mxu0
  %v10054 = vadd.f32 %v9797, %v10053
  %v10055 = vpop.f32.mrb[0].mxu0
  %v10056 = vpop.f32.mrb[0].mxu0
  %v10057 = vadd.f32 %v9800, %v10056
  %v10058 = vpop.f32.mrb[0].mxu0
  %10059 = vmatprep.mubr.bf16.mxu0 %v7335
  %10060 = vmatmul.mubr.bf16.gmra.mrb[0].mxu0 %v7334
  %v10061 = vpop.f32.mrb[0].mxu0
  %v10062 = vadd.f32 %v9805, %v10061
  %v10063 = vpop.f32.mrb[0].mxu0
  %v10064 = vpop.f32.mrb[0].mxu0
  %v10065 = vadd.f32 %v9808, %v10064
  %v10066 = vpop.f32.mrb[0].mxu0
  %10067 = vmatprep.mubr.bf16.mxu0 %v7356
  %10068 = vmatmul.mubr.bf16.gmra.mrb[0].mxu0 %v7355
  %v10069 = vpop.f32.mrb[0].mxu0
  %v10070 = vadd.f32 %v9813, %v10069
  %v10071 = vpop.f32.mrb[0].mxu0
  %v10072 = vpop.f32.mrb[0].mxu0
  %v10073 = vadd.f32 %v9816, %v10072
  %v10074 = vpop.f32.mrb[0].mxu0
  %10075 = vmatprep.mubr.bf16.mxu0 %v7377
  %10076 = vmatmul.mubr.bf16.gmra.mrb[0].mxu0 %v7376
  %v10077 = vpop.f32.mrb[0].mxu0
  %v10078 = vadd.f32 %v9821, %v10077
  %v10079 = vpop.f32.mrb[0].mxu0
  %v10080 = vpop.f32.mrb[0].mxu0
  %v10081 = vadd.f32 %v9824, %v10080
  %v10082 = vpop.f32.mrb[0].mxu0
  %10083 = vmatprep.mubr.bf16.mxu0 %v7398
  %10084 = vmatmul.mubr.bf16.gmra.mrb[0].mxu0 %v7397
  %v10085 = vpop.f32.mrb[0].mxu0
  %v10086 = vadd.f32 %v9829, %v10085
  %v10087 = vpop.f32.mrb[0].mxu0
  %v10088 = vpop.f32.mrb[0].mxu0
  %v10089 = vadd.f32 %v9832, %v10088
  %v10090 = vpop.f32.mrb[0].mxu0
  %10091 = vmatprep.mubr.bf16.mxu0 %v7419
  %10092 = vmatmul.mubr.bf16.gmra.mrb[0].mxu0 %v7418
  %v10093 = vpop.f32.mrb[0].mxu0
  %v10094 = vadd.f32 %v9837, %v10093
  %v10095 = vpop.f32.mrb[0].mxu0
  %v10096 = vpop.f32.mrb[0].mxu0
  %v10097 = vadd.f32 %v9840, %v10096
  %v10098 = vpop.f32.mrb[0].mxu0
  %10099 = vmatprep.mubr.bf16.mxu0 %v7440
  %10100 = vmatmul.mubr.bf16.gmra.mrb[0].mxu0 %v7439
  %v10101 = vpop.f32.mrb[0].mxu0
  %v10102 = vadd.f32 %v9845, %v10101
  %v10103 = vpop.f32.mrb[0].mxu0
  %v10104 = vpop.f32.mrb[0].mxu0
  %v10105 = vadd.f32 %v9848, %v10104
  %v10106 = vpop.f32.mrb[0].mxu0
  %10107 = vmatprep.mubr.bf16.mxu0 %v7461
  %10108 = vmatmul.mubr.bf16.gmra.mrb[0].mxu0 %v7460
  %v10109 = vpop.f32.mrb[0].mxu0
  %v10110 = vadd.f32 %v9853, %v10109
  %v10111 = vpop.f32.mrb[0].mxu0
  %v10112 = vpop.f32.mrb[0].mxu0
  %v10113 = vadd.f32 %v9856, %v10112
  %v10114 = vpop.f32.mrb[0].mxu0
  %10115 = vmatprep.mubr.bf16.mxu0 %v7482
  %10116 = vmatmul.mubr.bf16.gmra.mrb[0].mxu0 %v7481
  %v10117 = vpop.f32.mrb[0].mxu0
  %v10118 = vadd.f32 %v9861, %v10117
  %v10119 = vpop.f32.mrb[0].mxu0
  %v10120 = vpop.f32.mrb[0].mxu0
  %v10121 = vadd.f32 %v9864, %v10120
  %v10122 = vpop.f32.mrb[0].mxu0
  %10123 = vmatprep.mubr.bf16.mxu0 %v7503
  %10124 = vmatmul.mubr.bf16.gmra.mrb[0].mxu0 %v7502
  %v10125 = vpop.f32.mrb[0].mxu0
  %v10126 = vadd.f32 %v9869, %v10125
  %v10127 = vpop.f32.mrb[0].mxu0
  %v10128 = vpop.f32.mrb[0].mxu0
  %v10129 = vadd.f32 %v9872, %v10128
  %v10130 = vpop.f32.mrb[0].mxu0
  %10131 = vmatprep.mubr.bf16.mxu0 %v7524
  %10132 = vmatmul.mubr.bf16.gmra.mrb[0].mxu0 %v7523
  %v10133 = vpop.f32.mrb[0].mxu0
  %v10134 = vadd.f32 %v9877, %v10133
  %v10135 = vpop.f32.mrb[0].mxu0
  %v10136 = vpop.f32.mrb[0].mxu0
  %v10137 = vadd.f32 %v9880, %v10136
  %v10138 = vpop.f32.mrb[0].mxu0
  %10139 = vmatprep.mubr.bf16.mxu0 %v7545
  %10140 = vmatmul.mubr.bf16.gmra.mrb[0].mxu0 %v7544
  %v10141 = vpop.f32.mrb[0].mxu0
  %v10142 = vadd.f32 %v9885, %v10141
  %v10143 = vpop.f32.mrb[0].mxu0
  %v10144 = vpop.f32.mrb[0].mxu0
  %v10145 = vadd.f32 %v9888, %v10144
  %v10146 = vpop.f32.mrb[0].mxu0
  %10147 = vmatprep.mubr.bf16.mxu0 %v7566
  %10148 = vmatmul.mubr.bf16.gmra.mrb[0].mxu0 %v7565
  %v10149 = vpop.f32.mrb[0].mxu0
  %v10150 = vadd.f32 %v9893, %v10149
  %v10151 = vpop.f32.mrb[0].mxu0
  %v10152 = vpop.f32.mrb[0].mxu0
  %v10153 = vadd.f32 %v9896, %v10152
  %v10154 = vpop.f32.mrb[0].mxu0
  %10155 = vmatprep.mubr.bf16.mxu0 %v7587
  %10156 = vmatmul.mubr.bf16.gmra.mrb[0].mxu0 %v7586
  %v10157 = vpop.f32.mrb[0].mxu0
  %v10158 = vadd.f32 %v9901, %v10157
  %v10159 = vpop.f32.mrb[0].mxu0
  %v10160 = vpop.f32.mrb[0].mxu0
  %v10161 = vadd.f32 %v9904, %v10160
  %v10162 = vpop.f32.mrb[0].mxu0
  %10163 = vmatprep.mubr.bf16.mxu0 %v7608
  %10164 = vmatmul.mubr.bf16.gmra.mrb[0].mxu0 %v7607
  %v10165 = vpop.f32.mrb[0].mxu0
  %v10166 = vadd.f32 %v9909, %v10165
  %v10167 = vpop.f32.mrb[0].mxu0
  %v10168 = vpop.f32.mrb[0].mxu0
  %v10169 = vadd.f32 %v9912, %v10168
  %v10170 = vpop.f32.mrb[0].mxu0
  %10171 = vmatprep.mubr.bf16.mxu0 %v7629
  %10172 = vmatmul.mubr.bf16.gmra.mrb[0].mxu0 %v7628
  %v10173 = vpop.f32.mrb[0].mxu0
  %v10174 = vadd.f32 %v9917, %v10173
  %v10175 = vpop.f32.mrb[0].mxu0
  %v10176 = vpop.f32.mrb[0].mxu0
  %v10177 = vadd.f32 %v9920, %v10176
  %v10178 = vpop.f32.mrb[0].mxu0
  %10179 = vmatprep.mubr.bf16.mxu0 %v7650
  %10180 = vmatmul.mubr.bf16.gmra.mrb[0].mxu0 %v7649
  %v10181 = vpop.f32.mrb[0].mxu0
  %v10182 = vadd.f32 %v9925, %v10181
  %v10183 = vpop.f32.mrb[0].mxu0
  %v10184 = vpop.f32.mrb[0].mxu0
  %v10185 = vadd.f32 %v9928, %v10184
  %v10186 = vpop.f32.mrb[0].mxu0
  %10187 = vmatprep.mubr.bf16.mxu0 %v7671
  %10188 = vmatmul.mubr.bf16.gmra.mrb[0].mxu0 %v7670
  %v10189 = vpop.f32.mrb[0].mxu0
  %v10190 = vadd.f32 %v9933, %v10189
  %v10191 = vpop.f32.mrb[0].mxu0
  %v10192 = vpop.f32.mrb[0].mxu0
  %v10193 = vadd.f32 %v9936, %v10192
  %v10194 = vpop.f32.mrb[0].mxu0
  %10195 = vmatprep.mubr.bf16.mxu0 %v7692
  %10196 = vmatmul.mubr.bf16.gmra.mrb[0].mxu0 %v7691
  %v10197 = vpop.f32.mrb[0].mxu0
  %v10198 = vadd.f32 %v9941, %v10197
  %v10199 = vpop.f32.mrb[0].mxu0
  %v10200 = vpop.f32.mrb[0].mxu0
  %v10201 = vadd.f32 %v9944, %v10200
  %v10202 = vpop.f32.mrb[0].mxu0
  %10203 = vmatprep.mubr.bf16.mxu0 %v7713
  %10204 = vmatmul.mubr.bf16.gmra.mrb[0].mxu0 %v7712
  %v10205 = vpop.f32.mrb[0].mxu0
  %v10206 = vadd.f32 %v9949, %v10205
  %v10207 = vpop.f32.mrb[0].mxu0
  %v10208 = vpop.f32.mrb[0].mxu0
  %v10209 = vadd.f32 %v9952, %v10208
  %v10210 = vpop.f32.mrb[0].mxu0
  %10211 = vmatprep.mubr.bf16.mxu0 %v7734
  %10212 = vmatmul.mubr.bf16.gmra.mrb[0].mxu0 %v7733
  %v10213 = vpop.f32.mrb[0].mxu0
  %v10214 = vadd.f32 %v9957, %v10213
  %v10215 = vpop.f32.mrb[0].mxu0
  %v10216 = vpop.f32.mrb[0].mxu0
  %v10217 = vadd.f32 %v9960, %v10216
  %v10218 = vpop.f32.mrb[0].mxu0
  %10219 = vmatprep.mubr.bf16.mxu0 %v7755
  %10220 = vmatmul.mubr.bf16.gmra.mrb[0].mxu0 %v7754
  %v10221 = vpop.f32.mrb[0].mxu0
  %v10222 = vadd.f32 %v9965, %v10221
  %v10223 = vpop.f32.mrb[0].mxu0
  %v10224 = vpop.f32.mrb[0].mxu0
  %v10225 = vadd.f32 %v9968, %v10224
  %v10226 = vpop.f32.mrb[0].mxu0
  %10227 = vmatprep.mubr.bf16.mxu0 %v7776
  %10228 = vmatmul.mubr.bf16.gmra.mrb[0].mxu0 %v7775
  %v10229 = vpop.f32.mrb[0].mxu0
  %v10230 = vadd.f32 %v9973, %v10229
  %v10231 = vpop.f32.mrb[0].mxu0
  %v10232 = vpop.f32.mrb[0].mxu0
  %v10233 = vadd.f32 %v9976, %v10232
  %v10234 = vpop.f32.mrb[0].mxu0
  %10235 = vmatprep.mubr.bf16.mxu0 %v7797
  %10236 = vmatmul.mubr.bf16.gmra.mrb[0].mxu0 %v7796
  %v10237 = vpop.f32.mrb[0].mxu0
  %v10238 = vadd.f32 %v9981, %v10237
  %v10239 = vpop.f32.mrb[0].mxu0
  %v10240 = vpop.f32.mrb[0].mxu0
  %v10241 = vadd.f32 %v9984, %v10240
  %v10242 = vpop.f32.mrb[0].mxu0
  %10243 = vmatprep.mubr.bf16.mxu0 %v7818
  %10244 = vmatmul.mubr.bf16.gmra.mrb[0].mxu0 %v7817
  %v10245 = vpop.f32.mrb[0].mxu0
  %v10246 = vadd.f32 %v9989, %v10245
  %v10247 = vpop.f32.mrb[0].mxu0
  %v10248 = vpop.f32.mrb[0].mxu0
  %v10249 = vadd.f32 %v9992, %v10248
  %v10250 = vpop.f32.mrb[0].mxu0
  %10251 = vmatprep.mubr.bf16.mxu0 %v7839
  %10252 = vmatmul.mubr.bf16.gmra.mrb[0].mxu0 %v7838
  %v10253 = vpop.f32.mrb[0].mxu0
  %v10254 = vadd.f32 %v9997, %v10253
  %v10255 = vpop.f32.mrb[0].mxu0
  %v10256 = vpop.f32.mrb[0].mxu0
  %v10257 = vadd.f32 %v10000, %v10256
  %v10258 = vpop.f32.mrb[0].mxu0
  %10259 = vmatprep.mubr.bf16.mxu0 %v7860
  %10260 = vmatmul.mubr.bf16.gmra.mrb[0].mxu0 %v7859
  %v10261 = vpop.f32.mrb[0].mxu0
  %v10262 = vadd.f32 %v10005, %v10261
  %v10263 = vpop.f32.mrb[0].mxu0
  %v10264 = vpop.f32.mrb[0].mxu0
  %v10265 = vadd.f32 %v10008, %v10264
  %v10266 = vpop.f32.mrb[0].mxu0
  %10267 = vmatprep.mubr.bf16.mxu0 %v7881
  %10268 = vmatmul.mubr.bf16.gmra.mrb[0].mxu0 %v7880
  %v10269 = vpop.f32.mrb[0].mxu0
  %v10270 = vadd.f32 %v10013, %v10269
  %v10271 = vpop.f32.mrb[0].mxu0
  %v10272 = vpop.f32.mrb[0].mxu0
  %v10273 = vadd.f32 %v10016, %v10272
  %v10274 = vpop.f32.mrb[0].mxu0
  %10275 = vdwg.mxu0
  %10276 = vmatprep.subr.bf16.mxu0 0
  %10277 = vmatpush1.bf16.msra.mxu0 %v4837
  %10278 = vmatprep.subr.bf16.mxu0 0
  %10279 = vmatpush1.bf16.msra.mxu0 %v4838
  %10280 = vmatprep.subr.bf16.mxu0 0
  %10281 = vmatpush1.bf16.msra.mxu0 %v4839
  %10282 = vmatprep.subr.bf16.mxu0 0
  %10283 = vmatpush1.bf16.msra.mxu0 %v4840
  %10284 = vmatprep.subr.bf16.mxu0 0
  %10285 = vmatpush1.bf16.msra.mxu0 %v4841
  %10286 = vmatprep.subr.bf16.mxu0 0
  %10287 = vmatpush1.bf16.msra.mxu0 %v4842
  %10288 = vmatprep.subr.bf16.mxu0 0
  %10289 = vmatpush1.bf16.msra.mxu0 %v4843
  %10290 = vmatprep.subr.bf16.mxu0 0
  %10291 = vmatpush1.bf16.msra.mxu0 %v4844
  %10292 = vmatprep.subr.bf16.mxu0 0
  %10293 = vmatpush1.bf16.msra.mxu0 %v4845
  %10294 = vmatprep.subr.bf16.mxu0 0
  %10295 = vmatpush1.bf16.msra.mxu0 %v4846
  %10296 = vmatprep.subr.bf16.mxu0 0
  %10297 = vmatpush1.bf16.msra.mxu0 %v4847
  %10298 = vmatprep.subr.bf16.mxu0 0
  %10299 = vmatpush1.bf16.msra.mxu0 %v4848
  %10300 = vmatprep.subr.bf16.mxu0 0
  %10301 = vmatpush1.bf16.msra.mxu0 %v4849
  %10302 = vmatprep.subr.bf16.mxu0 0
  %10303 = vmatpush1.bf16.msra.mxu0 %v4850
  %10304 = vmatprep.subr.bf16.mxu0 0
  %10305 = vmatpush1.bf16.msra.mxu0 %v4851
  %10306 = vmatprep.subr.bf16.mxu0 0
  %10307 = vmatpush1.bf16.msra.mxu0 %v4852
  %10308 = vmatprep.mubr.bf16.mxu0 %v7316
  %10309 = vmatmul.mubr.bf16.gmra.mrb[0].mxu0 %v7315
  %v10310 = vpop.f32.mrb[0].mxu0
  %v10311 = vadd.f32 %v10054, %v10310
  %v10312 = vpop.f32.mrb[0].mxu0
  %v10313 = vpop.f32.mrb[0].mxu0
  %v10314 = vadd.f32 %v10057, %v10313
  %v10315 = vpop.f32.mrb[0].mxu0
  %10316 = vmatprep.mubr.bf16.mxu0 %v7337
  %10317 = vmatmul.mubr.bf16.gmra.mrb[0].mxu0 %v7336
  %v10318 = vpop.f32.mrb[0].mxu0
  %v10319 = vadd.f32 %v10062, %v10318
  %v10320 = vpop.f32.mrb[0].mxu0
  %v10321 = vpop.f32.mrb[0].mxu0
  %v10322 = vadd.f32 %v10065, %v10321
  %v10323 = vpop.f32.mrb[0].mxu0
  %10324 = vmatprep.mubr.bf16.mxu0 %v7358
  %10325 = vmatmul.mubr.bf16.gmra.mrb[0].mxu0 %v7357
  %v10326 = vpop.f32.mrb[0].mxu0
  %v10327 = vadd.f32 %v10070, %v10326
  %v10328 = vpop.f32.mrb[0].mxu0
  %v10329 = vpop.f32.mrb[0].mxu0
  %v10330 = vadd.f32 %v10073, %v10329
  %v10331 = vpop.f32.mrb[0].mxu0
  %10332 = vmatprep.mubr.bf16.mxu0 %v7379
  %10333 = vmatmul.mubr.bf16.gmra.mrb[0].mxu0 %v7378
  %v10334 = vpop.f32.mrb[0].mxu0
  %v10335 = vadd.f32 %v10078, %v10334
  %v10336 = vpop.f32.mrb[0].mxu0
  %v10337 = vpop.f32.mrb[0].mxu0
  %v10338 = vadd.f32 %v10081, %v10337
  %v10339 = vpop.f32.mrb[0].mxu0
  %10340 = vmatprep.mubr.bf16.mxu0 %v7400
  %10341 = vmatmul.mubr.bf16.gmra.mrb[0].mxu0 %v7399
  %v10342 = vpop.f32.mrb[0].mxu0
  %v10343 = vadd.f32 %v10086, %v10342
  %v10344 = vpop.f32.mrb[0].mxu0
  %v10345 = vpop.f32.mrb[0].mxu0
  %v10346 = vadd.f32 %v10089, %v10345
  %v10347 = vpop.f32.mrb[0].mxu0
  %10348 = vmatprep.mubr.bf16.mxu0 %v7421
  %10349 = vmatmul.mubr.bf16.gmra.mrb[0].mxu0 %v7420
  %v10350 = vpop.f32.mrb[0].mxu0
  %v10351 = vadd.f32 %v10094, %v10350
  %v10352 = vpop.f32.mrb[0].mxu0
  %v10353 = vpop.f32.mrb[0].mxu0
  %v10354 = vadd.f32 %v10097, %v10353
  %v10355 = vpop.f32.mrb[0].mxu0
  %10356 = vmatprep.mubr.bf16.mxu0 %v7442
  %10357 = vmatmul.mubr.bf16.gmra.mrb[0].mxu0 %v7441
  %v10358 = vpop.f32.mrb[0].mxu0
  %v10359 = vadd.f32 %v10102, %v10358
  %v10360 = vpop.f32.mrb[0].mxu0
  %v10361 = vpop.f32.mrb[0].mxu0
  %v10362 = vadd.f32 %v10105, %v10361
  %v10363 = vpop.f32.mrb[0].mxu0
  %10364 = vmatprep.mubr.bf16.mxu0 %v7463
  %10365 = vmatmul.mubr.bf16.gmra.mrb[0].mxu0 %v7462
  %v10366 = vpop.f32.mrb[0].mxu0
  %v10367 = vadd.f32 %v10110, %v10366
  %v10368 = vpop.f32.mrb[0].mxu0
  %v10369 = vpop.f32.mrb[0].mxu0
  %v10370 = vadd.f32 %v10113, %v10369
  %v10371 = vpop.f32.mrb[0].mxu0
  %10372 = vmatprep.mubr.bf16.mxu0 %v7484
  %10373 = vmatmul.mubr.bf16.gmra.mrb[0].mxu0 %v7483
  %v10374 = vpop.f32.mrb[0].mxu0
  %v10375 = vadd.f32 %v10118, %v10374
  %v10376 = vpop.f32.mrb[0].mxu0
  %v10377 = vpop.f32.mrb[0].mxu0
  %v10378 = vadd.f32 %v10121, %v10377
  %v10379 = vpop.f32.mrb[0].mxu0
  %10380 = vmatprep.mubr.bf16.mxu0 %v7505
  %10381 = vmatmul.mubr.bf16.gmra.mrb[0].mxu0 %v7504
  %v10382 = vpop.f32.mrb[0].mxu0
  %v10383 = vadd.f32 %v10126, %v10382
  %v10384 = vpop.f32.mrb[0].mxu0
  %v10385 = vpop.f32.mrb[0].mxu0
  %v10386 = vadd.f32 %v10129, %v10385
  %v10387 = vpop.f32.mrb[0].mxu0
  %10388 = vmatprep.mubr.bf16.mxu0 %v7526
  %10389 = vmatmul.mubr.bf16.gmra.mrb[0].mxu0 %v7525
  %v10390 = vpop.f32.mrb[0].mxu0
  %v10391 = vadd.f32 %v10134, %v10390
  %v10392 = vpop.f32.mrb[0].mxu0
  %v10393 = vpop.f32.mrb[0].mxu0
  %v10394 = vadd.f32 %v10137, %v10393
  %v10395 = vpop.f32.mrb[0].mxu0
  %10396 = vmatprep.mubr.bf16.mxu0 %v7547
  %10397 = vmatmul.mubr.bf16.gmra.mrb[0].mxu0 %v7546
  %v10398 = vpop.f32.mrb[0].mxu0
  %v10399 = vadd.f32 %v10142, %v10398
  %v10400 = vpop.f32.mrb[0].mxu0
  %v10401 = vpop.f32.mrb[0].mxu0
  %v10402 = vadd.f32 %v10145, %v10401
  %v10403 = vpop.f32.mrb[0].mxu0
  %10404 = vmatprep.mubr.bf16.mxu0 %v7568
  %10405 = vmatmul.mubr.bf16.gmra.mrb[0].mxu0 %v7567
  %v10406 = vpop.f32.mrb[0].mxu0
  %v10407 = vadd.f32 %v10150, %v10406
  %v10408 = vpop.f32.mrb[0].mxu0
  %v10409 = vpop.f32.mrb[0].mxu0
  %v10410 = vadd.f32 %v10153, %v10409
  %v10411 = vpop.f32.mrb[0].mxu0
  %10412 = vmatprep.mubr.bf16.mxu0 %v7589
  %10413 = vmatmul.mubr.bf16.gmra.mrb[0].mxu0 %v7588
  %v10414 = vpop.f32.mrb[0].mxu0
  %v10415 = vadd.f32 %v10158, %v10414
  %v10416 = vpop.f32.mrb[0].mxu0
  %v10417 = vpop.f32.mrb[0].mxu0
  %v10418 = vadd.f32 %v10161, %v10417
  %v10419 = vpop.f32.mrb[0].mxu0
  %10420 = vmatprep.mubr.bf16.mxu0 %v7610
  %10421 = vmatmul.mubr.bf16.gmra.mrb[0].mxu0 %v7609
  %v10422 = vpop.f32.mrb[0].mxu0
  %v10423 = vadd.f32 %v10166, %v10422
  %v10424 = vpop.f32.mrb[0].mxu0
  %v10425 = vpop.f32.mrb[0].mxu0
  %v10426 = vadd.f32 %v10169, %v10425
  %v10427 = vpop.f32.mrb[0].mxu0
  %10428 = vmatprep.mubr.bf16.mxu0 %v7631
  %10429 = vmatmul.mubr.bf16.gmra.mrb[0].mxu0 %v7630
  %v10430 = vpop.f32.mrb[0].mxu0
  %v10431 = vadd.f32 %v10174, %v10430
  %v10432 = vpop.f32.mrb[0].mxu0
  %v10433 = vpop.f32.mrb[0].mxu0
  %v10434 = vadd.f32 %v10177, %v10433
  %v10435 = vpop.f32.mrb[0].mxu0
  %10436 = vmatprep.mubr.bf16.mxu0 %v7652
  %10437 = vmatmul.mubr.bf16.gmra.mrb[0].mxu0 %v7651
  %v10438 = vpop.f32.mrb[0].mxu0
  %v10439 = vadd.f32 %v10182, %v10438
  %v10440 = vpop.f32.mrb[0].mxu0
  %v10441 = vpop.f32.mrb[0].mxu0
  %v10442 = vadd.f32 %v10185, %v10441
  %v10443 = vpop.f32.mrb[0].mxu0
  %10444 = vmatprep.mubr.bf16.mxu0 %v7673
  %10445 = vmatmul.mubr.bf16.gmra.mrb[0].mxu0 %v7672
  %v10446 = vpop.f32.mrb[0].mxu0
  %v10447 = vadd.f32 %v10190, %v10446
  %v10448 = vpop.f32.mrb[0].mxu0
  %v10449 = vpop.f32.mrb[0].mxu0
  %v10450 = vadd.f32 %v10193, %v10449
  %v10451 = vpop.f32.mrb[0].mxu0
  %10452 = vmatprep.mubr.bf16.mxu0 %v7694
  %10453 = vmatmul.mubr.bf16.gmra.mrb[0].mxu0 %v7693
  %v10454 = vpop.f32.mrb[0].mxu0
  %v10455 = vadd.f32 %v10198, %v10454
  %v10456 = vpop.f32.mrb[0].mxu0
  %v10457 = vpop.f32.mrb[0].mxu0
  %v10458 = vadd.f32 %v10201, %v10457
  %v10459 = vpop.f32.mrb[0].mxu0
  %10460 = vmatprep.mubr.bf16.mxu0 %v7715
  %10461 = vmatmul.mubr.bf16.gmra.mrb[0].mxu0 %v7714
  %v10462 = vpop.f32.mrb[0].mxu0
  %v10463 = vadd.f32 %v10206, %v10462
  %v10464 = vpop.f32.mrb[0].mxu0
  %v10465 = vpop.f32.mrb[0].mxu0
  %v10466 = vadd.f32 %v10209, %v10465
  %v10467 = vpop.f32.mrb[0].mxu0
  %10468 = vmatprep.mubr.bf16.mxu0 %v7736
  %10469 = vmatmul.mubr.bf16.gmra.mrb[0].mxu0 %v7735
  %v10470 = vpop.f32.mrb[0].mxu0
  %v10471 = vadd.f32 %v10214, %v10470
  %v10472 = vpop.f32.mrb[0].mxu0
  %v10473 = vpop.f32.mrb[0].mxu0
  %v10474 = vadd.f32 %v10217, %v10473
  %v10475 = vpop.f32.mrb[0].mxu0
  %10476 = vmatprep.mubr.bf16.mxu0 %v7757
  %10477 = vmatmul.mubr.bf16.gmra.mrb[0].mxu0 %v7756
  %v10478 = vpop.f32.mrb[0].mxu0
  %v10479 = vadd.f32 %v10222, %v10478
  %v10480 = vpop.f32.mrb[0].mxu0
  %v10481 = vpop.f32.mrb[0].mxu0
  %v10482 = vadd.f32 %v10225, %v10481
  %v10483 = vpop.f32.mrb[0].mxu0
  %10484 = vmatprep.mubr.bf16.mxu0 %v7778
  %10485 = vmatmul.mubr.bf16.gmra.mrb[0].mxu0 %v7777
  %v10486 = vpop.f32.mrb[0].mxu0
  %v10487 = vadd.f32 %v10230, %v10486
  %v10488 = vpop.f32.mrb[0].mxu0
  %v10489 = vpop.f32.mrb[0].mxu0
  %v10490 = vadd.f32 %v10233, %v10489
  %v10491 = vpop.f32.mrb[0].mxu0
  %10492 = vmatprep.mubr.bf16.mxu0 %v7799
  %10493 = vmatmul.mubr.bf16.gmra.mrb[0].mxu0 %v7798
  %v10494 = vpop.f32.mrb[0].mxu0
  %v10495 = vadd.f32 %v10238, %v10494
  %v10496 = vpop.f32.mrb[0].mxu0
  %v10497 = vpop.f32.mrb[0].mxu0
  %v10498 = vadd.f32 %v10241, %v10497
  %v10499 = vpop.f32.mrb[0].mxu0
  %10500 = vmatprep.mubr.bf16.mxu0 %v7820
  %10501 = vmatmul.mubr.bf16.gmra.mrb[0].mxu0 %v7819
  %v10502 = vpop.f32.mrb[0].mxu0
  %v10503 = vadd.f32 %v10246, %v10502
  %v10504 = vpop.f32.mrb[0].mxu0
  %v10505 = vpop.f32.mrb[0].mxu0
  %v10506 = vadd.f32 %v10249, %v10505
  %v10507 = vpop.f32.mrb[0].mxu0
  %10508 = vmatprep.mubr.bf16.mxu0 %v7841
  %10509 = vmatmul.mubr.bf16.gmra.mrb[0].mxu0 %v7840
  %v10510 = vpop.f32.mrb[0].mxu0
  %v10511 = vadd.f32 %v10254, %v10510
  %v10512 = vpop.f32.mrb[0].mxu0
  %v10513 = vpop.f32.mrb[0].mxu0
  %v10514 = vadd.f32 %v10257, %v10513
  %v10515 = vpop.f32.mrb[0].mxu0
  %10516 = vmatprep.mubr.bf16.mxu0 %v7862
  %10517 = vmatmul.mubr.bf16.gmra.mrb[0].mxu0 %v7861
  %v10518 = vpop.f32.mrb[0].mxu0
  %v10519 = vadd.f32 %v10262, %v10518
  %v10520 = vpop.f32.mrb[0].mxu0
  %v10521 = vpop.f32.mrb[0].mxu0
  %v10522 = vadd.f32 %v10265, %v10521
  %v10523 = vpop.f32.mrb[0].mxu0
  %10524 = vmatprep.mubr.bf16.mxu0 %v7883
  %10525 = vmatmul.mubr.bf16.gmra.mrb[0].mxu0 %v7882
  %v10526 = vpop.f32.mrb[0].mxu0
  %v10527 = vadd.f32 %v10270, %v10526
  %v10528 = vpop.f32.mrb[0].mxu0
  %v10529 = vpop.f32.mrb[0].mxu0
  %v10530 = vadd.f32 %v10273, %v10529
  %v10531 = vpop.f32.mrb[0].mxu0
  %10532 = vdwg.mxu0
  %10533 = vmatprep.subr.bf16.mxu0 0
  %10534 = vmatpush1.bf16.msra.mxu0 %v4853
  %10535 = vmatprep.subr.bf16.mxu0 0
  %10536 = vmatpush1.bf16.msra.mxu0 %v4854
  %10537 = vmatprep.subr.bf16.mxu0 0
  %10538 = vmatpush1.bf16.msra.mxu0 %v4855
  %10539 = vmatprep.subr.bf16.mxu0 0
  %10540 = vmatpush1.bf16.msra.mxu0 %v4856
  %10541 = vmatprep.subr.bf16.mxu0 0
  %10542 = vmatpush1.bf16.msra.mxu0 %v4857
  %10543 = vmatprep.subr.bf16.mxu0 0
  %10544 = vmatpush1.bf16.msra.mxu0 %v4858
  %10545 = vmatprep.subr.bf16.mxu0 0
  %10546 = vmatpush1.bf16.msra.mxu0 %v4859
  %10547 = vmatprep.subr.bf16.mxu0 0
  %10548 = vmatpush1.bf16.msra.mxu0 %v4860
  %10549 = vmatprep.subr.bf16.mxu0 0
  %10550 = vmatpush1.bf16.msra.mxu0 %v4861
  %10551 = vmatprep.subr.bf16.mxu0 0
  %10552 = vmatpush1.bf16.msra.mxu0 %v4862
  %10553 = vmatprep.subr.bf16.mxu0 0
  %10554 = vmatpush1.bf16.msra.mxu0 %v4863
  %10555 = vmatprep.subr.bf16.mxu0 0
  %10556 = vmatpush1.bf16.msra.mxu0 %v4864
  %10557 = vmatprep.subr.bf16.mxu0 0
  %10558 = vmatpush1.bf16.msra.mxu0 %v4865
  %10559 = vmatprep.subr.bf16.mxu0 0
  %10560 = vmatpush1.bf16.msra.mxu0 %v4866
  %10561 = vmatprep.subr.bf16.mxu0 0
  %10562 = vmatpush1.bf16.msra.mxu0 %v4867
  %10563 = vmatprep.subr.bf16.mxu0 0
  %10564 = vmatpush1.bf16.msra.mxu0 %v4868
  %10565 = vmatprep.mubr.bf16.mxu0 %v7318
  %10566 = vmatmul.mubr.bf16.gmra.mrb[0].mxu0 %v7317
  %v10567 = vpop.f32.mrb[0].mxu0
  %v10568 = vadd.f32 %v10311, %v10567
  %v10569 = vpop.f32.mrb[0].mxu0
  %v10570 = vpop.f32.mrb[0].mxu0
  %v10571 = vadd.f32 %v10314, %v10570
  %v10572 = vpop.f32.mrb[0].mxu0
  %10573 = vmatprep.mubr.bf16.mxu0 %v7339
  %10574 = vmatmul.mubr.bf16.gmra.mrb[0].mxu0 %v7338
  %v10575 = vpop.f32.mrb[0].mxu0
  %v10576 = vadd.f32 %v10319, %v10575
  %v10577 = vpop.f32.mrb[0].mxu0
  %v10578 = vpop.f32.mrb[0].mxu0
  %v10579 = vadd.f32 %v10322, %v10578
  %v10580 = vpop.f32.mrb[0].mxu0
  %10581 = vmatprep.mubr.bf16.mxu0 %v7360
  %10582 = vmatmul.mubr.bf16.gmra.mrb[0].mxu0 %v7359
  %v10583 = vpop.f32.mrb[0].mxu0
  %v10584 = vadd.f32 %v10327, %v10583
  %v10585 = vpop.f32.mrb[0].mxu0
  %v10586 = vpop.f32.mrb[0].mxu0
  %v10587 = vadd.f32 %v10330, %v10586
  %v10588 = vpop.f32.mrb[0].mxu0
  %10589 = vmatprep.mubr.bf16.mxu0 %v7381
  %10590 = vmatmul.mubr.bf16.gmra.mrb[0].mxu0 %v7380
  %v10591 = vpop.f32.mrb[0].mxu0
  %v10592 = vadd.f32 %v10335, %v10591
  %v10593 = vpop.f32.mrb[0].mxu0
  %v10594 = vpop.f32.mrb[0].mxu0
  %v10595 = vadd.f32 %v10338, %v10594
  %v10596 = vpop.f32.mrb[0].mxu0
  %10597 = vmatprep.mubr.bf16.mxu0 %v7402
  %10598 = vmatmul.mubr.bf16.gmra.mrb[0].mxu0 %v7401
  %v10599 = vpop.f32.mrb[0].mxu0
  %v10600 = vadd.f32 %v10343, %v10599
  %v10601 = vpop.f32.mrb[0].mxu0
  %v10602 = vpop.f32.mrb[0].mxu0
  %v10603 = vadd.f32 %v10346, %v10602
  %v10604 = vpop.f32.mrb[0].mxu0
  %10605 = vmatprep.mubr.bf16.mxu0 %v7423
  %10606 = vmatmul.mubr.bf16.gmra.mrb[0].mxu0 %v7422
  %v10607 = vpop.f32.mrb[0].mxu0
  %v10608 = vadd.f32 %v10351, %v10607
  %v10609 = vpop.f32.mrb[0].mxu0
  %v10610 = vpop.f32.mrb[0].mxu0
  %v10611 = vadd.f32 %v10354, %v10610
  %v10612 = vpop.f32.mrb[0].mxu0
  %10613 = vmatprep.mubr.bf16.mxu0 %v7444
  %10614 = vmatmul.mubr.bf16.gmra.mrb[0].mxu0 %v7443
  %v10615 = vpop.f32.mrb[0].mxu0
  %v10616 = vadd.f32 %v10359, %v10615
  %v10617 = vpop.f32.mrb[0].mxu0
  %v10618 = vpop.f32.mrb[0].mxu0
  %v10619 = vadd.f32 %v10362, %v10618
  %v10620 = vpop.f32.mrb[0].mxu0
  %10621 = vmatprep.mubr.bf16.mxu0 %v7465
  %10622 = vmatmul.mubr.bf16.gmra.mrb[0].mxu0 %v7464
  %v10623 = vpop.f32.mrb[0].mxu0
  %v10624 = vadd.f32 %v10367, %v10623
  %v10625 = vpop.f32.mrb[0].mxu0
  %v10626 = vpop.f32.mrb[0].mxu0
  %v10627 = vadd.f32 %v10370, %v10626
  %v10628 = vpop.f32.mrb[0].mxu0
  %10629 = vmatprep.mubr.bf16.mxu0 %v7486
  %10630 = vmatmul.mubr.bf16.gmra.mrb[0].mxu0 %v7485
  %v10631 = vpop.f32.mrb[0].mxu0
  %v10632 = vadd.f32 %v10375, %v10631
  %v10633 = vpop.f32.mrb[0].mxu0
  %v10634 = vpop.f32.mrb[0].mxu0
  %v10635 = vadd.f32 %v10378, %v10634
  %v10636 = vpop.f32.mrb[0].mxu0
  %10637 = vmatprep.mubr.bf16.mxu0 %v7507
  %10638 = vmatmul.mubr.bf16.gmra.mrb[0].mxu0 %v7506
  %v10639 = vpop.f32.mrb[0].mxu0
  %v10640 = vadd.f32 %v10383, %v10639
  %v10641 = vpop.f32.mrb[0].mxu0
  %v10642 = vpop.f32.mrb[0].mxu0
  %v10643 = vadd.f32 %v10386, %v10642
  %v10644 = vpop.f32.mrb[0].mxu0
  %10645 = vmatprep.mubr.bf16.mxu0 %v7528
  %10646 = vmatmul.mubr.bf16.gmra.mrb[0].mxu0 %v7527
  %v10647 = vpop.f32.mrb[0].mxu0
  %v10648 = vadd.f32 %v10391, %v10647
  %v10649 = vpop.f32.mrb[0].mxu0
  %v10650 = vpop.f32.mrb[0].mxu0
  %v10651 = vadd.f32 %v10394, %v10650
  %v10652 = vpop.f32.mrb[0].mxu0
  %10653 = vmatprep.mubr.bf16.mxu0 %v7549
  %10654 = vmatmul.mubr.bf16.gmra.mrb[0].mxu0 %v7548
  %v10655 = vpop.f32.mrb[0].mxu0
  %v10656 = vadd.f32 %v10399, %v10655
  %v10657 = vpop.f32.mrb[0].mxu0
  %v10658 = vpop.f32.mrb[0].mxu0
  %v10659 = vadd.f32 %v10402, %v10658
  %v10660 = vpop.f32.mrb[0].mxu0
  %10661 = vmatprep.mubr.bf16.mxu0 %v7570
  %10662 = vmatmul.mubr.bf16.gmra.mrb[0].mxu0 %v7569
  %v10663 = vpop.f32.mrb[0].mxu0
  %v10664 = vadd.f32 %v10407, %v10663
  %v10665 = vpop.f32.mrb[0].mxu0
  %v10666 = vpop.f32.mrb[0].mxu0
  %v10667 = vadd.f32 %v10410, %v10666
  %v10668 = vpop.f32.mrb[0].mxu0
  %10669 = vmatprep.mubr.bf16.mxu0 %v7591
  %10670 = vmatmul.mubr.bf16.gmra.mrb[0].mxu0 %v7590
  %v10671 = vpop.f32.mrb[0].mxu0
  %v10672 = vadd.f32 %v10415, %v10671
  %v10673 = vpop.f32.mrb[0].mxu0
  %v10674 = vpop.f32.mrb[0].mxu0
  %v10675 = vadd.f32 %v10418, %v10674
  %v10676 = vpop.f32.mrb[0].mxu0
  %10677 = vmatprep.mubr.bf16.mxu0 %v7612
  %10678 = vmatmul.mubr.bf16.gmra.mrb[0].mxu0 %v7611
  %v10679 = vpop.f32.mrb[0].mxu0
  %v10680 = vadd.f32 %v10423, %v10679
  %v10681 = vpop.f32.mrb[0].mxu0
  %v10682 = vpop.f32.mrb[0].mxu0
  %v10683 = vadd.f32 %v10426, %v10682
  %v10684 = vpop.f32.mrb[0].mxu0
  %10685 = vmatprep.mubr.bf16.mxu0 %v7633
  %10686 = vmatmul.mubr.bf16.gmra.mrb[0].mxu0 %v7632
  %v10687 = vpop.f32.mrb[0].mxu0
  %v10688 = vadd.f32 %v10431, %v10687
  %v10689 = vpop.f32.mrb[0].mxu0
  %v10690 = vpop.f32.mrb[0].mxu0
  %v10691 = vadd.f32 %v10434, %v10690
  %v10692 = vpop.f32.mrb[0].mxu0
  %10693 = vmatprep.mubr.bf16.mxu0 %v7654
  %10694 = vmatmul.mubr.bf16.gmra.mrb[0].mxu0 %v7653
  %v10695 = vpop.f32.mrb[0].mxu0
  %v10696 = vadd.f32 %v10439, %v10695
  %v10697 = vpop.f32.mrb[0].mxu0
  %v10698 = vpop.f32.mrb[0].mxu0
  %v10699 = vadd.f32 %v10442, %v10698
  %v10700 = vpop.f32.mrb[0].mxu0
  %10701 = vmatprep.mubr.bf16.mxu0 %v7675
  %10702 = vmatmul.mubr.bf16.gmra.mrb[0].mxu0 %v7674
  %v10703 = vpop.f32.mrb[0].mxu0
  %v10704 = vadd.f32 %v10447, %v10703
  %v10705 = vpop.f32.mrb[0].mxu0
  %v10706 = vpop.f32.mrb[0].mxu0
  %v10707 = vadd.f32 %v10450, %v10706
  %v10708 = vpop.f32.mrb[0].mxu0
  %10709 = vmatprep.mubr.bf16.mxu0 %v7696
  %10710 = vmatmul.mubr.bf16.gmra.mrb[0].mxu0 %v7695
  %v10711 = vpop.f32.mrb[0].mxu0
  %v10712 = vadd.f32 %v10455, %v10711
  %v10713 = vpop.f32.mrb[0].mxu0
  %v10714 = vpop.f32.mrb[0].mxu0
  %v10715 = vadd.f32 %v10458, %v10714
  %v10716 = vpop.f32.mrb[0].mxu0
  %10717 = vmatprep.mubr.bf16.mxu0 %v7717
  %10718 = vmatmul.mubr.bf16.gmra.mrb[0].mxu0 %v7716
  %v10719 = vpop.f32.mrb[0].mxu0
  %v10720 = vadd.f32 %v10463, %v10719
  %v10721 = vpop.f32.mrb[0].mxu0
  %v10722 = vpop.f32.mrb[0].mxu0
  %v10723 = vadd.f32 %v10466, %v10722
  %v10724 = vpop.f32.mrb[0].mxu0
  %10725 = vmatprep.mubr.bf16.mxu0 %v7738
  %10726 = vmatmul.mubr.bf16.gmra.mrb[0].mxu0 %v7737
  %v10727 = vpop.f32.mrb[0].mxu0
  %v10728 = vadd.f32 %v10471, %v10727
  %v10729 = vpop.f32.mrb[0].mxu0
  %v10730 = vpop.f32.mrb[0].mxu0
  %v10731 = vadd.f32 %v10474, %v10730
  %v10732 = vpop.f32.mrb[0].mxu0
  %10733 = vmatprep.mubr.bf16.mxu0 %v7759
  %10734 = vmatmul.mubr.bf16.gmra.mrb[0].mxu0 %v7758
  %v10735 = vpop.f32.mrb[0].mxu0
  %v10736 = vadd.f32 %v10479, %v10735
  %v10737 = vpop.f32.mrb[0].mxu0
  %v10738 = vpop.f32.mrb[0].mxu0
  %v10739 = vadd.f32 %v10482, %v10738
  %v10740 = vpop.f32.mrb[0].mxu0
  %10741 = vmatprep.mubr.bf16.mxu0 %v7780
  %10742 = vmatmul.mubr.bf16.gmra.mrb[0].mxu0 %v7779
  %v10743 = vpop.f32.mrb[0].mxu0
  %v10744 = vadd.f32 %v10487, %v10743
  %v10745 = vpop.f32.mrb[0].mxu0
  %v10746 = vpop.f32.mrb[0].mxu0
  %v10747 = vadd.f32 %v10490, %v10746
  %v10748 = vpop.f32.mrb[0].mxu0
  %10749 = vmatprep.mubr.bf16.mxu0 %v7801
  %10750 = vmatmul.mubr.bf16.gmra.mrb[0].mxu0 %v7800
  %v10751 = vpop.f32.mrb[0].mxu0
  %v10752 = vadd.f32 %v10495, %v10751
  %v10753 = vpop.f32.mrb[0].mxu0
  %v10754 = vpop.f32.mrb[0].mxu0
  %v10755 = vadd.f32 %v10498, %v10754
  %v10756 = vpop.f32.mrb[0].mxu0
  %10757 = vmatprep.mubr.bf16.mxu0 %v7822
  %10758 = vmatmul.mubr.bf16.gmra.mrb[0].mxu0 %v7821
  %v10759 = vpop.f32.mrb[0].mxu0
  %v10760 = vadd.f32 %v10503, %v10759
  %v10761 = vpop.f32.mrb[0].mxu0
  %v10762 = vpop.f32.mrb[0].mxu0
  %v10763 = vadd.f32 %v10506, %v10762
  %v10764 = vpop.f32.mrb[0].mxu0
  %10765 = vmatprep.mubr.bf16.mxu0 %v7843
  %10766 = vmatmul.mubr.bf16.gmra.mrb[0].mxu0 %v7842
  %v10767 = vpop.f32.mrb[0].mxu0
  %v10768 = vadd.f32 %v10511, %v10767
  %v10769 = vpop.f32.mrb[0].mxu0
  %v10770 = vpop.f32.mrb[0].mxu0
  %v10771 = vadd.f32 %v10514, %v10770
  %v10772 = vpop.f32.mrb[0].mxu0
  %10773 = vmatprep.mubr.bf16.mxu0 %v7864
  %10774 = vmatmul.mubr.bf16.gmra.mrb[0].mxu0 %v7863
  %v10775 = vpop.f32.mrb[0].mxu0
  %v10776 = vadd.f32 %v10519, %v10775
  %v10777 = vpop.f32.mrb[0].mxu0
  %v10778 = vpop.f32.mrb[0].mxu0
  %v10779 = vadd.f32 %v10522, %v10778
  %v10780 = vpop.f32.mrb[0].mxu0
  %10781 = vmatprep.mubr.bf16.mxu0 %v7885
  %10782 = vmatmul.mubr.bf16.gmra.mrb[0].mxu0 %v7884
  %v10783 = vpop.f32.mrb[0].mxu0
  %v10784 = vadd.f32 %v10527, %v10783
  %v10785 = vpop.f32.mrb[0].mxu0
  %v10786 = vpop.f32.mrb[0].mxu0
  %v10787 = vadd.f32 %v10530, %v10786
  %v10788 = vpop.f32.mrb[0].mxu0
  %10789 = vdwg.mxu0
  %10790 = vmatprep.subr.bf16.mxu0 0
  %10791 = vmatpush1.bf16.msra.mxu0 %v4869
  %10792 = vmatprep.subr.bf16.mxu0 0
  %10793 = vmatpush1.bf16.msra.mxu0 %v4870
  %10794 = vmatprep.subr.bf16.mxu0 0
  %10795 = vmatpush1.bf16.msra.mxu0 %v4871
  %10796 = vmatprep.subr.bf16.mxu0 0
  %10797 = vmatpush1.bf16.msra.mxu0 %v4872
  %10798 = vmatprep.subr.bf16.mxu0 0
  %10799 = vmatpush1.bf16.msra.mxu0 %v4873
  %10800 = vmatprep.subr.bf16.mxu0 0
  %10801 = vmatpush1.bf16.msra.mxu0 %v4874
  %10802 = vmatprep.subr.bf16.mxu0 0
  %10803 = vmatpush1.bf16.msra.mxu0 %v4875
  %10804 = vmatprep.subr.bf16.mxu0 0
  %10805 = vmatpush1.bf16.msra.mxu0 %v4876
  %10806 = vmatprep.subr.bf16.mxu0 0
  %10807 = vmatpush1.bf16.msra.mxu0 %v4877
  %10808 = vmatprep.subr.bf16.mxu0 0
  %10809 = vmatpush1.bf16.msra.mxu0 %v4878
  %10810 = vmatprep.subr.bf16.mxu0 0
  %10811 = vmatpush1.bf16.msra.mxu0 %v4879
  %10812 = vmatprep.subr.bf16.mxu0 0
  %10813 = vmatpush1.bf16.msra.mxu0 %v4880
  %10814 = vmatprep.subr.bf16.mxu0 0
  %10815 = vmatpush1.bf16.msra.mxu0 %v4881
  %10816 = vmatprep.subr.bf16.mxu0 0
  %10817 = vmatpush1.bf16.msra.mxu0 %v4882
  %10818 = vmatprep.subr.bf16.mxu0 0
  %10819 = vmatpush1.bf16.msra.mxu0 %v4883
  %10820 = vmatprep.subr.bf16.mxu0 0
  %10821 = vmatpush1.bf16.msra.mxu0 %v4884
  %10822 = vmatprep.mubr.bf16.mxu0 %v7320
  %10823 = vmatmul.mubr.bf16.gmra.mrb[0].mxu0 %v7319
  %v10824 = vpop.f32.mrb[0].mxu0
  %v10825 = vadd.f32 %v10568, %v10824
  %v10826 = vpop.f32.mrb[0].mxu0
  %v10827 = vpop.f32.mrb[0].mxu0
  %v10828 = vadd.f32 %v10571, %v10827
  %v10829 = vpop.f32.mrb[0].mxu0
  %10830 = vmatprep.mubr.bf16.mxu0 %v7341
  %10831 = vmatmul.mubr.bf16.gmra.mrb[0].mxu0 %v7340
  %v10832 = vpop.f32.mrb[0].mxu0
  %v10833 = vadd.f32 %v10576, %v10832
  %v10834 = vpop.f32.mrb[0].mxu0
  %v10835 = vpop.f32.mrb[0].mxu0
  %v10836 = vadd.f32 %v10579, %v10835
  %v10837 = vpop.f32.mrb[0].mxu0
  %10838 = vmatprep.mubr.bf16.mxu0 %v7362
  %10839 = vmatmul.mubr.bf16.gmra.mrb[0].mxu0 %v7361
  %v10840 = vpop.f32.mrb[0].mxu0
  %v10841 = vadd.f32 %v10584, %v10840
  %v10842 = vpop.f32.mrb[0].mxu0
  %v10843 = vpop.f32.mrb[0].mxu0
  %v10844 = vadd.f32 %v10587, %v10843
  %v10845 = vpop.f32.mrb[0].mxu0
  %10846 = vmatprep.mubr.bf16.mxu0 %v7383
  %10847 = vmatmul.mubr.bf16.gmra.mrb[0].mxu0 %v7382
  %v10848 = vpop.f32.mrb[0].mxu0
  %v10849 = vadd.f32 %v10592, %v10848
  %v10850 = vpop.f32.mrb[0].mxu0
  %v10851 = vpop.f32.mrb[0].mxu0
  %v10852 = vadd.f32 %v10595, %v10851
  %v10853 = vpop.f32.mrb[0].mxu0
  %10854 = vmatprep.mubr.bf16.mxu0 %v7404
  %10855 = vmatmul.mubr.bf16.gmra.mrb[0].mxu0 %v7403
  %v10856 = vpop.f32.mrb[0].mxu0
  %v10857 = vadd.f32 %v10600, %v10856
  %v10858 = vpop.f32.mrb[0].mxu0
  %v10859 = vpop.f32.mrb[0].mxu0
  %v10860 = vadd.f32 %v10603, %v10859
  %v10861 = vpop.f32.mrb[0].mxu0
  %10862 = vmatprep.mubr.bf16.mxu0 %v7425
  %10863 = vmatmul.mubr.bf16.gmra.mrb[0].mxu0 %v7424
  %v10864 = vpop.f32.mrb[0].mxu0
  %v10865 = vadd.f32 %v10608, %v10864
  %v10866 = vpop.f32.mrb[0].mxu0
  %v10867 = vpop.f32.mrb[0].mxu0
  %v10868 = vadd.f32 %v10611, %v10867
  %v10869 = vpop.f32.mrb[0].mxu0
  %10870 = vmatprep.mubr.bf16.mxu0 %v7446
  %10871 = vmatmul.mubr.bf16.gmra.mrb[0].mxu0 %v7445
  %v10872 = vpop.f32.mrb[0].mxu0
  %v10873 = vadd.f32 %v10616, %v10872
  %v10874 = vpop.f32.mrb[0].mxu0
  %v10875 = vpop.f32.mrb[0].mxu0
  %v10876 = vadd.f32 %v10619, %v10875
  %v10877 = vpop.f32.mrb[0].mxu0
  %10878 = vmatprep.mubr.bf16.mxu0 %v7467
  %10879 = vmatmul.mubr.bf16.gmra.mrb[0].mxu0 %v7466
  %v10880 = vpop.f32.mrb[0].mxu0
  %v10881 = vadd.f32 %v10624, %v10880
  %v10882 = vpop.f32.mrb[0].mxu0
  %v10883 = vpop.f32.mrb[0].mxu0
  %v10884 = vadd.f32 %v10627, %v10883
  %v10885 = vpop.f32.mrb[0].mxu0
  %10886 = vmatprep.mubr.bf16.mxu0 %v7488
  %10887 = vmatmul.mubr.bf16.gmra.mrb[0].mxu0 %v7487
  %v10888 = vpop.f32.mrb[0].mxu0
  %v10889 = vadd.f32 %v10632, %v10888
  %v10890 = vpop.f32.mrb[0].mxu0
  %v10891 = vpop.f32.mrb[0].mxu0
  %v10892 = vadd.f32 %v10635, %v10891
  %v10893 = vpop.f32.mrb[0].mxu0
  %10894 = vmatprep.mubr.bf16.mxu0 %v7509
  %10895 = vmatmul.mubr.bf16.gmra.mrb[0].mxu0 %v7508
  %v10896 = vpop.f32.mrb[0].mxu0
  %v10897 = vadd.f32 %v10640, %v10896
  %v10898 = vpop.f32.mrb[0].mxu0
  %v10899 = vpop.f32.mrb[0].mxu0
  %v10900 = vadd.f32 %v10643, %v10899
  %v10901 = vpop.f32.mrb[0].mxu0
  %10902 = vmatprep.mubr.bf16.mxu0 %v7530
  %10903 = vmatmul.mubr.bf16.gmra.mrb[0].mxu0 %v7529
  %v10904 = vpop.f32.mrb[0].mxu0
  %v10905 = vadd.f32 %v10648, %v10904
  %v10906 = vpop.f32.mrb[0].mxu0
  %v10907 = vpop.f32.mrb[0].mxu0
  %v10908 = vadd.f32 %v10651, %v10907
  %v10909 = vpop.f32.mrb[0].mxu0
  %10910 = vmatprep.mubr.bf16.mxu0 %v7551
  %10911 = vmatmul.mubr.bf16.gmra.mrb[0].mxu0 %v7550
  %v10912 = vpop.f32.mrb[0].mxu0
  %v10913 = vadd.f32 %v10656, %v10912
  %v10914 = vpop.f32.mrb[0].mxu0
  %v10915 = vpop.f32.mrb[0].mxu0
  %v10916 = vadd.f32 %v10659, %v10915
  %v10917 = vpop.f32.mrb[0].mxu0
  %10918 = vmatprep.mubr.bf16.mxu0 %v7572
  %10919 = vmatmul.mubr.bf16.gmra.mrb[0].mxu0 %v7571
  %v10920 = vpop.f32.mrb[0].mxu0
  %v10921 = vadd.f32 %v10664, %v10920
  %v10922 = vpop.f32.mrb[0].mxu0
  %v10923 = vpop.f32.mrb[0].mxu0
  %v10924 = vadd.f32 %v10667, %v10923
  %v10925 = vpop.f32.mrb[0].mxu0
  %10926 = vmatprep.mubr.bf16.mxu0 %v7593
  %10927 = vmatmul.mubr.bf16.gmra.mrb[0].mxu0 %v7592
  %v10928 = vpop.f32.mrb[0].mxu0
  %v10929 = vadd.f32 %v10672, %v10928
  %v10930 = vpop.f32.mrb[0].mxu0
  %v10931 = vpop.f32.mrb[0].mxu0
  %v10932 = vadd.f32 %v10675, %v10931
  %v10933 = vpop.f32.mrb[0].mxu0
  %10934 = vmatprep.mubr.bf16.mxu0 %v7614
  %10935 = vmatmul.mubr.bf16.gmra.mrb[0].mxu0 %v7613
  %v10936 = vpop.f32.mrb[0].mxu0
  %v10937 = vadd.f32 %v10680, %v10936
  %v10938 = vpop.f32.mrb[0].mxu0
  %v10939 = vpop.f32.mrb[0].mxu0
  %v10940 = vadd.f32 %v10683, %v10939
  %v10941 = vpop.f32.mrb[0].mxu0
  %10942 = vmatprep.mubr.bf16.mxu0 %v7635
  %10943 = vmatmul.mubr.bf16.gmra.mrb[0].mxu0 %v7634
  %v10944 = vpop.f32.mrb[0].mxu0
  %v10945 = vadd.f32 %v10688, %v10944
  %v10946 = vpop.f32.mrb[0].mxu0
  %v10947 = vpop.f32.mrb[0].mxu0
  %v10948 = vadd.f32 %v10691, %v10947
  %v10949 = vpop.f32.mrb[0].mxu0
  %10950 = vmatprep.mubr.bf16.mxu0 %v7656
  %10951 = vmatmul.mubr.bf16.gmra.mrb[0].mxu0 %v7655
  %v10952 = vpop.f32.mrb[0].mxu0
  %v10953 = vadd.f32 %v10696, %v10952
  %v10954 = vpop.f32.mrb[0].mxu0
  %v10955 = vpop.f32.mrb[0].mxu0
  %v10956 = vadd.f32 %v10699, %v10955
  %v10957 = vpop.f32.mrb[0].mxu0
  %10958 = vmatprep.mubr.bf16.mxu0 %v7677
  %10959 = vmatmul.mubr.bf16.gmra.mrb[0].mxu0 %v7676
  %v10960 = vpop.f32.mrb[0].mxu0
  %v10961 = vadd.f32 %v10704, %v10960
  %v10962 = vpop.f32.mrb[0].mxu0
  %v10963 = vpop.f32.mrb[0].mxu0
  %v10964 = vadd.f32 %v10707, %v10963
  %v10965 = vpop.f32.mrb[0].mxu0
  %10966 = vmatprep.mubr.bf16.mxu0 %v7698
  %10967 = vmatmul.mubr.bf16.gmra.mrb[0].mxu0 %v7697
  %v10968 = vpop.f32.mrb[0].mxu0
  %v10969 = vadd.f32 %v10712, %v10968
  %v10970 = vpop.f32.mrb[0].mxu0
  %v10971 = vpop.f32.mrb[0].mxu0
  %v10972 = vadd.f32 %v10715, %v10971
  %v10973 = vpop.f32.mrb[0].mxu0
  %10974 = vmatprep.mubr.bf16.mxu0 %v7719
  %10975 = vmatmul.mubr.bf16.gmra.mrb[0].mxu0 %v7718
  %v10976 = vpop.f32.mrb[0].mxu0
  %v10977 = vadd.f32 %v10720, %v10976
  %v10978 = vpop.f32.mrb[0].mxu0
  %v10979 = vpop.f32.mrb[0].mxu0
  %v10980 = vadd.f32 %v10723, %v10979
  %v10981 = vpop.f32.mrb[0].mxu0
  %10982 = vmatprep.mubr.bf16.mxu0 %v7740
  %10983 = vmatmul.mubr.bf16.gmra.mrb[0].mxu0 %v7739
  %v10984 = vpop.f32.mrb[0].mxu0
  %v10985 = vadd.f32 %v10728, %v10984
  %v10986 = vpop.f32.mrb[0].mxu0
  %v10987 = vpop.f32.mrb[0].mxu0
  %v10988 = vadd.f32 %v10731, %v10987
  %v10989 = vpop.f32.mrb[0].mxu0
  %10990 = vmatprep.mubr.bf16.mxu0 %v7761
  %10991 = vmatmul.mubr.bf16.gmra.mrb[0].mxu0 %v7760
  %v10992 = vpop.f32.mrb[0].mxu0
  %v10993 = vadd.f32 %v10736, %v10992
  %v10994 = vpop.f32.mrb[0].mxu0
  %v10995 = vpop.f32.mrb[0].mxu0
  %v10996 = vadd.f32 %v10739, %v10995
  %v10997 = vpop.f32.mrb[0].mxu0
  %10998 = vmatprep.mubr.bf16.mxu0 %v7782
  %10999 = vmatmul.mubr.bf16.gmra.mrb[0].mxu0 %v7781
  %v11000 = vpop.f32.mrb[0].mxu0
  %v11001 = vadd.f32 %v10744, %v11000
  %v11002 = vpop.f32.mrb[0].mxu0
  %v11003 = vpop.f32.mrb[0].mxu0
  %v11004 = vadd.f32 %v10747, %v11003
  %v11005 = vpop.f32.mrb[0].mxu0
  %11006 = vmatprep.mubr.bf16.mxu0 %v7803
  %11007 = vmatmul.mubr.bf16.gmra.mrb[0].mxu0 %v7802
  %v11008 = vpop.f32.mrb[0].mxu0
  %v11009 = vadd.f32 %v10752, %v11008
  %v11010 = vpop.f32.mrb[0].mxu0
  %v11011 = vpop.f32.mrb[0].mxu0
  %v11012 = vadd.f32 %v10755, %v11011
  %v11013 = vpop.f32.mrb[0].mxu0
  %11014 = vmatprep.mubr.bf16.mxu0 %v7824
  %11015 = vmatmul.mubr.bf16.gmra.mrb[0].mxu0 %v7823
  %v11016 = vpop.f32.mrb[0].mxu0
  %v11017 = vadd.f32 %v10760, %v11016
  %v11018 = vpop.f32.mrb[0].mxu0
  %v11019 = vpop.f32.mrb[0].mxu0
  %v11020 = vadd.f32 %v10763, %v11019
  %v11021 = vpop.f32.mrb[0].mxu0
  %11022 = vmatprep.mubr.bf16.mxu0 %v7845
  %11023 = vmatmul.mubr.bf16.gmra.mrb[0].mxu0 %v7844
  %v11024 = vpop.f32.mrb[0].mxu0
  %v11025 = vadd.f32 %v10768, %v11024
  %v11026 = vpop.f32.mrb[0].mxu0
  %v11027 = vpop.f32.mrb[0].mxu0
  %v11028 = vadd.f32 %v10771, %v11027
  %v11029 = vpop.f32.mrb[0].mxu0
  %11030 = vmatprep.mubr.bf16.mxu0 %v7866
  %11031 = vmatmul.mubr.bf16.gmra.mrb[0].mxu0 %v7865
  %v11032 = vpop.f32.mrb[0].mxu0
  %v11033 = vadd.f32 %v10776, %v11032
  %v11034 = vpop.f32.mrb[0].mxu0
  %v11035 = vpop.f32.mrb[0].mxu0
  %v11036 = vadd.f32 %v10779, %v11035
  %v11037 = vpop.f32.mrb[0].mxu0
  %11038 = vmatprep.mubr.bf16.mxu0 %v7887
  %11039 = vmatmul.mubr.bf16.gmra.mrb[0].mxu0 %v7886
  %v11040 = vpop.f32.mrb[0].mxu0
  %v11041 = vadd.f32 %v10784, %v11040
  %v11042 = vpop.f32.mrb[0].mxu0
  %v11043 = vpop.f32.mrb[0].mxu0
  %v11044 = vadd.f32 %v10787, %v11043
  %v11045 = vpop.f32.mrb[0].mxu0
  %11046 = vdwg.mxu0
  %11047 = vmatprep.subr.bf16.mxu0 0
  %11048 = vmatpush1.bf16.msra.mxu0 %v4885
  %11049 = vmatprep.subr.bf16.mxu0 0
  %11050 = vmatpush1.bf16.msra.mxu0 %v4886
  %11051 = vmatprep.subr.bf16.mxu0 0
  %11052 = vmatpush1.bf16.msra.mxu0 %v4887
  %11053 = vmatprep.subr.bf16.mxu0 0
  %11054 = vmatpush1.bf16.msra.mxu0 %v4888
  %11055 = vmatprep.subr.bf16.mxu0 0
  %11056 = vmatpush1.bf16.msra.mxu0 %v4889
  %11057 = vmatprep.subr.bf16.mxu0 0
  %11058 = vmatpush1.bf16.msra.mxu0 %v4890
  %11059 = vmatprep.subr.bf16.mxu0 0
  %11060 = vmatpush1.bf16.msra.mxu0 %v4891
  %11061 = vmatprep.subr.bf16.mxu0 0
  %11062 = vmatpush1.bf16.msra.mxu0 %v4892
  %11063 = vmatprep.subr.bf16.mxu0 0
  %11064 = vmatpush1.bf16.msra.mxu0 0
  %11065 = vmatprep.subr.bf16.mxu0 0
  %11066 = vmatpush1.bf16.msra.mxu0 0
  %11067 = vmatprep.subr.bf16.mxu0 0
  %11068 = vmatpush1.bf16.msra.mxu0 0
  %11069 = vmatprep.subr.bf16.mxu0 0
  %11070 = vmatpush1.bf16.msra.mxu0 0
  %11071 = vmatprep.subr.bf16.mxu0 0
  %11072 = vmatpush1.bf16.msra.mxu0 0
  %11073 = vmatprep.subr.bf16.mxu0 0
  %11074 = vmatpush1.bf16.msra.mxu0 0
  %11075 = vmatprep.subr.bf16.mxu0 0
  %11076 = vmatpush1.bf16.msra.mxu0 0
  %11077 = vmatprep.subr.bf16.mxu0 0
  %11078 = vmatpush1.bf16.msra.mxu0 0
  %11079 = vmatprep.mubr.bf16.mxu0 0
  %11080 = vmatmul.mubr.bf16.gmra.mrb[0].mxu0 %v7321
  %v11081 = vpop.f32.mrb[0].mxu0
  %v11082 = vadd.f32 %v10825, %v11081
  %v11083 = vpop.f32.mrb[0].mxu0
  %v11084 = vpop.f32.mrb[0].mxu0
  %v11085 = vadd.f32 %v10828, %v11084
  %v11086 = vpop.f32.mrb[0].mxu0
  %11087 = vmatprep.mubr.bf16.mxu0 0
  %11088 = vmatmul.mubr.bf16.gmra.mrb[0].mxu0 %v7342
  %v11089 = vpop.f32.mrb[0].mxu0
  %v11090 = vadd.f32 %v10833, %v11089
  %v11091 = vpop.f32.mrb[0].mxu0
  %v11092 = vpop.f32.mrb[0].mxu0
  %v11093 = vadd.f32 %v10836, %v11092
  %v11094 = vpop.f32.mrb[0].mxu0
  %11095 = vmatprep.mubr.bf16.mxu0 0
  %11096 = vmatmul.mubr.bf16.gmra.mrb[0].mxu0 %v7363
  %v11097 = vpop.f32.mrb[0].mxu0
  %v11098 = vadd.f32 %v10841, %v11097
  %v11099 = vpop.f32.mrb[0].mxu0
  %v11100 = vpop.f32.mrb[0].mxu0
  %v11101 = vadd.f32 %v10844, %v11100
  %v11102 = vpop.f32.mrb[0].mxu0
  %11103 = vmatprep.mubr.bf16.mxu0 0
  %11104 = vmatmul.mubr.bf16.gmra.mrb[0].mxu0 %v7384
  %v11105 = vpop.f32.mrb[0].mxu0
  %v11106 = vadd.f32 %v10849, %v11105
  %v11107 = vpop.f32.mrb[0].mxu0
  %v11108 = vpop.f32.mrb[0].mxu0
  %v11109 = vadd.f32 %v10852, %v11108
  %v11110 = vpop.f32.mrb[0].mxu0
  %11111 = vmatprep.mubr.bf16.mxu0 0
  %11112 = vmatmul.mubr.bf16.gmra.mrb[0].mxu0 %v7405
  %v11113 = vpop.f32.mrb[0].mxu0
  %v11114 = vadd.f32 %v10857, %v11113
  %v11115 = vpop.f32.mrb[0].mxu0
  %v11116 = vpop.f32.mrb[0].mxu0
  %v11117 = vadd.f32 %v10860, %v11116
  %v11118 = vpop.f32.mrb[0].mxu0
  %11119 = vmatprep.mubr.bf16.mxu0 0
  %11120 = vmatmul.mubr.bf16.gmra.mrb[0].mxu0 %v7426
  %v11121 = vpop.f32.mrb[0].mxu0
  %v11122 = vadd.f32 %v10865, %v11121
  %v11123 = vpop.f32.mrb[0].mxu0
  %v11124 = vpop.f32.mrb[0].mxu0
  %v11125 = vadd.f32 %v10868, %v11124
  %v11126 = vpop.f32.mrb[0].mxu0
  %11127 = vmatprep.mubr.bf16.mxu0 0
  %11128 = vmatmul.mubr.bf16.gmra.mrb[0].mxu0 %v7447
  %v11129 = vpop.f32.mrb[0].mxu0
  %v11130 = vadd.f32 %v10873, %v11129
  %v11131 = vpop.f32.mrb[0].mxu0
  %v11132 = vpop.f32.mrb[0].mxu0
  %v11133 = vadd.f32 %v10876, %v11132
  %v11134 = vpop.f32.mrb[0].mxu0
  %11135 = vmatprep.mubr.bf16.mxu0 0
  %11136 = vmatmul.mubr.bf16.gmra.mrb[0].mxu0 %v7468
  %v11137 = vpop.f32.mrb[0].mxu0
  %v11138 = vadd.f32 %v10881, %v11137
  %v11139 = vpop.f32.mrb[0].mxu0
  %v11140 = vpop.f32.mrb[0].mxu0
  %v11141 = vadd.f32 %v10884, %v11140
  %v11142 = vpop.f32.mrb[0].mxu0
  %11143 = vmatprep.mubr.bf16.mxu0 0
  %11144 = vmatmul.mubr.bf16.gmra.mrb[0].mxu0 %v7489
  %v11145 = vpop.f32.mrb[0].mxu0
  %v11146 = vadd.f32 %v10889, %v11145
  %v11147 = vpop.f32.mrb[0].mxu0
  %v11148 = vpop.f32.mrb[0].mxu0
  %v11149 = vadd.f32 %v10892, %v11148
  %v11150 = vpop.f32.mrb[0].mxu0
  %11151 = vmatprep.mubr.bf16.mxu0 0
  %11152 = vmatmul.mubr.bf16.gmra.mrb[0].mxu0 %v7510
  %v11153 = vpop.f32.mrb[0].mxu0
  %v11154 = vadd.f32 %v10897, %v11153
  %v11155 = vpop.f32.mrb[0].mxu0
  %v11156 = vpop.f32.mrb[0].mxu0
  %v11157 = vadd.f32 %v10900, %v11156
  %v11158 = vpop.f32.mrb[0].mxu0
  %11159 = vmatprep.mubr.bf16.mxu0 0
  %11160 = vmatmul.mubr.bf16.gmra.mrb[0].mxu0 %v7531
  %v11161 = vpop.f32.mrb[0].mxu0
  %v11162 = vadd.f32 %v10905, %v11161
  %v11163 = vpop.f32.mrb[0].mxu0
  %v11164 = vpop.f32.mrb[0].mxu0
  %v11165 = vadd.f32 %v10908, %v11164
  %v11166 = vpop.f32.mrb[0].mxu0
  %11167 = vmatprep.mubr.bf16.mxu0 0
  %11168 = vmatmul.mubr.bf16.gmra.mrb[0].mxu0 %v7552
  %v11169 = vpop.f32.mrb[0].mxu0
  %v11170 = vadd.f32 %v10913, %v11169
  %v11171 = vpop.f32.mrb[0].mxu0
  %v11172 = vpop.f32.mrb[0].mxu0
  %v11173 = vadd.f32 %v10916, %v11172
  %v11174 = vpop.f32.mrb[0].mxu0
  %11175 = vmatprep.mubr.bf16.mxu0 0
  %11176 = vmatmul.mubr.bf16.gmra.mrb[0].mxu0 %v7573
  %v11177 = vpop.f32.mrb[0].mxu0
  %v11178 = vadd.f32 %v10921, %v11177
  %v11179 = vpop.f32.mrb[0].mxu0
  %v11180 = vpop.f32.mrb[0].mxu0
  %v11181 = vadd.f32 %v10924, %v11180
  %v11182 = vpop.f32.mrb[0].mxu0
  %11183 = vmatprep.mubr.bf16.mxu0 0
  %11184 = vmatmul.mubr.bf16.gmra.mrb[0].mxu0 %v7594
  %v11185 = vpop.f32.mrb[0].mxu0
  %v11186 = vadd.f32 %v10929, %v11185
  %v11187 = vpop.f32.mrb[0].mxu0
  %v11188 = vpop.f32.mrb[0].mxu0
  %v11189 = vadd.f32 %v10932, %v11188
  %v11190 = vpop.f32.mrb[0].mxu0
  %11191 = vmatprep.mubr.bf16.mxu0 0
  %11192 = vmatmul.mubr.bf16.gmra.mrb[0].mxu0 %v7615
  %v11193 = vpop.f32.mrb[0].mxu0
  %v11194 = vadd.f32 %v10937, %v11193
  %v11195 = vpop.f32.mrb[0].mxu0
  %v11196 = vpop.f32.mrb[0].mxu0
  %v11197 = vadd.f32 %v10940, %v11196
  %v11198 = vpop.f32.mrb[0].mxu0
  %11199 = vmatprep.mubr.bf16.mxu0 0
  %11200 = vmatmul.mubr.bf16.gmra.mrb[0].mxu0 %v7636
  %v11201 = vpop.f32.mrb[0].mxu0
  %v11202 = vadd.f32 %v10945, %v11201
  %v11203 = vpop.f32.mrb[0].mxu0
  %v11204 = vpop.f32.mrb[0].mxu0
  %v11205 = vadd.f32 %v10948, %v11204
  %v11206 = vpop.f32.mrb[0].mxu0
  %11207 = vmatprep.mubr.bf16.mxu0 0
  %11208 = vmatmul.mubr.bf16.gmra.mrb[0].mxu0 %v7657
  %v11209 = vpop.f32.mrb[0].mxu0
  %v11210 = vadd.f32 %v10953, %v11209
  %v11211 = vpop.f32.mrb[0].mxu0
  %v11212 = vpop.f32.mrb[0].mxu0
  %v11213 = vadd.f32 %v10956, %v11212
  %v11214 = vpop.f32.mrb[0].mxu0
  %11215 = vmatprep.mubr.bf16.mxu0 0
  %11216 = vmatmul.mubr.bf16.gmra.mrb[0].mxu0 %v7678
  %v11217 = vpop.f32.mrb[0].mxu0
  %v11218 = vadd.f32 %v10961, %v11217
  %v11219 = vpop.f32.mrb[0].mxu0
  %v11220 = vpop.f32.mrb[0].mxu0
  %v11221 = vadd.f32 %v10964, %v11220
  %v11222 = vpop.f32.mrb[0].mxu0
  %11223 = vmatprep.mubr.bf16.mxu0 0
  %11224 = vmatmul.mubr.bf16.gmra.mrb[0].mxu0 %v7699
  %v11225 = vpop.f32.mrb[0].mxu0
  %v11226 = vadd.f32 %v10969, %v11225
  %v11227 = vpop.f32.mrb[0].mxu0
  %v11228 = vpop.f32.mrb[0].mxu0
  %v11229 = vadd.f32 %v10972, %v11228
  %v11230 = vpop.f32.mrb[0].mxu0
  %11231 = vmatprep.mubr.bf16.mxu0 0
  %11232 = vmatmul.mubr.bf16.gmra.mrb[0].mxu0 %v7720
  %v11233 = vpop.f32.mrb[0].mxu0
  %v11234 = vadd.f32 %v10977, %v11233
  %v11235 = vpop.f32.mrb[0].mxu0
  %v11236 = vpop.f32.mrb[0].mxu0
  %v11237 = vadd.f32 %v10980, %v11236
  %v11238 = vpop.f32.mrb[0].mxu0
  %11239 = vmatprep.mubr.bf16.mxu0 0
  %11240 = vmatmul.mubr.bf16.gmra.mrb[0].mxu0 %v7741
  %v11241 = vpop.f32.mrb[0].mxu0
  %v11242 = vadd.f32 %v10985, %v11241
  %v11243 = vpop.f32.mrb[0].mxu0
  %v11244 = vpop.f32.mrb[0].mxu0
  %v11245 = vadd.f32 %v10988, %v11244
  %v11246 = vpop.f32.mrb[0].mxu0
  %11247 = vmatprep.mubr.bf16.mxu0 0
  %11248 = vmatmul.mubr.bf16.gmra.mrb[0].mxu0 %v7762
  %v11249 = vpop.f32.mrb[0].mxu0
  %v11250 = vadd.f32 %v10993, %v11249
  %v11251 = vpop.f32.mrb[0].mxu0
  %v11252 = vpop.f32.mrb[0].mxu0
  %v11253 = vadd.f32 %v10996, %v11252
  %v11254 = vpop.f32.mrb[0].mxu0
  %11255 = vmatprep.mubr.bf16.mxu0 0
  %11256 = vmatmul.mubr.bf16.gmra.mrb[0].mxu0 %v7783
  %v11257 = vpop.f32.mrb[0].mxu0
  %v11258 = vadd.f32 %v11001, %v11257
  %v11259 = vpop.f32.mrb[0].mxu0
  %v11260 = vpop.f32.mrb[0].mxu0
  %v11261 = vadd.f32 %v11004, %v11260
  %v11262 = vpop.f32.mrb[0].mxu0
  %11263 = vmatprep.mubr.bf16.mxu0 0
  %11264 = vmatmul.mubr.bf16.gmra.mrb[0].mxu0 %v7804
  %v11265 = vpop.f32.mrb[0].mxu0
  %v11266 = vadd.f32 %v11009, %v11265
  %v11267 = vpop.f32.mrb[0].mxu0
  %v11268 = vpop.f32.mrb[0].mxu0
  %v11269 = vadd.f32 %v11012, %v11268
  %v11270 = vpop.f32.mrb[0].mxu0
  %11271 = vmatprep.mubr.bf16.mxu0 0
  %11272 = vmatmul.mubr.bf16.gmra.mrb[0].mxu0 %v7825
  %v11273 = vpop.f32.mrb[0].mxu0
  %v11274 = vadd.f32 %v11017, %v11273
  %v11275 = vpop.f32.mrb[0].mxu0
  %v11276 = vpop.f32.mrb[0].mxu0
  %v11277 = vadd.f32 %v11020, %v11276
  %v11278 = vpop.f32.mrb[0].mxu0
  %11279 = vmatprep.mubr.bf16.mxu0 0
  %11280 = vmatmul.mubr.bf16.gmra.mrb[0].mxu0 %v7846
  %v11281 = vpop.f32.mrb[0].mxu0
  %v11282 = vadd.f32 %v11025, %v11281
  %v11283 = vpop.f32.mrb[0].mxu0
  %v11284 = vpop.f32.mrb[0].mxu0
  %v11285 = vadd.f32 %v11028, %v11284
  %v11286 = vpop.f32.mrb[0].mxu0
  %11287 = vmatprep.mubr.bf16.mxu0 0
  %11288 = vmatmul.mubr.bf16.gmra.mrb[0].mxu0 %v7867
  %v11289 = vpop.f32.mrb[0].mxu0
  %v11290 = vadd.f32 %v11033, %v11289
  %v11291 = vpop.f32.mrb[0].mxu0
  %v11292 = vpop.f32.mrb[0].mxu0
  %v11293 = vadd.f32 %v11036, %v11292
  %v11294 = vpop.f32.mrb[0].mxu0
  %11295 = vmatprep.mubr.bf16.mxu0 0
  %11296 = vmatmul.mubr.bf16.gmra.mrb[0].mxu0 %v7888
  %v11297 = vpop.f32.mrb[0].mxu0
  %v11298 = vadd.f32 %v11041, %v11297
  %v11299 = vpop.f32.mrb[0].mxu0
  %v11300 = vpop.f32.mrb[0].mxu0
  %v11301 = vadd.f32 %v11044, %v11300
  %v11302 = vpop.f32.mrb[0].mxu0
  %11303 = vdwg.mxu0
  %vm11304 = vcmask 400384
  %v11305 = vsel %vm11304, %v11082, 0.0
  %11306 = vadd.xlane.f32.xlu0 %v11305
  %v11307 = vpop.xlane.xlu0 %11306
  %v11308 = vsel %vm11304, %v11085, 0.0
  %11309 = vadd.xlane.f32.xlu0 %v11308
  %v11310 = vpop.xlane.xlu0 %11309
  %v11311 = vsel %vm11304, %v11090, 0.0
  %11312 = vadd.xlane.f32.xlu0 %v11311
  %v11313 = vpop.xlane.xlu0 %11312
  %v11314 = vsel %vm11304, %v11093, 0.0
  %11315 = vadd.xlane.f32.xlu0 %v11314
  %v11316 = vpop.xlane.xlu0 %11315
  %v11317 = vsel %vm11304, %v11098, 0.0
  %11318 = vadd.xlane.f32.xlu0 %v11317
  %v11319 = vpop.xlane.xlu0 %11318
  %v11320 = vsel %vm11304, %v11101, 0.0
  %11321 = vadd.xlane.f32.xlu0 %v11320
  %v11322 = vpop.xlane.xlu0 %11321
  %v11323 = vsel %vm11304, %v11106, 0.0
  %11324 = vadd.xlane.f32.xlu0 %v11323
  %v11325 = vpop.xlane.xlu0 %11324
  %v11326 = vsel %vm11304, %v11109, 0.0
  %11327 = vadd.xlane.f32.xlu0 %v11326
  %v11328 = vpop.xlane.xlu0 %11327
  %v11329 = vsel %vm11304, %v11114, 0.0
  %11330 = vadd.xlane.f32.xlu0 %v11329
  %v11331 = vpop.xlane.xlu0 %11330
  %v11332 = vsel %vm11304, %v11117, 0.0
  %11333 = vadd.xlane.f32.xlu0 %v11332
  %v11334 = vpop.xlane.xlu0 %11333
  %v11335 = vsel %vm11304, %v11122, 0.0
  %11336 = vadd.xlane.f32.xlu0 %v11335
  %v11337 = vpop.xlane.xlu0 %11336
  %v11338 = vsel %vm11304, %v11125, 0.0
  %11339 = vadd.xlane.f32.xlu0 %v11338
  %v11340 = vpop.xlane.xlu0 %11339
  %v11341 = vsel %vm11304, %v11130, 0.0
  %11342 = vadd.xlane.f32.xlu0 %v11341
  %v11343 = vpop.xlane.xlu0 %11342
  %v11344 = vsel %vm11304, %v11133, 0.0
  %11345 = vadd.xlane.f32.xlu0 %v11344
  %v11346 = vpop.xlane.xlu0 %11345
  %v11347 = vsel %vm11304, %v11138, 0.0
  %11348 = vadd.xlane.f32.xlu0 %v11347
  %v11349 = vpop.xlane.xlu0 %11348
  %v11350 = vsel %vm11304, %v11141, 0.0
  %11351 = vadd.xlane.f32.xlu0 %v11350
  %v11352 = vpop.xlane.xlu0 %11351
  %v11353 = vsel %vm11304, %v11146, 0.0
  %11354 = vadd.xlane.f32.xlu0 %v11353
  %v11355 = vpop.xlane.xlu0 %11354
  %v11356 = vsel %vm11304, %v11149, 0.0
  %11357 = vadd.xlane.f32.xlu0 %v11356
  %v11358 = vpop.xlane.xlu0 %11357
  %v11359 = vsel %vm11304, %v11154, 0.0
  %11360 = vadd.xlane.f32.xlu0 %v11359
  %v11361 = vpop.xlane.xlu0 %11360
  %v11362 = vsel %vm11304, %v11157, 0.0
  %11363 = vadd.xlane.f32.xlu0 %v11362
  %v11364 = vpop.xlane.xlu0 %11363
  %v11365 = vsel %vm11304, %v11162, 0.0
  %11366 = vadd.xlane.f32.xlu0 %v11365
  %v11367 = vpop.xlane.xlu0 %11366
  %v11368 = vsel %vm11304, %v11165, 0.0
  %11369 = vadd.xlane.f32.xlu0 %v11368
  %v11370 = vpop.xlane.xlu0 %11369
  %v11371 = vsel %vm11304, %v11170, 0.0
  %11372 = vadd.xlane.f32.xlu0 %v11371
  %v11373 = vpop.xlane.xlu0 %11372
  %v11374 = vsel %vm11304, %v11173, 0.0
  %11375 = vadd.xlane.f32.xlu0 %v11374
  %v11376 = vpop.xlane.xlu0 %11375
  %v11377 = vsel %vm11304, %v11178, 0.0
  %11378 = vadd.xlane.f32.xlu0 %v11377
  %v11379 = vpop.xlane.xlu0 %11378
  %v11380 = vsel %vm11304, %v11181, 0.0
  %11381 = vadd.xlane.f32.xlu0 %v11380
  %v11382 = vpop.xlane.xlu0 %11381
  %v11383 = vsel %vm11304, %v11186, 0.0
  %11384 = vadd.xlane.f32.xlu0 %v11383
  %v11385 = vpop.xlane.xlu0 %11384
  %v11386 = vsel %vm11304, %v11189, 0.0
  %11387 = vadd.xlane.f32.xlu0 %v11386
  %v11388 = vpop.xlane.xlu0 %11387
  %v11389 = vsel %vm11304, %v11194, 0.0
  %11390 = vadd.xlane.f32.xlu0 %v11389
  %v11391 = vpop.xlane.xlu0 %11390
  %v11392 = vsel %vm11304, %v11197, 0.0
  %11393 = vadd.xlane.f32.xlu0 %v11392
  %v11394 = vpop.xlane.xlu0 %11393
  %v11395 = vsel %vm11304, %v11202, 0.0
  %11396 = vadd.xlane.f32.xlu0 %v11395
  %v11397 = vpop.xlane.xlu0 %11396
  %v11398 = vsel %vm11304, %v11205, 0.0
  %11399 = vadd.xlane.f32.xlu0 %v11398
  %v11400 = vpop.xlane.xlu0 %11399
  %v11401 = vsel %vm11304, %v11210, 0.0
  %11402 = vadd.xlane.f32.xlu0 %v11401
  %v11403 = vpop.xlane.xlu0 %11402
  %v11404 = vsel %vm11304, %v11213, 0.0
  %11405 = vadd.xlane.f32.xlu0 %v11404
  %v11406 = vpop.xlane.xlu0 %11405
  %v11407 = vsel %vm11304, %v11218, 0.0
  %11408 = vadd.xlane.f32.xlu0 %v11407
  %v11409 = vpop.xlane.xlu0 %11408
  %v11410 = vsel %vm11304, %v11221, 0.0
  %11411 = vadd.xlane.f32.xlu0 %v11410
  %v11412 = vpop.xlane.xlu0 %11411
  %v11413 = vsel %vm11304, %v11226, 0.0
  %11414 = vadd.xlane.f32.xlu0 %v11413
  %v11415 = vpop.xlane.xlu0 %11414
  %v11416 = vsel %vm11304, %v11229, 0.0
  %11417 = vadd.xlane.f32.xlu0 %v11416
  %v11418 = vpop.xlane.xlu0 %11417
  %v11419 = vsel %vm11304, %v11234, 0.0
  %11420 = vadd.xlane.f32.xlu0 %v11419
  %v11421 = vpop.xlane.xlu0 %11420
  %v11422 = vsel %vm11304, %v11237, 0.0
  %11423 = vadd.xlane.f32.xlu0 %v11422
  %v11424 = vpop.xlane.xlu0 %11423
  %v11425 = vsel %vm11304, %v11242, 0.0
  %11426 = vadd.xlane.f32.xlu0 %v11425
  %v11427 = vpop.xlane.xlu0 %11426
  %v11428 = vsel %vm11304, %v11245, 0.0
  %11429 = vadd.xlane.f32.xlu0 %v11428
  %v11430 = vpop.xlane.xlu0 %11429
  %v11431 = vsel %vm11304, %v11250, 0.0
  %11432 = vadd.xlane.f32.xlu0 %v11431
  %v11433 = vpop.xlane.xlu0 %11432
  %v11434 = vsel %vm11304, %v11253, 0.0
  %11435 = vadd.xlane.f32.xlu0 %v11434
  %v11436 = vpop.xlane.xlu0 %11435
  %v11437 = vsel %vm11304, %v11258, 0.0
  %11438 = vadd.xlane.f32.xlu0 %v11437
  %v11439 = vpop.xlane.xlu0 %11438
  %v11440 = vsel %vm11304, %v11261, 0.0
  %11441 = vadd.xlane.f32.xlu0 %v11440
  %v11442 = vpop.xlane.xlu0 %11441
  %v11443 = vsel %vm11304, %v11266, 0.0
  %11444 = vadd.xlane.f32.xlu0 %v11443
  %v11445 = vpop.xlane.xlu0 %11444
  %v11446 = vsel %vm11304, %v11269, 0.0
  %11447 = vadd.xlane.f32.xlu0 %v11446
  %v11448 = vpop.xlane.xlu0 %11447
  %v11449 = vsel %vm11304, %v11274, 0.0
  %11450 = vadd.xlane.f32.xlu0 %v11449
  %v11451 = vpop.xlane.xlu0 %11450
  %v11452 = vsel %vm11304, %v11277, 0.0
  %11453 = vadd.xlane.f32.xlu0 %v11452
  %v11454 = vpop.xlane.xlu0 %11453
  %v11455 = vsel %vm11304, %v11282, 0.0
  %11456 = vadd.xlane.f32.xlu0 %v11455
  %v11457 = vpop.xlane.xlu0 %11456
  %v11458 = vsel %vm11304, %v11285, 0.0
  %11459 = vadd.xlane.f32.xlu0 %v11458
  %v11460 = vpop.xlane.xlu0 %11459
  %v11461 = vsel %vm11304, %v11290, 0.0
  %11462 = vadd.xlane.f32.xlu0 %v11461
  %v11463 = vpop.xlane.xlu0 %11462
  %v11464 = vsel %vm11304, %v11293, 0.0
  %11465 = vadd.xlane.f32.xlu0 %v11464
  %v11466 = vpop.xlane.xlu0 %11465
  %v11467 = vsel %vm11304, %v11298, 0.0
  %11468 = vadd.xlane.f32.xlu0 %v11467
  %v11469 = vpop.xlane.xlu0 %11468
  %v11470 = vsel %vm11304, %v11301, 0.0
  %11471 = vadd.xlane.f32.xlu0 %v11470
  %v11472 = vpop.xlane.xlu0 %11471
  %v11473 = vrcp.pop 49.0
  %v11474 = vmul.f32 %v11307, %v11473
  %v11475 = vmul.f32 %v11310, %v11473
  %v11476 = vmul.f32 %v11313, %v11473
  %v11477 = vmul.f32 %v11316, %v11473
  %v11478 = vmul.f32 %v11319, %v11473
  %v11479 = vmul.f32 %v11322, %v11473
  %v11480 = vmul.f32 %v11325, %v11473
  %v11481 = vmul.f32 %v11328, %v11473
  %v11482 = vmul.f32 %v11331, %v11473
  %v11483 = vmul.f32 %v11334, %v11473
  %v11484 = vmul.f32 %v11337, %v11473
  %v11485 = vmul.f32 %v11340, %v11473
  %v11486 = vmul.f32 %v11343, %v11473
  %v11487 = vmul.f32 %v11346, %v11473
  %v11488 = vmul.f32 %v11349, %v11473
  %v11489 = vmul.f32 %v11352, %v11473
  %v11490 = vmul.f32 %v11355, %v11473
  %v11491 = vmul.f32 %v11358, %v11473
  %v11492 = vmul.f32 %v11361, %v11473
  %v11493 = vmul.f32 %v11364, %v11473
  %v11494 = vmul.f32 %v11367, %v11473
  %v11495 = vmul.f32 %v11370, %v11473
  %v11496 = vmul.f32 %v11373, %v11473
  %v11497 = vmul.f32 %v11376, %v11473
  %v11498 = vmul.f32 %v11379, %v11473
  %v11499 = vmul.f32 %v11382, %v11473
  %v11500 = vmul.f32 %v11385, %v11473
  %v11501 = vmul.f32 %v11388, %v11473
  %v11502 = vmul.f32 %v11391, %v11473
  %v11503 = vmul.f32 %v11394, %v11473
  %v11504 = vmul.f32 %v11397, %v11473
  %v11505 = vmul.f32 %v11400, %v11473
  %v11506 = vmul.f32 %v11403, %v11473
  %v11507 = vmul.f32 %v11406, %v11473
  %v11508 = vmul.f32 %v11409, %v11473
  %v11509 = vmul.f32 %v11412, %v11473
  %v11510 = vmul.f32 %v11415, %v11473
  %v11511 = vmul.f32 %v11418, %v11473
  %v11512 = vmul.f32 %v11421, %v11473
  %v11513 = vmul.f32 %v11424, %v11473
  %v11514 = vmul.f32 %v11427, %v11473
  %v11515 = vmul.f32 %v11430, %v11473
  %v11516 = vmul.f32 %v11433, %v11473
  %v11517 = vmul.f32 %v11436, %v11473
  %v11518 = vmul.f32 %v11439, %v11473
  %v11519 = vmul.f32 %v11442, %v11473
  %v11520 = vmul.f32 %v11445, %v11473
  %v11521 = vmul.f32 %v11448, %v11473
  %v11522 = vmul.f32 %v11451, %v11473
  %v11523 = vmul.f32 %v11454, %v11473
  %v11524 = vmul.f32 %v11457, %v11473
  %v11525 = vmul.f32 %v11460, %v11473
  %v11526 = vmul.f32 %v11463, %v11473
  %v11527 = vmul.f32 %v11466, %v11473
  %v11528 = vmul.f32 %v11469, %v11473
  %v11529 = vmul.f32 %v11472, %v11473
  %v11530 = vsub.f32 %v11082, %v11474
  %v11531 = vsub.f32 %v11085, %v11475
  %v11532 = vsub.f32 %v11090, %v11476
  %v11533 = vsub.f32 %v11093, %v11477
  %v11534 = vsub.f32 %v11098, %v11478
  %v11535 = vsub.f32 %v11101, %v11479
  %v11536 = vsub.f32 %v11106, %v11480
  %v11537 = vsub.f32 %v11109, %v11481
  %v11538 = vsub.f32 %v11114, %v11482
  %v11539 = vsub.f32 %v11117, %v11483
  %v11540 = vsub.f32 %v11122, %v11484
  %v11541 = vsub.f32 %v11125, %v11485
  %v11542 = vsub.f32 %v11130, %v11486
  %v11543 = vsub.f32 %v11133, %v11487
  %v11544 = vsub.f32 %v11138, %v11488
  %v11545 = vsub.f32 %v11141, %v11489
  %v11546 = vsub.f32 %v11146, %v11490
  %v11547 = vsub.f32 %v11149, %v11491
  %v11548 = vsub.f32 %v11154, %v11492
  %v11549 = vsub.f32 %v11157, %v11493
  %v11550 = vsub.f32 %v11162, %v11494
  %v11551 = vsub.f32 %v11165, %v11495
  %v11552 = vsub.f32 %v11170, %v11496
  %v11553 = vsub.f32 %v11173, %v11497
  %v11554 = vsub.f32 %v11178, %v11498
  %v11555 = vsub.f32 %v11181, %v11499
  %v11556 = vsub.f32 %v11186, %v11500
  %v11557 = vsub.f32 %v11189, %v11501
  %v11558 = vsub.f32 %v11194, %v11502
  %v11559 = vsub.f32 %v11197, %v11503
  %v11560 = vsub.f32 %v11202, %v11504
  %v11561 = vsub.f32 %v11205, %v11505
  %v11562 = vsub.f32 %v11210, %v11506
  %v11563 = vsub.f32 %v11213, %v11507
  %v11564 = vsub.f32 %v11218, %v11508
  %v11565 = vsub.f32 %v11221, %v11509
  %v11566 = vsub.f32 %v11226, %v11510
  %v11567 = vsub.f32 %v11229, %v11511
  %v11568 = vsub.f32 %v11234, %v11512
  %v11569 = vsub.f32 %v11237, %v11513
  %v11570 = vsub.f32 %v11242, %v11514
  %v11571 = vsub.f32 %v11245, %v11515
  %v11572 = vsub.f32 %v11250, %v11516
  %v11573 = vsub.f32 %v11253, %v11517
  %v11574 = vsub.f32 %v11258, %v11518
  %v11575 = vsub.f32 %v11261, %v11519
  %v11576 = vsub.f32 %v11266, %v11520
  %v11577 = vsub.f32 %v11269, %v11521
  %v11578 = vsub.f32 %v11274, %v11522
  %v11579 = vsub.f32 %v11277, %v11523
  %v11580 = vsub.f32 %v11282, %v11524
  %v11581 = vsub.f32 %v11285, %v11525
  %v11582 = vsub.f32 %v11290, %v11526
  %v11583 = vsub.f32 %v11293, %v11527
  %v11584 = vsub.f32 %v11298, %v11528
  %v11585 = vsub.f32 %v11301, %v11529
  %v11586 = vmul.f32 %v11530, %v11530
  %v11587 = vmul.f32 %v11531, %v11531
  %v11588 = vmul.f32 %v11532, %v11532
  %v11589 = vmul.f32 %v11533, %v11533
  %v11590 = vmul.f32 %v11534, %v11534
  %v11591 = vmul.f32 %v11535, %v11535
  %v11592 = vmul.f32 %v11536, %v11536
  %v11593 = vmul.f32 %v11537, %v11537
  %v11594 = vmul.f32 %v11538, %v11538
  %v11595 = vmul.f32 %v11539, %v11539
  %v11596 = vmul.f32 %v11540, %v11540
  %v11597 = vmul.f32 %v11541, %v11541
  %v11598 = vmul.f32 %v11542, %v11542
  %v11599 = vmul.f32 %v11543, %v11543
  %v11600 = vmul.f32 %v11544, %v11544
  %v11601 = vmul.f32 %v11545, %v11545
  %v11602 = vmul.f32 %v11546, %v11546
  %v11603 = vmul.f32 %v11547, %v11547
  %v11604 = vmul.f32 %v11548, %v11548
  %v11605 = vmul.f32 %v11549, %v11549
  %v11606 = vmul.f32 %v11550, %v11550
  %v11607 = vmul.f32 %v11551, %v11551
  %v11608 = vmul.f32 %v11552, %v11552
  %v11609 = vmul.f32 %v11553, %v11553
  %v11610 = vmul.f32 %v11554, %v11554
  %v11611 = vmul.f32 %v11555, %v11555
  %v11612 = vmul.f32 %v11556, %v11556
  %v11613 = vmul.f32 %v11557, %v11557
  %v11614 = vmul.f32 %v11558, %v11558
  %v11615 = vmul.f32 %v11559, %v11559
  %v11616 = vmul.f32 %v11560, %v11560
  %v11617 = vmul.f32 %v11561, %v11561
  %v11618 = vmul.f32 %v11562, %v11562
  %v11619 = vmul.f32 %v11563, %v11563
  %v11620 = vmul.f32 %v11564, %v11564
  %v11621 = vmul.f32 %v11565, %v11565
  %v11622 = vmul.f32 %v11566, %v11566
  %v11623 = vmul.f32 %v11567, %v11567
  %v11624 = vmul.f32 %v11568, %v11568
  %v11625 = vmul.f32 %v11569, %v11569
  %v11626 = vmul.f32 %v11570, %v11570
  %v11627 = vmul.f32 %v11571, %v11571
  %v11628 = vmul.f32 %v11572, %v11572
  %v11629 = vmul.f32 %v11573, %v11573
  %v11630 = vmul.f32 %v11574, %v11574
  %v11631 = vmul.f32 %v11575, %v11575
  %v11632 = vmul.f32 %v11576, %v11576
  %v11633 = vmul.f32 %v11577, %v11577
  %v11634 = vmul.f32 %v11578, %v11578
  %v11635 = vmul.f32 %v11579, %v11579
  %v11636 = vmul.f32 %v11580, %v11580
  %v11637 = vmul.f32 %v11581, %v11581
  %v11638 = vmul.f32 %v11582, %v11582
  %v11639 = vmul.f32 %v11583, %v11583
  %v11640 = vmul.f32 %v11584, %v11584
  %v11641 = vmul.f32 %v11585, %v11585
  %v11642 = vsel %vm11304, %v11586, 0.0
  %11643 = vadd.xlane.f32.xlu0 %v11642
  %v11644 = vpop.xlane.xlu0 %11643
  %v11645 = vsel %vm11304, %v11587, 0.0
  %11646 = vadd.xlane.f32.xlu0 %v11645
  %v11647 = vpop.xlane.xlu0 %11646
  %v11648 = vsel %vm11304, %v11588, 0.0
  %11649 = vadd.xlane.f32.xlu0 %v11648
  %v11650 = vpop.xlane.xlu0 %11649
  %v11651 = vsel %vm11304, %v11589, 0.0
  %11652 = vadd.xlane.f32.xlu0 %v11651
  %v11653 = vpop.xlane.xlu0 %11652
  %v11654 = vsel %vm11304, %v11590, 0.0
  %11655 = vadd.xlane.f32.xlu0 %v11654
  %v11656 = vpop.xlane.xlu0 %11655
  %v11657 = vsel %vm11304, %v11591, 0.0
  %11658 = vadd.xlane.f32.xlu0 %v11657
  %v11659 = vpop.xlane.xlu0 %11658
  %v11660 = vsel %vm11304, %v11592, 0.0
  %11661 = vadd.xlane.f32.xlu0 %v11660
  %v11662 = vpop.xlane.xlu0 %11661
  %v11663 = vsel %vm11304, %v11593, 0.0
  %11664 = vadd.xlane.f32.xlu0 %v11663
  %v11665 = vpop.xlane.xlu0 %11664
  %v11666 = vsel %vm11304, %v11594, 0.0
  %11667 = vadd.xlane.f32.xlu0 %v11666
  %v11668 = vpop.xlane.xlu0 %11667
  %v11669 = vsel %vm11304, %v11595, 0.0
  %11670 = vadd.xlane.f32.xlu0 %v11669
  %v11671 = vpop.xlane.xlu0 %11670
  %v11672 = vsel %vm11304, %v11596, 0.0
  %11673 = vadd.xlane.f32.xlu0 %v11672
  %v11674 = vpop.xlane.xlu0 %11673
  %v11675 = vsel %vm11304, %v11597, 0.0
  %11676 = vadd.xlane.f32.xlu0 %v11675
  %v11677 = vpop.xlane.xlu0 %11676
  %v11678 = vsel %vm11304, %v11598, 0.0
  %11679 = vadd.xlane.f32.xlu0 %v11678
  %v11680 = vpop.xlane.xlu0 %11679
  %v11681 = vsel %vm11304, %v11599, 0.0
  %11682 = vadd.xlane.f32.xlu0 %v11681
  %v11683 = vpop.xlane.xlu0 %11682
  %v11684 = vsel %vm11304, %v11600, 0.0
  %11685 = vadd.xlane.f32.xlu0 %v11684
  %v11686 = vpop.xlane.xlu0 %11685
  %v11687 = vsel %vm11304, %v11601, 0.0
  %11688 = vadd.xlane.f32.xlu0 %v11687
  %v11689 = vpop.xlane.xlu0 %11688
  %v11690 = vsel %vm11304, %v11602, 0.0
  %11691 = vadd.xlane.f32.xlu0 %v11690
  %v11692 = vpop.xlane.xlu0 %11691
  %v11693 = vsel %vm11304, %v11603, 0.0
  %11694 = vadd.xlane.f32.xlu0 %v11693
  %v11695 = vpop.xlane.xlu0 %11694
  %v11696 = vsel %vm11304, %v11604, 0.0
  %11697 = vadd.xlane.f32.xlu0 %v11696
  %v11698 = vpop.xlane.xlu0 %11697
  %v11699 = vsel %vm11304, %v11605, 0.0
  %11700 = vadd.xlane.f32.xlu0 %v11699
  %v11701 = vpop.xlane.xlu0 %11700
  %v11702 = vsel %vm11304, %v11606, 0.0
  %11703 = vadd.xlane.f32.xlu0 %v11702
  %v11704 = vpop.xlane.xlu0 %11703
  %v11705 = vsel %vm11304, %v11607, 0.0
  %11706 = vadd.xlane.f32.xlu0 %v11705
  %v11707 = vpop.xlane.xlu0 %11706
  %v11708 = vsel %vm11304, %v11608, 0.0
  %11709 = vadd.xlane.f32.xlu0 %v11708
  %v11710 = vpop.xlane.xlu0 %11709
  %v11711 = vsel %vm11304, %v11609, 0.0
  %11712 = vadd.xlane.f32.xlu0 %v11711
  %v11713 = vpop.xlane.xlu0 %11712
  %v11714 = vsel %vm11304, %v11610, 0.0
  %11715 = vadd.xlane.f32.xlu0 %v11714
  %v11716 = vpop.xlane.xlu0 %11715
  %v11717 = vsel %vm11304, %v11611, 0.0
  %11718 = vadd.xlane.f32.xlu0 %v11717
  %v11719 = vpop.xlane.xlu0 %11718
  %v11720 = vsel %vm11304, %v11612, 0.0
  %11721 = vadd.xlane.f32.xlu0 %v11720
  %v11722 = vpop.xlane.xlu0 %11721
  %v11723 = vsel %vm11304, %v11613, 0.0
  %11724 = vadd.xlane.f32.xlu0 %v11723
  %v11725 = vpop.xlane.xlu0 %11724
  %v11726 = vsel %vm11304, %v11614, 0.0
  %11727 = vadd.xlane.f32.xlu0 %v11726
  %v11728 = vpop.xlane.xlu0 %11727
  %v11729 = vsel %vm11304, %v11615, 0.0
  %11730 = vadd.xlane.f32.xlu0 %v11729
  %v11731 = vpop.xlane.xlu0 %11730
  %v11732 = vsel %vm11304, %v11616, 0.0
  %11733 = vadd.xlane.f32.xlu0 %v11732
  %v11734 = vpop.xlane.xlu0 %11733
  %v11735 = vsel %vm11304, %v11617, 0.0
  %11736 = vadd.xlane.f32.xlu0 %v11735
  %v11737 = vpop.xlane.xlu0 %11736
  %v11738 = vsel %vm11304, %v11618, 0.0
  %11739 = vadd.xlane.f32.xlu0 %v11738
  %v11740 = vpop.xlane.xlu0 %11739
  %v11741 = vsel %vm11304, %v11619, 0.0
  %11742 = vadd.xlane.f32.xlu0 %v11741
  %v11743 = vpop.xlane.xlu0 %11742
  %v11744 = vsel %vm11304, %v11620, 0.0
  %11745 = vadd.xlane.f32.xlu0 %v11744
  %v11746 = vpop.xlane.xlu0 %11745
  %v11747 = vsel %vm11304, %v11621, 0.0
  %11748 = vadd.xlane.f32.xlu0 %v11747
  %v11749 = vpop.xlane.xlu0 %11748
  %v11750 = vsel %vm11304, %v11622, 0.0
  %11751 = vadd.xlane.f32.xlu0 %v11750
  %v11752 = vpop.xlane.xlu0 %11751
  %v11753 = vsel %vm11304, %v11623, 0.0
  %11754 = vadd.xlane.f32.xlu0 %v11753
  %v11755 = vpop.xlane.xlu0 %11754
  %v11756 = vsel %vm11304, %v11624, 0.0
  %11757 = vadd.xlane.f32.xlu0 %v11756
  %v11758 = vpop.xlane.xlu0 %11757
  %v11759 = vsel %vm11304, %v11625, 0.0
  %11760 = vadd.xlane.f32.xlu0 %v11759
  %v11761 = vpop.xlane.xlu0 %11760
  %v11762 = vsel %vm11304, %v11626, 0.0
  %11763 = vadd.xlane.f32.xlu0 %v11762
  %v11764 = vpop.xlane.xlu0 %11763
  %v11765 = vsel %vm11304, %v11627, 0.0
  %11766 = vadd.xlane.f32.xlu0 %v11765
  %v11767 = vpop.xlane.xlu0 %11766
  %v11768 = vsel %vm11304, %v11628, 0.0
  %11769 = vadd.xlane.f32.xlu0 %v11768
  %v11770 = vpop.xlane.xlu0 %11769
  %v11771 = vsel %vm11304, %v11629, 0.0
  %11772 = vadd.xlane.f32.xlu0 %v11771
  %v11773 = vpop.xlane.xlu0 %11772
  %v11774 = vsel %vm11304, %v11630, 0.0
  %11775 = vadd.xlane.f32.xlu0 %v11774
  %v11776 = vpop.xlane.xlu0 %11775
  %v11777 = vsel %vm11304, %v11631, 0.0
  %11778 = vadd.xlane.f32.xlu0 %v11777
  %v11779 = vpop.xlane.xlu0 %11778
  %v11780 = vsel %vm11304, %v11632, 0.0
  %11781 = vadd.xlane.f32.xlu0 %v11780
  %v11782 = vpop.xlane.xlu0 %11781
  %v11783 = vsel %vm11304, %v11633, 0.0
  %11784 = vadd.xlane.f32.xlu0 %v11783
  %v11785 = vpop.xlane.xlu0 %11784
  %v11786 = vsel %vm11304, %v11634, 0.0
  %11787 = vadd.xlane.f32.xlu0 %v11786
  %v11788 = vpop.xlane.xlu0 %11787
  %v11789 = vsel %vm11304, %v11635, 0.0
  %11790 = vadd.xlane.f32.xlu0 %v11789
  %v11791 = vpop.xlane.xlu0 %11790
  %v11792 = vsel %vm11304, %v11636, 0.0
  %11793 = vadd.xlane.f32.xlu0 %v11792
  %v11794 = vpop.xlane.xlu0 %11793
  %v11795 = vsel %vm11304, %v11637, 0.0
  %11796 = vadd.xlane.f32.xlu0 %v11795
  %v11797 = vpop.xlane.xlu0 %11796
  %v11798 = vsel %vm11304, %v11638, 0.0
  %11799 = vadd.xlane.f32.xlu0 %v11798
  %v11800 = vpop.xlane.xlu0 %11799
  %v11801 = vsel %vm11304, %v11639, 0.0
  %11802 = vadd.xlane.f32.xlu0 %v11801
  %v11803 = vpop.xlane.xlu0 %11802
  %v11804 = vsel %vm11304, %v11640, 0.0
  %11805 = vadd.xlane.f32.xlu0 %v11804
  %v11806 = vpop.xlane.xlu0 %11805
  %v11807 = vsel %vm11304, %v11641, 0.0
  %11808 = vadd.xlane.f32.xlu0 %v11807
  %v11809 = vpop.xlane.xlu0 %11808
  %v11810 = vmul.f32 %v11644, %v11473
  %v11811 = vmul.f32 %v11647, %v11473
  %v11812 = vmul.f32 %v11650, %v11473
  %v11813 = vmul.f32 %v11653, %v11473
  %v11814 = vmul.f32 %v11656, %v11473
  %v11815 = vmul.f32 %v11659, %v11473
  %v11816 = vmul.f32 %v11662, %v11473
  %v11817 = vmul.f32 %v11665, %v11473
  %v11818 = vmul.f32 %v11668, %v11473
  %v11819 = vmul.f32 %v11671, %v11473
  %v11820 = vmul.f32 %v11674, %v11473
  %v11821 = vmul.f32 %v11677, %v11473
  %v11822 = vmul.f32 %v11680, %v11473
  %v11823 = vmul.f32 %v11683, %v11473
  %v11824 = vmul.f32 %v11686, %v11473
  %v11825 = vmul.f32 %v11689, %v11473
  %v11826 = vmul.f32 %v11692, %v11473
  %v11827 = vmul.f32 %v11695, %v11473
  %v11828 = vmul.f32 %v11698, %v11473
  %v11829 = vmul.f32 %v11701, %v11473
  %v11830 = vmul.f32 %v11704, %v11473
  %v11831 = vmul.f32 %v11707, %v11473
  %v11832 = vmul.f32 %v11710, %v11473
  %v11833 = vmul.f32 %v11713, %v11473
  %v11834 = vmul.f32 %v11716, %v11473
  %v11835 = vmul.f32 %v11719, %v11473
  %v11836 = vmul.f32 %v11722, %v11473
  %v11837 = vmul.f32 %v11725, %v11473
  %v11838 = vmul.f32 %v11728, %v11473
  %v11839 = vmul.f32 %v11731, %v11473
  %v11840 = vmul.f32 %v11734, %v11473
  %v11841 = vmul.f32 %v11737, %v11473
  %v11842 = vmul.f32 %v11740, %v11473
  %v11843 = vmul.f32 %v11743, %v11473
  %v11844 = vmul.f32 %v11746, %v11473
  %v11845 = vmul.f32 %v11749, %v11473
  %v11846 = vmul.f32 %v11752, %v11473
  %v11847 = vmul.f32 %v11755, %v11473
  %v11848 = vmul.f32 %v11758, %v11473
  %v11849 = vmul.f32 %v11761, %v11473
  %v11850 = vmul.f32 %v11764, %v11473
  %v11851 = vmul.f32 %v11767, %v11473
  %v11852 = vmul.f32 %v11770, %v11473
  %v11853 = vmul.f32 %v11773, %v11473
  %v11854 = vmul.f32 %v11776, %v11473
  %v11855 = vmul.f32 %v11779, %v11473
  %v11856 = vmul.f32 %v11782, %v11473
  %v11857 = vmul.f32 %v11785, %v11473
  %v11858 = vmul.f32 %v11788, %v11473
  %v11859 = vmul.f32 %v11791, %v11473
  %v11860 = vmul.f32 %v11794, %v11473
  %v11861 = vmul.f32 %v11797, %v11473
  %v11862 = vmul.f32 %v11800, %v11473
  %v11863 = vmul.f32 %v11803, %v11473
  %v11864 = vmul.f32 %v11806, %v11473
  %v11865 = vmul.f32 %v11809, %v11473
  %v11866 = vadd.f32 %v11810, 1e-05
  %v11867 = vadd.f32 %v11811, 1e-05
  %v11868 = vadd.f32 %v11812, 1e-05
  %v11869 = vadd.f32 %v11813, 1e-05
  %v11870 = vadd.f32 %v11814, 1e-05
  %v11871 = vadd.f32 %v11815, 1e-05
  %v11872 = vadd.f32 %v11816, 1e-05
  %v11873 = vadd.f32 %v11817, 1e-05
  %v11874 = vadd.f32 %v11818, 1e-05
  %v11875 = vadd.f32 %v11819, 1e-05
  %v11876 = vadd.f32 %v11820, 1e-05
  %v11877 = vadd.f32 %v11821, 1e-05
  %v11878 = vadd.f32 %v11822, 1e-05
  %v11879 = vadd.f32 %v11823, 1e-05
  %v11880 = vadd.f32 %v11824, 1e-05
  %v11881 = vadd.f32 %v11825, 1e-05
  %v11882 = vadd.f32 %v11826, 1e-05
  %v11883 = vadd.f32 %v11827, 1e-05
  %v11884 = vadd.f32 %v11828, 1e-05
  %v11885 = vadd.f32 %v11829, 1e-05
  %v11886 = vadd.f32 %v11830, 1e-05
  %v11887 = vadd.f32 %v11831, 1e-05
  %v11888 = vadd.f32 %v11832, 1e-05
  %v11889 = vadd.f32 %v11833, 1e-05
  %v11890 = vadd.f32 %v11834, 1e-05
  %v11891 = vadd.f32 %v11835, 1e-05
  %v11892 = vadd.f32 %v11836, 1e-05
  %v11893 = vadd.f32 %v11837, 1e-05
  %v11894 = vadd.f32 %v11838, 1e-05
  %v11895 = vadd.f32 %v11839, 1e-05
  %v11896 = vadd.f32 %v11840, 1e-05
  %v11897 = vadd.f32 %v11841, 1e-05
  %v11898 = vadd.f32 %v11842, 1e-05
  %v11899 = vadd.f32 %v11843, 1e-05
  %v11900 = vadd.f32 %v11844, 1e-05
  %v11901 = vadd.f32 %v11845, 1e-05
  %v11902 = vadd.f32 %v11846, 1e-05
  %v11903 = vadd.f32 %v11847, 1e-05
  %v11904 = vadd.f32 %v11848, 1e-05
  %v11905 = vadd.f32 %v11849, 1e-05
  %v11906 = vadd.f32 %v11850, 1e-05
  %v11907 = vadd.f32 %v11851, 1e-05
  %v11908 = vadd.f32 %v11852, 1e-05
  %v11909 = vadd.f32 %v11853, 1e-05
  %v11910 = vadd.f32 %v11854, 1e-05
  %v11911 = vadd.f32 %v11855, 1e-05
  %v11912 = vadd.f32 %v11856, 1e-05
  %v11913 = vadd.f32 %v11857, 1e-05
  %v11914 = vadd.f32 %v11858, 1e-05
  %v11915 = vadd.f32 %v11859, 1e-05
  %v11916 = vadd.f32 %v11860, 1e-05
  %v11917 = vadd.f32 %v11861, 1e-05
  %v11918 = vadd.f32 %v11862, 1e-05
  %v11919 = vadd.f32 %v11863, 1e-05
  %v11920 = vadd.f32 %v11864, 1e-05
  %v11921 = vadd.f32 %v11865, 1e-05
  %v11922 = vrsqrt.pop %v11866
  %v11923 = vrsqrt.pop %v11867
  %v11924 = vrsqrt.pop %v11868
  %v11925 = vrsqrt.pop %v11869
  %v11926 = vrsqrt.pop %v11870
  %v11927 = vrsqrt.pop %v11871
  %v11928 = vrsqrt.pop %v11872
  %v11929 = vrsqrt.pop %v11873
  %v11930 = vrsqrt.pop %v11874
  %v11931 = vrsqrt.pop %v11875
  %v11932 = vrsqrt.pop %v11876
  %v11933 = vrsqrt.pop %v11877
  %v11934 = vrsqrt.pop %v11878
  %v11935 = vrsqrt.pop %v11879
  %v11936 = vrsqrt.pop %v11880
  %v11937 = vrsqrt.pop %v11881
  %v11938 = vrsqrt.pop %v11882
  %v11939 = vrsqrt.pop %v11883
  %v11940 = vrsqrt.pop %v11884
  %v11941 = vrsqrt.pop %v11885
  %v11942 = vrsqrt.pop %v11886
  %v11943 = vrsqrt.pop %v11887
  %v11944 = vrsqrt.pop %v11888
  %v11945 = vrsqrt.pop %v11889
  %v11946 = vrsqrt.pop %v11890
  %v11947 = vrsqrt.pop %v11891
  %v11948 = vrsqrt.pop %v11892
  %v11949 = vrsqrt.pop %v11893
  %v11950 = vrsqrt.pop %v11894
  %v11951 = vrsqrt.pop %v11895
  %v11952 = vrsqrt.pop %v11896
  %v11953 = vrsqrt.pop %v11897
  %v11954 = vrsqrt.pop %v11898
  %v11955 = vrsqrt.pop %v11899
  %v11956 = vrsqrt.pop %v11900
  %v11957 = vrsqrt.pop %v11901
  %v11958 = vrsqrt.pop %v11902
  %v11959 = vrsqrt.pop %v11903
  %v11960 = vrsqrt.pop %v11904
  %v11961 = vrsqrt.pop %v11905
  %v11962 = vrsqrt.pop %v11906
  %v11963 = vrsqrt.pop %v11907
  %v11964 = vrsqrt.pop %v11908
  %v11965 = vrsqrt.pop %v11909
  %v11966 = vrsqrt.pop %v11910
  %v11967 = vrsqrt.pop %v11911
  %v11968 = vrsqrt.pop %v11912
  %v11969 = vrsqrt.pop %v11913
  %v11970 = vrsqrt.pop %v11914
  %v11971 = vrsqrt.pop %v11915
  %v11972 = vrsqrt.pop %v11916
  %v11973 = vrsqrt.pop %v11917
  %v11974 = vrsqrt.pop %v11918
  %v11975 = vrsqrt.pop %v11919
  %v11976 = vrsqrt.pop %v11920
  %v11977 = vrsqrt.pop %v11921
  %v11978 = vld [vmem:[%s3] sm:$0xff]
  %v11979 = vld [vmem:[%s3 + $0x8] sm:$0xff]
  %v11980 = vld [vmem:[%s3 + $0x10] sm:$0xff]
  %v11981 = vld [vmem:[%s3 + $0x18] sm:$0xff]
  %v11982 = vld [vmem:[%s3 + $0x20] sm:$0xff]
  %v11983 = vld [vmem:[%s3 + $0x28] sm:$0xff]
  %v11984 = vld [vmem:[%s3 + $0x30] sm:$0xff]
  %v11985 = vld [vmem:[%s3 + $0x38] sm:$0xff]
  %v11986 = vld [vmem:[%s3 + $0x40] sm:$0xff]
  %v11987 = vld [vmem:[%s3 + $0x48] sm:$0xff]
  %v11988 = vld [vmem:[%s3 + $0x50] sm:$0xff]
  %v11989 = vld [vmem:[%s3 + $0x58] sm:$0xff]
  %v11990 = vld [vmem:[%s3 + $0x60] sm:$0xff]
  %v11991 = vld [vmem:[%s3 + $0x68] sm:$0xff]
  %v11992 = vld [vmem:[%s3 + $0x70] sm:$0xff]
  %v11993 = vld [vmem:[%s3 + $0x78] sm:$0xff]
  %v11994 = vld [vmem:[%s3 + $0x80] sm:$0xff]
  %v11995 = vld [vmem:[%s3 + $0x88] sm:$0xff]
  %v11996 = vld [vmem:[%s3 + $0x90] sm:$0xff]
  %v11997 = vld [vmem:[%s3 + $0x98] sm:$0xff]
  %v11998 = vld [vmem:[%s3 + $0xa0] sm:$0xff]
  %v11999 = vld [vmem:[%s3 + $0xa8] sm:$0xff]
  %v12000 = vld [vmem:[%s3 + $0xb0] sm:$0xff]
  %v12001 = vld [vmem:[%s3 + $0xb8] sm:$0xff]
  %v12002 = vld [vmem:[%s3 + $0xc0] sm:$0xff]
  %v12003 = vld [vmem:[%s3 + $0xc8] sm:$0xff]
  %v12004 = vld [vmem:[%s3 + $0xd0] sm:$0xff]
  %v12005 = vld [vmem:[%s3 + $0xd8] sm:$0xff]
  %v12006 = vld [vmem:[%s3 + $0xe0] sm:$0xff]
  %v12007 = vld [vmem:[%s3 + $0xe8] sm:$0xff]
  %v12008 = vld [vmem:[%s3 + $0xf0] sm:$0xff]
  %v12009 = vld [vmem:[%s3 + $0xf8] sm:$0xff]
  %v12010 = vld [vmem:[%s3 + $0x100] sm:$0xff]
  %v12011 = vld [vmem:[%s3 + $0x108] sm:$0xff]
  %v12012 = vld [vmem:[%s3 + $0x110] sm:$0xff]
  %v12013 = vld [vmem:[%s3 + $0x118] sm:$0xff]
  %v12014 = vld [vmem:[%s3 + $0x120] sm:$0xff]
  %v12015 = vld [vmem:[%s3 + $0x128] sm:$0xff]
  %v12016 = vld [vmem:[%s3 + $0x130] sm:$0xff]
  %v12017 = vld [vmem:[%s3 + $0x138] sm:$0xff]
  %v12018 = vld [vmem:[%s3 + $0x140] sm:$0xff]
  %v12019 = vld [vmem:[%s3 + $0x148] sm:$0xff]
  %v12020 = vld [vmem:[%s3 + $0x150] sm:$0xff]
  %v12021 = vld [vmem:[%s3 + $0x158] sm:$0xff]
  %v12022 = vld [vmem:[%s3 + $0x160] sm:$0xff]
  %v12023 = vld [vmem:[%s3 + $0x168] sm:$0xff]
  %v12024 = vld [vmem:[%s3 + $0x170] sm:$0xff]
  %v12025 = vld [vmem:[%s3 + $0x178] sm:$0xff]
  %v12026 = vld [vmem:[%s3 + $0x180] sm:$0xff]
  %v12027 = vld [vmem:[%s3 + $0x188] sm:$0xff]
  %v12028 = vld [vmem:[%s3 + $0x190] sm:$0xff]
  %v12029 = vld [vmem:[%s3 + $0x198] sm:$0xff]
  %v12030 = vld [vmem:[%s3 + $0x1a0] sm:$0xff]
  %v12031 = vld [vmem:[%s3 + $0x1a8] sm:$0xff]
  %v12032 = vld [vmem:[%s3 + $0x1b0] sm:$0xff]
  %v12033 = vld [vmem:[%s3 + $0x1b8] sm:$0xff]
  %v12034 = vld [vmem:[%s4] sm:$0xff]
  %v12035 = vld [vmem:[%s4 + $0x8] sm:$0xff]
  %v12036 = vld [vmem:[%s4 + $0x10] sm:$0xff]
  %v12037 = vld [vmem:[%s4 + $0x18] sm:$0xff]
  %v12038 = vld [vmem:[%s4 + $0x20] sm:$0xff]
  %v12039 = vld [vmem:[%s4 + $0x28] sm:$0xff]
  %v12040 = vld [vmem:[%s4 + $0x30] sm:$0xff]
  %v12041 = vld [vmem:[%s4 + $0x38] sm:$0xff]
  %v12042 = vld [vmem:[%s4 + $0x40] sm:$0xff]
  %v12043 = vld [vmem:[%s4 + $0x48] sm:$0xff]
  %v12044 = vld [vmem:[%s4 + $0x50] sm:$0xff]
  %v12045 = vld [vmem:[%s4 + $0x58] sm:$0xff]
  %v12046 = vld [vmem:[%s4 + $0x60] sm:$0xff]
  %v12047 = vld [vmem:[%s4 + $0x68] sm:$0xff]
  %v12048 = vld [vmem:[%s4 + $0x70] sm:$0xff]
  %v12049 = vld [vmem:[%s4 + $0x78] sm:$0xff]
  %v12050 = vld [vmem:[%s4 + $0x80] sm:$0xff]
  %v12051 = vld [vmem:[%s4 + $0x88] sm:$0xff]
  %v12052 = vld [vmem:[%s4 + $0x90] sm:$0xff]
  %v12053 = vld [vmem:[%s4 + $0x98] sm:$0xff]
  %v12054 = vld [vmem:[%s4 + $0xa0] sm:$0xff]
  %v12055 = vld [vmem:[%s4 + $0xa8] sm:$0xff]
  %v12056 = vld [vmem:[%s4 + $0xb0] sm:$0xff]
  %v12057 = vld [vmem:[%s4 + $0xb8] sm:$0xff]
  %v12058 = vld [vmem:[%s4 + $0xc0] sm:$0xff]
  %v12059 = vld [vmem:[%s4 + $0xc8] sm:$0xff]
  %v12060 = vld [vmem:[%s4 + $0xd0] sm:$0xff]
  %v12061 = vld [vmem:[%s4 + $0xd8] sm:$0xff]
  %v12062 = vld [vmem:[%s4 + $0xe0] sm:$0xff]
  %v12063 = vld [vmem:[%s4 + $0xe8] sm:$0xff]
  %v12064 = vld [vmem:[%s4 + $0xf0] sm:$0xff]
  %v12065 = vld [vmem:[%s4 + $0xf8] sm:$0xff]
  %v12066 = vld [vmem:[%s4 + $0x100] sm:$0xff]
  %v12067 = vld [vmem:[%s4 + $0x108] sm:$0xff]
  %v12068 = vld [vmem:[%s4 + $0x110] sm:$0xff]
  %v12069 = vld [vmem:[%s4 + $0x118] sm:$0xff]
  %v12070 = vld [vmem:[%s4 + $0x120] sm:$0xff]
  %v12071 = vld [vmem:[%s4 + $0x128] sm:$0xff]
  %v12072 = vld [vmem:[%s4 + $0x130] sm:$0xff]
  %v12073 = vld [vmem:[%s4 + $0x138] sm:$0xff]
  %v12074 = vld [vmem:[%s4 + $0x140] sm:$0xff]
  %v12075 = vld [vmem:[%s4 + $0x148] sm:$0xff]
  %v12076 = vld [vmem:[%s4 + $0x150] sm:$0xff]
  %v12077 = vld [vmem:[%s4 + $0x158] sm:$0xff]
  %v12078 = vld [vmem:[%s4 + $0x160] sm:$0xff]
  %v12079 = vld [vmem:[%s4 + $0x168] sm:$0xff]
  %v12080 = vld [vmem:[%s4 + $0x170] sm:$0xff]
  %v12081 = vld [vmem:[%s4 + $0x178] sm:$0xff]
  %v12082 = vld [vmem:[%s4 + $0x180] sm:$0xff]
  %v12083 = vld [vmem:[%s4 + $0x188] sm:$0xff]
  %v12084 = vld [vmem:[%s4 + $0x190] sm:$0xff]
  %v12085 = vld [vmem:[%s4 + $0x198] sm:$0xff]
  %v12086 = vld [vmem:[%s4 + $0x1a0] sm:$0xff]
  %v12087 = vld [vmem:[%s4 + $0x1a8] sm:$0xff]
  %v12088 = vld [vmem:[%s4 + $0x1b0] sm:$0xff]
  %v12089 = vld [vmem:[%s4 + $0x1b8] sm:$0xff]
  %v12090 = vmul.f32 %v11530, %v11922
  %v12091 = vmul.f32 %v11531, %v11923
  %v12092 = vmul.f32 %v11532, %v11924
  %v12093 = vmul.f32 %v11533, %v11925
  %v12094 = vmul.f32 %v11534, %v11926
  %v12095 = vmul.f32 %v11535, %v11927
  %v12096 = vmul.f32 %v11536, %v11928
  %v12097 = vmul.f32 %v11537, %v11929
  %v12098 = vmul.f32 %v11538, %v11930
  %v12099 = vmul.f32 %v11539, %v11931
  %v12100 = vmul.f32 %v11540, %v11932
  %v12101 = vmul.f32 %v11541, %v11933
  %v12102 = vmul.f32 %v11542, %v11934
  %v12103 = vmul.f32 %v11543, %v11935
  %v12104 = vmul.f32 %v11544, %v11936
  %v12105 = vmul.f32 %v11545, %v11937
  %v12106 = vmul.f32 %v11546, %v11938
  %v12107 = vmul.f32 %v11547, %v11939
  %v12108 = vmul.f32 %v11548, %v11940
  %v12109 = vmul.f32 %v11549, %v11941
  %v12110 = vmul.f32 %v11550, %v11942
  %v12111 = vmul.f32 %v11551, %v11943
  %v12112 = vmul.f32 %v11552, %v11944
  %v12113 = vmul.f32 %v11553, %v11945
  %v12114 = vmul.f32 %v11554, %v11946
  %v12115 = vmul.f32 %v11555, %v11947
  %v12116 = vmul.f32 %v11556, %v11948
  %v12117 = vmul.f32 %v11557, %v11949
  %v12118 = vmul.f32 %v11558, %v11950
  %v12119 = vmul.f32 %v11559, %v11951
  %v12120 = vmul.f32 %v11560, %v11952
  %v12121 = vmul.f32 %v11561, %v11953
  %v12122 = vmul.f32 %v11562, %v11954
  %v12123 = vmul.f32 %v11563, %v11955
  %v12124 = vmul.f32 %v11564, %v11956
  %v12125 = vmul.f32 %v11565, %v11957
  %v12126 = vmul.f32 %v11566, %v11958
  %v12127 = vmul.f32 %v11567, %v11959
  %v12128 = vmul.f32 %v11568, %v11960
  %v12129 = vmul.f32 %v11569, %v11961
  %v12130 = vmul.f32 %v11570, %v11962
  %v12131 = vmul.f32 %v11571, %v11963
  %v12132 = vmul.f32 %v11572, %v11964
  %v12133 = vmul.f32 %v11573, %v11965
  %v12134 = vmul.f32 %v11574, %v11966
  %v12135 = vmul.f32 %v11575, %v11967
  %v12136 = vmul.f32 %v11576, %v11968
  %v12137 = vmul.f32 %v11577, %v11969
  %v12138 = vmul.f32 %v11578, %v11970
  %v12139 = vmul.f32 %v11579, %v11971
  %v12140 = vmul.f32 %v11580, %v11972
  %v12141 = vmul.f32 %v11581, %v11973
  %v12142 = vmul.f32 %v11582, %v11974
  %v12143 = vmul.f32 %v11583, %v11975
  %v12144 = vmul.f32 %v11584, %v11976
  %v12145 = vmul.f32 %v11585, %v11977
  %12147 = vset.pattern.permute.xlu0 0
  %12148 = vperm.xlu0 %12147, %v11978
  %v12149 = vpop.permute.xlu0 %12148
  %12152 = vset.pattern.permute.xlu0 0
  %12153 = vperm.xlu0 %12152, %v11979
  %v12154 = vpop.permute.xlu0 %12153
  %12157 = vset.pattern.permute.xlu0 0
  %12158 = vperm.xlu0 %12157, %v11980
  %v12159 = vpop.permute.xlu0 %12158
  %12162 = vset.pattern.permute.xlu0 0
  %12163 = vperm.xlu0 %12162, %v11981
  %v12164 = vpop.permute.xlu0 %12163
  %12167 = vset.pattern.permute.xlu0 0
  %12168 = vperm.xlu0 %12167, %v11982
  %v12169 = vpop.permute.xlu0 %12168
  %12172 = vset.pattern.permute.xlu0 0
  %12173 = vperm.xlu0 %12172, %v11983
  %v12174 = vpop.permute.xlu0 %12173
  %12177 = vset.pattern.permute.xlu0 0
  %12178 = vperm.xlu0 %12177, %v11984
  %v12179 = vpop.permute.xlu0 %12178
  %12182 = vset.pattern.permute.xlu0 0
  %12183 = vperm.xlu0 %12182, %v11985
  %v12184 = vpop.permute.xlu0 %12183
  %12187 = vset.pattern.permute.xlu0 0
  %12188 = vperm.xlu0 %12187, %v11986
  %v12189 = vpop.permute.xlu0 %12188
  %12192 = vset.pattern.permute.xlu0 0
  %12193 = vperm.xlu0 %12192, %v11987
  %v12194 = vpop.permute.xlu0 %12193
  %12197 = vset.pattern.permute.xlu0 0
  %12198 = vperm.xlu0 %12197, %v11988
  %v12199 = vpop.permute.xlu0 %12198
  %12202 = vset.pattern.permute.xlu0 0
  %12203 = vperm.xlu0 %12202, %v11989
  %v12204 = vpop.permute.xlu0 %12203
  %12207 = vset.pattern.permute.xlu0 0
  %12208 = vperm.xlu0 %12207, %v11990
  %v12209 = vpop.permute.xlu0 %12208
  %12212 = vset.pattern.permute.xlu0 0
  %12213 = vperm.xlu0 %12212, %v11991
  %v12214 = vpop.permute.xlu0 %12213
  %12217 = vset.pattern.permute.xlu0 0
  %12218 = vperm.xlu0 %12217, %v11992
  %v12219 = vpop.permute.xlu0 %12218
  %12222 = vset.pattern.permute.xlu0 0
  %12223 = vperm.xlu0 %12222, %v11993
  %v12224 = vpop.permute.xlu0 %12223
  %12227 = vset.pattern.permute.xlu0 0
  %12228 = vperm.xlu0 %12227, %v11994
  %v12229 = vpop.permute.xlu0 %12228
  %12232 = vset.pattern.permute.xlu0 0
  %12233 = vperm.xlu0 %12232, %v11995
  %v12234 = vpop.permute.xlu0 %12233
  %12237 = vset.pattern.permute.xlu0 0
  %12238 = vperm.xlu0 %12237, %v11996
  %v12239 = vpop.permute.xlu0 %12238
  %12242 = vset.pattern.permute.xlu0 0
  %12243 = vperm.xlu0 %12242, %v11997
  %v12244 = vpop.permute.xlu0 %12243
  %12247 = vset.pattern.permute.xlu0 0
  %12248 = vperm.xlu0 %12247, %v11998
  %v12249 = vpop.permute.xlu0 %12248
  %12252 = vset.pattern.permute.xlu0 0
  %12253 = vperm.xlu0 %12252, %v11999
  %v12254 = vpop.permute.xlu0 %12253
  %12257 = vset.pattern.permute.xlu0 0
  %12258 = vperm.xlu0 %12257, %v12000
  %v12259 = vpop.permute.xlu0 %12258
  %12262 = vset.pattern.permute.xlu0 0
  %12263 = vperm.xlu0 %12262, %v12001
  %v12264 = vpop.permute.xlu0 %12263
  %12267 = vset.pattern.permute.xlu0 0
  %12268 = vperm.xlu0 %12267, %v12002
  %v12269 = vpop.permute.xlu0 %12268
  %12272 = vset.pattern.permute.xlu0 0
  %12273 = vperm.xlu0 %12272, %v12003
  %v12274 = vpop.permute.xlu0 %12273
  %12277 = vset.pattern.permute.xlu0 0
  %12278 = vperm.xlu0 %12277, %v12004
  %v12279 = vpop.permute.xlu0 %12278
  %12282 = vset.pattern.permute.xlu0 0
  %12283 = vperm.xlu0 %12282, %v12005
  %v12284 = vpop.permute.xlu0 %12283
  %12287 = vset.pattern.permute.xlu0 0
  %12288 = vperm.xlu0 %12287, %v12006
  %v12289 = vpop.permute.xlu0 %12288
  %12292 = vset.pattern.permute.xlu0 0
  %12293 = vperm.xlu0 %12292, %v12007
  %v12294 = vpop.permute.xlu0 %12293
  %12297 = vset.pattern.permute.xlu0 0
  %12298 = vperm.xlu0 %12297, %v12008
  %v12299 = vpop.permute.xlu0 %12298
  %12302 = vset.pattern.permute.xlu0 0
  %12303 = vperm.xlu0 %12302, %v12009
  %v12304 = vpop.permute.xlu0 %12303
  %12307 = vset.pattern.permute.xlu0 0
  %12308 = vperm.xlu0 %12307, %v12010
  %v12309 = vpop.permute.xlu0 %12308
  %12312 = vset.pattern.permute.xlu0 0
  %12313 = vperm.xlu0 %12312, %v12011
  %v12314 = vpop.permute.xlu0 %12313
  %12317 = vset.pattern.permute.xlu0 0
  %12318 = vperm.xlu0 %12317, %v12012
  %v12319 = vpop.permute.xlu0 %12318
  %12322 = vset.pattern.permute.xlu0 0
  %12323 = vperm.xlu0 %12322, %v12013
  %v12324 = vpop.permute.xlu0 %12323
  %12327 = vset.pattern.permute.xlu0 0
  %12328 = vperm.xlu0 %12327, %v12014
  %v12329 = vpop.permute.xlu0 %12328
  %12332 = vset.pattern.permute.xlu0 0
  %12333 = vperm.xlu0 %12332, %v12015
  %v12334 = vpop.permute.xlu0 %12333
  %12337 = vset.pattern.permute.xlu0 0
  %12338 = vperm.xlu0 %12337, %v12016
  %v12339 = vpop.permute.xlu0 %12338
  %12342 = vset.pattern.permute.xlu0 0
  %12343 = vperm.xlu0 %12342, %v12017
  %v12344 = vpop.permute.xlu0 %12343
  %12347 = vset.pattern.permute.xlu0 0
  %12348 = vperm.xlu0 %12347, %v12018
  %v12349 = vpop.permute.xlu0 %12348
  %12352 = vset.pattern.permute.xlu0 0
  %12353 = vperm.xlu0 %12352, %v12019
  %v12354 = vpop.permute.xlu0 %12353
  %12357 = vset.pattern.permute.xlu0 0
  %12358 = vperm.xlu0 %12357, %v12020
  %v12359 = vpop.permute.xlu0 %12358
  %12362 = vset.pattern.permute.xlu0 0
  %12363 = vperm.xlu0 %12362, %v12021
  %v12364 = vpop.permute.xlu0 %12363
  %12367 = vset.pattern.permute.xlu0 0
  %12368 = vperm.xlu0 %12367, %v12022
  %v12369 = vpop.permute.xlu0 %12368
  %12372 = vset.pattern.permute.xlu0 0
  %12373 = vperm.xlu0 %12372, %v12023
  %v12374 = vpop.permute.xlu0 %12373
  %12377 = vset.pattern.permute.xlu0 0
  %12378 = vperm.xlu0 %12377, %v12024
  %v12379 = vpop.permute.xlu0 %12378
  %12382 = vset.pattern.permute.xlu0 0
  %12383 = vperm.xlu0 %12382, %v12025
  %v12384 = vpop.permute.xlu0 %12383
  %12387 = vset.pattern.permute.xlu0 0
  %12388 = vperm.xlu0 %12387, %v12026
  %v12389 = vpop.permute.xlu0 %12388
  %12392 = vset.pattern.permute.xlu0 0
  %12393 = vperm.xlu0 %12392, %v12027
  %v12394 = vpop.permute.xlu0 %12393
  %12397 = vset.pattern.permute.xlu0 0
  %12398 = vperm.xlu0 %12397, %v12028
  %v12399 = vpop.permute.xlu0 %12398
  %12402 = vset.pattern.permute.xlu0 0
  %12403 = vperm.xlu0 %12402, %v12029
  %v12404 = vpop.permute.xlu0 %12403
  %12407 = vset.pattern.permute.xlu0 0
  %12408 = vperm.xlu0 %12407, %v12030
  %v12409 = vpop.permute.xlu0 %12408
  %12412 = vset.pattern.permute.xlu0 0
  %12413 = vperm.xlu0 %12412, %v12031
  %v12414 = vpop.permute.xlu0 %12413
  %12417 = vset.pattern.permute.xlu0 0
  %12418 = vperm.xlu0 %12417, %v12032
  %v12419 = vpop.permute.xlu0 %12418
  %12422 = vset.pattern.permute.xlu0 0
  %12423 = vperm.xlu0 %12422, %v12033
  %v12424 = vpop.permute.xlu0 %12423
  %v12426 = vmul.f32 %v12090, %v12149
  %v12427 = vmul.f32 %v12091, %v12154
  %v12428 = vmul.f32 %v12092, %v12159
  %v12429 = vmul.f32 %v12093, %v12164
  %v12430 = vmul.f32 %v12094, %v12169
  %v12431 = vmul.f32 %v12095, %v12174
  %v12432 = vmul.f32 %v12096, %v12179
  %v12433 = vmul.f32 %v12097, %v12184
  %v12434 = vmul.f32 %v12098, %v12189
  %v12435 = vmul.f32 %v12099, %v12194
  %v12436 = vmul.f32 %v12100, %v12199
  %v12437 = vmul.f32 %v12101, %v12204
  %v12438 = vmul.f32 %v12102, %v12209
  %v12439 = vmul.f32 %v12103, %v12214
  %v12440 = vmul.f32 %v12104, %v12219
  %v12441 = vmul.f32 %v12105, %v12224
  %v12442 = vmul.f32 %v12106, %v12229
  %v12443 = vmul.f32 %v12107, %v12234
  %v12444 = vmul.f32 %v12108, %v12239
  %v12445 = vmul.f32 %v12109, %v12244
  %v12446 = vmul.f32 %v12110, %v12249
  %v12447 = vmul.f32 %v12111, %v12254
  %v12448 = vmul.f32 %v12112, %v12259
  %v12449 = vmul.f32 %v12113, %v12264
  %v12450 = vmul.f32 %v12114, %v12269
  %v12451 = vmul.f32 %v12115, %v12274
  %v12452 = vmul.f32 %v12116, %v12279
  %v12453 = vmul.f32 %v12117, %v12284
  %v12454 = vmul.f32 %v12118, %v12289
  %v12455 = vmul.f32 %v12119, %v12294
  %v12456 = vmul.f32 %v12120, %v12299
  %v12457 = vmul.f32 %v12121, %v12304
  %v12458 = vmul.f32 %v12122, %v12309
  %v12459 = vmul.f32 %v12123, %v12314
  %v12460 = vmul.f32 %v12124, %v12319
  %v12461 = vmul.f32 %v12125, %v12324
  %v12462 = vmul.f32 %v12126, %v12329
  %v12463 = vmul.f32 %v12127, %v12334
  %v12464 = vmul.f32 %v12128, %v12339
  %v12465 = vmul.f32 %v12129, %v12344
  %v12466 = vmul.f32 %v12130, %v12349
  %v12467 = vmul.f32 %v12131, %v12354
  %v12468 = vmul.f32 %v12132, %v12359
  %v12469 = vmul.f32 %v12133, %v12364
  %v12470 = vmul.f32 %v12134, %v12369
  %v12471 = vmul.f32 %v12135, %v12374
  %v12472 = vmul.f32 %v12136, %v12379
  %v12473 = vmul.f32 %v12137, %v12384
  %v12474 = vmul.f32 %v12138, %v12389
  %v12475 = vmul.f32 %v12139, %v12394
  %v12476 = vmul.f32 %v12140, %v12399
  %v12477 = vmul.f32 %v12141, %v12404
  %v12478 = vmul.f32 %v12142, %v12409
  %v12479 = vmul.f32 %v12143, %v12414
  %v12480 = vmul.f32 %v12144, %v12419
  %v12481 = vmul.f32 %v12145, %v12424
  %12483 = vset.pattern.permute.xlu0 0
  %12484 = vperm.xlu0 %12483, %v12034
  %v12485 = vpop.permute.xlu0 %12484
  %12488 = vset.pattern.permute.xlu0 0
  %12489 = vperm.xlu0 %12488, %v12035
  %v12490 = vpop.permute.xlu0 %12489
  %12493 = vset.pattern.permute.xlu0 0
  %12494 = vperm.xlu0 %12493, %v12036
  %v12495 = vpop.permute.xlu0 %12494
  %12498 = vset.pattern.permute.xlu0 0
  %12499 = vperm.xlu0 %12498, %v12037
  %v12500 = vpop.permute.xlu0 %12499
  %12503 = vset.pattern.permute.xlu0 0
  %12504 = vperm.xlu0 %12503, %v12038
  %v12505 = vpop.permute.xlu0 %12504
  %12508 = vset.pattern.permute.xlu0 0
  %12509 = vperm.xlu0 %12508, %v12039
  %v12510 = vpop.permute.xlu0 %12509
  %12513 = vset.pattern.permute.xlu0 0
  %12514 = vperm.xlu0 %12513, %v12040
  %v12515 = vpop.permute.xlu0 %12514
  %12518 = vset.pattern.permute.xlu0 0
  %12519 = vperm.xlu0 %12518, %v12041
  %v12520 = vpop.permute.xlu0 %12519
  %12523 = vset.pattern.permute.xlu0 0
  %12524 = vperm.xlu0 %12523, %v12042
  %v12525 = vpop.permute.xlu0 %12524
  %12528 = vset.pattern.permute.xlu0 0
  %12529 = vperm.xlu0 %12528, %v12043
  %v12530 = vpop.permute.xlu0 %12529
  %12533 = vset.pattern.permute.xlu0 0
  %12534 = vperm.xlu0 %12533, %v12044
  %v12535 = vpop.permute.xlu0 %12534
  %12538 = vset.pattern.permute.xlu0 0
  %12539 = vperm.xlu0 %12538, %v12045
  %v12540 = vpop.permute.xlu0 %12539
  %12543 = vset.pattern.permute.xlu0 0
  %12544 = vperm.xlu0 %12543, %v12046
  %v12545 = vpop.permute.xlu0 %12544
  %12548 = vset.pattern.permute.xlu0 0
  %12549 = vperm.xlu0 %12548, %v12047
  %v12550 = vpop.permute.xlu0 %12549
  %12553 = vset.pattern.permute.xlu0 0
  %12554 = vperm.xlu0 %12553, %v12048
  %v12555 = vpop.permute.xlu0 %12554
  %12558 = vset.pattern.permute.xlu0 0
  %12559 = vperm.xlu0 %12558, %v12049
  %v12560 = vpop.permute.xlu0 %12559
  %12563 = vset.pattern.permute.xlu0 0
  %12564 = vperm.xlu0 %12563, %v12050
  %v12565 = vpop.permute.xlu0 %12564
  %12568 = vset.pattern.permute.xlu0 0
  %12569 = vperm.xlu0 %12568, %v12051
  %v12570 = vpop.permute.xlu0 %12569
  %12573 = vset.pattern.permute.xlu0 0
  %12574 = vperm.xlu0 %12573, %v12052
  %v12575 = vpop.permute.xlu0 %12574
  %12578 = vset.pattern.permute.xlu0 0
  %12579 = vperm.xlu0 %12578, %v12053
  %v12580 = vpop.permute.xlu0 %12579
  %12583 = vset.pattern.permute.xlu0 0
  %12584 = vperm.xlu0 %12583, %v12054
  %v12585 = vpop.permute.xlu0 %12584
  %12588 = vset.pattern.permute.xlu0 0
  %12589 = vperm.xlu0 %12588, %v12055
  %v12590 = vpop.permute.xlu0 %12589
  %12593 = vset.pattern.permute.xlu0 0
  %12594 = vperm.xlu0 %12593, %v12056
  %v12595 = vpop.permute.xlu0 %12594
  %12598 = vset.pattern.permute.xlu0 0
  %12599 = vperm.xlu0 %12598, %v12057
  %v12600 = vpop.permute.xlu0 %12599
  %12603 = vset.pattern.permute.xlu0 0
  %12604 = vperm.xlu0 %12603, %v12058
  %v12605 = vpop.permute.xlu0 %12604
  %12608 = vset.pattern.permute.xlu0 0
  %12609 = vperm.xlu0 %12608, %v12059
  %v12610 = vpop.permute.xlu0 %12609
  %12613 = vset.pattern.permute.xlu0 0
  %12614 = vperm.xlu0 %12613, %v12060
  %v12615 = vpop.permute.xlu0 %12614
  %12618 = vset.pattern.permute.xlu0 0
  %12619 = vperm.xlu0 %12618, %v12061
  %v12620 = vpop.permute.xlu0 %12619
  %12623 = vset.pattern.permute.xlu0 0
  %12624 = vperm.xlu0 %12623, %v12062
  %v12625 = vpop.permute.xlu0 %12624
  %12628 = vset.pattern.permute.xlu0 0
  %12629 = vperm.xlu0 %12628, %v12063
  %v12630 = vpop.permute.xlu0 %12629
  %12633 = vset.pattern.permute.xlu0 0
  %12634 = vperm.xlu0 %12633, %v12064
  %v12635 = vpop.permute.xlu0 %12634
  %12638 = vset.pattern.permute.xlu0 0
  %12639 = vperm.xlu0 %12638, %v12065
  %v12640 = vpop.permute.xlu0 %12639
  %12643 = vset.pattern.permute.xlu0 0
  %12644 = vperm.xlu0 %12643, %v12066
  %v12645 = vpop.permute.xlu0 %12644
  %12648 = vset.pattern.permute.xlu0 0
  %12649 = vperm.xlu0 %12648, %v12067
  %v12650 = vpop.permute.xlu0 %12649
  %12653 = vset.pattern.permute.xlu0 0
  %12654 = vperm.xlu0 %12653, %v12068
  %v12655 = vpop.permute.xlu0 %12654
  %12658 = vset.pattern.permute.xlu0 0
  %12659 = vperm.xlu0 %12658, %v12069
  %v12660 = vpop.permute.xlu0 %12659
  %12663 = vset.pattern.permute.xlu0 0
  %12664 = vperm.xlu0 %12663, %v12070
  %v12665 = vpop.permute.xlu0 %12664
  %12668 = vset.pattern.permute.xlu0 0
  %12669 = vperm.xlu0 %12668, %v12071
  %v12670 = vpop.permute.xlu0 %12669
  %12673 = vset.pattern.permute.xlu0 0
  %12674 = vperm.xlu0 %12673, %v12072
  %v12675 = vpop.permute.xlu0 %12674
  %12678 = vset.pattern.permute.xlu0 0
  %12679 = vperm.xlu0 %12678, %v12073
  %v12680 = vpop.permute.xlu0 %12679
  %12683 = vset.pattern.permute.xlu0 0
  %12684 = vperm.xlu0 %12683, %v12074
  %v12685 = vpop.permute.xlu0 %12684
  %12688 = vset.pattern.permute.xlu0 0
  %12689 = vperm.xlu0 %12688, %v12075
  %v12690 = vpop.permute.xlu0 %12689
  %12693 = vset.pattern.permute.xlu0 0
  %12694 = vperm.xlu0 %12693, %v12076
  %v12695 = vpop.permute.xlu0 %12694
  %12698 = vset.pattern.permute.xlu0 0
  %12699 = vperm.xlu0 %12698, %v12077
  %v12700 = vpop.permute.xlu0 %12699
  %12703 = vset.pattern.permute.xlu0 0
  %12704 = vperm.xlu0 %12703, %v12078
  %v12705 = vpop.permute.xlu0 %12704
  %12708 = vset.pattern.permute.xlu0 0
  %12709 = vperm.xlu0 %12708, %v12079
  %v12710 = vpop.permute.xlu0 %12709
  %12713 = vset.pattern.permute.xlu0 0
  %12714 = vperm.xlu0 %12713, %v12080
  %v12715 = vpop.permute.xlu0 %12714
  %12718 = vset.pattern.permute.xlu0 0
  %12719 = vperm.xlu0 %12718, %v12081
  %v12720 = vpop.permute.xlu0 %12719
  %12723 = vset.pattern.permute.xlu0 0
  %12724 = vperm.xlu0 %12723, %v12082
  %v12725 = vpop.permute.xlu0 %12724
  %12728 = vset.pattern.permute.xlu0 0
  %12729 = vperm.xlu0 %12728, %v12083
  %v12730 = vpop.permute.xlu0 %12729
  %12733 = vset.pattern.permute.xlu0 0
  %12734 = vperm.xlu0 %12733, %v12084
  %v12735 = vpop.permute.xlu0 %12734
  %12738 = vset.pattern.permute.xlu0 0
  %12739 = vperm.xlu0 %12738, %v12085
  %v12740 = vpop.permute.xlu0 %12739
  %12743 = vset.pattern.permute.xlu0 0
  %12744 = vperm.xlu0 %12743, %v12086
  %v12745 = vpop.permute.xlu0 %12744
  %12748 = vset.pattern.permute.xlu0 0
  %12749 = vperm.xlu0 %12748, %v12087
  %v12750 = vpop.permute.xlu0 %12749
  %12753 = vset.pattern.permute.xlu0 0
  %12754 = vperm.xlu0 %12753, %v12088
  %v12755 = vpop.permute.xlu0 %12754
  %12758 = vset.pattern.permute.xlu0 0
  %12759 = vperm.xlu0 %12758, %v12089
  %v12760 = vpop.permute.xlu0 %12759
  %v12762 = vadd.f32 %v12426, %v12485
  %v12763 = vadd.f32 %v12427, %v12490
  %v12764 = vadd.f32 %v12428, %v12495
  %v12765 = vadd.f32 %v12429, %v12500
  %v12766 = vadd.f32 %v12430, %v12505
  %v12767 = vadd.f32 %v12431, %v12510
  %v12768 = vadd.f32 %v12432, %v12515
  %v12769 = vadd.f32 %v12433, %v12520
  %v12770 = vadd.f32 %v12434, %v12525
  %v12771 = vadd.f32 %v12435, %v12530
  %v12772 = vadd.f32 %v12436, %v12535
  %v12773 = vadd.f32 %v12437, %v12540
  %v12774 = vadd.f32 %v12438, %v12545
  %v12775 = vadd.f32 %v12439, %v12550
  %v12776 = vadd.f32 %v12440, %v12555
  %v12777 = vadd.f32 %v12441, %v12560
  %v12778 = vadd.f32 %v12442, %v12565
  %v12779 = vadd.f32 %v12443, %v12570
  %v12780 = vadd.f32 %v12444, %v12575
  %v12781 = vadd.f32 %v12445, %v12580
  %v12782 = vadd.f32 %v12446, %v12585
  %v12783 = vadd.f32 %v12447, %v12590
  %v12784 = vadd.f32 %v12448, %v12595
  %v12785 = vadd.f32 %v12449, %v12600
  %v12786 = vadd.f32 %v12450, %v12605
  %v12787 = vadd.f32 %v12451, %v12610
  %v12788 = vadd.f32 %v12452, %v12615
  %v12789 = vadd.f32 %v12453, %v12620
  %v12790 = vadd.f32 %v12454, %v12625
  %v12791 = vadd.f32 %v12455, %v12630
  %v12792 = vadd.f32 %v12456, %v12635
  %v12793 = vadd.f32 %v12457, %v12640
  %v12794 = vadd.f32 %v12458, %v12645
  %v12795 = vadd.f32 %v12459, %v12650
  %v12796 = vadd.f32 %v12460, %v12655
  %v12797 = vadd.f32 %v12461, %v12660
  %v12798 = vadd.f32 %v12462, %v12665
  %v12799 = vadd.f32 %v12463, %v12670
  %v12800 = vadd.f32 %v12464, %v12675
  %v12801 = vadd.f32 %v12465, %v12680
  %v12802 = vadd.f32 %v12466, %v12685
  %v12803 = vadd.f32 %v12467, %v12690
  %v12804 = vadd.f32 %v12468, %v12695
  %v12805 = vadd.f32 %v12469, %v12700
  %v12806 = vadd.f32 %v12470, %v12705
  %v12807 = vadd.f32 %v12471, %v12710
  %v12808 = vadd.f32 %v12472, %v12715
  %v12809 = vadd.f32 %v12473, %v12720
  %v12810 = vadd.f32 %v12474, %v12725
  %v12811 = vadd.f32 %v12475, %v12730
  %v12812 = vadd.f32 %v12476, %v12735
  %v12813 = vadd.f32 %v12477, %v12740
  %v12814 = vadd.f32 %v12478, %v12745
  %v12815 = vadd.f32 %v12479, %v12750
  %v12816 = vadd.f32 %v12480, %v12755
  %v12817 = vadd.f32 %v12481, %v12760
  %12818 = vst.msk [vmem:[%s5] sm:$0xff] %vm11304, %v12762
  %12819 = vst.msk [vmem:[%s5 + $0x8] sm:$0xff] %vm11304, %v12763
  %12820 = vst.msk [vmem:[%s5 + $0x10] sm:$0xff] %vm11304, %v12764
  %12821 = vst.msk [vmem:[%s5 + $0x18] sm:$0xff] %vm11304, %v12765
  %12822 = vst.msk [vmem:[%s5 + $0x20] sm:$0xff] %vm11304, %v12766
  %12823 = vst.msk [vmem:[%s5 + $0x28] sm:$0xff] %vm11304, %v12767
  %12824 = vst.msk [vmem:[%s5 + $0x30] sm:$0xff] %vm11304, %v12768
  %12825 = vst.msk [vmem:[%s5 + $0x38] sm:$0xff] %vm11304, %v12769
  %12826 = vst.msk [vmem:[%s5 + $0x40] sm:$0xff] %vm11304, %v12770
  %12827 = vst.msk [vmem:[%s5 + $0x48] sm:$0xff] %vm11304, %v12771
  %12828 = vst.msk [vmem:[%s5 + $0x50] sm:$0xff] %vm11304, %v12772
  %12829 = vst.msk [vmem:[%s5 + $0x58] sm:$0xff] %vm11304, %v12773
  %12830 = vst.msk [vmem:[%s5 + $0x60] sm:$0xff] %vm11304, %v12774
  %12831 = vst.msk [vmem:[%s5 + $0x68] sm:$0xff] %vm11304, %v12775
  %12832 = vst.msk [vmem:[%s5 + $0x70] sm:$0xff] %vm11304, %v12776
  %12833 = vst.msk [vmem:[%s5 + $0x78] sm:$0xff] %vm11304, %v12777
  %12834 = vst.msk [vmem:[%s5 + $0x80] sm:$0xff] %vm11304, %v12778
  %12835 = vst.msk [vmem:[%s5 + $0x88] sm:$0xff] %vm11304, %v12779
  %12836 = vst.msk [vmem:[%s5 + $0x90] sm:$0xff] %vm11304, %v12780
  %12837 = vst.msk [vmem:[%s5 + $0x98] sm:$0xff] %vm11304, %v12781
  %12838 = vst.msk [vmem:[%s5 + $0xa0] sm:$0xff] %vm11304, %v12782
  %12839 = vst.msk [vmem:[%s5 + $0xa8] sm:$0xff] %vm11304, %v12783
  %12840 = vst.msk [vmem:[%s5 + $0xb0] sm:$0xff] %vm11304, %v12784
  %12841 = vst.msk [vmem:[%s5 + $0xb8] sm:$0xff] %vm11304, %v12785
  %12842 = vst.msk [vmem:[%s5 + $0xc0] sm:$0xff] %vm11304, %v12786
  %12843 = vst.msk [vmem:[%s5 + $0xc8] sm:$0xff] %vm11304, %v12787
  %12844 = vst.msk [vmem:[%s5 + $0xd0] sm:$0xff] %vm11304, %v12788
  %12845 = vst.msk [vmem:[%s5 + $0xd8] sm:$0xff] %vm11304, %v12789
  %12846 = vst.msk [vmem:[%s5 + $0xe0] sm:$0xff] %vm11304, %v12790
  %12847 = vst.msk [vmem:[%s5 + $0xe8] sm:$0xff] %vm11304, %v12791
  %12848 = vst.msk [vmem:[%s5 + $0xf0] sm:$0xff] %vm11304, %v12792
  %12849 = vst.msk [vmem:[%s5 + $0xf8] sm:$0xff] %vm11304, %v12793
  %12850 = vst.msk [vmem:[%s5 + $0x100] sm:$0xff] %vm11304, %v12794
  %12851 = vst.msk [vmem:[%s5 + $0x108] sm:$0xff] %vm11304, %v12795
  %12852 = vst.msk [vmem:[%s5 + $0x110] sm:$0xff] %vm11304, %v12796
  %12853 = vst.msk [vmem:[%s5 + $0x118] sm:$0xff] %vm11304, %v12797
  %12854 = vst.msk [vmem:[%s5 + $0x120] sm:$0xff] %vm11304, %v12798
  %12855 = vst.msk [vmem:[%s5 + $0x128] sm:$0xff] %vm11304, %v12799
  %12856 = vst.msk [vmem:[%s5 + $0x130] sm:$0xff] %vm11304, %v12800
  %12857 = vst.msk [vmem:[%s5 + $0x138] sm:$0xff] %vm11304, %v12801
  %12858 = vst.msk [vmem:[%s5 + $0x140] sm:$0xff] %vm11304, %v12802
  %12859 = vst.msk [vmem:[%s5 + $0x148] sm:$0xff] %vm11304, %v12803
  %12860 = vst.msk [vmem:[%s5 + $0x150] sm:$0xff] %vm11304, %v12804
  %12861 = vst.msk [vmem:[%s5 + $0x158] sm:$0xff] %vm11304, %v12805
  %12862 = vst.msk [vmem:[%s5 + $0x160] sm:$0xff] %vm11304, %v12806
  %12863 = vst.msk [vmem:[%s5 + $0x168] sm:$0xff] %vm11304, %v12807
  %12864 = vst.msk [vmem:[%s5 + $0x170] sm:$0xff] %vm11304, %v12808
  %12865 = vst.msk [vmem:[%s5 + $0x178] sm:$0xff] %vm11304, %v12809
  %12866 = vst.msk [vmem:[%s5 + $0x180] sm:$0xff] %vm11304, %v12810
  %12867 = vst.msk [vmem:[%s5 + $0x188] sm:$0xff] %vm11304, %v12811
  %12868 = vst.msk [vmem:[%s5 + $0x190] sm:$0xff] %vm11304, %v12812
  %12869 = vst.msk [vmem:[%s5 + $0x198] sm:$0xff] %vm11304, %v12813
  %12870 = vst.msk [vmem:[%s5 + $0x1a0] sm:$0xff] %vm11304, %v12814
  %12871 = vst.msk [vmem:[%s5 + $0x1a8] sm:$0xff] %vm11304, %v12815
  %12872 = vst.msk [vmem:[%s5 + $0x1b0] sm:$0xff] %vm11304, %v12816
  %12873 = vst.msk [vmem:[%s5 + $0x1b8] sm:$0xff] %vm11304, %v12817
  // Predicated region
  $region22: #{se_conv_bn.1} parent=0 // pred_check
    _
  $region23: #{se_conv_bn.1} parent=0 // pred_check_branch
    %12875 = sbr.rel (0) target = $region25
  $region24: #{se_conv_bn.1} parent=0 // pred_region
    _
  $region25: #{se_conv_bn.1} parent=0 // pred_fallthru
    _
  // Predicated region
  $region26: #{se_conv_bn.1} parent=0 // pred_check
    _
  $region27: #{se_conv_bn.1} parent=0 // pred_check_branch
    %12877 = sbr.rel (0) target = $region29
  $region28: #{se_conv_bn.1} parent=0 // pred_region
    _
  $region29: #{se_conv_bn.1} parent=0 // pred_fallthru
    _

</llo_original>
